<compile_context>
chip_gen: v7x
topology: tpu7x:2x2x1
jax: 0.10.0
libtpu: 0.0.40
codegen_flags: <defaults>
</compile_context>

<pallas_src>
import jax
import jax.numpy as jnp
from jax.experimental import pallas as pl
from jax.experimental.pallas import tpu as pltpu

EPS = 1e-5      # BatchNorm3d default eps
LANE = 128      # TPU lane width
VMEM_LIMIT = 48 * 1024 * 1024   # stay well under v7x's 64 MiB physical VMEM


def _round_up(x, m):
    return (x + m - 1) // m * m


def _pad_cols(a, lane=LANE):
    pad = (-a.shape[-1]) % lane
    if pad:
        a = jnp.pad(a, ((0, 0), (0, pad)))
    return a


# ----------------------------- Pallas kernels ------------------------------ #

def _maxpool_kernel(x_ref, o_ref):
    # x_ref: (TILE, 8, C) window-major block -> o_ref: (TILE, C)
    o_ref[...] = jnp.max(x_ref[...], axis=1)


def _make_conv_relu_stats_kernel(tile_m, m_valid):
    """conv (im2col matmul, bf16 on MXU) + bias + ReLU, plus per-tile partial
    BatchNorm statistics (sum, sum-of-squares) so the grid axis can be parallel."""
    def kernel(p_ref, w_ref, b_ref, y_ref, st_ref):
        # MXU matmul with f32 accumulation; bias + ReLU in f32.
        y = jnp.dot(p_ref[...], w_ref[...], preferred_element_type=jnp.float32)
        y = jnp.maximum(y + b_ref[...], 0.0)
        y_ref[...] = y
        # Partial BN stats; rows past the true M (zero-padded tiles) are masked.
        row = pl.program_id(0) * tile_m + jax.lax.broadcasted_iota(
            jnp.int32, y.shape, 0)
        ym = jnp.where(row < m_valid, y, 0.0)
        ssum = jnp.sum(ym, axis=0, keepdims=True)          # (1, Cpad)
        ssq = jnp.sum(ym * ym, axis=0, keepdims=True)      # (1, Cpad)
        zero = jnp.zeros_like(ssum)
        st_ref[...] = jnp.concatenate(
            [ssum, ssq, zero, zero, zero, zero, zero, zero], axis=0)
    return kernel


def _scale_shift_kernel(y_ref, s_ref, t_ref, o_ref):
    # Per-channel affine (BatchNorm apply): out = y * scale + shift
    o_ref[...] = y_ref[...] * s_ref[...] + t_ref[...]


# ------------------------------ Wrappers ----------------------------------- #

def maxpool3d_2(x_ndhwc):
    # x: (N, D, H, W, C) -> (N, D//2, H//2, W//2, C), max over 2x2x2 windows.
    N, D, H, W, C = x_ndhwc.shape
    Do, Ho, Wo = D // 2, H // 2, W // 2
    M0 = N * Do * Ho * Wo
    xw = x_ndhwc.reshape(N, Do, 2, Ho, 2, Wo, 2, C)
    xw = xw.transpose(0, 1, 3, 5, 2, 4, 6, 7).reshape(M0, 8, C)

    tile = min(1024, _round_up(M0, 8))
    Mp = _round_up(M0, tile)
    if Mp != M0:
        xw = jnp.pad(xw, ((0, Mp - M0), (0, 0), (0, 0)))

    out = pl.pallas_call(
        _maxpool_kernel,
        grid=(Mp // tile,),
        in_specs=[pl.BlockSpec((tile, 8, C), lambda i: (i, 0, 0))],
        out_specs=pl.BlockSpec((tile, C), lambda i: (i, 0)),
        out_shape=jax.ShapeDtypeStruct((Mp, C), x_ndhwc.dtype),
        compiler_params=pltpu.CompilerParams(
            dimension_semantics=("parallel",),
            vmem_limit_bytes=VMEM_LIMIT),
    )(xw)
    return out[:M0].reshape(N, Do, Ho, Wo, C)


def im2col3d(x_ndhwc, dtype=jnp.bfloat16):
    # x: (N, D, H, W, C), 3x3x3 kernel, padding 1 -> (N*D*H*W, 27*C) in bf16
    # (patch ordering (kd, kh, kw, c) matches the weight reshape below).
    N, D, H, W, C = x_ndhwc.shape
    xp = jnp.pad(x_ndhwc, ((0, 0), (1, 1), (1, 1), (1, 1), (0, 0)))
    cols = []
    for kd in range(3):
        for kh in range(3):
            for kw in range(3):
                cols.append(xp[:, kd:kd + D, kh:kh + H, kw:kw + W, :])
    patches = jnp.stack(cols, axis=-2)          # (N, D, H, W, 27, C)
    return patches.reshape(N * D * H * W, 27 * C).astype(dtype)


def conv_relu_stats(patches, w_mat, bias_row, m_valid, tile_m):
    # patches: (Mp, K) bf16   w_mat: (K, Cpad) bf16   bias_row: (1, Cpad) f32
    Mp, K = patches.shape
    Cpad = w_mat.shape[1]
    ntiles = Mp // tile_m
    bytes_accessed = (patches.size * patches.dtype.itemsize
                      + w_mat.size * w_mat.dtype.itemsize
                      + Mp * Cpad * 4 + ntiles * 8 * Cpad * 4)
    y, stats = pl.pallas_call(
        _make_conv_relu_stats_kernel(tile_m, m_valid),
        grid=(ntiles,),
        in_specs=[
            pl.BlockSpec((tile_m, K), lambda i: (i, 0)),     # streaming patches
            pl.BlockSpec((K, Cpad), lambda i: (0, 0)),       # resident weight
            pl.BlockSpec((1, Cpad), lambda i: (0, 0)),       # resident bias
        ],
        out_specs=(
            pl.BlockSpec((tile_m, Cpad), lambda i: (i, 0)),  # y tile
            pl.BlockSpec((8, Cpad), lambda i: (i, 0)),       # per-tile stats
        ),
        out_shape=(
            jax.ShapeDtypeStruct((Mp, Cpad), jnp.float32),
            jax.ShapeDtypeStruct((ntiles * 8, Cpad), jnp.float32),
        ),
        compiler_params=pltpu.CompilerParams(
            dimension_semantics=("parallel",),
            vmem_limit_bytes=VMEM_LIMIT),
        cost_estimate=pl.CostEstimate(
            flops=2 * Mp * K * Cpad,
            transcendentals=0,
            bytes_accessed=int(bytes_accessed)),
    )(patches, w_mat, bias_row)
    return y, stats


def scale_shift(y, scale_row, shift_row, tile_m):
    # y: (Mp, Cpad) f32, scale/shift: (1, Cpad) f32 -> (Mp, Cpad) f32
    Mp, Cpad = y.shape
    return pl.pallas_call(
        _scale_shift_kernel,
        grid=(Mp // tile_m,),
        in_specs=[
            pl.BlockSpec((tile_m, Cpad), lambda i: (i, 0)),
            pl.BlockSpec((1, Cpad), lambda i: (0, 0)),
            pl.BlockSpec((1, Cpad), lambda i: (0, 0)),
        ],
        out_specs=pl.BlockSpec((tile_m, Cpad), lambda i: (i, 0)),
        out_shape=jax.ShapeDtypeStruct((Mp, Cpad), jnp.float32),
        compiler_params=pltpu.CompilerParams(
            dimension_semantics=("parallel",),
            vmem_limit_bytes=VMEM_LIMIT),
    )(y, scale_row, shift_row)


def _finalize_stats(stats, m, c):
    # stats: (ntiles*8, Cpad) partial sums -> per-channel mean, biased var
    ntiles = stats.shape[0] // 8
    st = stats.reshape(ntiles, 8, stats.shape[-1])
    total = jnp.sum(st[:, 0, :], axis=0)[:c]
    total_sq = jnp.sum(st[:, 1, :], axis=0)[:c]
    mean = total / m
    var = jnp.maximum(total_sq / m - mean * mean, 0.0)
    return mean, var


def down_forward(x, params):
    # x: (N, Cin, D, H, W) NCDHW, matching PyTorch.
    N, Cin, D, H, W = x.shape
    Cout = params["w2"].shape[0]

    # Single NCDHW -> NDHWC transpose; stay channels-last until the end.
    x_cl = jnp.transpose(x, (0, 2, 3, 4, 1))

    # 1) MaxPool3d(2)  (Pallas)
    h0 = maxpool3d_2(x_cl)                       # (N, Do, Ho, Wo, Cin)
    _, Do, Ho, Wo, _ = h0.shape
    M = N * Do * Ho * Wo

    tile_m = min(1024, _round_up(M, 16))
    Mp = _round_up(M, tile_m)

    # 2) Conv1 (Cin->Cin) + ReLU + partial BN stats  (Pallas, tiled over M)
    patches1 = im2col3d(h0)                                       # (M, 27*Cin) bf16
    if Mp != M:
        patches1 = jnp.pad(patches1, ((0, Mp - M), (0, 0)))
    K = patches1.shape[1]
    w1 = params["w1"].transpose(2, 3, 4, 1, 0).reshape(K, Cin)
    w1p = _pad_cols(w1).astype(jnp.bfloat16)
    b1p = _pad_cols(params["b1"].reshape(1, Cin))
    y1, st1 = conv_relu_stats(patches1, w1p, b1p, M, tile_m)
    mean1, var1 = _finalize_stats(st1, M, Cin)
    s1 = params["g1"] * jax.lax.rsqrt(var1 + EPS)
    t1 = params["be1"] - mean1 * s1

    # BatchNorm1 applied as a per-channel affine BEFORE conv2's zero padding /
    # im2col (fuses into the XLA pad/slice copies that build patches2).
    h1 = y1[:M, :Cin] * s1 + t1
    h1 = h1.reshape(N, Do, Ho, Wo, Cin)

    # 3) Conv2 (Cin->Cout) + ReLU + partial BN stats  (Pallas, tiled over M)
    patches2 = im2col3d(h1)
    if Mp != M:
        patches2 = jnp.pad(patches2, ((0, Mp - M), (0, 0)))
    w2 = params["w2"].transpose(2, 3, 4, 1, 0).reshape(K, Cout)
    w2p = _pad_cols(w2).astype(jnp.bfloat16)
    b2p = _pad_cols(params["b2"].reshape(1, Cout))
    y2, st2 = conv_relu_stats(patches2, w2p, b2p, M, tile_m)
    mean2, var2 = _finalize_stats(st2, M, Cout)
    s2 = params["g2"] * jax.lax.rsqrt(var2 + EPS)
    t2 = params["be2"] - mean2 * s2

    # 4) BatchNorm2 apply  (Pallas lane-dense scale-shift, tiled over M)
    s2p = _pad_cols(s2.reshape(1, Cout))
    t2p = _pad_cols(t2.reshape(1, Cout))
    out = scale_shift(y2, s2p, t2p, tile_m)

    out = out[:M, :Cout].reshape(N, Do, Ho, Wo, Cout)
    return jnp.transpose(out, (0, 4, 1, 2, 3)).astype(x.dtype)   # NCDHW


def init_params(key, in_ch, out_ch):
    # Deterministic, PyTorch-style init (uniform(-1/sqrt(fan_in), +)).
    k1, k2, k3, k4 = jax.random.split(key, 4)
    fan_in = in_ch * 27
    bound = 1.0 / (fan_in ** 0.5)
    w1 = jax.random.uniform(k1, (in_ch, in_ch, 3, 3, 3), jnp.float32, -bound, bound)
    b1 = jax.random.uniform(k2, (in_ch,), jnp.float32, -bound, bound)
    w2 = jax.random.uniform(k3, (out_ch, in_ch, 3, 3, 3), jnp.float32, -bound, bound)
    b2 = jax.random.uniform(k4, (out_ch,), jnp.float32, -bound, bound)
    return dict(
        w1=w1, b1=b1,
        g1=jnp.ones((in_ch,), jnp.float32), be1=jnp.zeros((in_ch,), jnp.float32),
        w2=w2, b2=b2,
        g2=jnp.ones((out_ch,), jnp.float32), be2=jnp.zeros((out_ch,), jnp.float32),
    )


if __name__ == "__main__":
    in_ch, out_ch = 4, 8
    key = jax.random.PRNGKey(0)
    kx, kp = jax.random.split(key)
    x = jax.random.normal(kx, (2, in_ch, 16, 16, 16), jnp.float32)   # NCDHW
    params = init_params(kp, in_ch, out_ch)

    out = jax.jit(down_forward)(x, params)
    out = jax.block_until_ready(out)
    assert out.shape == (2, out_ch, 8, 8, 8), out.shape
    assert bool(jnp.all(jnp.isfinite(out)))
    print("KERNEL_OK")
</pallas_src>

<mosaic_0001>
module attributes {stable_mosaic.version = 11 : i64} {
  func.func @_maxpool_kernel(%arg0: i32, %arg1: memref<1024x8x4xf32, #tpu.memory_space<vmem>>, %arg2: memref<1024x4xf32, #tpu.memory_space<vmem>>) attributes {dimension_semantics = [#tpu.dimension_semantics<parallel>], iteration_bounds = array<i64: 1>, scalar_prefetch = 0 : i64, scratch_operands = 0 : i64, tpu.core_type = #tpu.core_type<tc>, window_params = [{transform_indices = @transform_0, window_bounds = array<i64: 1024, 8, 4>}, {transform_indices = @transform_1, window_bounds = array<i64: 1024, 4>}]} {
    %c0 = arith.constant 0 : index
    %c0_0 = arith.constant 0 : index
    %c0_1 = arith.constant 0 : index
    %0 = vector.load %arg1[%c0, %c0_0, %c0_1] : memref<1024x8x4xf32, #tpu.memory_space<vmem>>, vector<1024x8x4xf32>
    %cst = arith.constant dense<0xFF800000> : vector<1024x4xf32>
    %1 = vector.multi_reduction <maximumf>, %0, %cst [1] : vector<1024x8x4xf32> to vector<1024x4xf32>
    %c0_2 = arith.constant 0 : index
    %c0_3 = arith.constant 0 : index
    %2 = vector.load %arg2[%c0_2, %c0_3] : memref<1024x4xf32, #tpu.memory_space<vmem>>, vector<1024x4xf32>
    tpu.vector_store %arg2[%c0_2, %c0_3], %1 {strides = array<i32>} : memref<1024x4xf32, #tpu.memory_space<vmem>>, vector<1024x4xf32>,
    return
  }
  func.func @transform_0(%arg0: i32) -> (i32, i32, i32) {
    %c0_i32 = arith.constant 0 : i32
    %c0_i32_0 = arith.constant 0 : i32
    %c0_i32_1 = arith.constant 0 : i32
    return %arg0, %c0_i32, %c0_i32_0 : i32, i32, i32
  }
  func.func @transform_1(%arg0: i32) -> (i32, i32) {
    %c0_i32 = arith.constant 0 : i32
    %c0_i32_0 = arith.constant 0 : i32
    return %arg0, %c0_i32 : i32, i32
  }
}

module attributes {stable_mosaic.version = 11 : i64} {
  func.func @kernel(%arg0: i32, %arg1: memref<1024x108xbf16, #tpu.memory_space<vmem>>, %arg2: memref<108x128xbf16, #tpu.memory_space<vmem>>, %arg3: memref<1x128xf32, #tpu.memory_space<vmem>>, %arg4: memref<1024x128xf32, #tpu.memory_space<vmem>>, %arg5: memref<8x128xf32, #tpu.memory_space<vmem>>) attributes {dimension_semantics = [#tpu.dimension_semantics<parallel>], iteration_bounds = array<i64: 1>, scalar_prefetch = 0 : i64, scratch_operands = 0 : i64, tpu.core_type = #tpu.core_type<tc>, window_params = [{transform_indices = @transform_0, window_bounds = array<i64: 1024, 108>}, {pipeline_mode = #tpu.pipeline_mode<synchronous>, transform_indices = @transform_1, window_bounds = array<i64: 108, 128>}, {pipeline_mode = #tpu.pipeline_mode<synchronous>, transform_indices = @transform_2, window_bounds = array<i64: 1, 128>}, {transform_indices = @transform_3, window_bounds = array<i64: 1024, 128>}, {transform_indices = @transform_4, window_bounds = array<i64: 8, 128>}]} {
    %c0 = arith.constant 0 : index
    %c0_0 = arith.constant 0 : index
    %0 = vector.load %arg1[%c0, %c0_0] : memref<1024x108xbf16, #tpu.memory_space<vmem>>, vector<1024x108xbf16>
    %c0_1 = arith.constant 0 : index
    %c0_2 = arith.constant 0 : index
    %1 = vector.load %arg2[%c0_1, %c0_2] : memref<108x128xbf16, #tpu.memory_space<vmem>>, vector<108x128xbf16>
    %cst = arith.constant dense<0.000000e+00> : vector<1024x128xf32>
    %2 = tpu.matmul %0, %1, %cst {dimension_numbers = #tpu.dot_dimension_numbers<[1], [0], [0], [1], [0, 0, 1, 1], [], []>} : vector<1024x108xbf16>, vector<108x128xbf16>, vector<1024x128xf32> -> vector<1024x128xf32>
    %c0_3 = arith.constant 0 : index
    %c0_4 = arith.constant 0 : index
    %3 = vector.load %arg3[%c0_3, %c0_4] : memref<1x128xf32, #tpu.memory_space<vmem>>, vector<1x128xf32>
    %4 = vector.broadcast %3 : vector<1x128xf32> to vector<1024x128xf32>
    %5 = arith.addf %2, %4 : vector<1024x128xf32>
    %cst_5 = arith.constant 0.000000e+00 : f32
    %6 = vector.broadcast %cst_5 : f32 to vector<1024x128xf32>
    %7 = arith.maximumf %5, %6 : vector<1024x128xf32>
    %c0_6 = arith.constant 0 : index
    %c0_7 = arith.constant 0 : index
    %8 = vector.load %arg4[%c0_6, %c0_7] : memref<1024x128xf32, #tpu.memory_space<vmem>>, vector<1024x128xf32>
    tpu.vector_store %arg4[%c0_6, %c0_7], %7 {strides = array<i32>} : memref<1024x128xf32, #tpu.memory_space<vmem>>, vector<1024x128xf32>,
    %c1024_i32 = arith.constant 1024 : i32
    %9 = arith.muli %arg0, %c1024_i32 : i32
    %10 = tpu.iota {dimensions = array<i32: 0>} : vector<1024x128xi32>
    %11 = vector.broadcast %9 : i32 to vector<1024x128xi32>
    %12 = arith.addi %11, %10 : vector<1024x128xi32>
    %c1024_i32_8 = arith.constant 1024 : i32
    %13 = vector.broadcast %c1024_i32_8 : i32 to vector<1024x128xi32>
    %14 = arith.cmpi slt, %12, %13 : vector<1024x128xi32>
    %cst_9 = arith.constant 0.000000e+00 : f32
    %15 = vector.broadcast %cst_9 : f32 to vector<1024x128xf32>
    %16 = arith.select %14, %7, %15 : vector<1024x128xi1>, vector<1024x128xf32>
    %cst_10 = arith.constant dense<0.000000e+00> : vector<128xf32>
    %17 = vector.multi_reduction <add>, %16, %cst_10 [0] : vector<1024x128xf32> to vector<128xf32>
    %18 = vector.shape_cast %17 : vector<128xf32> to vector<1x128xf32>
    %19 = arith.mulf %16, %16 : vector<1024x128xf32>
    %cst_11 = arith.constant dense<0.000000e+00> : vector<128xf32>
    %20 = vector.multi_reduction <add>, %19, %cst_11 [0] : vector<1024x128xf32> to vector<128xf32>
    %21 = vector.shape_cast %20 : vector<128xf32> to vector<1x128xf32>
    %cst_12 = arith.constant 0.000000e+00 : f32
    %22 = vector.broadcast %cst_12 : f32 to vector<1x128xf32>
    %23 = tpu.concatenate %18, %21, %22, %22, %22, %22, %22, %22 in 0 : vector<1x128xf32>, vector<1x128xf32>, vector<1x128xf32>, vector<1x128xf32>, vector<1x128xf32>, vector<1x128xf32>, vector<1x128xf32>, vector<1x128xf32> -> vector<8x128xf32>
    %c0_13 = arith.constant 0 : index
    %c0_14 = arith.constant 0 : index
    %24 = vector.load %arg5[%c0_13, %c0_14] : memref<8x128xf32, #tpu.memory_space<vmem>>, vector<8x128xf32>
    tpu.vector_store %arg5[%c0_13, %c0_14], %23 {strides = array<i32>} : memref<8x128xf32, #tpu.memory_space<vmem>>, vector<8x128xf32>,
    return
  }
  func.func @transform_0(%arg0: i32) -> (i32, i32) {
    %c0_i32 = arith.constant 0 : i32
    %c0_i32_0 = arith.constant 0 : i32
    return %arg0, %c0_i32 : i32, i32
  }
  func.func @transform_1(%arg0: i32) -> (i32, i32) {
    %c0_i32 = arith.constant 0 : i32
    %c0_i32_0 = arith.constant 0 : i32
    %c0_i32_1 = arith.constant 0 : i32
    return %c0_i32, %c0_i32_0 : i32, i32
  }
  func.func @transform_2(%arg0: i32) -> (i32, i32) {
    %c0_i32 = arith.constant 0 : i32
    %c0_i32_0 = arith.constant 0 : i32
    %c0_i32_1 = arith.constant 0 : i32
    return %c0_i32, %c0_i32_0 : i32, i32
  }
  func.func @transform_3(%arg0: i32) -> (i32, i32) {
    %c0_i32 = arith.constant 0 : i32
    %c0_i32_0 = arith.constant 0 : i32
    return %arg0, %c0_i32 : i32, i32
  }
  func.func @transform_4(%arg0: i32) -> (i32, i32) {
    %c0_i32 = arith.constant 0 : i32
    %c0_i32_0 = arith.constant 0 : i32
    return %arg0, %c0_i32 : i32, i32
  }
}

module attributes {stable_mosaic.version = 11 : i64} {
  func.func @_scale_shift_kernel(%arg0: i32, %arg1: memref<1024x128xf32, #tpu.memory_space<vmem>>, %arg2: memref<1x128xf32, #tpu.memory_space<vmem>>, %arg3: memref<1x128xf32, #tpu.memory_space<vmem>>, %arg4: memref<1024x128xf32, #tpu.memory_space<vmem>>) attributes {dimension_semantics = [#tpu.dimension_semantics<parallel>], iteration_bounds = array<i64: 1>, scalar_prefetch = 0 : i64, scratch_operands = 0 : i64, tpu.core_type = #tpu.core_type<tc>, window_params = [{transform_indices = @transform_0, window_bounds = array<i64: 1024, 128>}, {pipeline_mode = #tpu.pipeline_mode<synchronous>, transform_indices = @transform_1, window_bounds = array<i64: 1, 128>}, {pipeline_mode = #tpu.pipeline_mode<synchronous>, transform_indices = @transform_2, window_bounds = array<i64: 1, 128>}, {transform_indices = @transform_3, window_bounds = array<i64: 1024, 128>}]} {
    %c0 = arith.constant 0 : index
    %c0_0 = arith.constant 0 : index
    %0 = vector.load %arg1[%c0, %c0_0] : memref<1024x128xf32, #tpu.memory_space<vmem>>, vector<1024x128xf32>
    %c0_1 = arith.constant 0 : index
    %c0_2 = arith.constant 0 : index
    %1 = vector.load %arg2[%c0_1, %c0_2] : memref<1x128xf32, #tpu.memory_space<vmem>>, vector<1x128xf32>
    %2 = vector.broadcast %1 : vector<1x128xf32> to vector<1024x128xf32>
    %3 = arith.mulf %0, %2 : vector<1024x128xf32>
    %c0_3 = arith.constant 0 : index
    %c0_4 = arith.constant 0 : index
    %4 = vector.load %arg3[%c0_3, %c0_4] : memref<1x128xf32, #tpu.memory_space<vmem>>, vector<1x128xf32>
    %5 = vector.broadcast %4 : vector<1x128xf32> to vector<1024x128xf32>
    %6 = arith.addf %3, %5 : vector<1024x128xf32>
    %c0_5 = arith.constant 0 : index
    %c0_6 = arith.constant 0 : index
    %7 = vector.load %arg4[%c0_5, %c0_6] : memref<1024x128xf32, #tpu.memory_space<vmem>>, vector<1024x128xf32>
    tpu.vector_store %arg4[%c0_5, %c0_6], %6 {strides = array<i32>} : memref<1024x128xf32, #tpu.memory_space<vmem>>, vector<1024x128xf32>,
    return
  }
  func.func @transform_0(%arg0: i32) -> (i32, i32) {
    %c0_i32 = arith.constant 0 : i32
    %c0_i32_0 = arith.constant 0 : i32
    return %arg0, %c0_i32 : i32, i32
  }
  func.func @transform_1(%arg0: i32) -> (i32, i32) {
    %c0_i32 = arith.constant 0 : i32
    %c0_i32_0 = arith.constant 0 : i32
    %c0_i32_1 = arith.constant 0 : i32
    return %c0_i32, %c0_i32_0 : i32, i32
  }
  func.func @transform_2(%arg0: i32) -> (i32, i32) {
    %c0_i32 = arith.constant 0 : i32
    %c0_i32_0 = arith.constant 0 : i32
    %c0_i32_1 = arith.constant 0 : i32
    return %c0_i32, %c0_i32_0 : i32, i32
  }
  func.func @transform_3(%arg0: i32) -> (i32, i32) {
    %c0_i32 = arith.constant 0 : i32
    %c0_i32_0 = arith.constant 0 : i32
    return %arg0, %c0_i32 : i32, i32
  }
}

</mosaic_0001>

<llo_original>
// kernel: down_forward.4
$region0: #{down_forward.4}
  #allocation0 [shape = 'u32[]', space=smem, size = 0x4, offset = 0x4, fixed_abs, tag = 'smem constant byte address 0x4 - core index']
  #allocation1 [shape = 'u32[144,128]{1,0:T(1,128)}', space=vmem, size = 0x12000, scoped, tag = 'internal scratch']
  %s0 = inlined_call_operand.vmem [shape: f32[1024,8,4], index: 0, kind: input, shape index: {}]
  %s1 = inlined_call_operand.vmem [shape: f32[1024,4], index: 1, kind: output, shape index: {}]
  %s2 = sld [smem:[#allocation0]]
  $region14: #{down_forward.4} parent=0
    _
  %s4 = ssub.s32 1, %s2
  %s5 = scalar_select 0, %s4, %s2
  // Predicated region
  $region2: #{down_forward.4} parent=0 // pred_check
    _
  $region3: #{down_forward.4} parent=0 // pred_check_branch
    %7 = sbr.rel (0) target = $region5
  $region4: #{down_forward.4} parent=0 // pred_region
    _
  $region5: #{down_forward.4} parent=0 // pred_fallthru
    _
  %v8 = vld [vmem:[%s0] sm:$0xff]
  %v9 = vld [vmem:[%s0 + $0x8] sm:$0xff]
  %v10 = vld [vmem:[%s0 + $0x10] sm:$0xff]
  %v11 = vld [vmem:[%s0 + $0x18] sm:$0xff]
  %v12 = vld [vmem:[%s0 + $0x20] sm:$0xff]
  %v13 = vld [vmem:[%s0 + $0x28] sm:$0xff]
  %v14 = vld [vmem:[%s0 + $0x30] sm:$0xff]
  %v15 = vld [vmem:[%s0 + $0x38] sm:$0xff]
  %v16 = vld [vmem:[%s0 + $0x40] sm:$0xff]
  %v17 = vld [vmem:[%s0 + $0x48] sm:$0xff]
  %v18 = vld [vmem:[%s0 + $0x50] sm:$0xff]
  %v19 = vld [vmem:[%s0 + $0x58] sm:$0xff]
  %v20 = vld [vmem:[%s0 + $0x60] sm:$0xff]
  %v21 = vld [vmem:[%s0 + $0x68] sm:$0xff]
  %v22 = vld [vmem:[%s0 + $0x70] sm:$0xff]
  %v23 = vld [vmem:[%s0 + $0x78] sm:$0xff]
  %v24 = vld [vmem:[%s0 + $0x80] sm:$0xff]
  %v25 = vld [vmem:[%s0 + $0x88] sm:$0xff]
  %v26 = vld [vmem:[%s0 + $0x90] sm:$0xff]
  %v27 = vld [vmem:[%s0 + $0x98] sm:$0xff]
  %v28 = vld [vmem:[%s0 + $0xa0] sm:$0xff]
  %v29 = vld [vmem:[%s0 + $0xa8] sm:$0xff]
  %v30 = vld [vmem:[%s0 + $0xb0] sm:$0xff]
  %v31 = vld [vmem:[%s0 + $0xb8] sm:$0xff]
  %v32 = vld [vmem:[%s0 + $0xc0] sm:$0xff]
  %v33 = vld [vmem:[%s0 + $0xc8] sm:$0xff]
  %v34 = vld [vmem:[%s0 + $0xd0] sm:$0xff]
  %v35 = vld [vmem:[%s0 + $0xd8] sm:$0xff]
  %v36 = vld [vmem:[%s0 + $0xe0] sm:$0xff]
  %v37 = vld [vmem:[%s0 + $0xe8] sm:$0xff]
  %v38 = vld [vmem:[%s0 + $0xf0] sm:$0xff]
  %v39 = vld [vmem:[%s0 + $0xf8] sm:$0xff]
  %v40 = vld [vmem:[%s0 + $0x100] sm:$0xff]
  %v41 = vld [vmem:[%s0 + $0x108] sm:$0xff]
  %v42 = vld [vmem:[%s0 + $0x110] sm:$0xff]
  %v43 = vld [vmem:[%s0 + $0x118] sm:$0xff]
  %v44 = vld [vmem:[%s0 + $0x120] sm:$0xff]
  %v45 = vld [vmem:[%s0 + $0x128] sm:$0xff]
  %v46 = vld [vmem:[%s0 + $0x130] sm:$0xff]
  %v47 = vld [vmem:[%s0 + $0x138] sm:$0xff]
  %v48 = vld [vmem:[%s0 + $0x140] sm:$0xff]
  %v49 = vld [vmem:[%s0 + $0x148] sm:$0xff]
  %v50 = vld [vmem:[%s0 + $0x150] sm:$0xff]
  %v51 = vld [vmem:[%s0 + $0x158] sm:$0xff]
  %v52 = vld [vmem:[%s0 + $0x160] sm:$0xff]
  %v53 = vld [vmem:[%s0 + $0x168] sm:$0xff]
  %v54 = vld [vmem:[%s0 + $0x170] sm:$0xff]
  %v55 = vld [vmem:[%s0 + $0x178] sm:$0xff]
  %v56 = vld [vmem:[%s0 + $0x180] sm:$0xff]
  %v57 = vld [vmem:[%s0 + $0x188] sm:$0xff]
  %v58 = vld [vmem:[%s0 + $0x190] sm:$0xff]
  %v59 = vld [vmem:[%s0 + $0x198] sm:$0xff]
  %v60 = vld [vmem:[%s0 + $0x1a0] sm:$0xff]
  %v61 = vld [vmem:[%s0 + $0x1a8] sm:$0xff]
  %v62 = vld [vmem:[%s0 + $0x1b0] sm:$0xff]
  %v63 = vld [vmem:[%s0 + $0x1b8] sm:$0xff]
  %v64 = vld [vmem:[%s0 + $0x1c0] sm:$0xff]
  %v65 = vld [vmem:[%s0 + $0x1c8] sm:$0xff]
  %v66 = vld [vmem:[%s0 + $0x1d0] sm:$0xff]
  %v67 = vld [vmem:[%s0 + $0x1d8] sm:$0xff]
  %v68 = vld [vmem:[%s0 + $0x1e0] sm:$0xff]
  %v69 = vld [vmem:[%s0 + $0x1e8] sm:$0xff]
  %v70 = vld [vmem:[%s0 + $0x1f0] sm:$0xff]
  %v71 = vld [vmem:[%s0 + $0x1f8] sm:$0xff]
  %v72 = vld [vmem:[%s0 + $0x200] sm:$0xff]
  %v73 = vld [vmem:[%s0 + $0x208] sm:$0xff]
  %v74 = vld [vmem:[%s0 + $0x210] sm:$0xff]
  %v75 = vld [vmem:[%s0 + $0x218] sm:$0xff]
  %v76 = vld [vmem:[%s0 + $0x220] sm:$0xff]
  %v77 = vld [vmem:[%s0 + $0x228] sm:$0xff]
  %v78 = vld [vmem:[%s0 + $0x230] sm:$0xff]
  %v79 = vld [vmem:[%s0 + $0x238] sm:$0xff]
  %v80 = vld [vmem:[%s0 + $0x240] sm:$0xff]
  %v81 = vld [vmem:[%s0 + $0x248] sm:$0xff]
  %v82 = vld [vmem:[%s0 + $0x250] sm:$0xff]
  %v83 = vld [vmem:[%s0 + $0x258] sm:$0xff]
  %v84 = vld [vmem:[%s0 + $0x260] sm:$0xff]
  %v85 = vld [vmem:[%s0 + $0x268] sm:$0xff]
  %v86 = vld [vmem:[%s0 + $0x270] sm:$0xff]
  %v87 = vld [vmem:[%s0 + $0x278] sm:$0xff]
  %v88 = vld [vmem:[%s0 + $0x280] sm:$0xff]
  %v89 = vld [vmem:[%s0 + $0x288] sm:$0xff]
  %v90 = vld [vmem:[%s0 + $0x290] sm:$0xff]
  %v91 = vld [vmem:[%s0 + $0x298] sm:$0xff]
  %v92 = vld [vmem:[%s0 + $0x2a0] sm:$0xff]
  %v93 = vld [vmem:[%s0 + $0x2a8] sm:$0xff]
  %v94 = vld [vmem:[%s0 + $0x2b0] sm:$0xff]
  %v95 = vld [vmem:[%s0 + $0x2b8] sm:$0xff]
  %v96 = vld [vmem:[%s0 + $0x2c0] sm:$0xff]
  %v97 = vld [vmem:[%s0 + $0x2c8] sm:$0xff]
  %v98 = vld [vmem:[%s0 + $0x2d0] sm:$0xff]
  %v99 = vld [vmem:[%s0 + $0x2d8] sm:$0xff]
  %v100 = vld [vmem:[%s0 + $0x2e0] sm:$0xff]
  %v101 = vld [vmem:[%s0 + $0x2e8] sm:$0xff]
  %v102 = vld [vmem:[%s0 + $0x2f0] sm:$0xff]
  %v103 = vld [vmem:[%s0 + $0x2f8] sm:$0xff]
  %v104 = vld [vmem:[%s0 + $0x300] sm:$0xff]
  %v105 = vld [vmem:[%s0 + $0x308] sm:$0xff]
  %v106 = vld [vmem:[%s0 + $0x310] sm:$0xff]
  %v107 = vld [vmem:[%s0 + $0x318] sm:$0xff]
  %v108 = vld [vmem:[%s0 + $0x320] sm:$0xff]
  %v109 = vld [vmem:[%s0 + $0x328] sm:$0xff]
  %v110 = vld [vmem:[%s0 + $0x330] sm:$0xff]
  %v111 = vld [vmem:[%s0 + $0x338] sm:$0xff]
  %v112 = vld [vmem:[%s0 + $0x340] sm:$0xff]
  %v113 = vld [vmem:[%s0 + $0x348] sm:$0xff]
  %v114 = vld [vmem:[%s0 + $0x350] sm:$0xff]
  %v115 = vld [vmem:[%s0 + $0x358] sm:$0xff]
  %v116 = vld [vmem:[%s0 + $0x360] sm:$0xff]
  %v117 = vld [vmem:[%s0 + $0x368] sm:$0xff]
  %v118 = vld [vmem:[%s0 + $0x370] sm:$0xff]
  %v119 = vld [vmem:[%s0 + $0x378] sm:$0xff]
  %v120 = vld [vmem:[%s0 + $0x380] sm:$0xff]
  %v121 = vld [vmem:[%s0 + $0x388] sm:$0xff]
  %v122 = vld [vmem:[%s0 + $0x390] sm:$0xff]
  %v123 = vld [vmem:[%s0 + $0x398] sm:$0xff]
  %v124 = vld [vmem:[%s0 + $0x3a0] sm:$0xff]
  %v125 = vld [vmem:[%s0 + $0x3a8] sm:$0xff]
  %v126 = vld [vmem:[%s0 + $0x3b0] sm:$0xff]
  %v127 = vld [vmem:[%s0 + $0x3b8] sm:$0xff]
  %v128 = vld [vmem:[%s0 + $0x3c0] sm:$0xff]
  %v129 = vld [vmem:[%s0 + $0x3c8] sm:$0xff]
  %v130 = vld [vmem:[%s0 + $0x3d0] sm:$0xff]
  %v131 = vld [vmem:[%s0 + $0x3d8] sm:$0xff]
  %v132 = vld [vmem:[%s0 + $0x3e0] sm:$0xff]
  %v133 = vld [vmem:[%s0 + $0x3e8] sm:$0xff]
  %v134 = vld [vmem:[%s0 + $0x3f0] sm:$0xff]
  %v135 = vld [vmem:[%s0 + $0x3f8] sm:$0xff]
  %v136 = vld [vmem:[%s0 + $0x400] sm:$0xff]
  %v137 = vld [vmem:[%s0 + $0x408] sm:$0xff]
  %v138 = vld [vmem:[%s0 + $0x410] sm:$0xff]
  %v139 = vld [vmem:[%s0 + $0x418] sm:$0xff]
  %v140 = vld [vmem:[%s0 + $0x420] sm:$0xff]
  %v141 = vld [vmem:[%s0 + $0x428] sm:$0xff]
  %v142 = vld [vmem:[%s0 + $0x430] sm:$0xff]
  %v143 = vld [vmem:[%s0 + $0x438] sm:$0xff]
  %v144 = vld [vmem:[%s0 + $0x440] sm:$0xff]
  %v145 = vld [vmem:[%s0 + $0x448] sm:$0xff]
  %v146 = vld [vmem:[%s0 + $0x450] sm:$0xff]
  %v147 = vld [vmem:[%s0 + $0x458] sm:$0xff]
  %v148 = vld [vmem:[%s0 + $0x460] sm:$0xff]
  %v149 = vld [vmem:[%s0 + $0x468] sm:$0xff]
  %v150 = vld [vmem:[%s0 + $0x470] sm:$0xff]
  %v151 = vld [vmem:[%s0 + $0x478] sm:$0xff]
  %v152 = vld [vmem:[%s0 + $0x480] sm:$0xff]
  %v153 = vld [vmem:[%s0 + $0x488] sm:$0xff]
  %v154 = vld [vmem:[%s0 + $0x490] sm:$0xff]
  %v155 = vld [vmem:[%s0 + $0x498] sm:$0xff]
  %v156 = vld [vmem:[%s0 + $0x4a0] sm:$0xff]
  %v157 = vld [vmem:[%s0 + $0x4a8] sm:$0xff]
  %v158 = vld [vmem:[%s0 + $0x4b0] sm:$0xff]
  %v159 = vld [vmem:[%s0 + $0x4b8] sm:$0xff]
  %v160 = vld [vmem:[%s0 + $0x4c0] sm:$0xff]
  %v161 = vld [vmem:[%s0 + $0x4c8] sm:$0xff]
  %v162 = vld [vmem:[%s0 + $0x4d0] sm:$0xff]
  %v163 = vld [vmem:[%s0 + $0x4d8] sm:$0xff]
  %v164 = vld [vmem:[%s0 + $0x4e0] sm:$0xff]
  %v165 = vld [vmem:[%s0 + $0x4e8] sm:$0xff]
  %v166 = vld [vmem:[%s0 + $0x4f0] sm:$0xff]
  %v167 = vld [vmem:[%s0 + $0x4f8] sm:$0xff]
  %v168 = vld [vmem:[%s0 + $0x500] sm:$0xff]
  %v169 = vld [vmem:[%s0 + $0x508] sm:$0xff]
  %v170 = vld [vmem:[%s0 + $0x510] sm:$0xff]
  %v171 = vld [vmem:[%s0 + $0x518] sm:$0xff]
  %v172 = vld [vmem:[%s0 + $0x520] sm:$0xff]
  %v173 = vld [vmem:[%s0 + $0x528] sm:$0xff]
  %v174 = vld [vmem:[%s0 + $0x530] sm:$0xff]
  %v175 = vld [vmem:[%s0 + $0x538] sm:$0xff]
  %v176 = vld [vmem:[%s0 + $0x540] sm:$0xff]
  %v177 = vld [vmem:[%s0 + $0x548] sm:$0xff]
  %v178 = vld [vmem:[%s0 + $0x550] sm:$0xff]
  %v179 = vld [vmem:[%s0 + $0x558] sm:$0xff]
  %v180 = vld [vmem:[%s0 + $0x560] sm:$0xff]
  %v181 = vld [vmem:[%s0 + $0x568] sm:$0xff]
  %v182 = vld [vmem:[%s0 + $0x570] sm:$0xff]
  %v183 = vld [vmem:[%s0 + $0x578] sm:$0xff]
  %v184 = vld [vmem:[%s0 + $0x580] sm:$0xff]
  %v185 = vld [vmem:[%s0 + $0x588] sm:$0xff]
  %v186 = vld [vmem:[%s0 + $0x590] sm:$0xff]
  %v187 = vld [vmem:[%s0 + $0x598] sm:$0xff]
  %v188 = vld [vmem:[%s0 + $0x5a0] sm:$0xff]
  %v189 = vld [vmem:[%s0 + $0x5a8] sm:$0xff]
  %v190 = vld [vmem:[%s0 + $0x5b0] sm:$0xff]
  %v191 = vld [vmem:[%s0 + $0x5b8] sm:$0xff]
  %v192 = vld [vmem:[%s0 + $0x5c0] sm:$0xff]
  %v193 = vld [vmem:[%s0 + $0x5c8] sm:$0xff]
  %v194 = vld [vmem:[%s0 + $0x5d0] sm:$0xff]
  %v195 = vld [vmem:[%s0 + $0x5d8] sm:$0xff]
  %v196 = vld [vmem:[%s0 + $0x5e0] sm:$0xff]
  %v197 = vld [vmem:[%s0 + $0x5e8] sm:$0xff]
  %v198 = vld [vmem:[%s0 + $0x5f0] sm:$0xff]
  %v199 = vld [vmem:[%s0 + $0x5f8] sm:$0xff]
  %v200 = vld [vmem:[%s0 + $0x600] sm:$0xff]
  %v201 = vld [vmem:[%s0 + $0x608] sm:$0xff]
  %v202 = vld [vmem:[%s0 + $0x610] sm:$0xff]
  %v203 = vld [vmem:[%s0 + $0x618] sm:$0xff]
  %v204 = vld [vmem:[%s0 + $0x620] sm:$0xff]
  %v205 = vld [vmem:[%s0 + $0x628] sm:$0xff]
  %v206 = vld [vmem:[%s0 + $0x630] sm:$0xff]
  %v207 = vld [vmem:[%s0 + $0x638] sm:$0xff]
  %v208 = vld [vmem:[%s0 + $0x640] sm:$0xff]
  %v209 = vld [vmem:[%s0 + $0x648] sm:$0xff]
  %v210 = vld [vmem:[%s0 + $0x650] sm:$0xff]
  %v211 = vld [vmem:[%s0 + $0x658] sm:$0xff]
  %v212 = vld [vmem:[%s0 + $0x660] sm:$0xff]
  %v213 = vld [vmem:[%s0 + $0x668] sm:$0xff]
  %v214 = vld [vmem:[%s0 + $0x670] sm:$0xff]
  %v215 = vld [vmem:[%s0 + $0x678] sm:$0xff]
  %v216 = vld [vmem:[%s0 + $0x680] sm:$0xff]
  %v217 = vld [vmem:[%s0 + $0x688] sm:$0xff]
  %v218 = vld [vmem:[%s0 + $0x690] sm:$0xff]
  %v219 = vld [vmem:[%s0 + $0x698] sm:$0xff]
  %v220 = vld [vmem:[%s0 + $0x6a0] sm:$0xff]
  %v221 = vld [vmem:[%s0 + $0x6a8] sm:$0xff]
  %v222 = vld [vmem:[%s0 + $0x6b0] sm:$0xff]
  %v223 = vld [vmem:[%s0 + $0x6b8] sm:$0xff]
  %v224 = vld [vmem:[%s0 + $0x6c0] sm:$0xff]
  %v225 = vld [vmem:[%s0 + $0x6c8] sm:$0xff]
  %v226 = vld [vmem:[%s0 + $0x6d0] sm:$0xff]
  %v227 = vld [vmem:[%s0 + $0x6d8] sm:$0xff]
  %v228 = vld [vmem:[%s0 + $0x6e0] sm:$0xff]
  %v229 = vld [vmem:[%s0 + $0x6e8] sm:$0xff]
  %v230 = vld [vmem:[%s0 + $0x6f0] sm:$0xff]
  %v231 = vld [vmem:[%s0 + $0x6f8] sm:$0xff]
  %v232 = vld [vmem:[%s0 + $0x700] sm:$0xff]
  %v233 = vld [vmem:[%s0 + $0x708] sm:$0xff]
  %v234 = vld [vmem:[%s0 + $0x710] sm:$0xff]
  %v235 = vld [vmem:[%s0 + $0x718] sm:$0xff]
  %v236 = vld [vmem:[%s0 + $0x720] sm:$0xff]
  %v237 = vld [vmem:[%s0 + $0x728] sm:$0xff]
  %v238 = vld [vmem:[%s0 + $0x730] sm:$0xff]
  %v239 = vld [vmem:[%s0 + $0x738] sm:$0xff]
  %v240 = vld [vmem:[%s0 + $0x740] sm:$0xff]
  %v241 = vld [vmem:[%s0 + $0x748] sm:$0xff]
  %v242 = vld [vmem:[%s0 + $0x750] sm:$0xff]
  %v243 = vld [vmem:[%s0 + $0x758] sm:$0xff]
  %v244 = vld [vmem:[%s0 + $0x760] sm:$0xff]
  %v245 = vld [vmem:[%s0 + $0x768] sm:$0xff]
  %v246 = vld [vmem:[%s0 + $0x770] sm:$0xff]
  %v247 = vld [vmem:[%s0 + $0x778] sm:$0xff]
  %v248 = vld [vmem:[%s0 + $0x780] sm:$0xff]
  %v249 = vld [vmem:[%s0 + $0x788] sm:$0xff]
  %v250 = vld [vmem:[%s0 + $0x790] sm:$0xff]
  %v251 = vld [vmem:[%s0 + $0x798] sm:$0xff]
  %v252 = vld [vmem:[%s0 + $0x7a0] sm:$0xff]
  %v253 = vld [vmem:[%s0 + $0x7a8] sm:$0xff]
  %v254 = vld [vmem:[%s0 + $0x7b0] sm:$0xff]
  %v255 = vld [vmem:[%s0 + $0x7b8] sm:$0xff]
  %v256 = vld [vmem:[%s0 + $0x7c0] sm:$0xff]
  %v257 = vld [vmem:[%s0 + $0x7c8] sm:$0xff]
  %v258 = vld [vmem:[%s0 + $0x7d0] sm:$0xff]
  %v259 = vld [vmem:[%s0 + $0x7d8] sm:$0xff]
  %v260 = vld [vmem:[%s0 + $0x7e0] sm:$0xff]
  %v261 = vld [vmem:[%s0 + $0x7e8] sm:$0xff]
  %v262 = vld [vmem:[%s0 + $0x7f0] sm:$0xff]
  %v263 = vld [vmem:[%s0 + $0x7f8] sm:$0xff]
  %v264 = vld [vmem:[%s0 + $0x800] sm:$0xff]
  %v265 = vld [vmem:[%s0 + $0x808] sm:$0xff]
  %v266 = vld [vmem:[%s0 + $0x810] sm:$0xff]
  %v267 = vld [vmem:[%s0 + $0x818] sm:$0xff]
  %v268 = vld [vmem:[%s0 + $0x820] sm:$0xff]
  %v269 = vld [vmem:[%s0 + $0x828] sm:$0xff]
  %v270 = vld [vmem:[%s0 + $0x830] sm:$0xff]
  %v271 = vld [vmem:[%s0 + $0x838] sm:$0xff]
  %v272 = vld [vmem:[%s0 + $0x840] sm:$0xff]
  %v273 = vld [vmem:[%s0 + $0x848] sm:$0xff]
  %v274 = vld [vmem:[%s0 + $0x850] sm:$0xff]
  %v275 = vld [vmem:[%s0 + $0x858] sm:$0xff]
  %v276 = vld [vmem:[%s0 + $0x860] sm:$0xff]
  %v277 = vld [vmem:[%s0 + $0x868] sm:$0xff]
  %v278 = vld [vmem:[%s0 + $0x870] sm:$0xff]
  %v279 = vld [vmem:[%s0 + $0x878] sm:$0xff]
  %v280 = vld [vmem:[%s0 + $0x880] sm:$0xff]
  %v281 = vld [vmem:[%s0 + $0x888] sm:$0xff]
  %v282 = vld [vmem:[%s0 + $0x890] sm:$0xff]
  %v283 = vld [vmem:[%s0 + $0x898] sm:$0xff]
  %v284 = vld [vmem:[%s0 + $0x8a0] sm:$0xff]
  %v285 = vld [vmem:[%s0 + $0x8a8] sm:$0xff]
  %v286 = vld [vmem:[%s0 + $0x8b0] sm:$0xff]
  %v287 = vld [vmem:[%s0 + $0x8b8] sm:$0xff]
  %v288 = vld [vmem:[%s0 + $0x8c0] sm:$0xff]
  %v289 = vld [vmem:[%s0 + $0x8c8] sm:$0xff]
  %v290 = vld [vmem:[%s0 + $0x8d0] sm:$0xff]
  %v291 = vld [vmem:[%s0 + $0x8d8] sm:$0xff]
  %v292 = vld [vmem:[%s0 + $0x8e0] sm:$0xff]
  %v293 = vld [vmem:[%s0 + $0x8e8] sm:$0xff]
  %v294 = vld [vmem:[%s0 + $0x8f0] sm:$0xff]
  %v295 = vld [vmem:[%s0 + $0x8f8] sm:$0xff]
  %v296 = vld [vmem:[%s0 + $0x900] sm:$0xff]
  %v297 = vld [vmem:[%s0 + $0x908] sm:$0xff]
  %v298 = vld [vmem:[%s0 + $0x910] sm:$0xff]
  %v299 = vld [vmem:[%s0 + $0x918] sm:$0xff]
  %v300 = vld [vmem:[%s0 + $0x920] sm:$0xff]
  %v301 = vld [vmem:[%s0 + $0x928] sm:$0xff]
  %v302 = vld [vmem:[%s0 + $0x930] sm:$0xff]
  %v303 = vld [vmem:[%s0 + $0x938] sm:$0xff]
  %v304 = vld [vmem:[%s0 + $0x940] sm:$0xff]
  %v305 = vld [vmem:[%s0 + $0x948] sm:$0xff]
  %v306 = vld [vmem:[%s0 + $0x950] sm:$0xff]
  %v307 = vld [vmem:[%s0 + $0x958] sm:$0xff]
  %v308 = vld [vmem:[%s0 + $0x960] sm:$0xff]
  %v309 = vld [vmem:[%s0 + $0x968] sm:$0xff]
  %v310 = vld [vmem:[%s0 + $0x970] sm:$0xff]
  %v311 = vld [vmem:[%s0 + $0x978] sm:$0xff]
  %v312 = vld [vmem:[%s0 + $0x980] sm:$0xff]
  %v313 = vld [vmem:[%s0 + $0x988] sm:$0xff]
  %v314 = vld [vmem:[%s0 + $0x990] sm:$0xff]
  %v315 = vld [vmem:[%s0 + $0x998] sm:$0xff]
  %v316 = vld [vmem:[%s0 + $0x9a0] sm:$0xff]
  %v317 = vld [vmem:[%s0 + $0x9a8] sm:$0xff]
  %v318 = vld [vmem:[%s0 + $0x9b0] sm:$0xff]
  %v319 = vld [vmem:[%s0 + $0x9b8] sm:$0xff]
  %v320 = vld [vmem:[%s0 + $0x9c0] sm:$0xff]
  %v321 = vld [vmem:[%s0 + $0x9c8] sm:$0xff]
  %v322 = vld [vmem:[%s0 + $0x9d0] sm:$0xff]
  %v323 = vld [vmem:[%s0 + $0x9d8] sm:$0xff]
  %v324 = vld [vmem:[%s0 + $0x9e0] sm:$0xff]
  %v325 = vld [vmem:[%s0 + $0x9e8] sm:$0xff]
  %v326 = vld [vmem:[%s0 + $0x9f0] sm:$0xff]
  %v327 = vld [vmem:[%s0 + $0x9f8] sm:$0xff]
  %v328 = vld [vmem:[%s0 + $0xa00] sm:$0xff]
  %v329 = vld [vmem:[%s0 + $0xa08] sm:$0xff]
  %v330 = vld [vmem:[%s0 + $0xa10] sm:$0xff]
  %v331 = vld [vmem:[%s0 + $0xa18] sm:$0xff]
  %v332 = vld [vmem:[%s0 + $0xa20] sm:$0xff]
  %v333 = vld [vmem:[%s0 + $0xa28] sm:$0xff]
  %v334 = vld [vmem:[%s0 + $0xa30] sm:$0xff]
  %v335 = vld [vmem:[%s0 + $0xa38] sm:$0xff]
  %v336 = vld [vmem:[%s0 + $0xa40] sm:$0xff]
  %v337 = vld [vmem:[%s0 + $0xa48] sm:$0xff]
  %v338 = vld [vmem:[%s0 + $0xa50] sm:$0xff]
  %v339 = vld [vmem:[%s0 + $0xa58] sm:$0xff]
  %v340 = vld [vmem:[%s0 + $0xa60] sm:$0xff]
  %v341 = vld [vmem:[%s0 + $0xa68] sm:$0xff]
  %v342 = vld [vmem:[%s0 + $0xa70] sm:$0xff]
  %v343 = vld [vmem:[%s0 + $0xa78] sm:$0xff]
  %v344 = vld [vmem:[%s0 + $0xa80] sm:$0xff]
  %v345 = vld [vmem:[%s0 + $0xa88] sm:$0xff]
  %v346 = vld [vmem:[%s0 + $0xa90] sm:$0xff]
  %v347 = vld [vmem:[%s0 + $0xa98] sm:$0xff]
  %v348 = vld [vmem:[%s0 + $0xaa0] sm:$0xff]
  %v349 = vld [vmem:[%s0 + $0xaa8] sm:$0xff]
  %v350 = vld [vmem:[%s0 + $0xab0] sm:$0xff]
  %v351 = vld [vmem:[%s0 + $0xab8] sm:$0xff]
  %v352 = vld [vmem:[%s0 + $0xac0] sm:$0xff]
  %v353 = vld [vmem:[%s0 + $0xac8] sm:$0xff]
  %v354 = vld [vmem:[%s0 + $0xad0] sm:$0xff]
  %v355 = vld [vmem:[%s0 + $0xad8] sm:$0xff]
  %v356 = vld [vmem:[%s0 + $0xae0] sm:$0xff]
  %v357 = vld [vmem:[%s0 + $0xae8] sm:$0xff]
  %v358 = vld [vmem:[%s0 + $0xaf0] sm:$0xff]
  %v359 = vld [vmem:[%s0 + $0xaf8] sm:$0xff]
  %v360 = vld [vmem:[%s0 + $0xb00] sm:$0xff]
  %v361 = vld [vmem:[%s0 + $0xb08] sm:$0xff]
  %v362 = vld [vmem:[%s0 + $0xb10] sm:$0xff]
  %v363 = vld [vmem:[%s0 + $0xb18] sm:$0xff]
  %v364 = vld [vmem:[%s0 + $0xb20] sm:$0xff]
  %v365 = vld [vmem:[%s0 + $0xb28] sm:$0xff]
  %v366 = vld [vmem:[%s0 + $0xb30] sm:$0xff]
  %v367 = vld [vmem:[%s0 + $0xb38] sm:$0xff]
  %v368 = vld [vmem:[%s0 + $0xb40] sm:$0xff]
  %v369 = vld [vmem:[%s0 + $0xb48] sm:$0xff]
  %v370 = vld [vmem:[%s0 + $0xb50] sm:$0xff]
  %v371 = vld [vmem:[%s0 + $0xb58] sm:$0xff]
  %v372 = vld [vmem:[%s0 + $0xb60] sm:$0xff]
  %v373 = vld [vmem:[%s0 + $0xb68] sm:$0xff]
  %v374 = vld [vmem:[%s0 + $0xb70] sm:$0xff]
  %v375 = vld [vmem:[%s0 + $0xb78] sm:$0xff]
  %v376 = vld [vmem:[%s0 + $0xb80] sm:$0xff]
  %v377 = vld [vmem:[%s0 + $0xb88] sm:$0xff]
  %v378 = vld [vmem:[%s0 + $0xb90] sm:$0xff]
  %v379 = vld [vmem:[%s0 + $0xb98] sm:$0xff]
  %v380 = vld [vmem:[%s0 + $0xba0] sm:$0xff]
  %v381 = vld [vmem:[%s0 + $0xba8] sm:$0xff]
  %v382 = vld [vmem:[%s0 + $0xbb0] sm:$0xff]
  %v383 = vld [vmem:[%s0 + $0xbb8] sm:$0xff]
  %v384 = vld [vmem:[%s0 + $0xbc0] sm:$0xff]
  %v385 = vld [vmem:[%s0 + $0xbc8] sm:$0xff]
  %v386 = vld [vmem:[%s0 + $0xbd0] sm:$0xff]
  %v387 = vld [vmem:[%s0 + $0xbd8] sm:$0xff]
  %v388 = vld [vmem:[%s0 + $0xbe0] sm:$0xff]
  %v389 = vld [vmem:[%s0 + $0xbe8] sm:$0xff]
  %v390 = vld [vmem:[%s0 + $0xbf0] sm:$0xff]
  %v391 = vld [vmem:[%s0 + $0xbf8] sm:$0xff]
  %v392 = vld [vmem:[%s0 + $0xc00] sm:$0xff]
  %v393 = vld [vmem:[%s0 + $0xc08] sm:$0xff]
  %v394 = vld [vmem:[%s0 + $0xc10] sm:$0xff]
  %v395 = vld [vmem:[%s0 + $0xc18] sm:$0xff]
  %v396 = vld [vmem:[%s0 + $0xc20] sm:$0xff]
  %v397 = vld [vmem:[%s0 + $0xc28] sm:$0xff]
  %v398 = vld [vmem:[%s0 + $0xc30] sm:$0xff]
  %v399 = vld [vmem:[%s0 + $0xc38] sm:$0xff]
  %v400 = vld [vmem:[%s0 + $0xc40] sm:$0xff]
  %v401 = vld [vmem:[%s0 + $0xc48] sm:$0xff]
  %v402 = vld [vmem:[%s0 + $0xc50] sm:$0xff]
  %v403 = vld [vmem:[%s0 + $0xc58] sm:$0xff]
  %v404 = vld [vmem:[%s0 + $0xc60] sm:$0xff]
  %v405 = vld [vmem:[%s0 + $0xc68] sm:$0xff]
  %v406 = vld [vmem:[%s0 + $0xc70] sm:$0xff]
  %v407 = vld [vmem:[%s0 + $0xc78] sm:$0xff]
  %v408 = vld [vmem:[%s0 + $0xc80] sm:$0xff]
  %v409 = vld [vmem:[%s0 + $0xc88] sm:$0xff]
  %v410 = vld [vmem:[%s0 + $0xc90] sm:$0xff]
  %v411 = vld [vmem:[%s0 + $0xc98] sm:$0xff]
  %v412 = vld [vmem:[%s0 + $0xca0] sm:$0xff]
  %v413 = vld [vmem:[%s0 + $0xca8] sm:$0xff]
  %v414 = vld [vmem:[%s0 + $0xcb0] sm:$0xff]
  %v415 = vld [vmem:[%s0 + $0xcb8] sm:$0xff]
  %v416 = vld [vmem:[%s0 + $0xcc0] sm:$0xff]
  %v417 = vld [vmem:[%s0 + $0xcc8] sm:$0xff]
  %v418 = vld [vmem:[%s0 + $0xcd0] sm:$0xff]
  %v419 = vld [vmem:[%s0 + $0xcd8] sm:$0xff]
  %v420 = vld [vmem:[%s0 + $0xce0] sm:$0xff]
  %v421 = vld [vmem:[%s0 + $0xce8] sm:$0xff]
  %v422 = vld [vmem:[%s0 + $0xcf0] sm:$0xff]
  %v423 = vld [vmem:[%s0 + $0xcf8] sm:$0xff]
  %v424 = vld [vmem:[%s0 + $0xd00] sm:$0xff]
  %v425 = vld [vmem:[%s0 + $0xd08] sm:$0xff]
  %v426 = vld [vmem:[%s0 + $0xd10] sm:$0xff]
  %v427 = vld [vmem:[%s0 + $0xd18] sm:$0xff]
  %v428 = vld [vmem:[%s0 + $0xd20] sm:$0xff]
  %v429 = vld [vmem:[%s0 + $0xd28] sm:$0xff]
  %v430 = vld [vmem:[%s0 + $0xd30] sm:$0xff]
  %v431 = vld [vmem:[%s0 + $0xd38] sm:$0xff]
  %v432 = vld [vmem:[%s0 + $0xd40] sm:$0xff]
  %v433 = vld [vmem:[%s0 + $0xd48] sm:$0xff]
  %v434 = vld [vmem:[%s0 + $0xd50] sm:$0xff]
  %v435 = vld [vmem:[%s0 + $0xd58] sm:$0xff]
  %v436 = vld [vmem:[%s0 + $0xd60] sm:$0xff]
  %v437 = vld [vmem:[%s0 + $0xd68] sm:$0xff]
  %v438 = vld [vmem:[%s0 + $0xd70] sm:$0xff]
  %v439 = vld [vmem:[%s0 + $0xd78] sm:$0xff]
  %v440 = vld [vmem:[%s0 + $0xd80] sm:$0xff]
  %v441 = vld [vmem:[%s0 + $0xd88] sm:$0xff]
  %v442 = vld [vmem:[%s0 + $0xd90] sm:$0xff]
  %v443 = vld [vmem:[%s0 + $0xd98] sm:$0xff]
  %v444 = vld [vmem:[%s0 + $0xda0] sm:$0xff]
  %v445 = vld [vmem:[%s0 + $0xda8] sm:$0xff]
  %v446 = vld [vmem:[%s0 + $0xdb0] sm:$0xff]
  %v447 = vld [vmem:[%s0 + $0xdb8] sm:$0xff]
  %v448 = vld [vmem:[%s0 + $0xdc0] sm:$0xff]
  %v449 = vld [vmem:[%s0 + $0xdc8] sm:$0xff]
  %v450 = vld [vmem:[%s0 + $0xdd0] sm:$0xff]
  %v451 = vld [vmem:[%s0 + $0xdd8] sm:$0xff]
  %v452 = vld [vmem:[%s0 + $0xde0] sm:$0xff]
  %v453 = vld [vmem:[%s0 + $0xde8] sm:$0xff]
  %v454 = vld [vmem:[%s0 + $0xdf0] sm:$0xff]
  %v455 = vld [vmem:[%s0 + $0xdf8] sm:$0xff]
  %v456 = vld [vmem:[%s0 + $0xe00] sm:$0xff]
  %v457 = vld [vmem:[%s0 + $0xe08] sm:$0xff]
  %v458 = vld [vmem:[%s0 + $0xe10] sm:$0xff]
  %v459 = vld [vmem:[%s0 + $0xe18] sm:$0xff]
  %v460 = vld [vmem:[%s0 + $0xe20] sm:$0xff]
  %v461 = vld [vmem:[%s0 + $0xe28] sm:$0xff]
  %v462 = vld [vmem:[%s0 + $0xe30] sm:$0xff]
  %v463 = vld [vmem:[%s0 + $0xe38] sm:$0xff]
  %v464 = vld [vmem:[%s0 + $0xe40] sm:$0xff]
  %v465 = vld [vmem:[%s0 + $0xe48] sm:$0xff]
  %v466 = vld [vmem:[%s0 + $0xe50] sm:$0xff]
  %v467 = vld [vmem:[%s0 + $0xe58] sm:$0xff]
  %v468 = vld [vmem:[%s0 + $0xe60] sm:$0xff]
  %v469 = vld [vmem:[%s0 + $0xe68] sm:$0xff]
  %v470 = vld [vmem:[%s0 + $0xe70] sm:$0xff]
  %v471 = vld [vmem:[%s0 + $0xe78] sm:$0xff]
  %v472 = vld [vmem:[%s0 + $0xe80] sm:$0xff]
  %v473 = vld [vmem:[%s0 + $0xe88] sm:$0xff]
  %v474 = vld [vmem:[%s0 + $0xe90] sm:$0xff]
  %v475 = vld [vmem:[%s0 + $0xe98] sm:$0xff]
  %v476 = vld [vmem:[%s0 + $0xea0] sm:$0xff]
  %v477 = vld [vmem:[%s0 + $0xea8] sm:$0xff]
  %v478 = vld [vmem:[%s0 + $0xeb0] sm:$0xff]
  %v479 = vld [vmem:[%s0 + $0xeb8] sm:$0xff]
  %v480 = vld [vmem:[%s0 + $0xec0] sm:$0xff]
  %v481 = vld [vmem:[%s0 + $0xec8] sm:$0xff]
  %v482 = vld [vmem:[%s0 + $0xed0] sm:$0xff]
  %v483 = vld [vmem:[%s0 + $0xed8] sm:$0xff]
  %v484 = vld [vmem:[%s0 + $0xee0] sm:$0xff]
  %v485 = vld [vmem:[%s0 + $0xee8] sm:$0xff]
  %v486 = vld [vmem:[%s0 + $0xef0] sm:$0xff]
  %v487 = vld [vmem:[%s0 + $0xef8] sm:$0xff]
  %v488 = vld [vmem:[%s0 + $0xf00] sm:$0xff]
  %v489 = vld [vmem:[%s0 + $0xf08] sm:$0xff]
  %v490 = vld [vmem:[%s0 + $0xf10] sm:$0xff]
  %v491 = vld [vmem:[%s0 + $0xf18] sm:$0xff]
  %v492 = vld [vmem:[%s0 + $0xf20] sm:$0xff]
  %v493 = vld [vmem:[%s0 + $0xf28] sm:$0xff]
  %v494 = vld [vmem:[%s0 + $0xf30] sm:$0xff]
  %v495 = vld [vmem:[%s0 + $0xf38] sm:$0xff]
  %v496 = vld [vmem:[%s0 + $0xf40] sm:$0xff]
  %v497 = vld [vmem:[%s0 + $0xf48] sm:$0xff]
  %v498 = vld [vmem:[%s0 + $0xf50] sm:$0xff]
  %v499 = vld [vmem:[%s0 + $0xf58] sm:$0xff]
  %v500 = vld [vmem:[%s0 + $0xf60] sm:$0xff]
  %v501 = vld [vmem:[%s0 + $0xf68] sm:$0xff]
  %v502 = vld [vmem:[%s0 + $0xf70] sm:$0xff]
  %v503 = vld [vmem:[%s0 + $0xf78] sm:$0xff]
  %v504 = vld [vmem:[%s0 + $0xf80] sm:$0xff]
  %v505 = vld [vmem:[%s0 + $0xf88] sm:$0xff]
  %v506 = vld [vmem:[%s0 + $0xf90] sm:$0xff]
  %v507 = vld [vmem:[%s0 + $0xf98] sm:$0xff]
  %v508 = vld [vmem:[%s0 + $0xfa0] sm:$0xff]
  %v509 = vld [vmem:[%s0 + $0xfa8] sm:$0xff]
  %v510 = vld [vmem:[%s0 + $0xfb0] sm:$0xff]
  %v511 = vld [vmem:[%s0 + $0xfb8] sm:$0xff]
  %v512 = vld [vmem:[%s0 + $0xfc0] sm:$0xff]
  %v513 = vld [vmem:[%s0 + $0xfc8] sm:$0xff]
  %v514 = vld [vmem:[%s0 + $0xfd0] sm:$0xff]
  %v515 = vld [vmem:[%s0 + $0xfd8] sm:$0xff]
  %v516 = vld [vmem:[%s0 + $0xfe0] sm:$0xff]
  %v517 = vld [vmem:[%s0 + $0xfe8] sm:$0xff]
  %v518 = vld [vmem:[%s0 + $0xff0] sm:$0xff]
  %v519 = vld [vmem:[%s0 + $0xff8] sm:$0xff]
  %v520 = vld [vmem:[%s0 + $0x1000] sm:$0xff]
  %v521 = vld [vmem:[%s0 + $0x1008] sm:$0xff]
  %v522 = vld [vmem:[%s0 + $0x1010] sm:$0xff]
  %v523 = vld [vmem:[%s0 + $0x1018] sm:$0xff]
  %v524 = vld [vmem:[%s0 + $0x1020] sm:$0xff]
  %v525 = vld [vmem:[%s0 + $0x1028] sm:$0xff]
  %v526 = vld [vmem:[%s0 + $0x1030] sm:$0xff]
  %v527 = vld [vmem:[%s0 + $0x1038] sm:$0xff]
  %v528 = vld [vmem:[%s0 + $0x1040] sm:$0xff]
  %v529 = vld [vmem:[%s0 + $0x1048] sm:$0xff]
  %v530 = vld [vmem:[%s0 + $0x1050] sm:$0xff]
  %v531 = vld [vmem:[%s0 + $0x1058] sm:$0xff]
  %v532 = vld [vmem:[%s0 + $0x1060] sm:$0xff]
  %v533 = vld [vmem:[%s0 + $0x1068] sm:$0xff]
  %v534 = vld [vmem:[%s0 + $0x1070] sm:$0xff]
  %v535 = vld [vmem:[%s0 + $0x1078] sm:$0xff]
  %v536 = vld [vmem:[%s0 + $0x1080] sm:$0xff]
  %v537 = vld [vmem:[%s0 + $0x1088] sm:$0xff]
  %v538 = vld [vmem:[%s0 + $0x1090] sm:$0xff]
  %v539 = vld [vmem:[%s0 + $0x1098] sm:$0xff]
  %v540 = vld [vmem:[%s0 + $0x10a0] sm:$0xff]
  %v541 = vld [vmem:[%s0 + $0x10a8] sm:$0xff]
  %v542 = vld [vmem:[%s0 + $0x10b0] sm:$0xff]
  %v543 = vld [vmem:[%s0 + $0x10b8] sm:$0xff]
  %v544 = vld [vmem:[%s0 + $0x10c0] sm:$0xff]
  %v545 = vld [vmem:[%s0 + $0x10c8] sm:$0xff]
  %v546 = vld [vmem:[%s0 + $0x10d0] sm:$0xff]
  %v547 = vld [vmem:[%s0 + $0x10d8] sm:$0xff]
  %v548 = vld [vmem:[%s0 + $0x10e0] sm:$0xff]
  %v549 = vld [vmem:[%s0 + $0x10e8] sm:$0xff]
  %v550 = vld [vmem:[%s0 + $0x10f0] sm:$0xff]
  %v551 = vld [vmem:[%s0 + $0x10f8] sm:$0xff]
  %v552 = vld [vmem:[%s0 + $0x1100] sm:$0xff]
  %v553 = vld [vmem:[%s0 + $0x1108] sm:$0xff]
  %v554 = vld [vmem:[%s0 + $0x1110] sm:$0xff]
  %v555 = vld [vmem:[%s0 + $0x1118] sm:$0xff]
  %v556 = vld [vmem:[%s0 + $0x1120] sm:$0xff]
  %v557 = vld [vmem:[%s0 + $0x1128] sm:$0xff]
  %v558 = vld [vmem:[%s0 + $0x1130] sm:$0xff]
  %v559 = vld [vmem:[%s0 + $0x1138] sm:$0xff]
  %v560 = vld [vmem:[%s0 + $0x1140] sm:$0xff]
  %v561 = vld [vmem:[%s0 + $0x1148] sm:$0xff]
  %v562 = vld [vmem:[%s0 + $0x1150] sm:$0xff]
  %v563 = vld [vmem:[%s0 + $0x1158] sm:$0xff]
  %v564 = vld [vmem:[%s0 + $0x1160] sm:$0xff]
  %v565 = vld [vmem:[%s0 + $0x1168] sm:$0xff]
  %v566 = vld [vmem:[%s0 + $0x1170] sm:$0xff]
  %v567 = vld [vmem:[%s0 + $0x1178] sm:$0xff]
  %v568 = vld [vmem:[%s0 + $0x1180] sm:$0xff]
  %v569 = vld [vmem:[%s0 + $0x1188] sm:$0xff]
  %v570 = vld [vmem:[%s0 + $0x1190] sm:$0xff]
  %v571 = vld [vmem:[%s0 + $0x1198] sm:$0xff]
  %v572 = vld [vmem:[%s0 + $0x11a0] sm:$0xff]
  %v573 = vld [vmem:[%s0 + $0x11a8] sm:$0xff]
  %v574 = vld [vmem:[%s0 + $0x11b0] sm:$0xff]
  %v575 = vld [vmem:[%s0 + $0x11b8] sm:$0xff]
  %v576 = vld [vmem:[%s0 + $0x11c0] sm:$0xff]
  %v577 = vld [vmem:[%s0 + $0x11c8] sm:$0xff]
  %v578 = vld [vmem:[%s0 + $0x11d0] sm:$0xff]
  %v579 = vld [vmem:[%s0 + $0x11d8] sm:$0xff]
  %v580 = vld [vmem:[%s0 + $0x11e0] sm:$0xff]
  %v581 = vld [vmem:[%s0 + $0x11e8] sm:$0xff]
  %v582 = vld [vmem:[%s0 + $0x11f0] sm:$0xff]
  %v583 = vld [vmem:[%s0 + $0x11f8] sm:$0xff]
  %v584 = vld [vmem:[%s0 + $0x1200] sm:$0xff]
  %v585 = vld [vmem:[%s0 + $0x1208] sm:$0xff]
  %v586 = vld [vmem:[%s0 + $0x1210] sm:$0xff]
  %v587 = vld [vmem:[%s0 + $0x1218] sm:$0xff]
  %v588 = vld [vmem:[%s0 + $0x1220] sm:$0xff]
  %v589 = vld [vmem:[%s0 + $0x1228] sm:$0xff]
  %v590 = vld [vmem:[%s0 + $0x1230] sm:$0xff]
  %v591 = vld [vmem:[%s0 + $0x1238] sm:$0xff]
  %v592 = vld [vmem:[%s0 + $0x1240] sm:$0xff]
  %v593 = vld [vmem:[%s0 + $0x1248] sm:$0xff]
  %v594 = vld [vmem:[%s0 + $0x1250] sm:$0xff]
  %v595 = vld [vmem:[%s0 + $0x1258] sm:$0xff]
  %v596 = vld [vmem:[%s0 + $0x1260] sm:$0xff]
  %v597 = vld [vmem:[%s0 + $0x1268] sm:$0xff]
  %v598 = vld [vmem:[%s0 + $0x1270] sm:$0xff]
  %v599 = vld [vmem:[%s0 + $0x1278] sm:$0xff]
  %v600 = vld [vmem:[%s0 + $0x1280] sm:$0xff]
  %v601 = vld [vmem:[%s0 + $0x1288] sm:$0xff]
  %v602 = vld [vmem:[%s0 + $0x1290] sm:$0xff]
  %v603 = vld [vmem:[%s0 + $0x1298] sm:$0xff]
  %v604 = vld [vmem:[%s0 + $0x12a0] sm:$0xff]
  %v605 = vld [vmem:[%s0 + $0x12a8] sm:$0xff]
  %v606 = vld [vmem:[%s0 + $0x12b0] sm:$0xff]
  %v607 = vld [vmem:[%s0 + $0x12b8] sm:$0xff]
  %v608 = vld [vmem:[%s0 + $0x12c0] sm:$0xff]
  %v609 = vld [vmem:[%s0 + $0x12c8] sm:$0xff]
  %v610 = vld [vmem:[%s0 + $0x12d0] sm:$0xff]
  %v611 = vld [vmem:[%s0 + $0x12d8] sm:$0xff]
  %v612 = vld [vmem:[%s0 + $0x12e0] sm:$0xff]
  %v613 = vld [vmem:[%s0 + $0x12e8] sm:$0xff]
  %v614 = vld [vmem:[%s0 + $0x12f0] sm:$0xff]
  %v615 = vld [vmem:[%s0 + $0x12f8] sm:$0xff]
  %v616 = vld [vmem:[%s0 + $0x1300] sm:$0xff]
  %v617 = vld [vmem:[%s0 + $0x1308] sm:$0xff]
  %v618 = vld [vmem:[%s0 + $0x1310] sm:$0xff]
  %v619 = vld [vmem:[%s0 + $0x1318] sm:$0xff]
  %v620 = vld [vmem:[%s0 + $0x1320] sm:$0xff]
  %v621 = vld [vmem:[%s0 + $0x1328] sm:$0xff]
  %v622 = vld [vmem:[%s0 + $0x1330] sm:$0xff]
  %v623 = vld [vmem:[%s0 + $0x1338] sm:$0xff]
  %v624 = vld [vmem:[%s0 + $0x1340] sm:$0xff]
  %v625 = vld [vmem:[%s0 + $0x1348] sm:$0xff]
  %v626 = vld [vmem:[%s0 + $0x1350] sm:$0xff]
  %v627 = vld [vmem:[%s0 + $0x1358] sm:$0xff]
  %v628 = vld [vmem:[%s0 + $0x1360] sm:$0xff]
  %v629 = vld [vmem:[%s0 + $0x1368] sm:$0xff]
  %v630 = vld [vmem:[%s0 + $0x1370] sm:$0xff]
  %v631 = vld [vmem:[%s0 + $0x1378] sm:$0xff]
  %v632 = vld [vmem:[%s0 + $0x1380] sm:$0xff]
  %v633 = vld [vmem:[%s0 + $0x1388] sm:$0xff]
  %v634 = vld [vmem:[%s0 + $0x1390] sm:$0xff]
  %v635 = vld [vmem:[%s0 + $0x1398] sm:$0xff]
  %v636 = vld [vmem:[%s0 + $0x13a0] sm:$0xff]
  %v637 = vld [vmem:[%s0 + $0x13a8] sm:$0xff]
  %v638 = vld [vmem:[%s0 + $0x13b0] sm:$0xff]
  %v639 = vld [vmem:[%s0 + $0x13b8] sm:$0xff]
  %v640 = vld [vmem:[%s0 + $0x13c0] sm:$0xff]
  %v641 = vld [vmem:[%s0 + $0x13c8] sm:$0xff]
  %v642 = vld [vmem:[%s0 + $0x13d0] sm:$0xff]
  %v643 = vld [vmem:[%s0 + $0x13d8] sm:$0xff]
  %v644 = vld [vmem:[%s0 + $0x13e0] sm:$0xff]
  %v645 = vld [vmem:[%s0 + $0x13e8] sm:$0xff]
  %v646 = vld [vmem:[%s0 + $0x13f0] sm:$0xff]
  %v647 = vld [vmem:[%s0 + $0x13f8] sm:$0xff]
  %v648 = vld [vmem:[%s0 + $0x1400] sm:$0xff]
  %v649 = vld [vmem:[%s0 + $0x1408] sm:$0xff]
  %v650 = vld [vmem:[%s0 + $0x1410] sm:$0xff]
  %v651 = vld [vmem:[%s0 + $0x1418] sm:$0xff]
  %v652 = vld [vmem:[%s0 + $0x1420] sm:$0xff]
  %v653 = vld [vmem:[%s0 + $0x1428] sm:$0xff]
  %v654 = vld [vmem:[%s0 + $0x1430] sm:$0xff]
  %v655 = vld [vmem:[%s0 + $0x1438] sm:$0xff]
  %v656 = vld [vmem:[%s0 + $0x1440] sm:$0xff]
  %v657 = vld [vmem:[%s0 + $0x1448] sm:$0xff]
  %v658 = vld [vmem:[%s0 + $0x1450] sm:$0xff]
  %v659 = vld [vmem:[%s0 + $0x1458] sm:$0xff]
  %v660 = vld [vmem:[%s0 + $0x1460] sm:$0xff]
  %v661 = vld [vmem:[%s0 + $0x1468] sm:$0xff]
  %v662 = vld [vmem:[%s0 + $0x1470] sm:$0xff]
  %v663 = vld [vmem:[%s0 + $0x1478] sm:$0xff]
  %v664 = vld [vmem:[%s0 + $0x1480] sm:$0xff]
  %v665 = vld [vmem:[%s0 + $0x1488] sm:$0xff]
  %v666 = vld [vmem:[%s0 + $0x1490] sm:$0xff]
  %v667 = vld [vmem:[%s0 + $0x1498] sm:$0xff]
  %v668 = vld [vmem:[%s0 + $0x14a0] sm:$0xff]
  %v669 = vld [vmem:[%s0 + $0x14a8] sm:$0xff]
  %v670 = vld [vmem:[%s0 + $0x14b0] sm:$0xff]
  %v671 = vld [vmem:[%s0 + $0x14b8] sm:$0xff]
  %v672 = vld [vmem:[%s0 + $0x14c0] sm:$0xff]
  %v673 = vld [vmem:[%s0 + $0x14c8] sm:$0xff]
  %v674 = vld [vmem:[%s0 + $0x14d0] sm:$0xff]
  %v675 = vld [vmem:[%s0 + $0x14d8] sm:$0xff]
  %v676 = vld [vmem:[%s0 + $0x14e0] sm:$0xff]
  %v677 = vld [vmem:[%s0 + $0x14e8] sm:$0xff]
  %v678 = vld [vmem:[%s0 + $0x14f0] sm:$0xff]
  %v679 = vld [vmem:[%s0 + $0x14f8] sm:$0xff]
  %v680 = vld [vmem:[%s0 + $0x1500] sm:$0xff]
  %v681 = vld [vmem:[%s0 + $0x1508] sm:$0xff]
  %v682 = vld [vmem:[%s0 + $0x1510] sm:$0xff]
  %v683 = vld [vmem:[%s0 + $0x1518] sm:$0xff]
  %v684 = vld [vmem:[%s0 + $0x1520] sm:$0xff]
  %v685 = vld [vmem:[%s0 + $0x1528] sm:$0xff]
  %v686 = vld [vmem:[%s0 + $0x1530] sm:$0xff]
  %v687 = vld [vmem:[%s0 + $0x1538] sm:$0xff]
  %v688 = vld [vmem:[%s0 + $0x1540] sm:$0xff]
  %v689 = vld [vmem:[%s0 + $0x1548] sm:$0xff]
  %v690 = vld [vmem:[%s0 + $0x1550] sm:$0xff]
  %v691 = vld [vmem:[%s0 + $0x1558] sm:$0xff]
  %v692 = vld [vmem:[%s0 + $0x1560] sm:$0xff]
  %v693 = vld [vmem:[%s0 + $0x1568] sm:$0xff]
  %v694 = vld [vmem:[%s0 + $0x1570] sm:$0xff]
  %v695 = vld [vmem:[%s0 + $0x1578] sm:$0xff]
  %v696 = vld [vmem:[%s0 + $0x1580] sm:$0xff]
  %v697 = vld [vmem:[%s0 + $0x1588] sm:$0xff]
  %v698 = vld [vmem:[%s0 + $0x1590] sm:$0xff]
  %v699 = vld [vmem:[%s0 + $0x1598] sm:$0xff]
  %v700 = vld [vmem:[%s0 + $0x15a0] sm:$0xff]
  %v701 = vld [vmem:[%s0 + $0x15a8] sm:$0xff]
  %v702 = vld [vmem:[%s0 + $0x15b0] sm:$0xff]
  %v703 = vld [vmem:[%s0 + $0x15b8] sm:$0xff]
  %v704 = vld [vmem:[%s0 + $0x15c0] sm:$0xff]
  %v705 = vld [vmem:[%s0 + $0x15c8] sm:$0xff]
  %v706 = vld [vmem:[%s0 + $0x15d0] sm:$0xff]
  %v707 = vld [vmem:[%s0 + $0x15d8] sm:$0xff]
  %v708 = vld [vmem:[%s0 + $0x15e0] sm:$0xff]
  %v709 = vld [vmem:[%s0 + $0x15e8] sm:$0xff]
  %v710 = vld [vmem:[%s0 + $0x15f0] sm:$0xff]
  %v711 = vld [vmem:[%s0 + $0x15f8] sm:$0xff]
  %v712 = vld [vmem:[%s0 + $0x1600] sm:$0xff]
  %v713 = vld [vmem:[%s0 + $0x1608] sm:$0xff]
  %v714 = vld [vmem:[%s0 + $0x1610] sm:$0xff]
  %v715 = vld [vmem:[%s0 + $0x1618] sm:$0xff]
  %v716 = vld [vmem:[%s0 + $0x1620] sm:$0xff]
  %v717 = vld [vmem:[%s0 + $0x1628] sm:$0xff]
  %v718 = vld [vmem:[%s0 + $0x1630] sm:$0xff]
  %v719 = vld [vmem:[%s0 + $0x1638] sm:$0xff]
  %v720 = vld [vmem:[%s0 + $0x1640] sm:$0xff]
  %v721 = vld [vmem:[%s0 + $0x1648] sm:$0xff]
  %v722 = vld [vmem:[%s0 + $0x1650] sm:$0xff]
  %v723 = vld [vmem:[%s0 + $0x1658] sm:$0xff]
  %v724 = vld [vmem:[%s0 + $0x1660] sm:$0xff]
  %v725 = vld [vmem:[%s0 + $0x1668] sm:$0xff]
  %v726 = vld [vmem:[%s0 + $0x1670] sm:$0xff]
  %v727 = vld [vmem:[%s0 + $0x1678] sm:$0xff]
  %v728 = vld [vmem:[%s0 + $0x1680] sm:$0xff]
  %v729 = vld [vmem:[%s0 + $0x1688] sm:$0xff]
  %v730 = vld [vmem:[%s0 + $0x1690] sm:$0xff]
  %v731 = vld [vmem:[%s0 + $0x1698] sm:$0xff]
  %v732 = vld [vmem:[%s0 + $0x16a0] sm:$0xff]
  %v733 = vld [vmem:[%s0 + $0x16a8] sm:$0xff]
  %v734 = vld [vmem:[%s0 + $0x16b0] sm:$0xff]
  %v735 = vld [vmem:[%s0 + $0x16b8] sm:$0xff]
  %v736 = vld [vmem:[%s0 + $0x16c0] sm:$0xff]
  %v737 = vld [vmem:[%s0 + $0x16c8] sm:$0xff]
  %v738 = vld [vmem:[%s0 + $0x16d0] sm:$0xff]
  %v739 = vld [vmem:[%s0 + $0x16d8] sm:$0xff]
  %v740 = vld [vmem:[%s0 + $0x16e0] sm:$0xff]
  %v741 = vld [vmem:[%s0 + $0x16e8] sm:$0xff]
  %v742 = vld [vmem:[%s0 + $0x16f0] sm:$0xff]
  %v743 = vld [vmem:[%s0 + $0x16f8] sm:$0xff]
  %v744 = vld [vmem:[%s0 + $0x1700] sm:$0xff]
  %v745 = vld [vmem:[%s0 + $0x1708] sm:$0xff]
  %v746 = vld [vmem:[%s0 + $0x1710] sm:$0xff]
  %v747 = vld [vmem:[%s0 + $0x1718] sm:$0xff]
  %v748 = vld [vmem:[%s0 + $0x1720] sm:$0xff]
  %v749 = vld [vmem:[%s0 + $0x1728] sm:$0xff]
  %v750 = vld [vmem:[%s0 + $0x1730] sm:$0xff]
  %v751 = vld [vmem:[%s0 + $0x1738] sm:$0xff]
  %v752 = vld [vmem:[%s0 + $0x1740] sm:$0xff]
  %v753 = vld [vmem:[%s0 + $0x1748] sm:$0xff]
  %v754 = vld [vmem:[%s0 + $0x1750] sm:$0xff]
  %v755 = vld [vmem:[%s0 + $0x1758] sm:$0xff]
  %v756 = vld [vmem:[%s0 + $0x1760] sm:$0xff]
  %v757 = vld [vmem:[%s0 + $0x1768] sm:$0xff]
  %v758 = vld [vmem:[%s0 + $0x1770] sm:$0xff]
  %v759 = vld [vmem:[%s0 + $0x1778] sm:$0xff]
  %v760 = vld [vmem:[%s0 + $0x1780] sm:$0xff]
  %v761 = vld [vmem:[%s0 + $0x1788] sm:$0xff]
  %v762 = vld [vmem:[%s0 + $0x1790] sm:$0xff]
  %v763 = vld [vmem:[%s0 + $0x1798] sm:$0xff]
  %v764 = vld [vmem:[%s0 + $0x17a0] sm:$0xff]
  %v765 = vld [vmem:[%s0 + $0x17a8] sm:$0xff]
  %v766 = vld [vmem:[%s0 + $0x17b0] sm:$0xff]
  %v767 = vld [vmem:[%s0 + $0x17b8] sm:$0xff]
  %v768 = vld [vmem:[%s0 + $0x17c0] sm:$0xff]
  %v769 = vld [vmem:[%s0 + $0x17c8] sm:$0xff]
  %v770 = vld [vmem:[%s0 + $0x17d0] sm:$0xff]
  %v771 = vld [vmem:[%s0 + $0x17d8] sm:$0xff]
  %v772 = vld [vmem:[%s0 + $0x17e0] sm:$0xff]
  %v773 = vld [vmem:[%s0 + $0x17e8] sm:$0xff]
  %v774 = vld [vmem:[%s0 + $0x17f0] sm:$0xff]
  %v775 = vld [vmem:[%s0 + $0x17f8] sm:$0xff]
  %v776 = vld [vmem:[%s0 + $0x1800] sm:$0xff]
  %v777 = vld [vmem:[%s0 + $0x1808] sm:$0xff]
  %v778 = vld [vmem:[%s0 + $0x1810] sm:$0xff]
  %v779 = vld [vmem:[%s0 + $0x1818] sm:$0xff]
  %v780 = vld [vmem:[%s0 + $0x1820] sm:$0xff]
  %v781 = vld [vmem:[%s0 + $0x1828] sm:$0xff]
  %v782 = vld [vmem:[%s0 + $0x1830] sm:$0xff]
  %v783 = vld [vmem:[%s0 + $0x1838] sm:$0xff]
  %v784 = vld [vmem:[%s0 + $0x1840] sm:$0xff]
  %v785 = vld [vmem:[%s0 + $0x1848] sm:$0xff]
  %v786 = vld [vmem:[%s0 + $0x1850] sm:$0xff]
  %v787 = vld [vmem:[%s0 + $0x1858] sm:$0xff]
  %v788 = vld [vmem:[%s0 + $0x1860] sm:$0xff]
  %v789 = vld [vmem:[%s0 + $0x1868] sm:$0xff]
  %v790 = vld [vmem:[%s0 + $0x1870] sm:$0xff]
  %v791 = vld [vmem:[%s0 + $0x1878] sm:$0xff]
  %v792 = vld [vmem:[%s0 + $0x1880] sm:$0xff]
  %v793 = vld [vmem:[%s0 + $0x1888] sm:$0xff]
  %v794 = vld [vmem:[%s0 + $0x1890] sm:$0xff]
  %v795 = vld [vmem:[%s0 + $0x1898] sm:$0xff]
  %v796 = vld [vmem:[%s0 + $0x18a0] sm:$0xff]
  %v797 = vld [vmem:[%s0 + $0x18a8] sm:$0xff]
  %v798 = vld [vmem:[%s0 + $0x18b0] sm:$0xff]
  %v799 = vld [vmem:[%s0 + $0x18b8] sm:$0xff]
  %v800 = vld [vmem:[%s0 + $0x18c0] sm:$0xff]
  %v801 = vld [vmem:[%s0 + $0x18c8] sm:$0xff]
  %v802 = vld [vmem:[%s0 + $0x18d0] sm:$0xff]
  %v803 = vld [vmem:[%s0 + $0x18d8] sm:$0xff]
  %v804 = vld [vmem:[%s0 + $0x18e0] sm:$0xff]
  %v805 = vld [vmem:[%s0 + $0x18e8] sm:$0xff]
  %v806 = vld [vmem:[%s0 + $0x18f0] sm:$0xff]
  %v807 = vld [vmem:[%s0 + $0x18f8] sm:$0xff]
  %v808 = vld [vmem:[%s0 + $0x1900] sm:$0xff]
  %v809 = vld [vmem:[%s0 + $0x1908] sm:$0xff]
  %v810 = vld [vmem:[%s0 + $0x1910] sm:$0xff]
  %v811 = vld [vmem:[%s0 + $0x1918] sm:$0xff]
  %v812 = vld [vmem:[%s0 + $0x1920] sm:$0xff]
  %v813 = vld [vmem:[%s0 + $0x1928] sm:$0xff]
  %v814 = vld [vmem:[%s0 + $0x1930] sm:$0xff]
  %v815 = vld [vmem:[%s0 + $0x1938] sm:$0xff]
  %v816 = vld [vmem:[%s0 + $0x1940] sm:$0xff]
  %v817 = vld [vmem:[%s0 + $0x1948] sm:$0xff]
  %v818 = vld [vmem:[%s0 + $0x1950] sm:$0xff]
  %v819 = vld [vmem:[%s0 + $0x1958] sm:$0xff]
  %v820 = vld [vmem:[%s0 + $0x1960] sm:$0xff]
  %v821 = vld [vmem:[%s0 + $0x1968] sm:$0xff]
  %v822 = vld [vmem:[%s0 + $0x1970] sm:$0xff]
  %v823 = vld [vmem:[%s0 + $0x1978] sm:$0xff]
  %v824 = vld [vmem:[%s0 + $0x1980] sm:$0xff]
  %v825 = vld [vmem:[%s0 + $0x1988] sm:$0xff]
  %v826 = vld [vmem:[%s0 + $0x1990] sm:$0xff]
  %v827 = vld [vmem:[%s0 + $0x1998] sm:$0xff]
  %v828 = vld [vmem:[%s0 + $0x19a0] sm:$0xff]
  %v829 = vld [vmem:[%s0 + $0x19a8] sm:$0xff]
  %v830 = vld [vmem:[%s0 + $0x19b0] sm:$0xff]
  %v831 = vld [vmem:[%s0 + $0x19b8] sm:$0xff]
  %v832 = vld [vmem:[%s0 + $0x19c0] sm:$0xff]
  %v833 = vld [vmem:[%s0 + $0x19c8] sm:$0xff]
  %v834 = vld [vmem:[%s0 + $0x19d0] sm:$0xff]
  %v835 = vld [vmem:[%s0 + $0x19d8] sm:$0xff]
  %v836 = vld [vmem:[%s0 + $0x19e0] sm:$0xff]
  %v837 = vld [vmem:[%s0 + $0x19e8] sm:$0xff]
  %v838 = vld [vmem:[%s0 + $0x19f0] sm:$0xff]
  %v839 = vld [vmem:[%s0 + $0x19f8] sm:$0xff]
  %v840 = vld [vmem:[%s0 + $0x1a00] sm:$0xff]
  %v841 = vld [vmem:[%s0 + $0x1a08] sm:$0xff]
  %v842 = vld [vmem:[%s0 + $0x1a10] sm:$0xff]
  %v843 = vld [vmem:[%s0 + $0x1a18] sm:$0xff]
  %v844 = vld [vmem:[%s0 + $0x1a20] sm:$0xff]
  %v845 = vld [vmem:[%s0 + $0x1a28] sm:$0xff]
  %v846 = vld [vmem:[%s0 + $0x1a30] sm:$0xff]
  %v847 = vld [vmem:[%s0 + $0x1a38] sm:$0xff]
  %v848 = vld [vmem:[%s0 + $0x1a40] sm:$0xff]
  %v849 = vld [vmem:[%s0 + $0x1a48] sm:$0xff]
  %v850 = vld [vmem:[%s0 + $0x1a50] sm:$0xff]
  %v851 = vld [vmem:[%s0 + $0x1a58] sm:$0xff]
  %v852 = vld [vmem:[%s0 + $0x1a60] sm:$0xff]
  %v853 = vld [vmem:[%s0 + $0x1a68] sm:$0xff]
  %v854 = vld [vmem:[%s0 + $0x1a70] sm:$0xff]
  %v855 = vld [vmem:[%s0 + $0x1a78] sm:$0xff]
  %v856 = vld [vmem:[%s0 + $0x1a80] sm:$0xff]
  %v857 = vld [vmem:[%s0 + $0x1a88] sm:$0xff]
  %v858 = vld [vmem:[%s0 + $0x1a90] sm:$0xff]
  %v859 = vld [vmem:[%s0 + $0x1a98] sm:$0xff]
  %v860 = vld [vmem:[%s0 + $0x1aa0] sm:$0xff]
  %v861 = vld [vmem:[%s0 + $0x1aa8] sm:$0xff]
  %v862 = vld [vmem:[%s0 + $0x1ab0] sm:$0xff]
  %v863 = vld [vmem:[%s0 + $0x1ab8] sm:$0xff]
  %v864 = vld [vmem:[%s0 + $0x1ac0] sm:$0xff]
  %v865 = vld [vmem:[%s0 + $0x1ac8] sm:$0xff]
  %v866 = vld [vmem:[%s0 + $0x1ad0] sm:$0xff]
  %v867 = vld [vmem:[%s0 + $0x1ad8] sm:$0xff]
  %v868 = vld [vmem:[%s0 + $0x1ae0] sm:$0xff]
  %v869 = vld [vmem:[%s0 + $0x1ae8] sm:$0xff]
  %v870 = vld [vmem:[%s0 + $0x1af0] sm:$0xff]
  %v871 = vld [vmem:[%s0 + $0x1af8] sm:$0xff]
  %v872 = vld [vmem:[%s0 + $0x1b00] sm:$0xff]
  %v873 = vld [vmem:[%s0 + $0x1b08] sm:$0xff]
  %v874 = vld [vmem:[%s0 + $0x1b10] sm:$0xff]
  %v875 = vld [vmem:[%s0 + $0x1b18] sm:$0xff]
  %v876 = vld [vmem:[%s0 + $0x1b20] sm:$0xff]
  %v877 = vld [vmem:[%s0 + $0x1b28] sm:$0xff]
  %v878 = vld [vmem:[%s0 + $0x1b30] sm:$0xff]
  %v879 = vld [vmem:[%s0 + $0x1b38] sm:$0xff]
  %v880 = vld [vmem:[%s0 + $0x1b40] sm:$0xff]
  %v881 = vld [vmem:[%s0 + $0x1b48] sm:$0xff]
  %v882 = vld [vmem:[%s0 + $0x1b50] sm:$0xff]
  %v883 = vld [vmem:[%s0 + $0x1b58] sm:$0xff]
  %v884 = vld [vmem:[%s0 + $0x1b60] sm:$0xff]
  %v885 = vld [vmem:[%s0 + $0x1b68] sm:$0xff]
  %v886 = vld [vmem:[%s0 + $0x1b70] sm:$0xff]
  %v887 = vld [vmem:[%s0 + $0x1b78] sm:$0xff]
  %v888 = vld [vmem:[%s0 + $0x1b80] sm:$0xff]
  %v889 = vld [vmem:[%s0 + $0x1b88] sm:$0xff]
  %v890 = vld [vmem:[%s0 + $0x1b90] sm:$0xff]
  %v891 = vld [vmem:[%s0 + $0x1b98] sm:$0xff]
  %v892 = vld [vmem:[%s0 + $0x1ba0] sm:$0xff]
  %v893 = vld [vmem:[%s0 + $0x1ba8] sm:$0xff]
  %v894 = vld [vmem:[%s0 + $0x1bb0] sm:$0xff]
  %v895 = vld [vmem:[%s0 + $0x1bb8] sm:$0xff]
  %v896 = vld [vmem:[%s0 + $0x1bc0] sm:$0xff]
  %v897 = vld [vmem:[%s0 + $0x1bc8] sm:$0xff]
  %v898 = vld [vmem:[%s0 + $0x1bd0] sm:$0xff]
  %v899 = vld [vmem:[%s0 + $0x1bd8] sm:$0xff]
  %v900 = vld [vmem:[%s0 + $0x1be0] sm:$0xff]
  %v901 = vld [vmem:[%s0 + $0x1be8] sm:$0xff]
  %v902 = vld [vmem:[%s0 + $0x1bf0] sm:$0xff]
  %v903 = vld [vmem:[%s0 + $0x1bf8] sm:$0xff]
  %v904 = vld [vmem:[%s0 + $0x1c00] sm:$0xff]
  %v905 = vld [vmem:[%s0 + $0x1c08] sm:$0xff]
  %v906 = vld [vmem:[%s0 + $0x1c10] sm:$0xff]
  %v907 = vld [vmem:[%s0 + $0x1c18] sm:$0xff]
  %v908 = vld [vmem:[%s0 + $0x1c20] sm:$0xff]
  %v909 = vld [vmem:[%s0 + $0x1c28] sm:$0xff]
  %v910 = vld [vmem:[%s0 + $0x1c30] sm:$0xff]
  %v911 = vld [vmem:[%s0 + $0x1c38] sm:$0xff]
  %v912 = vld [vmem:[%s0 + $0x1c40] sm:$0xff]
  %v913 = vld [vmem:[%s0 + $0x1c48] sm:$0xff]
  %v914 = vld [vmem:[%s0 + $0x1c50] sm:$0xff]
  %v915 = vld [vmem:[%s0 + $0x1c58] sm:$0xff]
  %v916 = vld [vmem:[%s0 + $0x1c60] sm:$0xff]
  %v917 = vld [vmem:[%s0 + $0x1c68] sm:$0xff]
  %v918 = vld [vmem:[%s0 + $0x1c70] sm:$0xff]
  %v919 = vld [vmem:[%s0 + $0x1c78] sm:$0xff]
  %v920 = vld [vmem:[%s0 + $0x1c80] sm:$0xff]
  %v921 = vld [vmem:[%s0 + $0x1c88] sm:$0xff]
  %v922 = vld [vmem:[%s0 + $0x1c90] sm:$0xff]
  %v923 = vld [vmem:[%s0 + $0x1c98] sm:$0xff]
  %v924 = vld [vmem:[%s0 + $0x1ca0] sm:$0xff]
  %v925 = vld [vmem:[%s0 + $0x1ca8] sm:$0xff]
  %v926 = vld [vmem:[%s0 + $0x1cb0] sm:$0xff]
  %v927 = vld [vmem:[%s0 + $0x1cb8] sm:$0xff]
  %v928 = vld [vmem:[%s0 + $0x1cc0] sm:$0xff]
  %v929 = vld [vmem:[%s0 + $0x1cc8] sm:$0xff]
  %v930 = vld [vmem:[%s0 + $0x1cd0] sm:$0xff]
  %v931 = vld [vmem:[%s0 + $0x1cd8] sm:$0xff]
  %v932 = vld [vmem:[%s0 + $0x1ce0] sm:$0xff]
  %v933 = vld [vmem:[%s0 + $0x1ce8] sm:$0xff]
  %v934 = vld [vmem:[%s0 + $0x1cf0] sm:$0xff]
  %v935 = vld [vmem:[%s0 + $0x1cf8] sm:$0xff]
  %v936 = vld [vmem:[%s0 + $0x1d00] sm:$0xff]
  %v937 = vld [vmem:[%s0 + $0x1d08] sm:$0xff]
  %v938 = vld [vmem:[%s0 + $0x1d10] sm:$0xff]
  %v939 = vld [vmem:[%s0 + $0x1d18] sm:$0xff]
  %v940 = vld [vmem:[%s0 + $0x1d20] sm:$0xff]
  %v941 = vld [vmem:[%s0 + $0x1d28] sm:$0xff]
  %v942 = vld [vmem:[%s0 + $0x1d30] sm:$0xff]
  %v943 = vld [vmem:[%s0 + $0x1d38] sm:$0xff]
  %v944 = vld [vmem:[%s0 + $0x1d40] sm:$0xff]
  %v945 = vld [vmem:[%s0 + $0x1d48] sm:$0xff]
  %v946 = vld [vmem:[%s0 + $0x1d50] sm:$0xff]
  %v947 = vld [vmem:[%s0 + $0x1d58] sm:$0xff]
  %v948 = vld [vmem:[%s0 + $0x1d60] sm:$0xff]
  %v949 = vld [vmem:[%s0 + $0x1d68] sm:$0xff]
  %v950 = vld [vmem:[%s0 + $0x1d70] sm:$0xff]
  %v951 = vld [vmem:[%s0 + $0x1d78] sm:$0xff]
  %v952 = vld [vmem:[%s0 + $0x1d80] sm:$0xff]
  %v953 = vld [vmem:[%s0 + $0x1d88] sm:$0xff]
  %v954 = vld [vmem:[%s0 + $0x1d90] sm:$0xff]
  %v955 = vld [vmem:[%s0 + $0x1d98] sm:$0xff]
  %v956 = vld [vmem:[%s0 + $0x1da0] sm:$0xff]
  %v957 = vld [vmem:[%s0 + $0x1da8] sm:$0xff]
  %v958 = vld [vmem:[%s0 + $0x1db0] sm:$0xff]
  %v959 = vld [vmem:[%s0 + $0x1db8] sm:$0xff]
  %v960 = vld [vmem:[%s0 + $0x1dc0] sm:$0xff]
  %v961 = vld [vmem:[%s0 + $0x1dc8] sm:$0xff]
  %v962 = vld [vmem:[%s0 + $0x1dd0] sm:$0xff]
  %v963 = vld [vmem:[%s0 + $0x1dd8] sm:$0xff]
  %v964 = vld [vmem:[%s0 + $0x1de0] sm:$0xff]
  %v965 = vld [vmem:[%s0 + $0x1de8] sm:$0xff]
  %v966 = vld [vmem:[%s0 + $0x1df0] sm:$0xff]
  %v967 = vld [vmem:[%s0 + $0x1df8] sm:$0xff]
  %v968 = vld [vmem:[%s0 + $0x1e00] sm:$0xff]
  %v969 = vld [vmem:[%s0 + $0x1e08] sm:$0xff]
  %v970 = vld [vmem:[%s0 + $0x1e10] sm:$0xff]
  %v971 = vld [vmem:[%s0 + $0x1e18] sm:$0xff]
  %v972 = vld [vmem:[%s0 + $0x1e20] sm:$0xff]
  %v973 = vld [vmem:[%s0 + $0x1e28] sm:$0xff]
  %v974 = vld [vmem:[%s0 + $0x1e30] sm:$0xff]
  %v975 = vld [vmem:[%s0 + $0x1e38] sm:$0xff]
  %v976 = vld [vmem:[%s0 + $0x1e40] sm:$0xff]
  %v977 = vld [vmem:[%s0 + $0x1e48] sm:$0xff]
  %v978 = vld [vmem:[%s0 + $0x1e50] sm:$0xff]
  %v979 = vld [vmem:[%s0 + $0x1e58] sm:$0xff]
  %v980 = vld [vmem:[%s0 + $0x1e60] sm:$0xff]
  %v981 = vld [vmem:[%s0 + $0x1e68] sm:$0xff]
  %v982 = vld [vmem:[%s0 + $0x1e70] sm:$0xff]
  %v983 = vld [vmem:[%s0 + $0x1e78] sm:$0xff]
  %v984 = vld [vmem:[%s0 + $0x1e80] sm:$0xff]
  %v985 = vld [vmem:[%s0 + $0x1e88] sm:$0xff]
  %v986 = vld [vmem:[%s0 + $0x1e90] sm:$0xff]
  %v987 = vld [vmem:[%s0 + $0x1e98] sm:$0xff]
  %v988 = vld [vmem:[%s0 + $0x1ea0] sm:$0xff]
  %v989 = vld [vmem:[%s0 + $0x1ea8] sm:$0xff]
  %v990 = vld [vmem:[%s0 + $0x1eb0] sm:$0xff]
  %v991 = vld [vmem:[%s0 + $0x1eb8] sm:$0xff]
  %v992 = vld [vmem:[%s0 + $0x1ec0] sm:$0xff]
  %v993 = vld [vmem:[%s0 + $0x1ec8] sm:$0xff]
  %v994 = vld [vmem:[%s0 + $0x1ed0] sm:$0xff]
  %v995 = vld [vmem:[%s0 + $0x1ed8] sm:$0xff]
  %v996 = vld [vmem:[%s0 + $0x1ee0] sm:$0xff]
  %v997 = vld [vmem:[%s0 + $0x1ee8] sm:$0xff]
  %v998 = vld [vmem:[%s0 + $0x1ef0] sm:$0xff]
  %v999 = vld [vmem:[%s0 + $0x1ef8] sm:$0xff]
  %v1000 = vld [vmem:[%s0 + $0x1f00] sm:$0xff]
  %v1001 = vld [vmem:[%s0 + $0x1f08] sm:$0xff]
  %v1002 = vld [vmem:[%s0 + $0x1f10] sm:$0xff]
  %v1003 = vld [vmem:[%s0 + $0x1f18] sm:$0xff]
  %v1004 = vld [vmem:[%s0 + $0x1f20] sm:$0xff]
  %v1005 = vld [vmem:[%s0 + $0x1f28] sm:$0xff]
  %v1006 = vld [vmem:[%s0 + $0x1f30] sm:$0xff]
  %v1007 = vld [vmem:[%s0 + $0x1f38] sm:$0xff]
  %v1008 = vld [vmem:[%s0 + $0x1f40] sm:$0xff]
  %v1009 = vld [vmem:[%s0 + $0x1f48] sm:$0xff]
  %v1010 = vld [vmem:[%s0 + $0x1f50] sm:$0xff]
  %v1011 = vld [vmem:[%s0 + $0x1f58] sm:$0xff]
  %v1012 = vld [vmem:[%s0 + $0x1f60] sm:$0xff]
  %v1013 = vld [vmem:[%s0 + $0x1f68] sm:$0xff]
  %v1014 = vld [vmem:[%s0 + $0x1f70] sm:$0xff]
  %v1015 = vld [vmem:[%s0 + $0x1f78] sm:$0xff]
  %v1016 = vld [vmem:[%s0 + $0x1f80] sm:$0xff]
  %v1017 = vld [vmem:[%s0 + $0x1f88] sm:$0xff]
  %v1018 = vld [vmem:[%s0 + $0x1f90] sm:$0xff]
  %v1019 = vld [vmem:[%s0 + $0x1f98] sm:$0xff]
  %v1020 = vld [vmem:[%s0 + $0x1fa0] sm:$0xff]
  %v1021 = vld [vmem:[%s0 + $0x1fa8] sm:$0xff]
  %v1022 = vld [vmem:[%s0 + $0x1fb0] sm:$0xff]
  %v1023 = vld [vmem:[%s0 + $0x1fb8] sm:$0xff]
  %v1024 = vld [vmem:[%s0 + $0x1fc0] sm:$0xff]
  %v1025 = vld [vmem:[%s0 + $0x1fc8] sm:$0xff]
  %v1026 = vld [vmem:[%s0 + $0x1fd0] sm:$0xff]
  %v1027 = vld [vmem:[%s0 + $0x1fd8] sm:$0xff]
  %v1028 = vld [vmem:[%s0 + $0x1fe0] sm:$0xff]
  %v1029 = vld [vmem:[%s0 + $0x1fe8] sm:$0xff]
  %v1030 = vld [vmem:[%s0 + $0x1ff0] sm:$0xff]
  %v1031 = vld [vmem:[%s0 + $0x1ff8] sm:$0xff]
  %vm1032 = vcmask 31744
  %v1033 = vsel %vm1032, %v8, -inf
  %v1034 = vrot.slane %v1033, 4
  %v1035 = vmax.f32 %v1033, %v1034
  %v1036 = vrot.slane %v1035, 2
  %v1037 = vmax.f32 %v1035, %v1036
  %v1038 = vrot.slane %v1037, 1
  %v1039 = vmax.f32 %v1037, %v1038
  %v1040 = vsel %vm1032, %v9, -inf
  %v1041 = vrot.slane %v1040, 4
  %v1042 = vmax.f32 %v1040, %v1041
  %v1043 = vrot.slane %v1042, 2
  %v1044 = vmax.f32 %v1042, %v1043
  %v1045 = vrot.slane %v1044, 1
  %v1046 = vmax.f32 %v1044, %v1045
  %v1047 = vsel %vm1032, %v10, -inf
  %v1048 = vrot.slane %v1047, 4
  %v1049 = vmax.f32 %v1047, %v1048
  %v1050 = vrot.slane %v1049, 2
  %v1051 = vmax.f32 %v1049, %v1050
  %v1052 = vrot.slane %v1051, 1
  %v1053 = vmax.f32 %v1051, %v1052
  %v1054 = vsel %vm1032, %v11, -inf
  %v1055 = vrot.slane %v1054, 4
  %v1056 = vmax.f32 %v1054, %v1055
  %v1057 = vrot.slane %v1056, 2
  %v1058 = vmax.f32 %v1056, %v1057
  %v1059 = vrot.slane %v1058, 1
  %v1060 = vmax.f32 %v1058, %v1059
  %v1061 = vsel %vm1032, %v12, -inf
  %v1062 = vrot.slane %v1061, 4
  %v1063 = vmax.f32 %v1061, %v1062
  %v1064 = vrot.slane %v1063, 2
  %v1065 = vmax.f32 %v1063, %v1064
  %v1066 = vrot.slane %v1065, 1
  %v1067 = vmax.f32 %v1065, %v1066
  %v1068 = vsel %vm1032, %v13, -inf
  %v1069 = vrot.slane %v1068, 4
  %v1070 = vmax.f32 %v1068, %v1069
  %v1071 = vrot.slane %v1070, 2
  %v1072 = vmax.f32 %v1070, %v1071
  %v1073 = vrot.slane %v1072, 1
  %v1074 = vmax.f32 %v1072, %v1073
  %v1075 = vsel %vm1032, %v14, -inf
  %v1076 = vrot.slane %v1075, 4
  %v1077 = vmax.f32 %v1075, %v1076
  %v1078 = vrot.slane %v1077, 2
  %v1079 = vmax.f32 %v1077, %v1078
  %v1080 = vrot.slane %v1079, 1
  %v1081 = vmax.f32 %v1079, %v1080
  %v1082 = vsel %vm1032, %v15, -inf
  %v1083 = vrot.slane %v1082, 4
  %v1084 = vmax.f32 %v1082, %v1083
  %v1085 = vrot.slane %v1084, 2
  %v1086 = vmax.f32 %v1084, %v1085
  %v1087 = vrot.slane %v1086, 1
  %v1088 = vmax.f32 %v1086, %v1087
  %v1089 = vsel %vm1032, %v16, -inf
  %v1090 = vrot.slane %v1089, 4
  %v1091 = vmax.f32 %v1089, %v1090
  %v1092 = vrot.slane %v1091, 2
  %v1093 = vmax.f32 %v1091, %v1092
  %v1094 = vrot.slane %v1093, 1
  %v1095 = vmax.f32 %v1093, %v1094
  %v1096 = vsel %vm1032, %v17, -inf
  %v1097 = vrot.slane %v1096, 4
  %v1098 = vmax.f32 %v1096, %v1097
  %v1099 = vrot.slane %v1098, 2
  %v1100 = vmax.f32 %v1098, %v1099
  %v1101 = vrot.slane %v1100, 1
  %v1102 = vmax.f32 %v1100, %v1101
  %v1103 = vsel %vm1032, %v18, -inf
  %v1104 = vrot.slane %v1103, 4
  %v1105 = vmax.f32 %v1103, %v1104
  %v1106 = vrot.slane %v1105, 2
  %v1107 = vmax.f32 %v1105, %v1106
  %v1108 = vrot.slane %v1107, 1
  %v1109 = vmax.f32 %v1107, %v1108
  %v1110 = vsel %vm1032, %v19, -inf
  %v1111 = vrot.slane %v1110, 4
  %v1112 = vmax.f32 %v1110, %v1111
  %v1113 = vrot.slane %v1112, 2
  %v1114 = vmax.f32 %v1112, %v1113
  %v1115 = vrot.slane %v1114, 1
  %v1116 = vmax.f32 %v1114, %v1115
  %v1117 = vsel %vm1032, %v20, -inf
  %v1118 = vrot.slane %v1117, 4
  %v1119 = vmax.f32 %v1117, %v1118
  %v1120 = vrot.slane %v1119, 2
  %v1121 = vmax.f32 %v1119, %v1120
  %v1122 = vrot.slane %v1121, 1
  %v1123 = vmax.f32 %v1121, %v1122
  %v1124 = vsel %vm1032, %v21, -inf
  %v1125 = vrot.slane %v1124, 4
  %v1126 = vmax.f32 %v1124, %v1125
  %v1127 = vrot.slane %v1126, 2
  %v1128 = vmax.f32 %v1126, %v1127
  %v1129 = vrot.slane %v1128, 1
  %v1130 = vmax.f32 %v1128, %v1129
  %v1131 = vsel %vm1032, %v22, -inf
  %v1132 = vrot.slane %v1131, 4
  %v1133 = vmax.f32 %v1131, %v1132
  %v1134 = vrot.slane %v1133, 2
  %v1135 = vmax.f32 %v1133, %v1134
  %v1136 = vrot.slane %v1135, 1
  %v1137 = vmax.f32 %v1135, %v1136
  %v1138 = vsel %vm1032, %v23, -inf
  %v1139 = vrot.slane %v1138, 4
  %v1140 = vmax.f32 %v1138, %v1139
  %v1141 = vrot.slane %v1140, 2
  %v1142 = vmax.f32 %v1140, %v1141
  %v1143 = vrot.slane %v1142, 1
  %v1144 = vmax.f32 %v1142, %v1143
  %v1145 = vsel %vm1032, %v24, -inf
  %v1146 = vrot.slane %v1145, 4
  %v1147 = vmax.f32 %v1145, %v1146
  %v1148 = vrot.slane %v1147, 2
  %v1149 = vmax.f32 %v1147, %v1148
  %v1150 = vrot.slane %v1149, 1
  %v1151 = vmax.f32 %v1149, %v1150
  %v1152 = vsel %vm1032, %v25, -inf
  %v1153 = vrot.slane %v1152, 4
  %v1154 = vmax.f32 %v1152, %v1153
  %v1155 = vrot.slane %v1154, 2
  %v1156 = vmax.f32 %v1154, %v1155
  %v1157 = vrot.slane %v1156, 1
  %v1158 = vmax.f32 %v1156, %v1157
  %v1159 = vsel %vm1032, %v26, -inf
  %v1160 = vrot.slane %v1159, 4
  %v1161 = vmax.f32 %v1159, %v1160
  %v1162 = vrot.slane %v1161, 2
  %v1163 = vmax.f32 %v1161, %v1162
  %v1164 = vrot.slane %v1163, 1
  %v1165 = vmax.f32 %v1163, %v1164
  %v1166 = vsel %vm1032, %v27, -inf
  %v1167 = vrot.slane %v1166, 4
  %v1168 = vmax.f32 %v1166, %v1167
  %v1169 = vrot.slane %v1168, 2
  %v1170 = vmax.f32 %v1168, %v1169
  %v1171 = vrot.slane %v1170, 1
  %v1172 = vmax.f32 %v1170, %v1171
  %v1173 = vsel %vm1032, %v28, -inf
  %v1174 = vrot.slane %v1173, 4
  %v1175 = vmax.f32 %v1173, %v1174
  %v1176 = vrot.slane %v1175, 2
  %v1177 = vmax.f32 %v1175, %v1176
  %v1178 = vrot.slane %v1177, 1
  %v1179 = vmax.f32 %v1177, %v1178
  %v1180 = vsel %vm1032, %v29, -inf
  %v1181 = vrot.slane %v1180, 4
  %v1182 = vmax.f32 %v1180, %v1181
  %v1183 = vrot.slane %v1182, 2
  %v1184 = vmax.f32 %v1182, %v1183
  %v1185 = vrot.slane %v1184, 1
  %v1186 = vmax.f32 %v1184, %v1185
  %v1187 = vsel %vm1032, %v30, -inf
  %v1188 = vrot.slane %v1187, 4
  %v1189 = vmax.f32 %v1187, %v1188
  %v1190 = vrot.slane %v1189, 2
  %v1191 = vmax.f32 %v1189, %v1190
  %v1192 = vrot.slane %v1191, 1
  %v1193 = vmax.f32 %v1191, %v1192
  %v1194 = vsel %vm1032, %v31, -inf
  %v1195 = vrot.slane %v1194, 4
  %v1196 = vmax.f32 %v1194, %v1195
  %v1197 = vrot.slane %v1196, 2
  %v1198 = vmax.f32 %v1196, %v1197
  %v1199 = vrot.slane %v1198, 1
  %v1200 = vmax.f32 %v1198, %v1199
  %v1201 = vsel %vm1032, %v32, -inf
  %v1202 = vrot.slane %v1201, 4
  %v1203 = vmax.f32 %v1201, %v1202
  %v1204 = vrot.slane %v1203, 2
  %v1205 = vmax.f32 %v1203, %v1204
  %v1206 = vrot.slane %v1205, 1
  %v1207 = vmax.f32 %v1205, %v1206
  %v1208 = vsel %vm1032, %v33, -inf
  %v1209 = vrot.slane %v1208, 4
  %v1210 = vmax.f32 %v1208, %v1209
  %v1211 = vrot.slane %v1210, 2
  %v1212 = vmax.f32 %v1210, %v1211
  %v1213 = vrot.slane %v1212, 1
  %v1214 = vmax.f32 %v1212, %v1213
  %v1215 = vsel %vm1032, %v34, -inf
  %v1216 = vrot.slane %v1215, 4
  %v1217 = vmax.f32 %v1215, %v1216
  %v1218 = vrot.slane %v1217, 2
  %v1219 = vmax.f32 %v1217, %v1218
  %v1220 = vrot.slane %v1219, 1
  %v1221 = vmax.f32 %v1219, %v1220
  %v1222 = vsel %vm1032, %v35, -inf
  %v1223 = vrot.slane %v1222, 4
  %v1224 = vmax.f32 %v1222, %v1223
  %v1225 = vrot.slane %v1224, 2
  %v1226 = vmax.f32 %v1224, %v1225
  %v1227 = vrot.slane %v1226, 1
  %v1228 = vmax.f32 %v1226, %v1227
  %v1229 = vsel %vm1032, %v36, -inf
  %v1230 = vrot.slane %v1229, 4
  %v1231 = vmax.f32 %v1229, %v1230
  %v1232 = vrot.slane %v1231, 2
  %v1233 = vmax.f32 %v1231, %v1232
  %v1234 = vrot.slane %v1233, 1
  %v1235 = vmax.f32 %v1233, %v1234
  %v1236 = vsel %vm1032, %v37, -inf
  %v1237 = vrot.slane %v1236, 4
  %v1238 = vmax.f32 %v1236, %v1237
  %v1239 = vrot.slane %v1238, 2
  %v1240 = vmax.f32 %v1238, %v1239
  %v1241 = vrot.slane %v1240, 1
  %v1242 = vmax.f32 %v1240, %v1241
  %v1243 = vsel %vm1032, %v38, -inf
  %v1244 = vrot.slane %v1243, 4
  %v1245 = vmax.f32 %v1243, %v1244
  %v1246 = vrot.slane %v1245, 2
  %v1247 = vmax.f32 %v1245, %v1246
  %v1248 = vrot.slane %v1247, 1
  %v1249 = vmax.f32 %v1247, %v1248
  %v1250 = vsel %vm1032, %v39, -inf
  %v1251 = vrot.slane %v1250, 4
  %v1252 = vmax.f32 %v1250, %v1251
  %v1253 = vrot.slane %v1252, 2
  %v1254 = vmax.f32 %v1252, %v1253
  %v1255 = vrot.slane %v1254, 1
  %v1256 = vmax.f32 %v1254, %v1255
  %v1257 = vsel %vm1032, %v40, -inf
  %v1258 = vrot.slane %v1257, 4
  %v1259 = vmax.f32 %v1257, %v1258
  %v1260 = vrot.slane %v1259, 2
  %v1261 = vmax.f32 %v1259, %v1260
  %v1262 = vrot.slane %v1261, 1
  %v1263 = vmax.f32 %v1261, %v1262
  %v1264 = vsel %vm1032, %v41, -inf
  %v1265 = vrot.slane %v1264, 4
  %v1266 = vmax.f32 %v1264, %v1265
  %v1267 = vrot.slane %v1266, 2
  %v1268 = vmax.f32 %v1266, %v1267
  %v1269 = vrot.slane %v1268, 1
  %v1270 = vmax.f32 %v1268, %v1269
  %v1271 = vsel %vm1032, %v42, -inf
  %v1272 = vrot.slane %v1271, 4
  %v1273 = vmax.f32 %v1271, %v1272
  %v1274 = vrot.slane %v1273, 2
  %v1275 = vmax.f32 %v1273, %v1274
  %v1276 = vrot.slane %v1275, 1
  %v1277 = vmax.f32 %v1275, %v1276
  %v1278 = vsel %vm1032, %v43, -inf
  %v1279 = vrot.slane %v1278, 4
  %v1280 = vmax.f32 %v1278, %v1279
  %v1281 = vrot.slane %v1280, 2
  %v1282 = vmax.f32 %v1280, %v1281
  %v1283 = vrot.slane %v1282, 1
  %v1284 = vmax.f32 %v1282, %v1283
  %v1285 = vsel %vm1032, %v44, -inf
  %v1286 = vrot.slane %v1285, 4
  %v1287 = vmax.f32 %v1285, %v1286
  %v1288 = vrot.slane %v1287, 2
  %v1289 = vmax.f32 %v1287, %v1288
  %v1290 = vrot.slane %v1289, 1
  %v1291 = vmax.f32 %v1289, %v1290
  %v1292 = vsel %vm1032, %v45, -inf
  %v1293 = vrot.slane %v1292, 4
  %v1294 = vmax.f32 %v1292, %v1293
  %v1295 = vrot.slane %v1294, 2
  %v1296 = vmax.f32 %v1294, %v1295
  %v1297 = vrot.slane %v1296, 1
  %v1298 = vmax.f32 %v1296, %v1297
  %v1299 = vsel %vm1032, %v46, -inf
  %v1300 = vrot.slane %v1299, 4
  %v1301 = vmax.f32 %v1299, %v1300
  %v1302 = vrot.slane %v1301, 2
  %v1303 = vmax.f32 %v1301, %v1302
  %v1304 = vrot.slane %v1303, 1
  %v1305 = vmax.f32 %v1303, %v1304
  %v1306 = vsel %vm1032, %v47, -inf
  %v1307 = vrot.slane %v1306, 4
  %v1308 = vmax.f32 %v1306, %v1307
  %v1309 = vrot.slane %v1308, 2
  %v1310 = vmax.f32 %v1308, %v1309
  %v1311 = vrot.slane %v1310, 1
  %v1312 = vmax.f32 %v1310, %v1311
  %v1313 = vsel %vm1032, %v48, -inf
  %v1314 = vrot.slane %v1313, 4
  %v1315 = vmax.f32 %v1313, %v1314
  %v1316 = vrot.slane %v1315, 2
  %v1317 = vmax.f32 %v1315, %v1316
  %v1318 = vrot.slane %v1317, 1
  %v1319 = vmax.f32 %v1317, %v1318
  %v1320 = vsel %vm1032, %v49, -inf
  %v1321 = vrot.slane %v1320, 4
  %v1322 = vmax.f32 %v1320, %v1321
  %v1323 = vrot.slane %v1322, 2
  %v1324 = vmax.f32 %v1322, %v1323
  %v1325 = vrot.slane %v1324, 1
  %v1326 = vmax.f32 %v1324, %v1325
  %v1327 = vsel %vm1032, %v50, -inf
  %v1328 = vrot.slane %v1327, 4
  %v1329 = vmax.f32 %v1327, %v1328
  %v1330 = vrot.slane %v1329, 2
  %v1331 = vmax.f32 %v1329, %v1330
  %v1332 = vrot.slane %v1331, 1
  %v1333 = vmax.f32 %v1331, %v1332
  %v1334 = vsel %vm1032, %v51, -inf
  %v1335 = vrot.slane %v1334, 4
  %v1336 = vmax.f32 %v1334, %v1335
  %v1337 = vrot.slane %v1336, 2
  %v1338 = vmax.f32 %v1336, %v1337
  %v1339 = vrot.slane %v1338, 1
  %v1340 = vmax.f32 %v1338, %v1339
  %v1341 = vsel %vm1032, %v52, -inf
  %v1342 = vrot.slane %v1341, 4
  %v1343 = vmax.f32 %v1341, %v1342
  %v1344 = vrot.slane %v1343, 2
  %v1345 = vmax.f32 %v1343, %v1344
  %v1346 = vrot.slane %v1345, 1
  %v1347 = vmax.f32 %v1345, %v1346
  %v1348 = vsel %vm1032, %v53, -inf
  %v1349 = vrot.slane %v1348, 4
  %v1350 = vmax.f32 %v1348, %v1349
  %v1351 = vrot.slane %v1350, 2
  %v1352 = vmax.f32 %v1350, %v1351
  %v1353 = vrot.slane %v1352, 1
  %v1354 = vmax.f32 %v1352, %v1353
  %v1355 = vsel %vm1032, %v54, -inf
  %v1356 = vrot.slane %v1355, 4
  %v1357 = vmax.f32 %v1355, %v1356
  %v1358 = vrot.slane %v1357, 2
  %v1359 = vmax.f32 %v1357, %v1358
  %v1360 = vrot.slane %v1359, 1
  %v1361 = vmax.f32 %v1359, %v1360
  %v1362 = vsel %vm1032, %v55, -inf
  %v1363 = vrot.slane %v1362, 4
  %v1364 = vmax.f32 %v1362, %v1363
  %v1365 = vrot.slane %v1364, 2
  %v1366 = vmax.f32 %v1364, %v1365
  %v1367 = vrot.slane %v1366, 1
  %v1368 = vmax.f32 %v1366, %v1367
  %v1369 = vsel %vm1032, %v56, -inf
  %v1370 = vrot.slane %v1369, 4
  %v1371 = vmax.f32 %v1369, %v1370
  %v1372 = vrot.slane %v1371, 2
  %v1373 = vmax.f32 %v1371, %v1372
  %v1374 = vrot.slane %v1373, 1
  %v1375 = vmax.f32 %v1373, %v1374
  %v1376 = vsel %vm1032, %v57, -inf
  %v1377 = vrot.slane %v1376, 4
  %v1378 = vmax.f32 %v1376, %v1377
  %v1379 = vrot.slane %v1378, 2
  %v1380 = vmax.f32 %v1378, %v1379
  %v1381 = vrot.slane %v1380, 1
  %v1382 = vmax.f32 %v1380, %v1381
  %v1383 = vsel %vm1032, %v58, -inf
  %v1384 = vrot.slane %v1383, 4
  %v1385 = vmax.f32 %v1383, %v1384
  %v1386 = vrot.slane %v1385, 2
  %v1387 = vmax.f32 %v1385, %v1386
  %v1388 = vrot.slane %v1387, 1
  %v1389 = vmax.f32 %v1387, %v1388
  %v1390 = vsel %vm1032, %v59, -inf
  %v1391 = vrot.slane %v1390, 4
  %v1392 = vmax.f32 %v1390, %v1391
  %v1393 = vrot.slane %v1392, 2
  %v1394 = vmax.f32 %v1392, %v1393
  %v1395 = vrot.slane %v1394, 1
  %v1396 = vmax.f32 %v1394, %v1395
  %v1397 = vsel %vm1032, %v60, -inf
  %v1398 = vrot.slane %v1397, 4
  %v1399 = vmax.f32 %v1397, %v1398
  %v1400 = vrot.slane %v1399, 2
  %v1401 = vmax.f32 %v1399, %v1400
  %v1402 = vrot.slane %v1401, 1
  %v1403 = vmax.f32 %v1401, %v1402
  %v1404 = vsel %vm1032, %v61, -inf
  %v1405 = vrot.slane %v1404, 4
  %v1406 = vmax.f32 %v1404, %v1405
  %v1407 = vrot.slane %v1406, 2
  %v1408 = vmax.f32 %v1406, %v1407
  %v1409 = vrot.slane %v1408, 1
  %v1410 = vmax.f32 %v1408, %v1409
  %v1411 = vsel %vm1032, %v62, -inf
  %v1412 = vrot.slane %v1411, 4
  %v1413 = vmax.f32 %v1411, %v1412
  %v1414 = vrot.slane %v1413, 2
  %v1415 = vmax.f32 %v1413, %v1414
  %v1416 = vrot.slane %v1415, 1
  %v1417 = vmax.f32 %v1415, %v1416
  %v1418 = vsel %vm1032, %v63, -inf
  %v1419 = vrot.slane %v1418, 4
  %v1420 = vmax.f32 %v1418, %v1419
  %v1421 = vrot.slane %v1420, 2
  %v1422 = vmax.f32 %v1420, %v1421
  %v1423 = vrot.slane %v1422, 1
  %v1424 = vmax.f32 %v1422, %v1423
  %v1425 = vsel %vm1032, %v64, -inf
  %v1426 = vrot.slane %v1425, 4
  %v1427 = vmax.f32 %v1425, %v1426
  %v1428 = vrot.slane %v1427, 2
  %v1429 = vmax.f32 %v1427, %v1428
  %v1430 = vrot.slane %v1429, 1
  %v1431 = vmax.f32 %v1429, %v1430
  %v1432 = vsel %vm1032, %v65, -inf
  %v1433 = vrot.slane %v1432, 4
  %v1434 = vmax.f32 %v1432, %v1433
  %v1435 = vrot.slane %v1434, 2
  %v1436 = vmax.f32 %v1434, %v1435
  %v1437 = vrot.slane %v1436, 1
  %v1438 = vmax.f32 %v1436, %v1437
  %v1439 = vsel %vm1032, %v66, -inf
  %v1440 = vrot.slane %v1439, 4
  %v1441 = vmax.f32 %v1439, %v1440
  %v1442 = vrot.slane %v1441, 2
  %v1443 = vmax.f32 %v1441, %v1442
  %v1444 = vrot.slane %v1443, 1
  %v1445 = vmax.f32 %v1443, %v1444
  %v1446 = vsel %vm1032, %v67, -inf
  %v1447 = vrot.slane %v1446, 4
  %v1448 = vmax.f32 %v1446, %v1447
  %v1449 = vrot.slane %v1448, 2
  %v1450 = vmax.f32 %v1448, %v1449
  %v1451 = vrot.slane %v1450, 1
  %v1452 = vmax.f32 %v1450, %v1451
  %v1453 = vsel %vm1032, %v68, -inf
  %v1454 = vrot.slane %v1453, 4
  %v1455 = vmax.f32 %v1453, %v1454
  %v1456 = vrot.slane %v1455, 2
  %v1457 = vmax.f32 %v1455, %v1456
  %v1458 = vrot.slane %v1457, 1
  %v1459 = vmax.f32 %v1457, %v1458
  %v1460 = vsel %vm1032, %v69, -inf
  %v1461 = vrot.slane %v1460, 4
  %v1462 = vmax.f32 %v1460, %v1461
  %v1463 = vrot.slane %v1462, 2
  %v1464 = vmax.f32 %v1462, %v1463
  %v1465 = vrot.slane %v1464, 1
  %v1466 = vmax.f32 %v1464, %v1465
  %v1467 = vsel %vm1032, %v70, -inf
  %v1468 = vrot.slane %v1467, 4
  %v1469 = vmax.f32 %v1467, %v1468
  %v1470 = vrot.slane %v1469, 2
  %v1471 = vmax.f32 %v1469, %v1470
  %v1472 = vrot.slane %v1471, 1
  %v1473 = vmax.f32 %v1471, %v1472
  %v1474 = vsel %vm1032, %v71, -inf
  %v1475 = vrot.slane %v1474, 4
  %v1476 = vmax.f32 %v1474, %v1475
  %v1477 = vrot.slane %v1476, 2
  %v1478 = vmax.f32 %v1476, %v1477
  %v1479 = vrot.slane %v1478, 1
  %v1480 = vmax.f32 %v1478, %v1479
  %v1481 = vsel %vm1032, %v72, -inf
  %v1482 = vrot.slane %v1481, 4
  %v1483 = vmax.f32 %v1481, %v1482
  %v1484 = vrot.slane %v1483, 2
  %v1485 = vmax.f32 %v1483, %v1484
  %v1486 = vrot.slane %v1485, 1
  %v1487 = vmax.f32 %v1485, %v1486
  %v1488 = vsel %vm1032, %v73, -inf
  %v1489 = vrot.slane %v1488, 4
  %v1490 = vmax.f32 %v1488, %v1489
  %v1491 = vrot.slane %v1490, 2
  %v1492 = vmax.f32 %v1490, %v1491
  %v1493 = vrot.slane %v1492, 1
  %v1494 = vmax.f32 %v1492, %v1493
  %v1495 = vsel %vm1032, %v74, -inf
  %v1496 = vrot.slane %v1495, 4
  %v1497 = vmax.f32 %v1495, %v1496
  %v1498 = vrot.slane %v1497, 2
  %v1499 = vmax.f32 %v1497, %v1498
  %v1500 = vrot.slane %v1499, 1
  %v1501 = vmax.f32 %v1499, %v1500
  %v1502 = vsel %vm1032, %v75, -inf
  %v1503 = vrot.slane %v1502, 4
  %v1504 = vmax.f32 %v1502, %v1503
  %v1505 = vrot.slane %v1504, 2
  %v1506 = vmax.f32 %v1504, %v1505
  %v1507 = vrot.slane %v1506, 1
  %v1508 = vmax.f32 %v1506, %v1507
  %v1509 = vsel %vm1032, %v76, -inf
  %v1510 = vrot.slane %v1509, 4
  %v1511 = vmax.f32 %v1509, %v1510
  %v1512 = vrot.slane %v1511, 2
  %v1513 = vmax.f32 %v1511, %v1512
  %v1514 = vrot.slane %v1513, 1
  %v1515 = vmax.f32 %v1513, %v1514
  %v1516 = vsel %vm1032, %v77, -inf
  %v1517 = vrot.slane %v1516, 4
  %v1518 = vmax.f32 %v1516, %v1517
  %v1519 = vrot.slane %v1518, 2
  %v1520 = vmax.f32 %v1518, %v1519
  %v1521 = vrot.slane %v1520, 1
  %v1522 = vmax.f32 %v1520, %v1521
  %v1523 = vsel %vm1032, %v78, -inf
  %v1524 = vrot.slane %v1523, 4
  %v1525 = vmax.f32 %v1523, %v1524
  %v1526 = vrot.slane %v1525, 2
  %v1527 = vmax.f32 %v1525, %v1526
  %v1528 = vrot.slane %v1527, 1
  %v1529 = vmax.f32 %v1527, %v1528
  %v1530 = vsel %vm1032, %v79, -inf
  %v1531 = vrot.slane %v1530, 4
  %v1532 = vmax.f32 %v1530, %v1531
  %v1533 = vrot.slane %v1532, 2
  %v1534 = vmax.f32 %v1532, %v1533
  %v1535 = vrot.slane %v1534, 1
  %v1536 = vmax.f32 %v1534, %v1535
  %v1537 = vsel %vm1032, %v80, -inf
  %v1538 = vrot.slane %v1537, 4
  %v1539 = vmax.f32 %v1537, %v1538
  %v1540 = vrot.slane %v1539, 2
  %v1541 = vmax.f32 %v1539, %v1540
  %v1542 = vrot.slane %v1541, 1
  %v1543 = vmax.f32 %v1541, %v1542
  %v1544 = vsel %vm1032, %v81, -inf
  %v1545 = vrot.slane %v1544, 4
  %v1546 = vmax.f32 %v1544, %v1545
  %v1547 = vrot.slane %v1546, 2
  %v1548 = vmax.f32 %v1546, %v1547
  %v1549 = vrot.slane %v1548, 1
  %v1550 = vmax.f32 %v1548, %v1549
  %v1551 = vsel %vm1032, %v82, -inf
  %v1552 = vrot.slane %v1551, 4
  %v1553 = vmax.f32 %v1551, %v1552
  %v1554 = vrot.slane %v1553, 2
  %v1555 = vmax.f32 %v1553, %v1554
  %v1556 = vrot.slane %v1555, 1
  %v1557 = vmax.f32 %v1555, %v1556
  %v1558 = vsel %vm1032, %v83, -inf
  %v1559 = vrot.slane %v1558, 4
  %v1560 = vmax.f32 %v1558, %v1559
  %v1561 = vrot.slane %v1560, 2
  %v1562 = vmax.f32 %v1560, %v1561
  %v1563 = vrot.slane %v1562, 1
  %v1564 = vmax.f32 %v1562, %v1563
  %v1565 = vsel %vm1032, %v84, -inf
  %v1566 = vrot.slane %v1565, 4
  %v1567 = vmax.f32 %v1565, %v1566
  %v1568 = vrot.slane %v1567, 2
  %v1569 = vmax.f32 %v1567, %v1568
  %v1570 = vrot.slane %v1569, 1
  %v1571 = vmax.f32 %v1569, %v1570
  %v1572 = vsel %vm1032, %v85, -inf
  %v1573 = vrot.slane %v1572, 4
  %v1574 = vmax.f32 %v1572, %v1573
  %v1575 = vrot.slane %v1574, 2
  %v1576 = vmax.f32 %v1574, %v1575
  %v1577 = vrot.slane %v1576, 1
  %v1578 = vmax.f32 %v1576, %v1577
  %v1579 = vsel %vm1032, %v86, -inf
  %v1580 = vrot.slane %v1579, 4
  %v1581 = vmax.f32 %v1579, %v1580
  %v1582 = vrot.slane %v1581, 2
  %v1583 = vmax.f32 %v1581, %v1582
  %v1584 = vrot.slane %v1583, 1
  %v1585 = vmax.f32 %v1583, %v1584
  %v1586 = vsel %vm1032, %v87, -inf
  %v1587 = vrot.slane %v1586, 4
  %v1588 = vmax.f32 %v1586, %v1587
  %v1589 = vrot.slane %v1588, 2
  %v1590 = vmax.f32 %v1588, %v1589
  %v1591 = vrot.slane %v1590, 1
  %v1592 = vmax.f32 %v1590, %v1591
  %v1593 = vsel %vm1032, %v88, -inf
  %v1594 = vrot.slane %v1593, 4
  %v1595 = vmax.f32 %v1593, %v1594
  %v1596 = vrot.slane %v1595, 2
  %v1597 = vmax.f32 %v1595, %v1596
  %v1598 = vrot.slane %v1597, 1
  %v1599 = vmax.f32 %v1597, %v1598
  %v1600 = vsel %vm1032, %v89, -inf
  %v1601 = vrot.slane %v1600, 4
  %v1602 = vmax.f32 %v1600, %v1601
  %v1603 = vrot.slane %v1602, 2
  %v1604 = vmax.f32 %v1602, %v1603
  %v1605 = vrot.slane %v1604, 1
  %v1606 = vmax.f32 %v1604, %v1605
  %v1607 = vsel %vm1032, %v90, -inf
  %v1608 = vrot.slane %v1607, 4
  %v1609 = vmax.f32 %v1607, %v1608
  %v1610 = vrot.slane %v1609, 2
  %v1611 = vmax.f32 %v1609, %v1610
  %v1612 = vrot.slane %v1611, 1
  %v1613 = vmax.f32 %v1611, %v1612
  %v1614 = vsel %vm1032, %v91, -inf
  %v1615 = vrot.slane %v1614, 4
  %v1616 = vmax.f32 %v1614, %v1615
  %v1617 = vrot.slane %v1616, 2
  %v1618 = vmax.f32 %v1616, %v1617
  %v1619 = vrot.slane %v1618, 1
  %v1620 = vmax.f32 %v1618, %v1619
  %v1621 = vsel %vm1032, %v92, -inf
  %v1622 = vrot.slane %v1621, 4
  %v1623 = vmax.f32 %v1621, %v1622
  %v1624 = vrot.slane %v1623, 2
  %v1625 = vmax.f32 %v1623, %v1624
  %v1626 = vrot.slane %v1625, 1
  %v1627 = vmax.f32 %v1625, %v1626
  %v1628 = vsel %vm1032, %v93, -inf
  %v1629 = vrot.slane %v1628, 4
  %v1630 = vmax.f32 %v1628, %v1629
  %v1631 = vrot.slane %v1630, 2
  %v1632 = vmax.f32 %v1630, %v1631
  %v1633 = vrot.slane %v1632, 1
  %v1634 = vmax.f32 %v1632, %v1633
  %v1635 = vsel %vm1032, %v94, -inf
  %v1636 = vrot.slane %v1635, 4
  %v1637 = vmax.f32 %v1635, %v1636
  %v1638 = vrot.slane %v1637, 2
  %v1639 = vmax.f32 %v1637, %v1638
  %v1640 = vrot.slane %v1639, 1
  %v1641 = vmax.f32 %v1639, %v1640
  %v1642 = vsel %vm1032, %v95, -inf
  %v1643 = vrot.slane %v1642, 4
  %v1644 = vmax.f32 %v1642, %v1643
  %v1645 = vrot.slane %v1644, 2
  %v1646 = vmax.f32 %v1644, %v1645
  %v1647 = vrot.slane %v1646, 1
  %v1648 = vmax.f32 %v1646, %v1647
  %v1649 = vsel %vm1032, %v96, -inf
  %v1650 = vrot.slane %v1649, 4
  %v1651 = vmax.f32 %v1649, %v1650
  %v1652 = vrot.slane %v1651, 2
  %v1653 = vmax.f32 %v1651, %v1652
  %v1654 = vrot.slane %v1653, 1
  %v1655 = vmax.f32 %v1653, %v1654
  %v1656 = vsel %vm1032, %v97, -inf
  %v1657 = vrot.slane %v1656, 4
  %v1658 = vmax.f32 %v1656, %v1657
  %v1659 = vrot.slane %v1658, 2
  %v1660 = vmax.f32 %v1658, %v1659
  %v1661 = vrot.slane %v1660, 1
  %v1662 = vmax.f32 %v1660, %v1661
  %v1663 = vsel %vm1032, %v98, -inf
  %v1664 = vrot.slane %v1663, 4
  %v1665 = vmax.f32 %v1663, %v1664
  %v1666 = vrot.slane %v1665, 2
  %v1667 = vmax.f32 %v1665, %v1666
  %v1668 = vrot.slane %v1667, 1
  %v1669 = vmax.f32 %v1667, %v1668
  %v1670 = vsel %vm1032, %v99, -inf
  %v1671 = vrot.slane %v1670, 4
  %v1672 = vmax.f32 %v1670, %v1671
  %v1673 = vrot.slane %v1672, 2
  %v1674 = vmax.f32 %v1672, %v1673
  %v1675 = vrot.slane %v1674, 1
  %v1676 = vmax.f32 %v1674, %v1675
  %v1677 = vsel %vm1032, %v100, -inf
  %v1678 = vrot.slane %v1677, 4
  %v1679 = vmax.f32 %v1677, %v1678
  %v1680 = vrot.slane %v1679, 2
  %v1681 = vmax.f32 %v1679, %v1680
  %v1682 = vrot.slane %v1681, 1
  %v1683 = vmax.f32 %v1681, %v1682
  %v1684 = vsel %vm1032, %v101, -inf
  %v1685 = vrot.slane %v1684, 4
  %v1686 = vmax.f32 %v1684, %v1685
  %v1687 = vrot.slane %v1686, 2
  %v1688 = vmax.f32 %v1686, %v1687
  %v1689 = vrot.slane %v1688, 1
  %v1690 = vmax.f32 %v1688, %v1689
  %v1691 = vsel %vm1032, %v102, -inf
  %v1692 = vrot.slane %v1691, 4
  %v1693 = vmax.f32 %v1691, %v1692
  %v1694 = vrot.slane %v1693, 2
  %v1695 = vmax.f32 %v1693, %v1694
  %v1696 = vrot.slane %v1695, 1
  %v1697 = vmax.f32 %v1695, %v1696
  %v1698 = vsel %vm1032, %v103, -inf
  %v1699 = vrot.slane %v1698, 4
  %v1700 = vmax.f32 %v1698, %v1699
  %v1701 = vrot.slane %v1700, 2
  %v1702 = vmax.f32 %v1700, %v1701
  %v1703 = vrot.slane %v1702, 1
  %v1704 = vmax.f32 %v1702, %v1703
  %v1705 = vsel %vm1032, %v104, -inf
  %v1706 = vrot.slane %v1705, 4
  %v1707 = vmax.f32 %v1705, %v1706
  %v1708 = vrot.slane %v1707, 2
  %v1709 = vmax.f32 %v1707, %v1708
  %v1710 = vrot.slane %v1709, 1
  %v1711 = vmax.f32 %v1709, %v1710
  %v1712 = vsel %vm1032, %v105, -inf
  %v1713 = vrot.slane %v1712, 4
  %v1714 = vmax.f32 %v1712, %v1713
  %v1715 = vrot.slane %v1714, 2
  %v1716 = vmax.f32 %v1714, %v1715
  %v1717 = vrot.slane %v1716, 1
  %v1718 = vmax.f32 %v1716, %v1717
  %v1719 = vsel %vm1032, %v106, -inf
  %v1720 = vrot.slane %v1719, 4
  %v1721 = vmax.f32 %v1719, %v1720
  %v1722 = vrot.slane %v1721, 2
  %v1723 = vmax.f32 %v1721, %v1722
  %v1724 = vrot.slane %v1723, 1
  %v1725 = vmax.f32 %v1723, %v1724
  %v1726 = vsel %vm1032, %v107, -inf
  %v1727 = vrot.slane %v1726, 4
  %v1728 = vmax.f32 %v1726, %v1727
  %v1729 = vrot.slane %v1728, 2
  %v1730 = vmax.f32 %v1728, %v1729
  %v1731 = vrot.slane %v1730, 1
  %v1732 = vmax.f32 %v1730, %v1731
  %v1733 = vsel %vm1032, %v108, -inf
  %v1734 = vrot.slane %v1733, 4
  %v1735 = vmax.f32 %v1733, %v1734
  %v1736 = vrot.slane %v1735, 2
  %v1737 = vmax.f32 %v1735, %v1736
  %v1738 = vrot.slane %v1737, 1
  %v1739 = vmax.f32 %v1737, %v1738
  %v1740 = vsel %vm1032, %v109, -inf
  %v1741 = vrot.slane %v1740, 4
  %v1742 = vmax.f32 %v1740, %v1741
  %v1743 = vrot.slane %v1742, 2
  %v1744 = vmax.f32 %v1742, %v1743
  %v1745 = vrot.slane %v1744, 1
  %v1746 = vmax.f32 %v1744, %v1745
  %v1747 = vsel %vm1032, %v110, -inf
  %v1748 = vrot.slane %v1747, 4
  %v1749 = vmax.f32 %v1747, %v1748
  %v1750 = vrot.slane %v1749, 2
  %v1751 = vmax.f32 %v1749, %v1750
  %v1752 = vrot.slane %v1751, 1
  %v1753 = vmax.f32 %v1751, %v1752
  %v1754 = vsel %vm1032, %v111, -inf
  %v1755 = vrot.slane %v1754, 4
  %v1756 = vmax.f32 %v1754, %v1755
  %v1757 = vrot.slane %v1756, 2
  %v1758 = vmax.f32 %v1756, %v1757
  %v1759 = vrot.slane %v1758, 1
  %v1760 = vmax.f32 %v1758, %v1759
  %v1761 = vsel %vm1032, %v112, -inf
  %v1762 = vrot.slane %v1761, 4
  %v1763 = vmax.f32 %v1761, %v1762
  %v1764 = vrot.slane %v1763, 2
  %v1765 = vmax.f32 %v1763, %v1764
  %v1766 = vrot.slane %v1765, 1
  %v1767 = vmax.f32 %v1765, %v1766
  %v1768 = vsel %vm1032, %v113, -inf
  %v1769 = vrot.slane %v1768, 4
  %v1770 = vmax.f32 %v1768, %v1769
  %v1771 = vrot.slane %v1770, 2
  %v1772 = vmax.f32 %v1770, %v1771
  %v1773 = vrot.slane %v1772, 1
  %v1774 = vmax.f32 %v1772, %v1773
  %v1775 = vsel %vm1032, %v114, -inf
  %v1776 = vrot.slane %v1775, 4
  %v1777 = vmax.f32 %v1775, %v1776
  %v1778 = vrot.slane %v1777, 2
  %v1779 = vmax.f32 %v1777, %v1778
  %v1780 = vrot.slane %v1779, 1
  %v1781 = vmax.f32 %v1779, %v1780
  %v1782 = vsel %vm1032, %v115, -inf
  %v1783 = vrot.slane %v1782, 4
  %v1784 = vmax.f32 %v1782, %v1783
  %v1785 = vrot.slane %v1784, 2
  %v1786 = vmax.f32 %v1784, %v1785
  %v1787 = vrot.slane %v1786, 1
  %v1788 = vmax.f32 %v1786, %v1787
  %v1789 = vsel %vm1032, %v116, -inf
  %v1790 = vrot.slane %v1789, 4
  %v1791 = vmax.f32 %v1789, %v1790
  %v1792 = vrot.slane %v1791, 2
  %v1793 = vmax.f32 %v1791, %v1792
  %v1794 = vrot.slane %v1793, 1
  %v1795 = vmax.f32 %v1793, %v1794
  %v1796 = vsel %vm1032, %v117, -inf
  %v1797 = vrot.slane %v1796, 4
  %v1798 = vmax.f32 %v1796, %v1797
  %v1799 = vrot.slane %v1798, 2
  %v1800 = vmax.f32 %v1798, %v1799
  %v1801 = vrot.slane %v1800, 1
  %v1802 = vmax.f32 %v1800, %v1801
  %v1803 = vsel %vm1032, %v118, -inf
  %v1804 = vrot.slane %v1803, 4
  %v1805 = vmax.f32 %v1803, %v1804
  %v1806 = vrot.slane %v1805, 2
  %v1807 = vmax.f32 %v1805, %v1806
  %v1808 = vrot.slane %v1807, 1
  %v1809 = vmax.f32 %v1807, %v1808
  %v1810 = vsel %vm1032, %v119, -inf
  %v1811 = vrot.slane %v1810, 4
  %v1812 = vmax.f32 %v1810, %v1811
  %v1813 = vrot.slane %v1812, 2
  %v1814 = vmax.f32 %v1812, %v1813
  %v1815 = vrot.slane %v1814, 1
  %v1816 = vmax.f32 %v1814, %v1815
  %v1817 = vsel %vm1032, %v120, -inf
  %v1818 = vrot.slane %v1817, 4
  %v1819 = vmax.f32 %v1817, %v1818
  %v1820 = vrot.slane %v1819, 2
  %v1821 = vmax.f32 %v1819, %v1820
  %v1822 = vrot.slane %v1821, 1
  %v1823 = vmax.f32 %v1821, %v1822
  %v1824 = vsel %vm1032, %v121, -inf
  %v1825 = vrot.slane %v1824, 4
  %v1826 = vmax.f32 %v1824, %v1825
  %v1827 = vrot.slane %v1826, 2
  %v1828 = vmax.f32 %v1826, %v1827
  %v1829 = vrot.slane %v1828, 1
  %v1830 = vmax.f32 %v1828, %v1829
  %v1831 = vsel %vm1032, %v122, -inf
  %v1832 = vrot.slane %v1831, 4
  %v1833 = vmax.f32 %v1831, %v1832
  %v1834 = vrot.slane %v1833, 2
  %v1835 = vmax.f32 %v1833, %v1834
  %v1836 = vrot.slane %v1835, 1
  %v1837 = vmax.f32 %v1835, %v1836
  %v1838 = vsel %vm1032, %v123, -inf
  %v1839 = vrot.slane %v1838, 4
  %v1840 = vmax.f32 %v1838, %v1839
  %v1841 = vrot.slane %v1840, 2
  %v1842 = vmax.f32 %v1840, %v1841
  %v1843 = vrot.slane %v1842, 1
  %v1844 = vmax.f32 %v1842, %v1843
  %v1845 = vsel %vm1032, %v124, -inf
  %v1846 = vrot.slane %v1845, 4
  %v1847 = vmax.f32 %v1845, %v1846
  %v1848 = vrot.slane %v1847, 2
  %v1849 = vmax.f32 %v1847, %v1848
  %v1850 = vrot.slane %v1849, 1
  %v1851 = vmax.f32 %v1849, %v1850
  %v1852 = vsel %vm1032, %v125, -inf
  %v1853 = vrot.slane %v1852, 4
  %v1854 = vmax.f32 %v1852, %v1853
  %v1855 = vrot.slane %v1854, 2
  %v1856 = vmax.f32 %v1854, %v1855
  %v1857 = vrot.slane %v1856, 1
  %v1858 = vmax.f32 %v1856, %v1857
  %v1859 = vsel %vm1032, %v126, -inf
  %v1860 = vrot.slane %v1859, 4
  %v1861 = vmax.f32 %v1859, %v1860
  %v1862 = vrot.slane %v1861, 2
  %v1863 = vmax.f32 %v1861, %v1862
  %v1864 = vrot.slane %v1863, 1
  %v1865 = vmax.f32 %v1863, %v1864
  %v1866 = vsel %vm1032, %v127, -inf
  %v1867 = vrot.slane %v1866, 4
  %v1868 = vmax.f32 %v1866, %v1867
  %v1869 = vrot.slane %v1868, 2
  %v1870 = vmax.f32 %v1868, %v1869
  %v1871 = vrot.slane %v1870, 1
  %v1872 = vmax.f32 %v1870, %v1871
  %v1873 = vsel %vm1032, %v128, -inf
  %v1874 = vrot.slane %v1873, 4
  %v1875 = vmax.f32 %v1873, %v1874
  %v1876 = vrot.slane %v1875, 2
  %v1877 = vmax.f32 %v1875, %v1876
  %v1878 = vrot.slane %v1877, 1
  %v1879 = vmax.f32 %v1877, %v1878
  %v1880 = vsel %vm1032, %v129, -inf
  %v1881 = vrot.slane %v1880, 4
  %v1882 = vmax.f32 %v1880, %v1881
  %v1883 = vrot.slane %v1882, 2
  %v1884 = vmax.f32 %v1882, %v1883
  %v1885 = vrot.slane %v1884, 1
  %v1886 = vmax.f32 %v1884, %v1885
  %v1887 = vsel %vm1032, %v130, -inf
  %v1888 = vrot.slane %v1887, 4
  %v1889 = vmax.f32 %v1887, %v1888
  %v1890 = vrot.slane %v1889, 2
  %v1891 = vmax.f32 %v1889, %v1890
  %v1892 = vrot.slane %v1891, 1
  %v1893 = vmax.f32 %v1891, %v1892
  %v1894 = vsel %vm1032, %v131, -inf
  %v1895 = vrot.slane %v1894, 4
  %v1896 = vmax.f32 %v1894, %v1895
  %v1897 = vrot.slane %v1896, 2
  %v1898 = vmax.f32 %v1896, %v1897
  %v1899 = vrot.slane %v1898, 1
  %v1900 = vmax.f32 %v1898, %v1899
  %v1901 = vsel %vm1032, %v132, -inf
  %v1902 = vrot.slane %v1901, 4
  %v1903 = vmax.f32 %v1901, %v1902
  %v1904 = vrot.slane %v1903, 2
  %v1905 = vmax.f32 %v1903, %v1904
  %v1906 = vrot.slane %v1905, 1
  %v1907 = vmax.f32 %v1905, %v1906
  %v1908 = vsel %vm1032, %v133, -inf
  %v1909 = vrot.slane %v1908, 4
  %v1910 = vmax.f32 %v1908, %v1909
  %v1911 = vrot.slane %v1910, 2
  %v1912 = vmax.f32 %v1910, %v1911
  %v1913 = vrot.slane %v1912, 1
  %v1914 = vmax.f32 %v1912, %v1913
  %v1915 = vsel %vm1032, %v134, -inf
  %v1916 = vrot.slane %v1915, 4
  %v1917 = vmax.f32 %v1915, %v1916
  %v1918 = vrot.slane %v1917, 2
  %v1919 = vmax.f32 %v1917, %v1918
  %v1920 = vrot.slane %v1919, 1
  %v1921 = vmax.f32 %v1919, %v1920
  %v1922 = vsel %vm1032, %v135, -inf
  %v1923 = vrot.slane %v1922, 4
  %v1924 = vmax.f32 %v1922, %v1923
  %v1925 = vrot.slane %v1924, 2
  %v1926 = vmax.f32 %v1924, %v1925
  %v1927 = vrot.slane %v1926, 1
  %v1928 = vmax.f32 %v1926, %v1927
  %v1929 = vsel %vm1032, %v136, -inf
  %v1930 = vrot.slane %v1929, 4
  %v1931 = vmax.f32 %v1929, %v1930
  %v1932 = vrot.slane %v1931, 2
  %v1933 = vmax.f32 %v1931, %v1932
  %v1934 = vrot.slane %v1933, 1
  %v1935 = vmax.f32 %v1933, %v1934
  %v1936 = vsel %vm1032, %v137, -inf
  %v1937 = vrot.slane %v1936, 4
  %v1938 = vmax.f32 %v1936, %v1937
  %v1939 = vrot.slane %v1938, 2
  %v1940 = vmax.f32 %v1938, %v1939
  %v1941 = vrot.slane %v1940, 1
  %v1942 = vmax.f32 %v1940, %v1941
  %v1943 = vsel %vm1032, %v138, -inf
  %v1944 = vrot.slane %v1943, 4
  %v1945 = vmax.f32 %v1943, %v1944
  %v1946 = vrot.slane %v1945, 2
  %v1947 = vmax.f32 %v1945, %v1946
  %v1948 = vrot.slane %v1947, 1
  %v1949 = vmax.f32 %v1947, %v1948
  %v1950 = vsel %vm1032, %v139, -inf
  %v1951 = vrot.slane %v1950, 4
  %v1952 = vmax.f32 %v1950, %v1951
  %v1953 = vrot.slane %v1952, 2
  %v1954 = vmax.f32 %v1952, %v1953
  %v1955 = vrot.slane %v1954, 1
  %v1956 = vmax.f32 %v1954, %v1955
  %v1957 = vsel %vm1032, %v140, -inf
  %v1958 = vrot.slane %v1957, 4
  %v1959 = vmax.f32 %v1957, %v1958
  %v1960 = vrot.slane %v1959, 2
  %v1961 = vmax.f32 %v1959, %v1960
  %v1962 = vrot.slane %v1961, 1
  %v1963 = vmax.f32 %v1961, %v1962
  %v1964 = vsel %vm1032, %v141, -inf
  %v1965 = vrot.slane %v1964, 4
  %v1966 = vmax.f32 %v1964, %v1965
  %v1967 = vrot.slane %v1966, 2
  %v1968 = vmax.f32 %v1966, %v1967
  %v1969 = vrot.slane %v1968, 1
  %v1970 = vmax.f32 %v1968, %v1969
  %v1971 = vsel %vm1032, %v142, -inf
  %v1972 = vrot.slane %v1971, 4
  %v1973 = vmax.f32 %v1971, %v1972
  %v1974 = vrot.slane %v1973, 2
  %v1975 = vmax.f32 %v1973, %v1974
  %v1976 = vrot.slane %v1975, 1
  %v1977 = vmax.f32 %v1975, %v1976
  %v1978 = vsel %vm1032, %v143, -inf
  %v1979 = vrot.slane %v1978, 4
  %v1980 = vmax.f32 %v1978, %v1979
  %v1981 = vrot.slane %v1980, 2
  %v1982 = vmax.f32 %v1980, %v1981
  %v1983 = vrot.slane %v1982, 1
  %v1984 = vmax.f32 %v1982, %v1983
  %v1985 = vsel %vm1032, %v144, -inf
  %v1986 = vrot.slane %v1985, 4
  %v1987 = vmax.f32 %v1985, %v1986
  %v1988 = vrot.slane %v1987, 2
  %v1989 = vmax.f32 %v1987, %v1988
  %v1990 = vrot.slane %v1989, 1
  %v1991 = vmax.f32 %v1989, %v1990
  %v1992 = vsel %vm1032, %v145, -inf
  %v1993 = vrot.slane %v1992, 4
  %v1994 = vmax.f32 %v1992, %v1993
  %v1995 = vrot.slane %v1994, 2
  %v1996 = vmax.f32 %v1994, %v1995
  %v1997 = vrot.slane %v1996, 1
  %v1998 = vmax.f32 %v1996, %v1997
  %v1999 = vsel %vm1032, %v146, -inf
  %v2000 = vrot.slane %v1999, 4
  %v2001 = vmax.f32 %v1999, %v2000
  %v2002 = vrot.slane %v2001, 2
  %v2003 = vmax.f32 %v2001, %v2002
  %v2004 = vrot.slane %v2003, 1
  %v2005 = vmax.f32 %v2003, %v2004
  %v2006 = vsel %vm1032, %v147, -inf
  %v2007 = vrot.slane %v2006, 4
  %v2008 = vmax.f32 %v2006, %v2007
  %v2009 = vrot.slane %v2008, 2
  %v2010 = vmax.f32 %v2008, %v2009
  %v2011 = vrot.slane %v2010, 1
  %v2012 = vmax.f32 %v2010, %v2011
  %v2013 = vsel %vm1032, %v148, -inf
  %v2014 = vrot.slane %v2013, 4
  %v2015 = vmax.f32 %v2013, %v2014
  %v2016 = vrot.slane %v2015, 2
  %v2017 = vmax.f32 %v2015, %v2016
  %v2018 = vrot.slane %v2017, 1
  %v2019 = vmax.f32 %v2017, %v2018
  %v2020 = vsel %vm1032, %v149, -inf
  %v2021 = vrot.slane %v2020, 4
  %v2022 = vmax.f32 %v2020, %v2021
  %v2023 = vrot.slane %v2022, 2
  %v2024 = vmax.f32 %v2022, %v2023
  %v2025 = vrot.slane %v2024, 1
  %v2026 = vmax.f32 %v2024, %v2025
  %v2027 = vsel %vm1032, %v150, -inf
  %v2028 = vrot.slane %v2027, 4
  %v2029 = vmax.f32 %v2027, %v2028
  %v2030 = vrot.slane %v2029, 2
  %v2031 = vmax.f32 %v2029, %v2030
  %v2032 = vrot.slane %v2031, 1
  %v2033 = vmax.f32 %v2031, %v2032
  %v2034 = vsel %vm1032, %v151, -inf
  %v2035 = vrot.slane %v2034, 4
  %v2036 = vmax.f32 %v2034, %v2035
  %v2037 = vrot.slane %v2036, 2
  %v2038 = vmax.f32 %v2036, %v2037
  %v2039 = vrot.slane %v2038, 1
  %v2040 = vmax.f32 %v2038, %v2039
  %v2041 = vsel %vm1032, %v152, -inf
  %v2042 = vrot.slane %v2041, 4
  %v2043 = vmax.f32 %v2041, %v2042
  %v2044 = vrot.slane %v2043, 2
  %v2045 = vmax.f32 %v2043, %v2044
  %v2046 = vrot.slane %v2045, 1
  %v2047 = vmax.f32 %v2045, %v2046
  %v2048 = vsel %vm1032, %v153, -inf
  %v2049 = vrot.slane %v2048, 4
  %v2050 = vmax.f32 %v2048, %v2049
  %v2051 = vrot.slane %v2050, 2
  %v2052 = vmax.f32 %v2050, %v2051
  %v2053 = vrot.slane %v2052, 1
  %v2054 = vmax.f32 %v2052, %v2053
  %v2055 = vsel %vm1032, %v154, -inf
  %v2056 = vrot.slane %v2055, 4
  %v2057 = vmax.f32 %v2055, %v2056
  %v2058 = vrot.slane %v2057, 2
  %v2059 = vmax.f32 %v2057, %v2058
  %v2060 = vrot.slane %v2059, 1
  %v2061 = vmax.f32 %v2059, %v2060
  %v2062 = vsel %vm1032, %v155, -inf
  %v2063 = vrot.slane %v2062, 4
  %v2064 = vmax.f32 %v2062, %v2063
  %v2065 = vrot.slane %v2064, 2
  %v2066 = vmax.f32 %v2064, %v2065
  %v2067 = vrot.slane %v2066, 1
  %v2068 = vmax.f32 %v2066, %v2067
  %v2069 = vsel %vm1032, %v156, -inf
  %v2070 = vrot.slane %v2069, 4
  %v2071 = vmax.f32 %v2069, %v2070
  %v2072 = vrot.slane %v2071, 2
  %v2073 = vmax.f32 %v2071, %v2072
  %v2074 = vrot.slane %v2073, 1
  %v2075 = vmax.f32 %v2073, %v2074
  %v2076 = vsel %vm1032, %v157, -inf
  %v2077 = vrot.slane %v2076, 4
  %v2078 = vmax.f32 %v2076, %v2077
  %v2079 = vrot.slane %v2078, 2
  %v2080 = vmax.f32 %v2078, %v2079
  %v2081 = vrot.slane %v2080, 1
  %v2082 = vmax.f32 %v2080, %v2081
  %v2083 = vsel %vm1032, %v158, -inf
  %v2084 = vrot.slane %v2083, 4
  %v2085 = vmax.f32 %v2083, %v2084
  %v2086 = vrot.slane %v2085, 2
  %v2087 = vmax.f32 %v2085, %v2086
  %v2088 = vrot.slane %v2087, 1
  %v2089 = vmax.f32 %v2087, %v2088
  %v2090 = vsel %vm1032, %v159, -inf
  %v2091 = vrot.slane %v2090, 4
  %v2092 = vmax.f32 %v2090, %v2091
  %v2093 = vrot.slane %v2092, 2
  %v2094 = vmax.f32 %v2092, %v2093
  %v2095 = vrot.slane %v2094, 1
  %v2096 = vmax.f32 %v2094, %v2095
  %v2097 = vsel %vm1032, %v160, -inf
  %v2098 = vrot.slane %v2097, 4
  %v2099 = vmax.f32 %v2097, %v2098
  %v2100 = vrot.slane %v2099, 2
  %v2101 = vmax.f32 %v2099, %v2100
  %v2102 = vrot.slane %v2101, 1
  %v2103 = vmax.f32 %v2101, %v2102
  %v2104 = vsel %vm1032, %v161, -inf
  %v2105 = vrot.slane %v2104, 4
  %v2106 = vmax.f32 %v2104, %v2105
  %v2107 = vrot.slane %v2106, 2
  %v2108 = vmax.f32 %v2106, %v2107
  %v2109 = vrot.slane %v2108, 1
  %v2110 = vmax.f32 %v2108, %v2109
  %v2111 = vsel %vm1032, %v162, -inf
  %v2112 = vrot.slane %v2111, 4
  %v2113 = vmax.f32 %v2111, %v2112
  %v2114 = vrot.slane %v2113, 2
  %v2115 = vmax.f32 %v2113, %v2114
  %v2116 = vrot.slane %v2115, 1
  %v2117 = vmax.f32 %v2115, %v2116
  %v2118 = vsel %vm1032, %v163, -inf
  %v2119 = vrot.slane %v2118, 4
  %v2120 = vmax.f32 %v2118, %v2119
  %v2121 = vrot.slane %v2120, 2
  %v2122 = vmax.f32 %v2120, %v2121
  %v2123 = vrot.slane %v2122, 1
  %v2124 = vmax.f32 %v2122, %v2123
  %v2125 = vsel %vm1032, %v164, -inf
  %v2126 = vrot.slane %v2125, 4
  %v2127 = vmax.f32 %v2125, %v2126
  %v2128 = vrot.slane %v2127, 2
  %v2129 = vmax.f32 %v2127, %v2128
  %v2130 = vrot.slane %v2129, 1
  %v2131 = vmax.f32 %v2129, %v2130
  %v2132 = vsel %vm1032, %v165, -inf
  %v2133 = vrot.slane %v2132, 4
  %v2134 = vmax.f32 %v2132, %v2133
  %v2135 = vrot.slane %v2134, 2
  %v2136 = vmax.f32 %v2134, %v2135
  %v2137 = vrot.slane %v2136, 1
  %v2138 = vmax.f32 %v2136, %v2137
  %v2139 = vsel %vm1032, %v166, -inf
  %v2140 = vrot.slane %v2139, 4
  %v2141 = vmax.f32 %v2139, %v2140
  %v2142 = vrot.slane %v2141, 2
  %v2143 = vmax.f32 %v2141, %v2142
  %v2144 = vrot.slane %v2143, 1
  %v2145 = vmax.f32 %v2143, %v2144
  %v2146 = vsel %vm1032, %v167, -inf
  %v2147 = vrot.slane %v2146, 4
  %v2148 = vmax.f32 %v2146, %v2147
  %v2149 = vrot.slane %v2148, 2
  %v2150 = vmax.f32 %v2148, %v2149
  %v2151 = vrot.slane %v2150, 1
  %v2152 = vmax.f32 %v2150, %v2151
  %v2153 = vsel %vm1032, %v168, -inf
  %v2154 = vrot.slane %v2153, 4
  %v2155 = vmax.f32 %v2153, %v2154
  %v2156 = vrot.slane %v2155, 2
  %v2157 = vmax.f32 %v2155, %v2156
  %v2158 = vrot.slane %v2157, 1
  %v2159 = vmax.f32 %v2157, %v2158
  %v2160 = vsel %vm1032, %v169, -inf
  %v2161 = vrot.slane %v2160, 4
  %v2162 = vmax.f32 %v2160, %v2161
  %v2163 = vrot.slane %v2162, 2
  %v2164 = vmax.f32 %v2162, %v2163
  %v2165 = vrot.slane %v2164, 1
  %v2166 = vmax.f32 %v2164, %v2165
  %v2167 = vsel %vm1032, %v170, -inf
  %v2168 = vrot.slane %v2167, 4
  %v2169 = vmax.f32 %v2167, %v2168
  %v2170 = vrot.slane %v2169, 2
  %v2171 = vmax.f32 %v2169, %v2170
  %v2172 = vrot.slane %v2171, 1
  %v2173 = vmax.f32 %v2171, %v2172
  %v2174 = vsel %vm1032, %v171, -inf
  %v2175 = vrot.slane %v2174, 4
  %v2176 = vmax.f32 %v2174, %v2175
  %v2177 = vrot.slane %v2176, 2
  %v2178 = vmax.f32 %v2176, %v2177
  %v2179 = vrot.slane %v2178, 1
  %v2180 = vmax.f32 %v2178, %v2179
  %v2181 = vsel %vm1032, %v172, -inf
  %v2182 = vrot.slane %v2181, 4
  %v2183 = vmax.f32 %v2181, %v2182
  %v2184 = vrot.slane %v2183, 2
  %v2185 = vmax.f32 %v2183, %v2184
  %v2186 = vrot.slane %v2185, 1
  %v2187 = vmax.f32 %v2185, %v2186
  %v2188 = vsel %vm1032, %v173, -inf
  %v2189 = vrot.slane %v2188, 4
  %v2190 = vmax.f32 %v2188, %v2189
  %v2191 = vrot.slane %v2190, 2
  %v2192 = vmax.f32 %v2190, %v2191
  %v2193 = vrot.slane %v2192, 1
  %v2194 = vmax.f32 %v2192, %v2193
  %v2195 = vsel %vm1032, %v174, -inf
  %v2196 = vrot.slane %v2195, 4
  %v2197 = vmax.f32 %v2195, %v2196
  %v2198 = vrot.slane %v2197, 2
  %v2199 = vmax.f32 %v2197, %v2198
  %v2200 = vrot.slane %v2199, 1
  %v2201 = vmax.f32 %v2199, %v2200
  %v2202 = vsel %vm1032, %v175, -inf
  %v2203 = vrot.slane %v2202, 4
  %v2204 = vmax.f32 %v2202, %v2203
  %v2205 = vrot.slane %v2204, 2
  %v2206 = vmax.f32 %v2204, %v2205
  %v2207 = vrot.slane %v2206, 1
  %v2208 = vmax.f32 %v2206, %v2207
  %v2209 = vsel %vm1032, %v176, -inf
  %v2210 = vrot.slane %v2209, 4
  %v2211 = vmax.f32 %v2209, %v2210
  %v2212 = vrot.slane %v2211, 2
  %v2213 = vmax.f32 %v2211, %v2212
  %v2214 = vrot.slane %v2213, 1
  %v2215 = vmax.f32 %v2213, %v2214
  %v2216 = vsel %vm1032, %v177, -inf
  %v2217 = vrot.slane %v2216, 4
  %v2218 = vmax.f32 %v2216, %v2217
  %v2219 = vrot.slane %v2218, 2
  %v2220 = vmax.f32 %v2218, %v2219
  %v2221 = vrot.slane %v2220, 1
  %v2222 = vmax.f32 %v2220, %v2221
  %v2223 = vsel %vm1032, %v178, -inf
  %v2224 = vrot.slane %v2223, 4
  %v2225 = vmax.f32 %v2223, %v2224
  %v2226 = vrot.slane %v2225, 2
  %v2227 = vmax.f32 %v2225, %v2226
  %v2228 = vrot.slane %v2227, 1
  %v2229 = vmax.f32 %v2227, %v2228
  %v2230 = vsel %vm1032, %v179, -inf
  %v2231 = vrot.slane %v2230, 4
  %v2232 = vmax.f32 %v2230, %v2231
  %v2233 = vrot.slane %v2232, 2
  %v2234 = vmax.f32 %v2232, %v2233
  %v2235 = vrot.slane %v2234, 1
  %v2236 = vmax.f32 %v2234, %v2235
  %v2237 = vsel %vm1032, %v180, -inf
  %v2238 = vrot.slane %v2237, 4
  %v2239 = vmax.f32 %v2237, %v2238
  %v2240 = vrot.slane %v2239, 2
  %v2241 = vmax.f32 %v2239, %v2240
  %v2242 = vrot.slane %v2241, 1
  %v2243 = vmax.f32 %v2241, %v2242
  %v2244 = vsel %vm1032, %v181, -inf
  %v2245 = vrot.slane %v2244, 4
  %v2246 = vmax.f32 %v2244, %v2245
  %v2247 = vrot.slane %v2246, 2
  %v2248 = vmax.f32 %v2246, %v2247
  %v2249 = vrot.slane %v2248, 1
  %v2250 = vmax.f32 %v2248, %v2249
  %v2251 = vsel %vm1032, %v182, -inf
  %v2252 = vrot.slane %v2251, 4
  %v2253 = vmax.f32 %v2251, %v2252
  %v2254 = vrot.slane %v2253, 2
  %v2255 = vmax.f32 %v2253, %v2254
  %v2256 = vrot.slane %v2255, 1
  %v2257 = vmax.f32 %v2255, %v2256
  %v2258 = vsel %vm1032, %v183, -inf
  %v2259 = vrot.slane %v2258, 4
  %v2260 = vmax.f32 %v2258, %v2259
  %v2261 = vrot.slane %v2260, 2
  %v2262 = vmax.f32 %v2260, %v2261
  %v2263 = vrot.slane %v2262, 1
  %v2264 = vmax.f32 %v2262, %v2263
  %v2265 = vsel %vm1032, %v184, -inf
  %v2266 = vrot.slane %v2265, 4
  %v2267 = vmax.f32 %v2265, %v2266
  %v2268 = vrot.slane %v2267, 2
  %v2269 = vmax.f32 %v2267, %v2268
  %v2270 = vrot.slane %v2269, 1
  %v2271 = vmax.f32 %v2269, %v2270
  %v2272 = vsel %vm1032, %v185, -inf
  %v2273 = vrot.slane %v2272, 4
  %v2274 = vmax.f32 %v2272, %v2273
  %v2275 = vrot.slane %v2274, 2
  %v2276 = vmax.f32 %v2274, %v2275
  %v2277 = vrot.slane %v2276, 1
  %v2278 = vmax.f32 %v2276, %v2277
  %v2279 = vsel %vm1032, %v186, -inf
  %v2280 = vrot.slane %v2279, 4
  %v2281 = vmax.f32 %v2279, %v2280
  %v2282 = vrot.slane %v2281, 2
  %v2283 = vmax.f32 %v2281, %v2282
  %v2284 = vrot.slane %v2283, 1
  %v2285 = vmax.f32 %v2283, %v2284
  %v2286 = vsel %vm1032, %v187, -inf
  %v2287 = vrot.slane %v2286, 4
  %v2288 = vmax.f32 %v2286, %v2287
  %v2289 = vrot.slane %v2288, 2
  %v2290 = vmax.f32 %v2288, %v2289
  %v2291 = vrot.slane %v2290, 1
  %v2292 = vmax.f32 %v2290, %v2291
  %v2293 = vsel %vm1032, %v188, -inf
  %v2294 = vrot.slane %v2293, 4
  %v2295 = vmax.f32 %v2293, %v2294
  %v2296 = vrot.slane %v2295, 2
  %v2297 = vmax.f32 %v2295, %v2296
  %v2298 = vrot.slane %v2297, 1
  %v2299 = vmax.f32 %v2297, %v2298
  %v2300 = vsel %vm1032, %v189, -inf
  %v2301 = vrot.slane %v2300, 4
  %v2302 = vmax.f32 %v2300, %v2301
  %v2303 = vrot.slane %v2302, 2
  %v2304 = vmax.f32 %v2302, %v2303
  %v2305 = vrot.slane %v2304, 1
  %v2306 = vmax.f32 %v2304, %v2305
  %v2307 = vsel %vm1032, %v190, -inf
  %v2308 = vrot.slane %v2307, 4
  %v2309 = vmax.f32 %v2307, %v2308
  %v2310 = vrot.slane %v2309, 2
  %v2311 = vmax.f32 %v2309, %v2310
  %v2312 = vrot.slane %v2311, 1
  %v2313 = vmax.f32 %v2311, %v2312
  %v2314 = vsel %vm1032, %v191, -inf
  %v2315 = vrot.slane %v2314, 4
  %v2316 = vmax.f32 %v2314, %v2315
  %v2317 = vrot.slane %v2316, 2
  %v2318 = vmax.f32 %v2316, %v2317
  %v2319 = vrot.slane %v2318, 1
  %v2320 = vmax.f32 %v2318, %v2319
  %v2321 = vsel %vm1032, %v192, -inf
  %v2322 = vrot.slane %v2321, 4
  %v2323 = vmax.f32 %v2321, %v2322
  %v2324 = vrot.slane %v2323, 2
  %v2325 = vmax.f32 %v2323, %v2324
  %v2326 = vrot.slane %v2325, 1
  %v2327 = vmax.f32 %v2325, %v2326
  %v2328 = vsel %vm1032, %v193, -inf
  %v2329 = vrot.slane %v2328, 4
  %v2330 = vmax.f32 %v2328, %v2329
  %v2331 = vrot.slane %v2330, 2
  %v2332 = vmax.f32 %v2330, %v2331
  %v2333 = vrot.slane %v2332, 1
  %v2334 = vmax.f32 %v2332, %v2333
  %v2335 = vsel %vm1032, %v194, -inf
  %v2336 = vrot.slane %v2335, 4
  %v2337 = vmax.f32 %v2335, %v2336
  %v2338 = vrot.slane %v2337, 2
  %v2339 = vmax.f32 %v2337, %v2338
  %v2340 = vrot.slane %v2339, 1
  %v2341 = vmax.f32 %v2339, %v2340
  %v2342 = vsel %vm1032, %v195, -inf
  %v2343 = vrot.slane %v2342, 4
  %v2344 = vmax.f32 %v2342, %v2343
  %v2345 = vrot.slane %v2344, 2
  %v2346 = vmax.f32 %v2344, %v2345
  %v2347 = vrot.slane %v2346, 1
  %v2348 = vmax.f32 %v2346, %v2347
  %v2349 = vsel %vm1032, %v196, -inf
  %v2350 = vrot.slane %v2349, 4
  %v2351 = vmax.f32 %v2349, %v2350
  %v2352 = vrot.slane %v2351, 2
  %v2353 = vmax.f32 %v2351, %v2352
  %v2354 = vrot.slane %v2353, 1
  %v2355 = vmax.f32 %v2353, %v2354
  %v2356 = vsel %vm1032, %v197, -inf
  %v2357 = vrot.slane %v2356, 4
  %v2358 = vmax.f32 %v2356, %v2357
  %v2359 = vrot.slane %v2358, 2
  %v2360 = vmax.f32 %v2358, %v2359
  %v2361 = vrot.slane %v2360, 1
  %v2362 = vmax.f32 %v2360, %v2361
  %v2363 = vsel %vm1032, %v198, -inf
  %v2364 = vrot.slane %v2363, 4
  %v2365 = vmax.f32 %v2363, %v2364
  %v2366 = vrot.slane %v2365, 2
  %v2367 = vmax.f32 %v2365, %v2366
  %v2368 = vrot.slane %v2367, 1
  %v2369 = vmax.f32 %v2367, %v2368
  %v2370 = vsel %vm1032, %v199, -inf
  %v2371 = vrot.slane %v2370, 4
  %v2372 = vmax.f32 %v2370, %v2371
  %v2373 = vrot.slane %v2372, 2
  %v2374 = vmax.f32 %v2372, %v2373
  %v2375 = vrot.slane %v2374, 1
  %v2376 = vmax.f32 %v2374, %v2375
  %v2377 = vsel %vm1032, %v200, -inf
  %v2378 = vrot.slane %v2377, 4
  %v2379 = vmax.f32 %v2377, %v2378
  %v2380 = vrot.slane %v2379, 2
  %v2381 = vmax.f32 %v2379, %v2380
  %v2382 = vrot.slane %v2381, 1
  %v2383 = vmax.f32 %v2381, %v2382
  %v2384 = vsel %vm1032, %v201, -inf
  %v2385 = vrot.slane %v2384, 4
  %v2386 = vmax.f32 %v2384, %v2385
  %v2387 = vrot.slane %v2386, 2
  %v2388 = vmax.f32 %v2386, %v2387
  %v2389 = vrot.slane %v2388, 1
  %v2390 = vmax.f32 %v2388, %v2389
  %v2391 = vsel %vm1032, %v202, -inf
  %v2392 = vrot.slane %v2391, 4
  %v2393 = vmax.f32 %v2391, %v2392
  %v2394 = vrot.slane %v2393, 2
  %v2395 = vmax.f32 %v2393, %v2394
  %v2396 = vrot.slane %v2395, 1
  %v2397 = vmax.f32 %v2395, %v2396
  %v2398 = vsel %vm1032, %v203, -inf
  %v2399 = vrot.slane %v2398, 4
  %v2400 = vmax.f32 %v2398, %v2399
  %v2401 = vrot.slane %v2400, 2
  %v2402 = vmax.f32 %v2400, %v2401
  %v2403 = vrot.slane %v2402, 1
  %v2404 = vmax.f32 %v2402, %v2403
  %v2405 = vsel %vm1032, %v204, -inf
  %v2406 = vrot.slane %v2405, 4
  %v2407 = vmax.f32 %v2405, %v2406
  %v2408 = vrot.slane %v2407, 2
  %v2409 = vmax.f32 %v2407, %v2408
  %v2410 = vrot.slane %v2409, 1
  %v2411 = vmax.f32 %v2409, %v2410
  %v2412 = vsel %vm1032, %v205, -inf
  %v2413 = vrot.slane %v2412, 4
  %v2414 = vmax.f32 %v2412, %v2413
  %v2415 = vrot.slane %v2414, 2
  %v2416 = vmax.f32 %v2414, %v2415
  %v2417 = vrot.slane %v2416, 1
  %v2418 = vmax.f32 %v2416, %v2417
  %v2419 = vsel %vm1032, %v206, -inf
  %v2420 = vrot.slane %v2419, 4
  %v2421 = vmax.f32 %v2419, %v2420
  %v2422 = vrot.slane %v2421, 2
  %v2423 = vmax.f32 %v2421, %v2422
  %v2424 = vrot.slane %v2423, 1
  %v2425 = vmax.f32 %v2423, %v2424
  %v2426 = vsel %vm1032, %v207, -inf
  %v2427 = vrot.slane %v2426, 4
  %v2428 = vmax.f32 %v2426, %v2427
  %v2429 = vrot.slane %v2428, 2
  %v2430 = vmax.f32 %v2428, %v2429
  %v2431 = vrot.slane %v2430, 1
  %v2432 = vmax.f32 %v2430, %v2431
  %v2433 = vsel %vm1032, %v208, -inf
  %v2434 = vrot.slane %v2433, 4
  %v2435 = vmax.f32 %v2433, %v2434
  %v2436 = vrot.slane %v2435, 2
  %v2437 = vmax.f32 %v2435, %v2436
  %v2438 = vrot.slane %v2437, 1
  %v2439 = vmax.f32 %v2437, %v2438
  %v2440 = vsel %vm1032, %v209, -inf
  %v2441 = vrot.slane %v2440, 4
  %v2442 = vmax.f32 %v2440, %v2441
  %v2443 = vrot.slane %v2442, 2
  %v2444 = vmax.f32 %v2442, %v2443
  %v2445 = vrot.slane %v2444, 1
  %v2446 = vmax.f32 %v2444, %v2445
  %v2447 = vsel %vm1032, %v210, -inf
  %v2448 = vrot.slane %v2447, 4
  %v2449 = vmax.f32 %v2447, %v2448
  %v2450 = vrot.slane %v2449, 2
  %v2451 = vmax.f32 %v2449, %v2450
  %v2452 = vrot.slane %v2451, 1
  %v2453 = vmax.f32 %v2451, %v2452
  %v2454 = vsel %vm1032, %v211, -inf
  %v2455 = vrot.slane %v2454, 4
  %v2456 = vmax.f32 %v2454, %v2455
  %v2457 = vrot.slane %v2456, 2
  %v2458 = vmax.f32 %v2456, %v2457
  %v2459 = vrot.slane %v2458, 1
  %v2460 = vmax.f32 %v2458, %v2459
  %v2461 = vsel %vm1032, %v212, -inf
  %v2462 = vrot.slane %v2461, 4
  %v2463 = vmax.f32 %v2461, %v2462
  %v2464 = vrot.slane %v2463, 2
  %v2465 = vmax.f32 %v2463, %v2464
  %v2466 = vrot.slane %v2465, 1
  %v2467 = vmax.f32 %v2465, %v2466
  %v2468 = vsel %vm1032, %v213, -inf
  %v2469 = vrot.slane %v2468, 4
  %v2470 = vmax.f32 %v2468, %v2469
  %v2471 = vrot.slane %v2470, 2
  %v2472 = vmax.f32 %v2470, %v2471
  %v2473 = vrot.slane %v2472, 1
  %v2474 = vmax.f32 %v2472, %v2473
  %v2475 = vsel %vm1032, %v214, -inf
  %v2476 = vrot.slane %v2475, 4
  %v2477 = vmax.f32 %v2475, %v2476
  %v2478 = vrot.slane %v2477, 2
  %v2479 = vmax.f32 %v2477, %v2478
  %v2480 = vrot.slane %v2479, 1
  %v2481 = vmax.f32 %v2479, %v2480
  %v2482 = vsel %vm1032, %v215, -inf
  %v2483 = vrot.slane %v2482, 4
  %v2484 = vmax.f32 %v2482, %v2483
  %v2485 = vrot.slane %v2484, 2
  %v2486 = vmax.f32 %v2484, %v2485
  %v2487 = vrot.slane %v2486, 1
  %v2488 = vmax.f32 %v2486, %v2487
  %v2489 = vsel %vm1032, %v216, -inf
  %v2490 = vrot.slane %v2489, 4
  %v2491 = vmax.f32 %v2489, %v2490
  %v2492 = vrot.slane %v2491, 2
  %v2493 = vmax.f32 %v2491, %v2492
  %v2494 = vrot.slane %v2493, 1
  %v2495 = vmax.f32 %v2493, %v2494
  %v2496 = vsel %vm1032, %v217, -inf
  %v2497 = vrot.slane %v2496, 4
  %v2498 = vmax.f32 %v2496, %v2497
  %v2499 = vrot.slane %v2498, 2
  %v2500 = vmax.f32 %v2498, %v2499
  %v2501 = vrot.slane %v2500, 1
  %v2502 = vmax.f32 %v2500, %v2501
  %v2503 = vsel %vm1032, %v218, -inf
  %v2504 = vrot.slane %v2503, 4
  %v2505 = vmax.f32 %v2503, %v2504
  %v2506 = vrot.slane %v2505, 2
  %v2507 = vmax.f32 %v2505, %v2506
  %v2508 = vrot.slane %v2507, 1
  %v2509 = vmax.f32 %v2507, %v2508
  %v2510 = vsel %vm1032, %v219, -inf
  %v2511 = vrot.slane %v2510, 4
  %v2512 = vmax.f32 %v2510, %v2511
  %v2513 = vrot.slane %v2512, 2
  %v2514 = vmax.f32 %v2512, %v2513
  %v2515 = vrot.slane %v2514, 1
  %v2516 = vmax.f32 %v2514, %v2515
  %v2517 = vsel %vm1032, %v220, -inf
  %v2518 = vrot.slane %v2517, 4
  %v2519 = vmax.f32 %v2517, %v2518
  %v2520 = vrot.slane %v2519, 2
  %v2521 = vmax.f32 %v2519, %v2520
  %v2522 = vrot.slane %v2521, 1
  %v2523 = vmax.f32 %v2521, %v2522
  %v2524 = vsel %vm1032, %v221, -inf
  %v2525 = vrot.slane %v2524, 4
  %v2526 = vmax.f32 %v2524, %v2525
  %v2527 = vrot.slane %v2526, 2
  %v2528 = vmax.f32 %v2526, %v2527
  %v2529 = vrot.slane %v2528, 1
  %v2530 = vmax.f32 %v2528, %v2529
  %v2531 = vsel %vm1032, %v222, -inf
  %v2532 = vrot.slane %v2531, 4
  %v2533 = vmax.f32 %v2531, %v2532
  %v2534 = vrot.slane %v2533, 2
  %v2535 = vmax.f32 %v2533, %v2534
  %v2536 = vrot.slane %v2535, 1
  %v2537 = vmax.f32 %v2535, %v2536
  %v2538 = vsel %vm1032, %v223, -inf
  %v2539 = vrot.slane %v2538, 4
  %v2540 = vmax.f32 %v2538, %v2539
  %v2541 = vrot.slane %v2540, 2
  %v2542 = vmax.f32 %v2540, %v2541
  %v2543 = vrot.slane %v2542, 1
  %v2544 = vmax.f32 %v2542, %v2543
  %v2545 = vsel %vm1032, %v224, -inf
  %v2546 = vrot.slane %v2545, 4
  %v2547 = vmax.f32 %v2545, %v2546
  %v2548 = vrot.slane %v2547, 2
  %v2549 = vmax.f32 %v2547, %v2548
  %v2550 = vrot.slane %v2549, 1
  %v2551 = vmax.f32 %v2549, %v2550
  %v2552 = vsel %vm1032, %v225, -inf
  %v2553 = vrot.slane %v2552, 4
  %v2554 = vmax.f32 %v2552, %v2553
  %v2555 = vrot.slane %v2554, 2
  %v2556 = vmax.f32 %v2554, %v2555
  %v2557 = vrot.slane %v2556, 1
  %v2558 = vmax.f32 %v2556, %v2557
  %v2559 = vsel %vm1032, %v226, -inf
  %v2560 = vrot.slane %v2559, 4
  %v2561 = vmax.f32 %v2559, %v2560
  %v2562 = vrot.slane %v2561, 2
  %v2563 = vmax.f32 %v2561, %v2562
  %v2564 = vrot.slane %v2563, 1
  %v2565 = vmax.f32 %v2563, %v2564
  %v2566 = vsel %vm1032, %v227, -inf
  %v2567 = vrot.slane %v2566, 4
  %v2568 = vmax.f32 %v2566, %v2567
  %v2569 = vrot.slane %v2568, 2
  %v2570 = vmax.f32 %v2568, %v2569
  %v2571 = vrot.slane %v2570, 1
  %v2572 = vmax.f32 %v2570, %v2571
  %v2573 = vsel %vm1032, %v228, -inf
  %v2574 = vrot.slane %v2573, 4
  %v2575 = vmax.f32 %v2573, %v2574
  %v2576 = vrot.slane %v2575, 2
  %v2577 = vmax.f32 %v2575, %v2576
  %v2578 = vrot.slane %v2577, 1
  %v2579 = vmax.f32 %v2577, %v2578
  %v2580 = vsel %vm1032, %v229, -inf
  %v2581 = vrot.slane %v2580, 4
  %v2582 = vmax.f32 %v2580, %v2581
  %v2583 = vrot.slane %v2582, 2
  %v2584 = vmax.f32 %v2582, %v2583
  %v2585 = vrot.slane %v2584, 1
  %v2586 = vmax.f32 %v2584, %v2585
  %v2587 = vsel %vm1032, %v230, -inf
  %v2588 = vrot.slane %v2587, 4
  %v2589 = vmax.f32 %v2587, %v2588
  %v2590 = vrot.slane %v2589, 2
  %v2591 = vmax.f32 %v2589, %v2590
  %v2592 = vrot.slane %v2591, 1
  %v2593 = vmax.f32 %v2591, %v2592
  %v2594 = vsel %vm1032, %v231, -inf
  %v2595 = vrot.slane %v2594, 4
  %v2596 = vmax.f32 %v2594, %v2595
  %v2597 = vrot.slane %v2596, 2
  %v2598 = vmax.f32 %v2596, %v2597
  %v2599 = vrot.slane %v2598, 1
  %v2600 = vmax.f32 %v2598, %v2599
  %v2601 = vsel %vm1032, %v232, -inf
  %v2602 = vrot.slane %v2601, 4
  %v2603 = vmax.f32 %v2601, %v2602
  %v2604 = vrot.slane %v2603, 2
  %v2605 = vmax.f32 %v2603, %v2604
  %v2606 = vrot.slane %v2605, 1
  %v2607 = vmax.f32 %v2605, %v2606
  %v2608 = vsel %vm1032, %v233, -inf
  %v2609 = vrot.slane %v2608, 4
  %v2610 = vmax.f32 %v2608, %v2609
  %v2611 = vrot.slane %v2610, 2
  %v2612 = vmax.f32 %v2610, %v2611
  %v2613 = vrot.slane %v2612, 1
  %v2614 = vmax.f32 %v2612, %v2613
  %v2615 = vsel %vm1032, %v234, -inf
  %v2616 = vrot.slane %v2615, 4
  %v2617 = vmax.f32 %v2615, %v2616
  %v2618 = vrot.slane %v2617, 2
  %v2619 = vmax.f32 %v2617, %v2618
  %v2620 = vrot.slane %v2619, 1
  %v2621 = vmax.f32 %v2619, %v2620
  %v2622 = vsel %vm1032, %v235, -inf
  %v2623 = vrot.slane %v2622, 4
  %v2624 = vmax.f32 %v2622, %v2623
  %v2625 = vrot.slane %v2624, 2
  %v2626 = vmax.f32 %v2624, %v2625
  %v2627 = vrot.slane %v2626, 1
  %v2628 = vmax.f32 %v2626, %v2627
  %v2629 = vsel %vm1032, %v236, -inf
  %v2630 = vrot.slane %v2629, 4
  %v2631 = vmax.f32 %v2629, %v2630
  %v2632 = vrot.slane %v2631, 2
  %v2633 = vmax.f32 %v2631, %v2632
  %v2634 = vrot.slane %v2633, 1
  %v2635 = vmax.f32 %v2633, %v2634
  %v2636 = vsel %vm1032, %v237, -inf
  %v2637 = vrot.slane %v2636, 4
  %v2638 = vmax.f32 %v2636, %v2637
  %v2639 = vrot.slane %v2638, 2
  %v2640 = vmax.f32 %v2638, %v2639
  %v2641 = vrot.slane %v2640, 1
  %v2642 = vmax.f32 %v2640, %v2641
  %v2643 = vsel %vm1032, %v238, -inf
  %v2644 = vrot.slane %v2643, 4
  %v2645 = vmax.f32 %v2643, %v2644
  %v2646 = vrot.slane %v2645, 2
  %v2647 = vmax.f32 %v2645, %v2646
  %v2648 = vrot.slane %v2647, 1
  %v2649 = vmax.f32 %v2647, %v2648
  %v2650 = vsel %vm1032, %v239, -inf
  %v2651 = vrot.slane %v2650, 4
  %v2652 = vmax.f32 %v2650, %v2651
  %v2653 = vrot.slane %v2652, 2
  %v2654 = vmax.f32 %v2652, %v2653
  %v2655 = vrot.slane %v2654, 1
  %v2656 = vmax.f32 %v2654, %v2655
  %v2657 = vsel %vm1032, %v240, -inf
  %v2658 = vrot.slane %v2657, 4
  %v2659 = vmax.f32 %v2657, %v2658
  %v2660 = vrot.slane %v2659, 2
  %v2661 = vmax.f32 %v2659, %v2660
  %v2662 = vrot.slane %v2661, 1
  %v2663 = vmax.f32 %v2661, %v2662
  %v2664 = vsel %vm1032, %v241, -inf
  %v2665 = vrot.slane %v2664, 4
  %v2666 = vmax.f32 %v2664, %v2665
  %v2667 = vrot.slane %v2666, 2
  %v2668 = vmax.f32 %v2666, %v2667
  %v2669 = vrot.slane %v2668, 1
  %v2670 = vmax.f32 %v2668, %v2669
  %v2671 = vsel %vm1032, %v242, -inf
  %v2672 = vrot.slane %v2671, 4
  %v2673 = vmax.f32 %v2671, %v2672
  %v2674 = vrot.slane %v2673, 2
  %v2675 = vmax.f32 %v2673, %v2674
  %v2676 = vrot.slane %v2675, 1
  %v2677 = vmax.f32 %v2675, %v2676
  %v2678 = vsel %vm1032, %v243, -inf
  %v2679 = vrot.slane %v2678, 4
  %v2680 = vmax.f32 %v2678, %v2679
  %v2681 = vrot.slane %v2680, 2
  %v2682 = vmax.f32 %v2680, %v2681
  %v2683 = vrot.slane %v2682, 1
  %v2684 = vmax.f32 %v2682, %v2683
  %v2685 = vsel %vm1032, %v244, -inf
  %v2686 = vrot.slane %v2685, 4
  %v2687 = vmax.f32 %v2685, %v2686
  %v2688 = vrot.slane %v2687, 2
  %v2689 = vmax.f32 %v2687, %v2688
  %v2690 = vrot.slane %v2689, 1
  %v2691 = vmax.f32 %v2689, %v2690
  %v2692 = vsel %vm1032, %v245, -inf
  %v2693 = vrot.slane %v2692, 4
  %v2694 = vmax.f32 %v2692, %v2693
  %v2695 = vrot.slane %v2694, 2
  %v2696 = vmax.f32 %v2694, %v2695
  %v2697 = vrot.slane %v2696, 1
  %v2698 = vmax.f32 %v2696, %v2697
  %v2699 = vsel %vm1032, %v246, -inf
  %v2700 = vrot.slane %v2699, 4
  %v2701 = vmax.f32 %v2699, %v2700
  %v2702 = vrot.slane %v2701, 2
  %v2703 = vmax.f32 %v2701, %v2702
  %v2704 = vrot.slane %v2703, 1
  %v2705 = vmax.f32 %v2703, %v2704
  %v2706 = vsel %vm1032, %v247, -inf
  %v2707 = vrot.slane %v2706, 4
  %v2708 = vmax.f32 %v2706, %v2707
  %v2709 = vrot.slane %v2708, 2
  %v2710 = vmax.f32 %v2708, %v2709
  %v2711 = vrot.slane %v2710, 1
  %v2712 = vmax.f32 %v2710, %v2711
  %v2713 = vsel %vm1032, %v248, -inf
  %v2714 = vrot.slane %v2713, 4
  %v2715 = vmax.f32 %v2713, %v2714
  %v2716 = vrot.slane %v2715, 2
  %v2717 = vmax.f32 %v2715, %v2716
  %v2718 = vrot.slane %v2717, 1
  %v2719 = vmax.f32 %v2717, %v2718
  %v2720 = vsel %vm1032, %v249, -inf
  %v2721 = vrot.slane %v2720, 4
  %v2722 = vmax.f32 %v2720, %v2721
  %v2723 = vrot.slane %v2722, 2
  %v2724 = vmax.f32 %v2722, %v2723
  %v2725 = vrot.slane %v2724, 1
  %v2726 = vmax.f32 %v2724, %v2725
  %v2727 = vsel %vm1032, %v250, -inf
  %v2728 = vrot.slane %v2727, 4
  %v2729 = vmax.f32 %v2727, %v2728
  %v2730 = vrot.slane %v2729, 2
  %v2731 = vmax.f32 %v2729, %v2730
  %v2732 = vrot.slane %v2731, 1
  %v2733 = vmax.f32 %v2731, %v2732
  %v2734 = vsel %vm1032, %v251, -inf
  %v2735 = vrot.slane %v2734, 4
  %v2736 = vmax.f32 %v2734, %v2735
  %v2737 = vrot.slane %v2736, 2
  %v2738 = vmax.f32 %v2736, %v2737
  %v2739 = vrot.slane %v2738, 1
  %v2740 = vmax.f32 %v2738, %v2739
  %v2741 = vsel %vm1032, %v252, -inf
  %v2742 = vrot.slane %v2741, 4
  %v2743 = vmax.f32 %v2741, %v2742
  %v2744 = vrot.slane %v2743, 2
  %v2745 = vmax.f32 %v2743, %v2744
  %v2746 = vrot.slane %v2745, 1
  %v2747 = vmax.f32 %v2745, %v2746
  %v2748 = vsel %vm1032, %v253, -inf
  %v2749 = vrot.slane %v2748, 4
  %v2750 = vmax.f32 %v2748, %v2749
  %v2751 = vrot.slane %v2750, 2
  %v2752 = vmax.f32 %v2750, %v2751
  %v2753 = vrot.slane %v2752, 1
  %v2754 = vmax.f32 %v2752, %v2753
  %v2755 = vsel %vm1032, %v254, -inf
  %v2756 = vrot.slane %v2755, 4
  %v2757 = vmax.f32 %v2755, %v2756
  %v2758 = vrot.slane %v2757, 2
  %v2759 = vmax.f32 %v2757, %v2758
  %v2760 = vrot.slane %v2759, 1
  %v2761 = vmax.f32 %v2759, %v2760
  %v2762 = vsel %vm1032, %v255, -inf
  %v2763 = vrot.slane %v2762, 4
  %v2764 = vmax.f32 %v2762, %v2763
  %v2765 = vrot.slane %v2764, 2
  %v2766 = vmax.f32 %v2764, %v2765
  %v2767 = vrot.slane %v2766, 1
  %v2768 = vmax.f32 %v2766, %v2767
  %v2769 = vsel %vm1032, %v256, -inf
  %v2770 = vrot.slane %v2769, 4
  %v2771 = vmax.f32 %v2769, %v2770
  %v2772 = vrot.slane %v2771, 2
  %v2773 = vmax.f32 %v2771, %v2772
  %v2774 = vrot.slane %v2773, 1
  %v2775 = vmax.f32 %v2773, %v2774
  %v2776 = vsel %vm1032, %v257, -inf
  %v2777 = vrot.slane %v2776, 4
  %v2778 = vmax.f32 %v2776, %v2777
  %v2779 = vrot.slane %v2778, 2
  %v2780 = vmax.f32 %v2778, %v2779
  %v2781 = vrot.slane %v2780, 1
  %v2782 = vmax.f32 %v2780, %v2781
  %v2783 = vsel %vm1032, %v258, -inf
  %v2784 = vrot.slane %v2783, 4
  %v2785 = vmax.f32 %v2783, %v2784
  %v2786 = vrot.slane %v2785, 2
  %v2787 = vmax.f32 %v2785, %v2786
  %v2788 = vrot.slane %v2787, 1
  %v2789 = vmax.f32 %v2787, %v2788
  %v2790 = vsel %vm1032, %v259, -inf
  %v2791 = vrot.slane %v2790, 4
  %v2792 = vmax.f32 %v2790, %v2791
  %v2793 = vrot.slane %v2792, 2
  %v2794 = vmax.f32 %v2792, %v2793
  %v2795 = vrot.slane %v2794, 1
  %v2796 = vmax.f32 %v2794, %v2795
  %v2797 = vsel %vm1032, %v260, -inf
  %v2798 = vrot.slane %v2797, 4
  %v2799 = vmax.f32 %v2797, %v2798
  %v2800 = vrot.slane %v2799, 2
  %v2801 = vmax.f32 %v2799, %v2800
  %v2802 = vrot.slane %v2801, 1
  %v2803 = vmax.f32 %v2801, %v2802
  %v2804 = vsel %vm1032, %v261, -inf
  %v2805 = vrot.slane %v2804, 4
  %v2806 = vmax.f32 %v2804, %v2805
  %v2807 = vrot.slane %v2806, 2
  %v2808 = vmax.f32 %v2806, %v2807
  %v2809 = vrot.slane %v2808, 1
  %v2810 = vmax.f32 %v2808, %v2809
  %v2811 = vsel %vm1032, %v262, -inf
  %v2812 = vrot.slane %v2811, 4
  %v2813 = vmax.f32 %v2811, %v2812
  %v2814 = vrot.slane %v2813, 2
  %v2815 = vmax.f32 %v2813, %v2814
  %v2816 = vrot.slane %v2815, 1
  %v2817 = vmax.f32 %v2815, %v2816
  %v2818 = vsel %vm1032, %v263, -inf
  %v2819 = vrot.slane %v2818, 4
  %v2820 = vmax.f32 %v2818, %v2819
  %v2821 = vrot.slane %v2820, 2
  %v2822 = vmax.f32 %v2820, %v2821
  %v2823 = vrot.slane %v2822, 1
  %v2824 = vmax.f32 %v2822, %v2823
  %v2825 = vsel %vm1032, %v264, -inf
  %v2826 = vrot.slane %v2825, 4
  %v2827 = vmax.f32 %v2825, %v2826
  %v2828 = vrot.slane %v2827, 2
  %v2829 = vmax.f32 %v2827, %v2828
  %v2830 = vrot.slane %v2829, 1
  %v2831 = vmax.f32 %v2829, %v2830
  %v2832 = vsel %vm1032, %v265, -inf
  %v2833 = vrot.slane %v2832, 4
  %v2834 = vmax.f32 %v2832, %v2833
  %v2835 = vrot.slane %v2834, 2
  %v2836 = vmax.f32 %v2834, %v2835
  %v2837 = vrot.slane %v2836, 1
  %v2838 = vmax.f32 %v2836, %v2837
  %v2839 = vsel %vm1032, %v266, -inf
  %v2840 = vrot.slane %v2839, 4
  %v2841 = vmax.f32 %v2839, %v2840
  %v2842 = vrot.slane %v2841, 2
  %v2843 = vmax.f32 %v2841, %v2842
  %v2844 = vrot.slane %v2843, 1
  %v2845 = vmax.f32 %v2843, %v2844
  %v2846 = vsel %vm1032, %v267, -inf
  %v2847 = vrot.slane %v2846, 4
  %v2848 = vmax.f32 %v2846, %v2847
  %v2849 = vrot.slane %v2848, 2
  %v2850 = vmax.f32 %v2848, %v2849
  %v2851 = vrot.slane %v2850, 1
  %v2852 = vmax.f32 %v2850, %v2851
  %v2853 = vsel %vm1032, %v268, -inf
  %v2854 = vrot.slane %v2853, 4
  %v2855 = vmax.f32 %v2853, %v2854
  %v2856 = vrot.slane %v2855, 2
  %v2857 = vmax.f32 %v2855, %v2856
  %v2858 = vrot.slane %v2857, 1
  %v2859 = vmax.f32 %v2857, %v2858
  %v2860 = vsel %vm1032, %v269, -inf
  %v2861 = vrot.slane %v2860, 4
  %v2862 = vmax.f32 %v2860, %v2861
  %v2863 = vrot.slane %v2862, 2
  %v2864 = vmax.f32 %v2862, %v2863
  %v2865 = vrot.slane %v2864, 1
  %v2866 = vmax.f32 %v2864, %v2865
  %v2867 = vsel %vm1032, %v270, -inf
  %v2868 = vrot.slane %v2867, 4
  %v2869 = vmax.f32 %v2867, %v2868
  %v2870 = vrot.slane %v2869, 2
  %v2871 = vmax.f32 %v2869, %v2870
  %v2872 = vrot.slane %v2871, 1
  %v2873 = vmax.f32 %v2871, %v2872
  %v2874 = vsel %vm1032, %v271, -inf
  %v2875 = vrot.slane %v2874, 4
  %v2876 = vmax.f32 %v2874, %v2875
  %v2877 = vrot.slane %v2876, 2
  %v2878 = vmax.f32 %v2876, %v2877
  %v2879 = vrot.slane %v2878, 1
  %v2880 = vmax.f32 %v2878, %v2879
  %v2881 = vsel %vm1032, %v272, -inf
  %v2882 = vrot.slane %v2881, 4
  %v2883 = vmax.f32 %v2881, %v2882
  %v2884 = vrot.slane %v2883, 2
  %v2885 = vmax.f32 %v2883, %v2884
  %v2886 = vrot.slane %v2885, 1
  %v2887 = vmax.f32 %v2885, %v2886
  %v2888 = vsel %vm1032, %v273, -inf
  %v2889 = vrot.slane %v2888, 4
  %v2890 = vmax.f32 %v2888, %v2889
  %v2891 = vrot.slane %v2890, 2
  %v2892 = vmax.f32 %v2890, %v2891
  %v2893 = vrot.slane %v2892, 1
  %v2894 = vmax.f32 %v2892, %v2893
  %v2895 = vsel %vm1032, %v274, -inf
  %v2896 = vrot.slane %v2895, 4
  %v2897 = vmax.f32 %v2895, %v2896
  %v2898 = vrot.slane %v2897, 2
  %v2899 = vmax.f32 %v2897, %v2898
  %v2900 = vrot.slane %v2899, 1
  %v2901 = vmax.f32 %v2899, %v2900
  %v2902 = vsel %vm1032, %v275, -inf
  %v2903 = vrot.slane %v2902, 4
  %v2904 = vmax.f32 %v2902, %v2903
  %v2905 = vrot.slane %v2904, 2
  %v2906 = vmax.f32 %v2904, %v2905
  %v2907 = vrot.slane %v2906, 1
  %v2908 = vmax.f32 %v2906, %v2907
  %v2909 = vsel %vm1032, %v276, -inf
  %v2910 = vrot.slane %v2909, 4
  %v2911 = vmax.f32 %v2909, %v2910
  %v2912 = vrot.slane %v2911, 2
  %v2913 = vmax.f32 %v2911, %v2912
  %v2914 = vrot.slane %v2913, 1
  %v2915 = vmax.f32 %v2913, %v2914
  %v2916 = vsel %vm1032, %v277, -inf
  %v2917 = vrot.slane %v2916, 4
  %v2918 = vmax.f32 %v2916, %v2917
  %v2919 = vrot.slane %v2918, 2
  %v2920 = vmax.f32 %v2918, %v2919
  %v2921 = vrot.slane %v2920, 1
  %v2922 = vmax.f32 %v2920, %v2921
  %v2923 = vsel %vm1032, %v278, -inf
  %v2924 = vrot.slane %v2923, 4
  %v2925 = vmax.f32 %v2923, %v2924
  %v2926 = vrot.slane %v2925, 2
  %v2927 = vmax.f32 %v2925, %v2926
  %v2928 = vrot.slane %v2927, 1
  %v2929 = vmax.f32 %v2927, %v2928
  %v2930 = vsel %vm1032, %v279, -inf
  %v2931 = vrot.slane %v2930, 4
  %v2932 = vmax.f32 %v2930, %v2931
  %v2933 = vrot.slane %v2932, 2
  %v2934 = vmax.f32 %v2932, %v2933
  %v2935 = vrot.slane %v2934, 1
  %v2936 = vmax.f32 %v2934, %v2935
  %v2937 = vsel %vm1032, %v280, -inf
  %v2938 = vrot.slane %v2937, 4
  %v2939 = vmax.f32 %v2937, %v2938
  %v2940 = vrot.slane %v2939, 2
  %v2941 = vmax.f32 %v2939, %v2940
  %v2942 = vrot.slane %v2941, 1
  %v2943 = vmax.f32 %v2941, %v2942
  %v2944 = vsel %vm1032, %v281, -inf
  %v2945 = vrot.slane %v2944, 4
  %v2946 = vmax.f32 %v2944, %v2945
  %v2947 = vrot.slane %v2946, 2
  %v2948 = vmax.f32 %v2946, %v2947
  %v2949 = vrot.slane %v2948, 1
  %v2950 = vmax.f32 %v2948, %v2949
  %v2951 = vsel %vm1032, %v282, -inf
  %v2952 = vrot.slane %v2951, 4
  %v2953 = vmax.f32 %v2951, %v2952
  %v2954 = vrot.slane %v2953, 2
  %v2955 = vmax.f32 %v2953, %v2954
  %v2956 = vrot.slane %v2955, 1
  %v2957 = vmax.f32 %v2955, %v2956
  %v2958 = vsel %vm1032, %v283, -inf
  %v2959 = vrot.slane %v2958, 4
  %v2960 = vmax.f32 %v2958, %v2959
  %v2961 = vrot.slane %v2960, 2
  %v2962 = vmax.f32 %v2960, %v2961
  %v2963 = vrot.slane %v2962, 1
  %v2964 = vmax.f32 %v2962, %v2963
  %v2965 = vsel %vm1032, %v284, -inf
  %v2966 = vrot.slane %v2965, 4
  %v2967 = vmax.f32 %v2965, %v2966
  %v2968 = vrot.slane %v2967, 2
  %v2969 = vmax.f32 %v2967, %v2968
  %v2970 = vrot.slane %v2969, 1
  %v2971 = vmax.f32 %v2969, %v2970
  %v2972 = vsel %vm1032, %v285, -inf
  %v2973 = vrot.slane %v2972, 4
  %v2974 = vmax.f32 %v2972, %v2973
  %v2975 = vrot.slane %v2974, 2
  %v2976 = vmax.f32 %v2974, %v2975
  %v2977 = vrot.slane %v2976, 1
  %v2978 = vmax.f32 %v2976, %v2977
  %v2979 = vsel %vm1032, %v286, -inf
  %v2980 = vrot.slane %v2979, 4
  %v2981 = vmax.f32 %v2979, %v2980
  %v2982 = vrot.slane %v2981, 2
  %v2983 = vmax.f32 %v2981, %v2982
  %v2984 = vrot.slane %v2983, 1
  %v2985 = vmax.f32 %v2983, %v2984
  %v2986 = vsel %vm1032, %v287, -inf
  %v2987 = vrot.slane %v2986, 4
  %v2988 = vmax.f32 %v2986, %v2987
  %v2989 = vrot.slane %v2988, 2
  %v2990 = vmax.f32 %v2988, %v2989
  %v2991 = vrot.slane %v2990, 1
  %v2992 = vmax.f32 %v2990, %v2991
  %v2993 = vsel %vm1032, %v288, -inf
  %v2994 = vrot.slane %v2993, 4
  %v2995 = vmax.f32 %v2993, %v2994
  %v2996 = vrot.slane %v2995, 2
  %v2997 = vmax.f32 %v2995, %v2996
  %v2998 = vrot.slane %v2997, 1
  %v2999 = vmax.f32 %v2997, %v2998
  %v3000 = vsel %vm1032, %v289, -inf
  %v3001 = vrot.slane %v3000, 4
  %v3002 = vmax.f32 %v3000, %v3001
  %v3003 = vrot.slane %v3002, 2
  %v3004 = vmax.f32 %v3002, %v3003
  %v3005 = vrot.slane %v3004, 1
  %v3006 = vmax.f32 %v3004, %v3005
  %v3007 = vsel %vm1032, %v290, -inf
  %v3008 = vrot.slane %v3007, 4
  %v3009 = vmax.f32 %v3007, %v3008
  %v3010 = vrot.slane %v3009, 2
  %v3011 = vmax.f32 %v3009, %v3010
  %v3012 = vrot.slane %v3011, 1
  %v3013 = vmax.f32 %v3011, %v3012
  %v3014 = vsel %vm1032, %v291, -inf
  %v3015 = vrot.slane %v3014, 4
  %v3016 = vmax.f32 %v3014, %v3015
  %v3017 = vrot.slane %v3016, 2
  %v3018 = vmax.f32 %v3016, %v3017
  %v3019 = vrot.slane %v3018, 1
  %v3020 = vmax.f32 %v3018, %v3019
  %v3021 = vsel %vm1032, %v292, -inf
  %v3022 = vrot.slane %v3021, 4
  %v3023 = vmax.f32 %v3021, %v3022
  %v3024 = vrot.slane %v3023, 2
  %v3025 = vmax.f32 %v3023, %v3024
  %v3026 = vrot.slane %v3025, 1
  %v3027 = vmax.f32 %v3025, %v3026
  %v3028 = vsel %vm1032, %v293, -inf
  %v3029 = vrot.slane %v3028, 4
  %v3030 = vmax.f32 %v3028, %v3029
  %v3031 = vrot.slane %v3030, 2
  %v3032 = vmax.f32 %v3030, %v3031
  %v3033 = vrot.slane %v3032, 1
  %v3034 = vmax.f32 %v3032, %v3033
  %v3035 = vsel %vm1032, %v294, -inf
  %v3036 = vrot.slane %v3035, 4
  %v3037 = vmax.f32 %v3035, %v3036
  %v3038 = vrot.slane %v3037, 2
  %v3039 = vmax.f32 %v3037, %v3038
  %v3040 = vrot.slane %v3039, 1
  %v3041 = vmax.f32 %v3039, %v3040
  %v3042 = vsel %vm1032, %v295, -inf
  %v3043 = vrot.slane %v3042, 4
  %v3044 = vmax.f32 %v3042, %v3043
  %v3045 = vrot.slane %v3044, 2
  %v3046 = vmax.f32 %v3044, %v3045
  %v3047 = vrot.slane %v3046, 1
  %v3048 = vmax.f32 %v3046, %v3047
  %v3049 = vsel %vm1032, %v296, -inf
  %v3050 = vrot.slane %v3049, 4
  %v3051 = vmax.f32 %v3049, %v3050
  %v3052 = vrot.slane %v3051, 2
  %v3053 = vmax.f32 %v3051, %v3052
  %v3054 = vrot.slane %v3053, 1
  %v3055 = vmax.f32 %v3053, %v3054
  %v3056 = vsel %vm1032, %v297, -inf
  %v3057 = vrot.slane %v3056, 4
  %v3058 = vmax.f32 %v3056, %v3057
  %v3059 = vrot.slane %v3058, 2
  %v3060 = vmax.f32 %v3058, %v3059
  %v3061 = vrot.slane %v3060, 1
  %v3062 = vmax.f32 %v3060, %v3061
  %v3063 = vsel %vm1032, %v298, -inf
  %v3064 = vrot.slane %v3063, 4
  %v3065 = vmax.f32 %v3063, %v3064
  %v3066 = vrot.slane %v3065, 2
  %v3067 = vmax.f32 %v3065, %v3066
  %v3068 = vrot.slane %v3067, 1
  %v3069 = vmax.f32 %v3067, %v3068
  %v3070 = vsel %vm1032, %v299, -inf
  %v3071 = vrot.slane %v3070, 4
  %v3072 = vmax.f32 %v3070, %v3071
  %v3073 = vrot.slane %v3072, 2
  %v3074 = vmax.f32 %v3072, %v3073
  %v3075 = vrot.slane %v3074, 1
  %v3076 = vmax.f32 %v3074, %v3075
  %v3077 = vsel %vm1032, %v300, -inf
  %v3078 = vrot.slane %v3077, 4
  %v3079 = vmax.f32 %v3077, %v3078
  %v3080 = vrot.slane %v3079, 2
  %v3081 = vmax.f32 %v3079, %v3080
  %v3082 = vrot.slane %v3081, 1
  %v3083 = vmax.f32 %v3081, %v3082
  %v3084 = vsel %vm1032, %v301, -inf
  %v3085 = vrot.slane %v3084, 4
  %v3086 = vmax.f32 %v3084, %v3085
  %v3087 = vrot.slane %v3086, 2
  %v3088 = vmax.f32 %v3086, %v3087
  %v3089 = vrot.slane %v3088, 1
  %v3090 = vmax.f32 %v3088, %v3089
  %v3091 = vsel %vm1032, %v302, -inf
  %v3092 = vrot.slane %v3091, 4
  %v3093 = vmax.f32 %v3091, %v3092
  %v3094 = vrot.slane %v3093, 2
  %v3095 = vmax.f32 %v3093, %v3094
  %v3096 = vrot.slane %v3095, 1
  %v3097 = vmax.f32 %v3095, %v3096
  %v3098 = vsel %vm1032, %v303, -inf
  %v3099 = vrot.slane %v3098, 4
  %v3100 = vmax.f32 %v3098, %v3099
  %v3101 = vrot.slane %v3100, 2
  %v3102 = vmax.f32 %v3100, %v3101
  %v3103 = vrot.slane %v3102, 1
  %v3104 = vmax.f32 %v3102, %v3103
  %v3105 = vsel %vm1032, %v304, -inf
  %v3106 = vrot.slane %v3105, 4
  %v3107 = vmax.f32 %v3105, %v3106
  %v3108 = vrot.slane %v3107, 2
  %v3109 = vmax.f32 %v3107, %v3108
  %v3110 = vrot.slane %v3109, 1
  %v3111 = vmax.f32 %v3109, %v3110
  %v3112 = vsel %vm1032, %v305, -inf
  %v3113 = vrot.slane %v3112, 4
  %v3114 = vmax.f32 %v3112, %v3113
  %v3115 = vrot.slane %v3114, 2
  %v3116 = vmax.f32 %v3114, %v3115
  %v3117 = vrot.slane %v3116, 1
  %v3118 = vmax.f32 %v3116, %v3117
  %v3119 = vsel %vm1032, %v306, -inf
  %v3120 = vrot.slane %v3119, 4
  %v3121 = vmax.f32 %v3119, %v3120
  %v3122 = vrot.slane %v3121, 2
  %v3123 = vmax.f32 %v3121, %v3122
  %v3124 = vrot.slane %v3123, 1
  %v3125 = vmax.f32 %v3123, %v3124
  %v3126 = vsel %vm1032, %v307, -inf
  %v3127 = vrot.slane %v3126, 4
  %v3128 = vmax.f32 %v3126, %v3127
  %v3129 = vrot.slane %v3128, 2
  %v3130 = vmax.f32 %v3128, %v3129
  %v3131 = vrot.slane %v3130, 1
  %v3132 = vmax.f32 %v3130, %v3131
  %v3133 = vsel %vm1032, %v308, -inf
  %v3134 = vrot.slane %v3133, 4
  %v3135 = vmax.f32 %v3133, %v3134
  %v3136 = vrot.slane %v3135, 2
  %v3137 = vmax.f32 %v3135, %v3136
  %v3138 = vrot.slane %v3137, 1
  %v3139 = vmax.f32 %v3137, %v3138
  %v3140 = vsel %vm1032, %v309, -inf
  %v3141 = vrot.slane %v3140, 4
  %v3142 = vmax.f32 %v3140, %v3141
  %v3143 = vrot.slane %v3142, 2
  %v3144 = vmax.f32 %v3142, %v3143
  %v3145 = vrot.slane %v3144, 1
  %v3146 = vmax.f32 %v3144, %v3145
  %v3147 = vsel %vm1032, %v310, -inf
  %v3148 = vrot.slane %v3147, 4
  %v3149 = vmax.f32 %v3147, %v3148
  %v3150 = vrot.slane %v3149, 2
  %v3151 = vmax.f32 %v3149, %v3150
  %v3152 = vrot.slane %v3151, 1
  %v3153 = vmax.f32 %v3151, %v3152
  %v3154 = vsel %vm1032, %v311, -inf
  %v3155 = vrot.slane %v3154, 4
  %v3156 = vmax.f32 %v3154, %v3155
  %v3157 = vrot.slane %v3156, 2
  %v3158 = vmax.f32 %v3156, %v3157
  %v3159 = vrot.slane %v3158, 1
  %v3160 = vmax.f32 %v3158, %v3159
  %v3161 = vsel %vm1032, %v312, -inf
  %v3162 = vrot.slane %v3161, 4
  %v3163 = vmax.f32 %v3161, %v3162
  %v3164 = vrot.slane %v3163, 2
  %v3165 = vmax.f32 %v3163, %v3164
  %v3166 = vrot.slane %v3165, 1
  %v3167 = vmax.f32 %v3165, %v3166
  %v3168 = vsel %vm1032, %v313, -inf
  %v3169 = vrot.slane %v3168, 4
  %v3170 = vmax.f32 %v3168, %v3169
  %v3171 = vrot.slane %v3170, 2
  %v3172 = vmax.f32 %v3170, %v3171
  %v3173 = vrot.slane %v3172, 1
  %v3174 = vmax.f32 %v3172, %v3173
  %v3175 = vsel %vm1032, %v314, -inf
  %v3176 = vrot.slane %v3175, 4
  %v3177 = vmax.f32 %v3175, %v3176
  %v3178 = vrot.slane %v3177, 2
  %v3179 = vmax.f32 %v3177, %v3178
  %v3180 = vrot.slane %v3179, 1
  %v3181 = vmax.f32 %v3179, %v3180
  %v3182 = vsel %vm1032, %v315, -inf
  %v3183 = vrot.slane %v3182, 4
  %v3184 = vmax.f32 %v3182, %v3183
  %v3185 = vrot.slane %v3184, 2
  %v3186 = vmax.f32 %v3184, %v3185
  %v3187 = vrot.slane %v3186, 1
  %v3188 = vmax.f32 %v3186, %v3187
  %v3189 = vsel %vm1032, %v316, -inf
  %v3190 = vrot.slane %v3189, 4
  %v3191 = vmax.f32 %v3189, %v3190
  %v3192 = vrot.slane %v3191, 2
  %v3193 = vmax.f32 %v3191, %v3192
  %v3194 = vrot.slane %v3193, 1
  %v3195 = vmax.f32 %v3193, %v3194
  %v3196 = vsel %vm1032, %v317, -inf
  %v3197 = vrot.slane %v3196, 4
  %v3198 = vmax.f32 %v3196, %v3197
  %v3199 = vrot.slane %v3198, 2
  %v3200 = vmax.f32 %v3198, %v3199
  %v3201 = vrot.slane %v3200, 1
  %v3202 = vmax.f32 %v3200, %v3201
  %v3203 = vsel %vm1032, %v318, -inf
  %v3204 = vrot.slane %v3203, 4
  %v3205 = vmax.f32 %v3203, %v3204
  %v3206 = vrot.slane %v3205, 2
  %v3207 = vmax.f32 %v3205, %v3206
  %v3208 = vrot.slane %v3207, 1
  %v3209 = vmax.f32 %v3207, %v3208
  %v3210 = vsel %vm1032, %v319, -inf
  %v3211 = vrot.slane %v3210, 4
  %v3212 = vmax.f32 %v3210, %v3211
  %v3213 = vrot.slane %v3212, 2
  %v3214 = vmax.f32 %v3212, %v3213
  %v3215 = vrot.slane %v3214, 1
  %v3216 = vmax.f32 %v3214, %v3215
  %v3217 = vsel %vm1032, %v320, -inf
  %v3218 = vrot.slane %v3217, 4
  %v3219 = vmax.f32 %v3217, %v3218
  %v3220 = vrot.slane %v3219, 2
  %v3221 = vmax.f32 %v3219, %v3220
  %v3222 = vrot.slane %v3221, 1
  %v3223 = vmax.f32 %v3221, %v3222
  %v3224 = vsel %vm1032, %v321, -inf
  %v3225 = vrot.slane %v3224, 4
  %v3226 = vmax.f32 %v3224, %v3225
  %v3227 = vrot.slane %v3226, 2
  %v3228 = vmax.f32 %v3226, %v3227
  %v3229 = vrot.slane %v3228, 1
  %v3230 = vmax.f32 %v3228, %v3229
  %v3231 = vsel %vm1032, %v322, -inf
  %v3232 = vrot.slane %v3231, 4
  %v3233 = vmax.f32 %v3231, %v3232
  %v3234 = vrot.slane %v3233, 2
  %v3235 = vmax.f32 %v3233, %v3234
  %v3236 = vrot.slane %v3235, 1
  %v3237 = vmax.f32 %v3235, %v3236
  %v3238 = vsel %vm1032, %v323, -inf
  %v3239 = vrot.slane %v3238, 4
  %v3240 = vmax.f32 %v3238, %v3239
  %v3241 = vrot.slane %v3240, 2
  %v3242 = vmax.f32 %v3240, %v3241
  %v3243 = vrot.slane %v3242, 1
  %v3244 = vmax.f32 %v3242, %v3243
  %v3245 = vsel %vm1032, %v324, -inf
  %v3246 = vrot.slane %v3245, 4
  %v3247 = vmax.f32 %v3245, %v3246
  %v3248 = vrot.slane %v3247, 2
  %v3249 = vmax.f32 %v3247, %v3248
  %v3250 = vrot.slane %v3249, 1
  %v3251 = vmax.f32 %v3249, %v3250
  %v3252 = vsel %vm1032, %v325, -inf
  %v3253 = vrot.slane %v3252, 4
  %v3254 = vmax.f32 %v3252, %v3253
  %v3255 = vrot.slane %v3254, 2
  %v3256 = vmax.f32 %v3254, %v3255
  %v3257 = vrot.slane %v3256, 1
  %v3258 = vmax.f32 %v3256, %v3257
  %v3259 = vsel %vm1032, %v326, -inf
  %v3260 = vrot.slane %v3259, 4
  %v3261 = vmax.f32 %v3259, %v3260
  %v3262 = vrot.slane %v3261, 2
  %v3263 = vmax.f32 %v3261, %v3262
  %v3264 = vrot.slane %v3263, 1
  %v3265 = vmax.f32 %v3263, %v3264
  %v3266 = vsel %vm1032, %v327, -inf
  %v3267 = vrot.slane %v3266, 4
  %v3268 = vmax.f32 %v3266, %v3267
  %v3269 = vrot.slane %v3268, 2
  %v3270 = vmax.f32 %v3268, %v3269
  %v3271 = vrot.slane %v3270, 1
  %v3272 = vmax.f32 %v3270, %v3271
  %v3273 = vsel %vm1032, %v328, -inf
  %v3274 = vrot.slane %v3273, 4
  %v3275 = vmax.f32 %v3273, %v3274
  %v3276 = vrot.slane %v3275, 2
  %v3277 = vmax.f32 %v3275, %v3276
  %v3278 = vrot.slane %v3277, 1
  %v3279 = vmax.f32 %v3277, %v3278
  %v3280 = vsel %vm1032, %v329, -inf
  %v3281 = vrot.slane %v3280, 4
  %v3282 = vmax.f32 %v3280, %v3281
  %v3283 = vrot.slane %v3282, 2
  %v3284 = vmax.f32 %v3282, %v3283
  %v3285 = vrot.slane %v3284, 1
  %v3286 = vmax.f32 %v3284, %v3285
  %v3287 = vsel %vm1032, %v330, -inf
  %v3288 = vrot.slane %v3287, 4
  %v3289 = vmax.f32 %v3287, %v3288
  %v3290 = vrot.slane %v3289, 2
  %v3291 = vmax.f32 %v3289, %v3290
  %v3292 = vrot.slane %v3291, 1
  %v3293 = vmax.f32 %v3291, %v3292
  %v3294 = vsel %vm1032, %v331, -inf
  %v3295 = vrot.slane %v3294, 4
  %v3296 = vmax.f32 %v3294, %v3295
  %v3297 = vrot.slane %v3296, 2
  %v3298 = vmax.f32 %v3296, %v3297
  %v3299 = vrot.slane %v3298, 1
  %v3300 = vmax.f32 %v3298, %v3299
  %v3301 = vsel %vm1032, %v332, -inf
  %v3302 = vrot.slane %v3301, 4
  %v3303 = vmax.f32 %v3301, %v3302
  %v3304 = vrot.slane %v3303, 2
  %v3305 = vmax.f32 %v3303, %v3304
  %v3306 = vrot.slane %v3305, 1
  %v3307 = vmax.f32 %v3305, %v3306
  %v3308 = vsel %vm1032, %v333, -inf
  %v3309 = vrot.slane %v3308, 4
  %v3310 = vmax.f32 %v3308, %v3309
  %v3311 = vrot.slane %v3310, 2
  %v3312 = vmax.f32 %v3310, %v3311
  %v3313 = vrot.slane %v3312, 1
  %v3314 = vmax.f32 %v3312, %v3313
  %v3315 = vsel %vm1032, %v334, -inf
  %v3316 = vrot.slane %v3315, 4
  %v3317 = vmax.f32 %v3315, %v3316
  %v3318 = vrot.slane %v3317, 2
  %v3319 = vmax.f32 %v3317, %v3318
  %v3320 = vrot.slane %v3319, 1
  %v3321 = vmax.f32 %v3319, %v3320
  %v3322 = vsel %vm1032, %v335, -inf
  %v3323 = vrot.slane %v3322, 4
  %v3324 = vmax.f32 %v3322, %v3323
  %v3325 = vrot.slane %v3324, 2
  %v3326 = vmax.f32 %v3324, %v3325
  %v3327 = vrot.slane %v3326, 1
  %v3328 = vmax.f32 %v3326, %v3327
  %v3329 = vsel %vm1032, %v336, -inf
  %v3330 = vrot.slane %v3329, 4
  %v3331 = vmax.f32 %v3329, %v3330
  %v3332 = vrot.slane %v3331, 2
  %v3333 = vmax.f32 %v3331, %v3332
  %v3334 = vrot.slane %v3333, 1
  %v3335 = vmax.f32 %v3333, %v3334
  %v3336 = vsel %vm1032, %v337, -inf
  %v3337 = vrot.slane %v3336, 4
  %v3338 = vmax.f32 %v3336, %v3337
  %v3339 = vrot.slane %v3338, 2
  %v3340 = vmax.f32 %v3338, %v3339
  %v3341 = vrot.slane %v3340, 1
  %v3342 = vmax.f32 %v3340, %v3341
  %v3343 = vsel %vm1032, %v338, -inf
  %v3344 = vrot.slane %v3343, 4
  %v3345 = vmax.f32 %v3343, %v3344
  %v3346 = vrot.slane %v3345, 2
  %v3347 = vmax.f32 %v3345, %v3346
  %v3348 = vrot.slane %v3347, 1
  %v3349 = vmax.f32 %v3347, %v3348
  %v3350 = vsel %vm1032, %v339, -inf
  %v3351 = vrot.slane %v3350, 4
  %v3352 = vmax.f32 %v3350, %v3351
  %v3353 = vrot.slane %v3352, 2
  %v3354 = vmax.f32 %v3352, %v3353
  %v3355 = vrot.slane %v3354, 1
  %v3356 = vmax.f32 %v3354, %v3355
  %v3357 = vsel %vm1032, %v340, -inf
  %v3358 = vrot.slane %v3357, 4
  %v3359 = vmax.f32 %v3357, %v3358
  %v3360 = vrot.slane %v3359, 2
  %v3361 = vmax.f32 %v3359, %v3360
  %v3362 = vrot.slane %v3361, 1
  %v3363 = vmax.f32 %v3361, %v3362
  %v3364 = vsel %vm1032, %v341, -inf
  %v3365 = vrot.slane %v3364, 4
  %v3366 = vmax.f32 %v3364, %v3365
  %v3367 = vrot.slane %v3366, 2
  %v3368 = vmax.f32 %v3366, %v3367
  %v3369 = vrot.slane %v3368, 1
  %v3370 = vmax.f32 %v3368, %v3369
  %v3371 = vsel %vm1032, %v342, -inf
  %v3372 = vrot.slane %v3371, 4
  %v3373 = vmax.f32 %v3371, %v3372
  %v3374 = vrot.slane %v3373, 2
  %v3375 = vmax.f32 %v3373, %v3374
  %v3376 = vrot.slane %v3375, 1
  %v3377 = vmax.f32 %v3375, %v3376
  %v3378 = vsel %vm1032, %v343, -inf
  %v3379 = vrot.slane %v3378, 4
  %v3380 = vmax.f32 %v3378, %v3379
  %v3381 = vrot.slane %v3380, 2
  %v3382 = vmax.f32 %v3380, %v3381
  %v3383 = vrot.slane %v3382, 1
  %v3384 = vmax.f32 %v3382, %v3383
  %v3385 = vsel %vm1032, %v344, -inf
  %v3386 = vrot.slane %v3385, 4
  %v3387 = vmax.f32 %v3385, %v3386
  %v3388 = vrot.slane %v3387, 2
  %v3389 = vmax.f32 %v3387, %v3388
  %v3390 = vrot.slane %v3389, 1
  %v3391 = vmax.f32 %v3389, %v3390
  %v3392 = vsel %vm1032, %v345, -inf
  %v3393 = vrot.slane %v3392, 4
  %v3394 = vmax.f32 %v3392, %v3393
  %v3395 = vrot.slane %v3394, 2
  %v3396 = vmax.f32 %v3394, %v3395
  %v3397 = vrot.slane %v3396, 1
  %v3398 = vmax.f32 %v3396, %v3397
  %v3399 = vsel %vm1032, %v346, -inf
  %v3400 = vrot.slane %v3399, 4
  %v3401 = vmax.f32 %v3399, %v3400
  %v3402 = vrot.slane %v3401, 2
  %v3403 = vmax.f32 %v3401, %v3402
  %v3404 = vrot.slane %v3403, 1
  %v3405 = vmax.f32 %v3403, %v3404
  %v3406 = vsel %vm1032, %v347, -inf
  %v3407 = vrot.slane %v3406, 4
  %v3408 = vmax.f32 %v3406, %v3407
  %v3409 = vrot.slane %v3408, 2
  %v3410 = vmax.f32 %v3408, %v3409
  %v3411 = vrot.slane %v3410, 1
  %v3412 = vmax.f32 %v3410, %v3411
  %v3413 = vsel %vm1032, %v348, -inf
  %v3414 = vrot.slane %v3413, 4
  %v3415 = vmax.f32 %v3413, %v3414
  %v3416 = vrot.slane %v3415, 2
  %v3417 = vmax.f32 %v3415, %v3416
  %v3418 = vrot.slane %v3417, 1
  %v3419 = vmax.f32 %v3417, %v3418
  %v3420 = vsel %vm1032, %v349, -inf
  %v3421 = vrot.slane %v3420, 4
  %v3422 = vmax.f32 %v3420, %v3421
  %v3423 = vrot.slane %v3422, 2
  %v3424 = vmax.f32 %v3422, %v3423
  %v3425 = vrot.slane %v3424, 1
  %v3426 = vmax.f32 %v3424, %v3425
  %v3427 = vsel %vm1032, %v350, -inf
  %v3428 = vrot.slane %v3427, 4
  %v3429 = vmax.f32 %v3427, %v3428
  %v3430 = vrot.slane %v3429, 2
  %v3431 = vmax.f32 %v3429, %v3430
  %v3432 = vrot.slane %v3431, 1
  %v3433 = vmax.f32 %v3431, %v3432
  %v3434 = vsel %vm1032, %v351, -inf
  %v3435 = vrot.slane %v3434, 4
  %v3436 = vmax.f32 %v3434, %v3435
  %v3437 = vrot.slane %v3436, 2
  %v3438 = vmax.f32 %v3436, %v3437
  %v3439 = vrot.slane %v3438, 1
  %v3440 = vmax.f32 %v3438, %v3439
  %v3441 = vsel %vm1032, %v352, -inf
  %v3442 = vrot.slane %v3441, 4
  %v3443 = vmax.f32 %v3441, %v3442
  %v3444 = vrot.slane %v3443, 2
  %v3445 = vmax.f32 %v3443, %v3444
  %v3446 = vrot.slane %v3445, 1
  %v3447 = vmax.f32 %v3445, %v3446
  %v3448 = vsel %vm1032, %v353, -inf
  %v3449 = vrot.slane %v3448, 4
  %v3450 = vmax.f32 %v3448, %v3449
  %v3451 = vrot.slane %v3450, 2
  %v3452 = vmax.f32 %v3450, %v3451
  %v3453 = vrot.slane %v3452, 1
  %v3454 = vmax.f32 %v3452, %v3453
  %v3455 = vsel %vm1032, %v354, -inf
  %v3456 = vrot.slane %v3455, 4
  %v3457 = vmax.f32 %v3455, %v3456
  %v3458 = vrot.slane %v3457, 2
  %v3459 = vmax.f32 %v3457, %v3458
  %v3460 = vrot.slane %v3459, 1
  %v3461 = vmax.f32 %v3459, %v3460
  %v3462 = vsel %vm1032, %v355, -inf
  %v3463 = vrot.slane %v3462, 4
  %v3464 = vmax.f32 %v3462, %v3463
  %v3465 = vrot.slane %v3464, 2
  %v3466 = vmax.f32 %v3464, %v3465
  %v3467 = vrot.slane %v3466, 1
  %v3468 = vmax.f32 %v3466, %v3467
  %v3469 = vsel %vm1032, %v356, -inf
  %v3470 = vrot.slane %v3469, 4
  %v3471 = vmax.f32 %v3469, %v3470
  %v3472 = vrot.slane %v3471, 2
  %v3473 = vmax.f32 %v3471, %v3472
  %v3474 = vrot.slane %v3473, 1
  %v3475 = vmax.f32 %v3473, %v3474
  %v3476 = vsel %vm1032, %v357, -inf
  %v3477 = vrot.slane %v3476, 4
  %v3478 = vmax.f32 %v3476, %v3477
  %v3479 = vrot.slane %v3478, 2
  %v3480 = vmax.f32 %v3478, %v3479
  %v3481 = vrot.slane %v3480, 1
  %v3482 = vmax.f32 %v3480, %v3481
  %v3483 = vsel %vm1032, %v358, -inf
  %v3484 = vrot.slane %v3483, 4
  %v3485 = vmax.f32 %v3483, %v3484
  %v3486 = vrot.slane %v3485, 2
  %v3487 = vmax.f32 %v3485, %v3486
  %v3488 = vrot.slane %v3487, 1
  %v3489 = vmax.f32 %v3487, %v3488
  %v3490 = vsel %vm1032, %v359, -inf
  %v3491 = vrot.slane %v3490, 4
  %v3492 = vmax.f32 %v3490, %v3491
  %v3493 = vrot.slane %v3492, 2
  %v3494 = vmax.f32 %v3492, %v3493
  %v3495 = vrot.slane %v3494, 1
  %v3496 = vmax.f32 %v3494, %v3495
  %v3497 = vsel %vm1032, %v360, -inf
  %v3498 = vrot.slane %v3497, 4
  %v3499 = vmax.f32 %v3497, %v3498
  %v3500 = vrot.slane %v3499, 2
  %v3501 = vmax.f32 %v3499, %v3500
  %v3502 = vrot.slane %v3501, 1
  %v3503 = vmax.f32 %v3501, %v3502
  %v3504 = vsel %vm1032, %v361, -inf
  %v3505 = vrot.slane %v3504, 4
  %v3506 = vmax.f32 %v3504, %v3505
  %v3507 = vrot.slane %v3506, 2
  %v3508 = vmax.f32 %v3506, %v3507
  %v3509 = vrot.slane %v3508, 1
  %v3510 = vmax.f32 %v3508, %v3509
  %v3511 = vsel %vm1032, %v362, -inf
  %v3512 = vrot.slane %v3511, 4
  %v3513 = vmax.f32 %v3511, %v3512
  %v3514 = vrot.slane %v3513, 2
  %v3515 = vmax.f32 %v3513, %v3514
  %v3516 = vrot.slane %v3515, 1
  %v3517 = vmax.f32 %v3515, %v3516
  %v3518 = vsel %vm1032, %v363, -inf
  %v3519 = vrot.slane %v3518, 4
  %v3520 = vmax.f32 %v3518, %v3519
  %v3521 = vrot.slane %v3520, 2
  %v3522 = vmax.f32 %v3520, %v3521
  %v3523 = vrot.slane %v3522, 1
  %v3524 = vmax.f32 %v3522, %v3523
  %v3525 = vsel %vm1032, %v364, -inf
  %v3526 = vrot.slane %v3525, 4
  %v3527 = vmax.f32 %v3525, %v3526
  %v3528 = vrot.slane %v3527, 2
  %v3529 = vmax.f32 %v3527, %v3528
  %v3530 = vrot.slane %v3529, 1
  %v3531 = vmax.f32 %v3529, %v3530
  %v3532 = vsel %vm1032, %v365, -inf
  %v3533 = vrot.slane %v3532, 4
  %v3534 = vmax.f32 %v3532, %v3533
  %v3535 = vrot.slane %v3534, 2
  %v3536 = vmax.f32 %v3534, %v3535
  %v3537 = vrot.slane %v3536, 1
  %v3538 = vmax.f32 %v3536, %v3537
  %v3539 = vsel %vm1032, %v366, -inf
  %v3540 = vrot.slane %v3539, 4
  %v3541 = vmax.f32 %v3539, %v3540
  %v3542 = vrot.slane %v3541, 2
  %v3543 = vmax.f32 %v3541, %v3542
  %v3544 = vrot.slane %v3543, 1
  %v3545 = vmax.f32 %v3543, %v3544
  %v3546 = vsel %vm1032, %v367, -inf
  %v3547 = vrot.slane %v3546, 4
  %v3548 = vmax.f32 %v3546, %v3547
  %v3549 = vrot.slane %v3548, 2
  %v3550 = vmax.f32 %v3548, %v3549
  %v3551 = vrot.slane %v3550, 1
  %v3552 = vmax.f32 %v3550, %v3551
  %v3553 = vsel %vm1032, %v368, -inf
  %v3554 = vrot.slane %v3553, 4
  %v3555 = vmax.f32 %v3553, %v3554
  %v3556 = vrot.slane %v3555, 2
  %v3557 = vmax.f32 %v3555, %v3556
  %v3558 = vrot.slane %v3557, 1
  %v3559 = vmax.f32 %v3557, %v3558
  %v3560 = vsel %vm1032, %v369, -inf
  %v3561 = vrot.slane %v3560, 4
  %v3562 = vmax.f32 %v3560, %v3561
  %v3563 = vrot.slane %v3562, 2
  %v3564 = vmax.f32 %v3562, %v3563
  %v3565 = vrot.slane %v3564, 1
  %v3566 = vmax.f32 %v3564, %v3565
  %v3567 = vsel %vm1032, %v370, -inf
  %v3568 = vrot.slane %v3567, 4
  %v3569 = vmax.f32 %v3567, %v3568
  %v3570 = vrot.slane %v3569, 2
  %v3571 = vmax.f32 %v3569, %v3570
  %v3572 = vrot.slane %v3571, 1
  %v3573 = vmax.f32 %v3571, %v3572
  %v3574 = vsel %vm1032, %v371, -inf
  %v3575 = vrot.slane %v3574, 4
  %v3576 = vmax.f32 %v3574, %v3575
  %v3577 = vrot.slane %v3576, 2
  %v3578 = vmax.f32 %v3576, %v3577
  %v3579 = vrot.slane %v3578, 1
  %v3580 = vmax.f32 %v3578, %v3579
  %v3581 = vsel %vm1032, %v372, -inf
  %v3582 = vrot.slane %v3581, 4
  %v3583 = vmax.f32 %v3581, %v3582
  %v3584 = vrot.slane %v3583, 2
  %v3585 = vmax.f32 %v3583, %v3584
  %v3586 = vrot.slane %v3585, 1
  %v3587 = vmax.f32 %v3585, %v3586
  %v3588 = vsel %vm1032, %v373, -inf
  %v3589 = vrot.slane %v3588, 4
  %v3590 = vmax.f32 %v3588, %v3589
  %v3591 = vrot.slane %v3590, 2
  %v3592 = vmax.f32 %v3590, %v3591
  %v3593 = vrot.slane %v3592, 1
  %v3594 = vmax.f32 %v3592, %v3593
  %v3595 = vsel %vm1032, %v374, -inf
  %v3596 = vrot.slane %v3595, 4
  %v3597 = vmax.f32 %v3595, %v3596
  %v3598 = vrot.slane %v3597, 2
  %v3599 = vmax.f32 %v3597, %v3598
  %v3600 = vrot.slane %v3599, 1
  %v3601 = vmax.f32 %v3599, %v3600
  %v3602 = vsel %vm1032, %v375, -inf
  %v3603 = vrot.slane %v3602, 4
  %v3604 = vmax.f32 %v3602, %v3603
  %v3605 = vrot.slane %v3604, 2
  %v3606 = vmax.f32 %v3604, %v3605
  %v3607 = vrot.slane %v3606, 1
  %v3608 = vmax.f32 %v3606, %v3607
  %v3609 = vsel %vm1032, %v376, -inf
  %v3610 = vrot.slane %v3609, 4
  %v3611 = vmax.f32 %v3609, %v3610
  %v3612 = vrot.slane %v3611, 2
  %v3613 = vmax.f32 %v3611, %v3612
  %v3614 = vrot.slane %v3613, 1
  %v3615 = vmax.f32 %v3613, %v3614
  %v3616 = vsel %vm1032, %v377, -inf
  %v3617 = vrot.slane %v3616, 4
  %v3618 = vmax.f32 %v3616, %v3617
  %v3619 = vrot.slane %v3618, 2
  %v3620 = vmax.f32 %v3618, %v3619
  %v3621 = vrot.slane %v3620, 1
  %v3622 = vmax.f32 %v3620, %v3621
  %v3623 = vsel %vm1032, %v378, -inf
  %v3624 = vrot.slane %v3623, 4
  %v3625 = vmax.f32 %v3623, %v3624
  %v3626 = vrot.slane %v3625, 2
  %v3627 = vmax.f32 %v3625, %v3626
  %v3628 = vrot.slane %v3627, 1
  %v3629 = vmax.f32 %v3627, %v3628
  %v3630 = vsel %vm1032, %v379, -inf
  %v3631 = vrot.slane %v3630, 4
  %v3632 = vmax.f32 %v3630, %v3631
  %v3633 = vrot.slane %v3632, 2
  %v3634 = vmax.f32 %v3632, %v3633
  %v3635 = vrot.slane %v3634, 1
  %v3636 = vmax.f32 %v3634, %v3635
  %v3637 = vsel %vm1032, %v380, -inf
  %v3638 = vrot.slane %v3637, 4
  %v3639 = vmax.f32 %v3637, %v3638
  %v3640 = vrot.slane %v3639, 2
  %v3641 = vmax.f32 %v3639, %v3640
  %v3642 = vrot.slane %v3641, 1
  %v3643 = vmax.f32 %v3641, %v3642
  %v3644 = vsel %vm1032, %v381, -inf
  %v3645 = vrot.slane %v3644, 4
  %v3646 = vmax.f32 %v3644, %v3645
  %v3647 = vrot.slane %v3646, 2
  %v3648 = vmax.f32 %v3646, %v3647
  %v3649 = vrot.slane %v3648, 1
  %v3650 = vmax.f32 %v3648, %v3649
  %v3651 = vsel %vm1032, %v382, -inf
  %v3652 = vrot.slane %v3651, 4
  %v3653 = vmax.f32 %v3651, %v3652
  %v3654 = vrot.slane %v3653, 2
  %v3655 = vmax.f32 %v3653, %v3654
  %v3656 = vrot.slane %v3655, 1
  %v3657 = vmax.f32 %v3655, %v3656
  %v3658 = vsel %vm1032, %v383, -inf
  %v3659 = vrot.slane %v3658, 4
  %v3660 = vmax.f32 %v3658, %v3659
  %v3661 = vrot.slane %v3660, 2
  %v3662 = vmax.f32 %v3660, %v3661
  %v3663 = vrot.slane %v3662, 1
  %v3664 = vmax.f32 %v3662, %v3663
  %v3665 = vsel %vm1032, %v384, -inf
  %v3666 = vrot.slane %v3665, 4
  %v3667 = vmax.f32 %v3665, %v3666
  %v3668 = vrot.slane %v3667, 2
  %v3669 = vmax.f32 %v3667, %v3668
  %v3670 = vrot.slane %v3669, 1
  %v3671 = vmax.f32 %v3669, %v3670
  %v3672 = vsel %vm1032, %v385, -inf
  %v3673 = vrot.slane %v3672, 4
  %v3674 = vmax.f32 %v3672, %v3673
  %v3675 = vrot.slane %v3674, 2
  %v3676 = vmax.f32 %v3674, %v3675
  %v3677 = vrot.slane %v3676, 1
  %v3678 = vmax.f32 %v3676, %v3677
  %v3679 = vsel %vm1032, %v386, -inf
  %v3680 = vrot.slane %v3679, 4
  %v3681 = vmax.f32 %v3679, %v3680
  %v3682 = vrot.slane %v3681, 2
  %v3683 = vmax.f32 %v3681, %v3682
  %v3684 = vrot.slane %v3683, 1
  %v3685 = vmax.f32 %v3683, %v3684
  %v3686 = vsel %vm1032, %v387, -inf
  %v3687 = vrot.slane %v3686, 4
  %v3688 = vmax.f32 %v3686, %v3687
  %v3689 = vrot.slane %v3688, 2
  %v3690 = vmax.f32 %v3688, %v3689
  %v3691 = vrot.slane %v3690, 1
  %v3692 = vmax.f32 %v3690, %v3691
  %v3693 = vsel %vm1032, %v388, -inf
  %v3694 = vrot.slane %v3693, 4
  %v3695 = vmax.f32 %v3693, %v3694
  %v3696 = vrot.slane %v3695, 2
  %v3697 = vmax.f32 %v3695, %v3696
  %v3698 = vrot.slane %v3697, 1
  %v3699 = vmax.f32 %v3697, %v3698
  %v3700 = vsel %vm1032, %v389, -inf
  %v3701 = vrot.slane %v3700, 4
  %v3702 = vmax.f32 %v3700, %v3701
  %v3703 = vrot.slane %v3702, 2
  %v3704 = vmax.f32 %v3702, %v3703
  %v3705 = vrot.slane %v3704, 1
  %v3706 = vmax.f32 %v3704, %v3705
  %v3707 = vsel %vm1032, %v390, -inf
  %v3708 = vrot.slane %v3707, 4
  %v3709 = vmax.f32 %v3707, %v3708
  %v3710 = vrot.slane %v3709, 2
  %v3711 = vmax.f32 %v3709, %v3710
  %v3712 = vrot.slane %v3711, 1
  %v3713 = vmax.f32 %v3711, %v3712
  %v3714 = vsel %vm1032, %v391, -inf
  %v3715 = vrot.slane %v3714, 4
  %v3716 = vmax.f32 %v3714, %v3715
  %v3717 = vrot.slane %v3716, 2
  %v3718 = vmax.f32 %v3716, %v3717
  %v3719 = vrot.slane %v3718, 1
  %v3720 = vmax.f32 %v3718, %v3719
  %v3721 = vsel %vm1032, %v392, -inf
  %v3722 = vrot.slane %v3721, 4
  %v3723 = vmax.f32 %v3721, %v3722
  %v3724 = vrot.slane %v3723, 2
  %v3725 = vmax.f32 %v3723, %v3724
  %v3726 = vrot.slane %v3725, 1
  %v3727 = vmax.f32 %v3725, %v3726
  %v3728 = vsel %vm1032, %v393, -inf
  %v3729 = vrot.slane %v3728, 4
  %v3730 = vmax.f32 %v3728, %v3729
  %v3731 = vrot.slane %v3730, 2
  %v3732 = vmax.f32 %v3730, %v3731
  %v3733 = vrot.slane %v3732, 1
  %v3734 = vmax.f32 %v3732, %v3733
  %v3735 = vsel %vm1032, %v394, -inf
  %v3736 = vrot.slane %v3735, 4
  %v3737 = vmax.f32 %v3735, %v3736
  %v3738 = vrot.slane %v3737, 2
  %v3739 = vmax.f32 %v3737, %v3738
  %v3740 = vrot.slane %v3739, 1
  %v3741 = vmax.f32 %v3739, %v3740
  %v3742 = vsel %vm1032, %v395, -inf
  %v3743 = vrot.slane %v3742, 4
  %v3744 = vmax.f32 %v3742, %v3743
  %v3745 = vrot.slane %v3744, 2
  %v3746 = vmax.f32 %v3744, %v3745
  %v3747 = vrot.slane %v3746, 1
  %v3748 = vmax.f32 %v3746, %v3747
  %v3749 = vsel %vm1032, %v396, -inf
  %v3750 = vrot.slane %v3749, 4
  %v3751 = vmax.f32 %v3749, %v3750
  %v3752 = vrot.slane %v3751, 2
  %v3753 = vmax.f32 %v3751, %v3752
  %v3754 = vrot.slane %v3753, 1
  %v3755 = vmax.f32 %v3753, %v3754
  %v3756 = vsel %vm1032, %v397, -inf
  %v3757 = vrot.slane %v3756, 4
  %v3758 = vmax.f32 %v3756, %v3757
  %v3759 = vrot.slane %v3758, 2
  %v3760 = vmax.f32 %v3758, %v3759
  %v3761 = vrot.slane %v3760, 1
  %v3762 = vmax.f32 %v3760, %v3761
  %v3763 = vsel %vm1032, %v398, -inf
  %v3764 = vrot.slane %v3763, 4
  %v3765 = vmax.f32 %v3763, %v3764
  %v3766 = vrot.slane %v3765, 2
  %v3767 = vmax.f32 %v3765, %v3766
  %v3768 = vrot.slane %v3767, 1
  %v3769 = vmax.f32 %v3767, %v3768
  %v3770 = vsel %vm1032, %v399, -inf
  %v3771 = vrot.slane %v3770, 4
  %v3772 = vmax.f32 %v3770, %v3771
  %v3773 = vrot.slane %v3772, 2
  %v3774 = vmax.f32 %v3772, %v3773
  %v3775 = vrot.slane %v3774, 1
  %v3776 = vmax.f32 %v3774, %v3775
  %v3777 = vsel %vm1032, %v400, -inf
  %v3778 = vrot.slane %v3777, 4
  %v3779 = vmax.f32 %v3777, %v3778
  %v3780 = vrot.slane %v3779, 2
  %v3781 = vmax.f32 %v3779, %v3780
  %v3782 = vrot.slane %v3781, 1
  %v3783 = vmax.f32 %v3781, %v3782
  %v3784 = vsel %vm1032, %v401, -inf
  %v3785 = vrot.slane %v3784, 4
  %v3786 = vmax.f32 %v3784, %v3785
  %v3787 = vrot.slane %v3786, 2
  %v3788 = vmax.f32 %v3786, %v3787
  %v3789 = vrot.slane %v3788, 1
  %v3790 = vmax.f32 %v3788, %v3789
  %v3791 = vsel %vm1032, %v402, -inf
  %v3792 = vrot.slane %v3791, 4
  %v3793 = vmax.f32 %v3791, %v3792
  %v3794 = vrot.slane %v3793, 2
  %v3795 = vmax.f32 %v3793, %v3794
  %v3796 = vrot.slane %v3795, 1
  %v3797 = vmax.f32 %v3795, %v3796
  %v3798 = vsel %vm1032, %v403, -inf
  %v3799 = vrot.slane %v3798, 4
  %v3800 = vmax.f32 %v3798, %v3799
  %v3801 = vrot.slane %v3800, 2
  %v3802 = vmax.f32 %v3800, %v3801
  %v3803 = vrot.slane %v3802, 1
  %v3804 = vmax.f32 %v3802, %v3803
  %v3805 = vsel %vm1032, %v404, -inf
  %v3806 = vrot.slane %v3805, 4
  %v3807 = vmax.f32 %v3805, %v3806
  %v3808 = vrot.slane %v3807, 2
  %v3809 = vmax.f32 %v3807, %v3808
  %v3810 = vrot.slane %v3809, 1
  %v3811 = vmax.f32 %v3809, %v3810
  %v3812 = vsel %vm1032, %v405, -inf
  %v3813 = vrot.slane %v3812, 4
  %v3814 = vmax.f32 %v3812, %v3813
  %v3815 = vrot.slane %v3814, 2
  %v3816 = vmax.f32 %v3814, %v3815
  %v3817 = vrot.slane %v3816, 1
  %v3818 = vmax.f32 %v3816, %v3817
  %v3819 = vsel %vm1032, %v406, -inf
  %v3820 = vrot.slane %v3819, 4
  %v3821 = vmax.f32 %v3819, %v3820
  %v3822 = vrot.slane %v3821, 2
  %v3823 = vmax.f32 %v3821, %v3822
  %v3824 = vrot.slane %v3823, 1
  %v3825 = vmax.f32 %v3823, %v3824
  %v3826 = vsel %vm1032, %v407, -inf
  %v3827 = vrot.slane %v3826, 4
  %v3828 = vmax.f32 %v3826, %v3827
  %v3829 = vrot.slane %v3828, 2
  %v3830 = vmax.f32 %v3828, %v3829
  %v3831 = vrot.slane %v3830, 1
  %v3832 = vmax.f32 %v3830, %v3831
  %v3833 = vsel %vm1032, %v408, -inf
  %v3834 = vrot.slane %v3833, 4
  %v3835 = vmax.f32 %v3833, %v3834
  %v3836 = vrot.slane %v3835, 2
  %v3837 = vmax.f32 %v3835, %v3836
  %v3838 = vrot.slane %v3837, 1
  %v3839 = vmax.f32 %v3837, %v3838
  %v3840 = vsel %vm1032, %v409, -inf
  %v3841 = vrot.slane %v3840, 4
  %v3842 = vmax.f32 %v3840, %v3841
  %v3843 = vrot.slane %v3842, 2
  %v3844 = vmax.f32 %v3842, %v3843
  %v3845 = vrot.slane %v3844, 1
  %v3846 = vmax.f32 %v3844, %v3845
  %v3847 = vsel %vm1032, %v410, -inf
  %v3848 = vrot.slane %v3847, 4
  %v3849 = vmax.f32 %v3847, %v3848
  %v3850 = vrot.slane %v3849, 2
  %v3851 = vmax.f32 %v3849, %v3850
  %v3852 = vrot.slane %v3851, 1
  %v3853 = vmax.f32 %v3851, %v3852
  %v3854 = vsel %vm1032, %v411, -inf
  %v3855 = vrot.slane %v3854, 4
  %v3856 = vmax.f32 %v3854, %v3855
  %v3857 = vrot.slane %v3856, 2
  %v3858 = vmax.f32 %v3856, %v3857
  %v3859 = vrot.slane %v3858, 1
  %v3860 = vmax.f32 %v3858, %v3859
  %v3861 = vsel %vm1032, %v412, -inf
  %v3862 = vrot.slane %v3861, 4
  %v3863 = vmax.f32 %v3861, %v3862
  %v3864 = vrot.slane %v3863, 2
  %v3865 = vmax.f32 %v3863, %v3864
  %v3866 = vrot.slane %v3865, 1
  %v3867 = vmax.f32 %v3865, %v3866
  %v3868 = vsel %vm1032, %v413, -inf
  %v3869 = vrot.slane %v3868, 4
  %v3870 = vmax.f32 %v3868, %v3869
  %v3871 = vrot.slane %v3870, 2
  %v3872 = vmax.f32 %v3870, %v3871
  %v3873 = vrot.slane %v3872, 1
  %v3874 = vmax.f32 %v3872, %v3873
  %v3875 = vsel %vm1032, %v414, -inf
  %v3876 = vrot.slane %v3875, 4
  %v3877 = vmax.f32 %v3875, %v3876
  %v3878 = vrot.slane %v3877, 2
  %v3879 = vmax.f32 %v3877, %v3878
  %v3880 = vrot.slane %v3879, 1
  %v3881 = vmax.f32 %v3879, %v3880
  %v3882 = vsel %vm1032, %v415, -inf
  %v3883 = vrot.slane %v3882, 4
  %v3884 = vmax.f32 %v3882, %v3883
  %v3885 = vrot.slane %v3884, 2
  %v3886 = vmax.f32 %v3884, %v3885
  %v3887 = vrot.slane %v3886, 1
  %v3888 = vmax.f32 %v3886, %v3887
  %v3889 = vsel %vm1032, %v416, -inf
  %v3890 = vrot.slane %v3889, 4
  %v3891 = vmax.f32 %v3889, %v3890
  %v3892 = vrot.slane %v3891, 2
  %v3893 = vmax.f32 %v3891, %v3892
  %v3894 = vrot.slane %v3893, 1
  %v3895 = vmax.f32 %v3893, %v3894
  %v3896 = vsel %vm1032, %v417, -inf
  %v3897 = vrot.slane %v3896, 4
  %v3898 = vmax.f32 %v3896, %v3897
  %v3899 = vrot.slane %v3898, 2
  %v3900 = vmax.f32 %v3898, %v3899
  %v3901 = vrot.slane %v3900, 1
  %v3902 = vmax.f32 %v3900, %v3901
  %v3903 = vsel %vm1032, %v418, -inf
  %v3904 = vrot.slane %v3903, 4
  %v3905 = vmax.f32 %v3903, %v3904
  %v3906 = vrot.slane %v3905, 2
  %v3907 = vmax.f32 %v3905, %v3906
  %v3908 = vrot.slane %v3907, 1
  %v3909 = vmax.f32 %v3907, %v3908
  %v3910 = vsel %vm1032, %v419, -inf
  %v3911 = vrot.slane %v3910, 4
  %v3912 = vmax.f32 %v3910, %v3911
  %v3913 = vrot.slane %v3912, 2
  %v3914 = vmax.f32 %v3912, %v3913
  %v3915 = vrot.slane %v3914, 1
  %v3916 = vmax.f32 %v3914, %v3915
  %v3917 = vsel %vm1032, %v420, -inf
  %v3918 = vrot.slane %v3917, 4
  %v3919 = vmax.f32 %v3917, %v3918
  %v3920 = vrot.slane %v3919, 2
  %v3921 = vmax.f32 %v3919, %v3920
  %v3922 = vrot.slane %v3921, 1
  %v3923 = vmax.f32 %v3921, %v3922
  %v3924 = vsel %vm1032, %v421, -inf
  %v3925 = vrot.slane %v3924, 4
  %v3926 = vmax.f32 %v3924, %v3925
  %v3927 = vrot.slane %v3926, 2
  %v3928 = vmax.f32 %v3926, %v3927
  %v3929 = vrot.slane %v3928, 1
  %v3930 = vmax.f32 %v3928, %v3929
  %v3931 = vsel %vm1032, %v422, -inf
  %v3932 = vrot.slane %v3931, 4
  %v3933 = vmax.f32 %v3931, %v3932
  %v3934 = vrot.slane %v3933, 2
  %v3935 = vmax.f32 %v3933, %v3934
  %v3936 = vrot.slane %v3935, 1
  %v3937 = vmax.f32 %v3935, %v3936
  %v3938 = vsel %vm1032, %v423, -inf
  %v3939 = vrot.slane %v3938, 4
  %v3940 = vmax.f32 %v3938, %v3939
  %v3941 = vrot.slane %v3940, 2
  %v3942 = vmax.f32 %v3940, %v3941
  %v3943 = vrot.slane %v3942, 1
  %v3944 = vmax.f32 %v3942, %v3943
  %v3945 = vsel %vm1032, %v424, -inf
  %v3946 = vrot.slane %v3945, 4
  %v3947 = vmax.f32 %v3945, %v3946
  %v3948 = vrot.slane %v3947, 2
  %v3949 = vmax.f32 %v3947, %v3948
  %v3950 = vrot.slane %v3949, 1
  %v3951 = vmax.f32 %v3949, %v3950
  %v3952 = vsel %vm1032, %v425, -inf
  %v3953 = vrot.slane %v3952, 4
  %v3954 = vmax.f32 %v3952, %v3953
  %v3955 = vrot.slane %v3954, 2
  %v3956 = vmax.f32 %v3954, %v3955
  %v3957 = vrot.slane %v3956, 1
  %v3958 = vmax.f32 %v3956, %v3957
  %v3959 = vsel %vm1032, %v426, -inf
  %v3960 = vrot.slane %v3959, 4
  %v3961 = vmax.f32 %v3959, %v3960
  %v3962 = vrot.slane %v3961, 2
  %v3963 = vmax.f32 %v3961, %v3962
  %v3964 = vrot.slane %v3963, 1
  %v3965 = vmax.f32 %v3963, %v3964
  %v3966 = vsel %vm1032, %v427, -inf
  %v3967 = vrot.slane %v3966, 4
  %v3968 = vmax.f32 %v3966, %v3967
  %v3969 = vrot.slane %v3968, 2
  %v3970 = vmax.f32 %v3968, %v3969
  %v3971 = vrot.slane %v3970, 1
  %v3972 = vmax.f32 %v3970, %v3971
  %v3973 = vsel %vm1032, %v428, -inf
  %v3974 = vrot.slane %v3973, 4
  %v3975 = vmax.f32 %v3973, %v3974
  %v3976 = vrot.slane %v3975, 2
  %v3977 = vmax.f32 %v3975, %v3976
  %v3978 = vrot.slane %v3977, 1
  %v3979 = vmax.f32 %v3977, %v3978
  %v3980 = vsel %vm1032, %v429, -inf
  %v3981 = vrot.slane %v3980, 4
  %v3982 = vmax.f32 %v3980, %v3981
  %v3983 = vrot.slane %v3982, 2
  %v3984 = vmax.f32 %v3982, %v3983
  %v3985 = vrot.slane %v3984, 1
  %v3986 = vmax.f32 %v3984, %v3985
  %v3987 = vsel %vm1032, %v430, -inf
  %v3988 = vrot.slane %v3987, 4
  %v3989 = vmax.f32 %v3987, %v3988
  %v3990 = vrot.slane %v3989, 2
  %v3991 = vmax.f32 %v3989, %v3990
  %v3992 = vrot.slane %v3991, 1
  %v3993 = vmax.f32 %v3991, %v3992
  %v3994 = vsel %vm1032, %v431, -inf
  %v3995 = vrot.slane %v3994, 4
  %v3996 = vmax.f32 %v3994, %v3995
  %v3997 = vrot.slane %v3996, 2
  %v3998 = vmax.f32 %v3996, %v3997
  %v3999 = vrot.slane %v3998, 1
  %v4000 = vmax.f32 %v3998, %v3999
  %v4001 = vsel %vm1032, %v432, -inf
  %v4002 = vrot.slane %v4001, 4
  %v4003 = vmax.f32 %v4001, %v4002
  %v4004 = vrot.slane %v4003, 2
  %v4005 = vmax.f32 %v4003, %v4004
  %v4006 = vrot.slane %v4005, 1
  %v4007 = vmax.f32 %v4005, %v4006
  %v4008 = vsel %vm1032, %v433, -inf
  %v4009 = vrot.slane %v4008, 4
  %v4010 = vmax.f32 %v4008, %v4009
  %v4011 = vrot.slane %v4010, 2
  %v4012 = vmax.f32 %v4010, %v4011
  %v4013 = vrot.slane %v4012, 1
  %v4014 = vmax.f32 %v4012, %v4013
  %v4015 = vsel %vm1032, %v434, -inf
  %v4016 = vrot.slane %v4015, 4
  %v4017 = vmax.f32 %v4015, %v4016
  %v4018 = vrot.slane %v4017, 2
  %v4019 = vmax.f32 %v4017, %v4018
  %v4020 = vrot.slane %v4019, 1
  %v4021 = vmax.f32 %v4019, %v4020
  %v4022 = vsel %vm1032, %v435, -inf
  %v4023 = vrot.slane %v4022, 4
  %v4024 = vmax.f32 %v4022, %v4023
  %v4025 = vrot.slane %v4024, 2
  %v4026 = vmax.f32 %v4024, %v4025
  %v4027 = vrot.slane %v4026, 1
  %v4028 = vmax.f32 %v4026, %v4027
  %v4029 = vsel %vm1032, %v436, -inf
  %v4030 = vrot.slane %v4029, 4
  %v4031 = vmax.f32 %v4029, %v4030
  %v4032 = vrot.slane %v4031, 2
  %v4033 = vmax.f32 %v4031, %v4032
  %v4034 = vrot.slane %v4033, 1
  %v4035 = vmax.f32 %v4033, %v4034
  %v4036 = vsel %vm1032, %v437, -inf
  %v4037 = vrot.slane %v4036, 4
  %v4038 = vmax.f32 %v4036, %v4037
  %v4039 = vrot.slane %v4038, 2
  %v4040 = vmax.f32 %v4038, %v4039
  %v4041 = vrot.slane %v4040, 1
  %v4042 = vmax.f32 %v4040, %v4041
  %v4043 = vsel %vm1032, %v438, -inf
  %v4044 = vrot.slane %v4043, 4
  %v4045 = vmax.f32 %v4043, %v4044
  %v4046 = vrot.slane %v4045, 2
  %v4047 = vmax.f32 %v4045, %v4046
  %v4048 = vrot.slane %v4047, 1
  %v4049 = vmax.f32 %v4047, %v4048
  %v4050 = vsel %vm1032, %v439, -inf
  %v4051 = vrot.slane %v4050, 4
  %v4052 = vmax.f32 %v4050, %v4051
  %v4053 = vrot.slane %v4052, 2
  %v4054 = vmax.f32 %v4052, %v4053
  %v4055 = vrot.slane %v4054, 1
  %v4056 = vmax.f32 %v4054, %v4055
  %v4057 = vsel %vm1032, %v440, -inf
  %v4058 = vrot.slane %v4057, 4
  %v4059 = vmax.f32 %v4057, %v4058
  %v4060 = vrot.slane %v4059, 2
  %v4061 = vmax.f32 %v4059, %v4060
  %v4062 = vrot.slane %v4061, 1
  %v4063 = vmax.f32 %v4061, %v4062
  %v4064 = vsel %vm1032, %v441, -inf
  %v4065 = vrot.slane %v4064, 4
  %v4066 = vmax.f32 %v4064, %v4065
  %v4067 = vrot.slane %v4066, 2
  %v4068 = vmax.f32 %v4066, %v4067
  %v4069 = vrot.slane %v4068, 1
  %v4070 = vmax.f32 %v4068, %v4069
  %v4071 = vsel %vm1032, %v442, -inf
  %v4072 = vrot.slane %v4071, 4
  %v4073 = vmax.f32 %v4071, %v4072
  %v4074 = vrot.slane %v4073, 2
  %v4075 = vmax.f32 %v4073, %v4074
  %v4076 = vrot.slane %v4075, 1
  %v4077 = vmax.f32 %v4075, %v4076
  %v4078 = vsel %vm1032, %v443, -inf
  %v4079 = vrot.slane %v4078, 4
  %v4080 = vmax.f32 %v4078, %v4079
  %v4081 = vrot.slane %v4080, 2
  %v4082 = vmax.f32 %v4080, %v4081
  %v4083 = vrot.slane %v4082, 1
  %v4084 = vmax.f32 %v4082, %v4083
  %v4085 = vsel %vm1032, %v444, -inf
  %v4086 = vrot.slane %v4085, 4
  %v4087 = vmax.f32 %v4085, %v4086
  %v4088 = vrot.slane %v4087, 2
  %v4089 = vmax.f32 %v4087, %v4088
  %v4090 = vrot.slane %v4089, 1
  %v4091 = vmax.f32 %v4089, %v4090
  %v4092 = vsel %vm1032, %v445, -inf
  %v4093 = vrot.slane %v4092, 4
  %v4094 = vmax.f32 %v4092, %v4093
  %v4095 = vrot.slane %v4094, 2
  %v4096 = vmax.f32 %v4094, %v4095
  %v4097 = vrot.slane %v4096, 1
  %v4098 = vmax.f32 %v4096, %v4097
  %v4099 = vsel %vm1032, %v446, -inf
  %v4100 = vrot.slane %v4099, 4
  %v4101 = vmax.f32 %v4099, %v4100
  %v4102 = vrot.slane %v4101, 2
  %v4103 = vmax.f32 %v4101, %v4102
  %v4104 = vrot.slane %v4103, 1
  %v4105 = vmax.f32 %v4103, %v4104
  %v4106 = vsel %vm1032, %v447, -inf
  %v4107 = vrot.slane %v4106, 4
  %v4108 = vmax.f32 %v4106, %v4107
  %v4109 = vrot.slane %v4108, 2
  %v4110 = vmax.f32 %v4108, %v4109
  %v4111 = vrot.slane %v4110, 1
  %v4112 = vmax.f32 %v4110, %v4111
  %v4113 = vsel %vm1032, %v448, -inf
  %v4114 = vrot.slane %v4113, 4
  %v4115 = vmax.f32 %v4113, %v4114
  %v4116 = vrot.slane %v4115, 2
  %v4117 = vmax.f32 %v4115, %v4116
  %v4118 = vrot.slane %v4117, 1
  %v4119 = vmax.f32 %v4117, %v4118
  %v4120 = vsel %vm1032, %v449, -inf
  %v4121 = vrot.slane %v4120, 4
  %v4122 = vmax.f32 %v4120, %v4121
  %v4123 = vrot.slane %v4122, 2
  %v4124 = vmax.f32 %v4122, %v4123
  %v4125 = vrot.slane %v4124, 1
  %v4126 = vmax.f32 %v4124, %v4125
  %v4127 = vsel %vm1032, %v450, -inf
  %v4128 = vrot.slane %v4127, 4
  %v4129 = vmax.f32 %v4127, %v4128
  %v4130 = vrot.slane %v4129, 2
  %v4131 = vmax.f32 %v4129, %v4130
  %v4132 = vrot.slane %v4131, 1
  %v4133 = vmax.f32 %v4131, %v4132
  %v4134 = vsel %vm1032, %v451, -inf
  %v4135 = vrot.slane %v4134, 4
  %v4136 = vmax.f32 %v4134, %v4135
  %v4137 = vrot.slane %v4136, 2
  %v4138 = vmax.f32 %v4136, %v4137
  %v4139 = vrot.slane %v4138, 1
  %v4140 = vmax.f32 %v4138, %v4139
  %v4141 = vsel %vm1032, %v452, -inf
  %v4142 = vrot.slane %v4141, 4
  %v4143 = vmax.f32 %v4141, %v4142
  %v4144 = vrot.slane %v4143, 2
  %v4145 = vmax.f32 %v4143, %v4144
  %v4146 = vrot.slane %v4145, 1
  %v4147 = vmax.f32 %v4145, %v4146
  %v4148 = vsel %vm1032, %v453, -inf
  %v4149 = vrot.slane %v4148, 4
  %v4150 = vmax.f32 %v4148, %v4149
  %v4151 = vrot.slane %v4150, 2
  %v4152 = vmax.f32 %v4150, %v4151
  %v4153 = vrot.slane %v4152, 1
  %v4154 = vmax.f32 %v4152, %v4153
  %v4155 = vsel %vm1032, %v454, -inf
  %v4156 = vrot.slane %v4155, 4
  %v4157 = vmax.f32 %v4155, %v4156
  %v4158 = vrot.slane %v4157, 2
  %v4159 = vmax.f32 %v4157, %v4158
  %v4160 = vrot.slane %v4159, 1
  %v4161 = vmax.f32 %v4159, %v4160
  %v4162 = vsel %vm1032, %v455, -inf
  %v4163 = vrot.slane %v4162, 4
  %v4164 = vmax.f32 %v4162, %v4163
  %v4165 = vrot.slane %v4164, 2
  %v4166 = vmax.f32 %v4164, %v4165
  %v4167 = vrot.slane %v4166, 1
  %v4168 = vmax.f32 %v4166, %v4167
  %v4169 = vsel %vm1032, %v456, -inf
  %v4170 = vrot.slane %v4169, 4
  %v4171 = vmax.f32 %v4169, %v4170
  %v4172 = vrot.slane %v4171, 2
  %v4173 = vmax.f32 %v4171, %v4172
  %v4174 = vrot.slane %v4173, 1
  %v4175 = vmax.f32 %v4173, %v4174
  %v4176 = vsel %vm1032, %v457, -inf
  %v4177 = vrot.slane %v4176, 4
  %v4178 = vmax.f32 %v4176, %v4177
  %v4179 = vrot.slane %v4178, 2
  %v4180 = vmax.f32 %v4178, %v4179
  %v4181 = vrot.slane %v4180, 1
  %v4182 = vmax.f32 %v4180, %v4181
  %v4183 = vsel %vm1032, %v458, -inf
  %v4184 = vrot.slane %v4183, 4
  %v4185 = vmax.f32 %v4183, %v4184
  %v4186 = vrot.slane %v4185, 2
  %v4187 = vmax.f32 %v4185, %v4186
  %v4188 = vrot.slane %v4187, 1
  %v4189 = vmax.f32 %v4187, %v4188
  %v4190 = vsel %vm1032, %v459, -inf
  %v4191 = vrot.slane %v4190, 4
  %v4192 = vmax.f32 %v4190, %v4191
  %v4193 = vrot.slane %v4192, 2
  %v4194 = vmax.f32 %v4192, %v4193
  %v4195 = vrot.slane %v4194, 1
  %v4196 = vmax.f32 %v4194, %v4195
  %v4197 = vsel %vm1032, %v460, -inf
  %v4198 = vrot.slane %v4197, 4
  %v4199 = vmax.f32 %v4197, %v4198
  %v4200 = vrot.slane %v4199, 2
  %v4201 = vmax.f32 %v4199, %v4200
  %v4202 = vrot.slane %v4201, 1
  %v4203 = vmax.f32 %v4201, %v4202
  %v4204 = vsel %vm1032, %v461, -inf
  %v4205 = vrot.slane %v4204, 4
  %v4206 = vmax.f32 %v4204, %v4205
  %v4207 = vrot.slane %v4206, 2
  %v4208 = vmax.f32 %v4206, %v4207
  %v4209 = vrot.slane %v4208, 1
  %v4210 = vmax.f32 %v4208, %v4209
  %v4211 = vsel %vm1032, %v462, -inf
  %v4212 = vrot.slane %v4211, 4
  %v4213 = vmax.f32 %v4211, %v4212
  %v4214 = vrot.slane %v4213, 2
  %v4215 = vmax.f32 %v4213, %v4214
  %v4216 = vrot.slane %v4215, 1
  %v4217 = vmax.f32 %v4215, %v4216
  %v4218 = vsel %vm1032, %v463, -inf
  %v4219 = vrot.slane %v4218, 4
  %v4220 = vmax.f32 %v4218, %v4219
  %v4221 = vrot.slane %v4220, 2
  %v4222 = vmax.f32 %v4220, %v4221
  %v4223 = vrot.slane %v4222, 1
  %v4224 = vmax.f32 %v4222, %v4223
  %v4225 = vsel %vm1032, %v464, -inf
  %v4226 = vrot.slane %v4225, 4
  %v4227 = vmax.f32 %v4225, %v4226
  %v4228 = vrot.slane %v4227, 2
  %v4229 = vmax.f32 %v4227, %v4228
  %v4230 = vrot.slane %v4229, 1
  %v4231 = vmax.f32 %v4229, %v4230
  %v4232 = vsel %vm1032, %v465, -inf
  %v4233 = vrot.slane %v4232, 4
  %v4234 = vmax.f32 %v4232, %v4233
  %v4235 = vrot.slane %v4234, 2
  %v4236 = vmax.f32 %v4234, %v4235
  %v4237 = vrot.slane %v4236, 1
  %v4238 = vmax.f32 %v4236, %v4237
  %v4239 = vsel %vm1032, %v466, -inf
  %v4240 = vrot.slane %v4239, 4
  %v4241 = vmax.f32 %v4239, %v4240
  %v4242 = vrot.slane %v4241, 2
  %v4243 = vmax.f32 %v4241, %v4242
  %v4244 = vrot.slane %v4243, 1
  %v4245 = vmax.f32 %v4243, %v4244
  %v4246 = vsel %vm1032, %v467, -inf
  %v4247 = vrot.slane %v4246, 4
  %v4248 = vmax.f32 %v4246, %v4247
  %v4249 = vrot.slane %v4248, 2
  %v4250 = vmax.f32 %v4248, %v4249
  %v4251 = vrot.slane %v4250, 1
  %v4252 = vmax.f32 %v4250, %v4251
  %v4253 = vsel %vm1032, %v468, -inf
  %v4254 = vrot.slane %v4253, 4
  %v4255 = vmax.f32 %v4253, %v4254
  %v4256 = vrot.slane %v4255, 2
  %v4257 = vmax.f32 %v4255, %v4256
  %v4258 = vrot.slane %v4257, 1
  %v4259 = vmax.f32 %v4257, %v4258
  %v4260 = vsel %vm1032, %v469, -inf
  %v4261 = vrot.slane %v4260, 4
  %v4262 = vmax.f32 %v4260, %v4261
  %v4263 = vrot.slane %v4262, 2
  %v4264 = vmax.f32 %v4262, %v4263
  %v4265 = vrot.slane %v4264, 1
  %v4266 = vmax.f32 %v4264, %v4265
  %v4267 = vsel %vm1032, %v470, -inf
  %v4268 = vrot.slane %v4267, 4
  %v4269 = vmax.f32 %v4267, %v4268
  %v4270 = vrot.slane %v4269, 2
  %v4271 = vmax.f32 %v4269, %v4270
  %v4272 = vrot.slane %v4271, 1
  %v4273 = vmax.f32 %v4271, %v4272
  %v4274 = vsel %vm1032, %v471, -inf
  %v4275 = vrot.slane %v4274, 4
  %v4276 = vmax.f32 %v4274, %v4275
  %v4277 = vrot.slane %v4276, 2
  %v4278 = vmax.f32 %v4276, %v4277
  %v4279 = vrot.slane %v4278, 1
  %v4280 = vmax.f32 %v4278, %v4279
  %v4281 = vsel %vm1032, %v472, -inf
  %v4282 = vrot.slane %v4281, 4
  %v4283 = vmax.f32 %v4281, %v4282
  %v4284 = vrot.slane %v4283, 2
  %v4285 = vmax.f32 %v4283, %v4284
  %v4286 = vrot.slane %v4285, 1
  %v4287 = vmax.f32 %v4285, %v4286
  %v4288 = vsel %vm1032, %v473, -inf
  %v4289 = vrot.slane %v4288, 4
  %v4290 = vmax.f32 %v4288, %v4289
  %v4291 = vrot.slane %v4290, 2
  %v4292 = vmax.f32 %v4290, %v4291
  %v4293 = vrot.slane %v4292, 1
  %v4294 = vmax.f32 %v4292, %v4293
  %v4295 = vsel %vm1032, %v474, -inf
  %v4296 = vrot.slane %v4295, 4
  %v4297 = vmax.f32 %v4295, %v4296
  %v4298 = vrot.slane %v4297, 2
  %v4299 = vmax.f32 %v4297, %v4298
  %v4300 = vrot.slane %v4299, 1
  %v4301 = vmax.f32 %v4299, %v4300
  %v4302 = vsel %vm1032, %v475, -inf
  %v4303 = vrot.slane %v4302, 4
  %v4304 = vmax.f32 %v4302, %v4303
  %v4305 = vrot.slane %v4304, 2
  %v4306 = vmax.f32 %v4304, %v4305
  %v4307 = vrot.slane %v4306, 1
  %v4308 = vmax.f32 %v4306, %v4307
  %v4309 = vsel %vm1032, %v476, -inf
  %v4310 = vrot.slane %v4309, 4
  %v4311 = vmax.f32 %v4309, %v4310
  %v4312 = vrot.slane %v4311, 2
  %v4313 = vmax.f32 %v4311, %v4312
  %v4314 = vrot.slane %v4313, 1
  %v4315 = vmax.f32 %v4313, %v4314
  %v4316 = vsel %vm1032, %v477, -inf
  %v4317 = vrot.slane %v4316, 4
  %v4318 = vmax.f32 %v4316, %v4317
  %v4319 = vrot.slane %v4318, 2
  %v4320 = vmax.f32 %v4318, %v4319
  %v4321 = vrot.slane %v4320, 1
  %v4322 = vmax.f32 %v4320, %v4321
  %v4323 = vsel %vm1032, %v478, -inf
  %v4324 = vrot.slane %v4323, 4
  %v4325 = vmax.f32 %v4323, %v4324
  %v4326 = vrot.slane %v4325, 2
  %v4327 = vmax.f32 %v4325, %v4326
  %v4328 = vrot.slane %v4327, 1
  %v4329 = vmax.f32 %v4327, %v4328
  %v4330 = vsel %vm1032, %v479, -inf
  %v4331 = vrot.slane %v4330, 4
  %v4332 = vmax.f32 %v4330, %v4331
  %v4333 = vrot.slane %v4332, 2
  %v4334 = vmax.f32 %v4332, %v4333
  %v4335 = vrot.slane %v4334, 1
  %v4336 = vmax.f32 %v4334, %v4335
  %v4337 = vsel %vm1032, %v480, -inf
  %v4338 = vrot.slane %v4337, 4
  %v4339 = vmax.f32 %v4337, %v4338
  %v4340 = vrot.slane %v4339, 2
  %v4341 = vmax.f32 %v4339, %v4340
  %v4342 = vrot.slane %v4341, 1
  %v4343 = vmax.f32 %v4341, %v4342
  %v4344 = vsel %vm1032, %v481, -inf
  %v4345 = vrot.slane %v4344, 4
  %v4346 = vmax.f32 %v4344, %v4345
  %v4347 = vrot.slane %v4346, 2
  %v4348 = vmax.f32 %v4346, %v4347
  %v4349 = vrot.slane %v4348, 1
  %v4350 = vmax.f32 %v4348, %v4349
  %v4351 = vsel %vm1032, %v482, -inf
  %v4352 = vrot.slane %v4351, 4
  %v4353 = vmax.f32 %v4351, %v4352
  %v4354 = vrot.slane %v4353, 2
  %v4355 = vmax.f32 %v4353, %v4354
  %v4356 = vrot.slane %v4355, 1
  %v4357 = vmax.f32 %v4355, %v4356
  %v4358 = vsel %vm1032, %v483, -inf
  %v4359 = vrot.slane %v4358, 4
  %v4360 = vmax.f32 %v4358, %v4359
  %v4361 = vrot.slane %v4360, 2
  %v4362 = vmax.f32 %v4360, %v4361
  %v4363 = vrot.slane %v4362, 1
  %v4364 = vmax.f32 %v4362, %v4363
  %v4365 = vsel %vm1032, %v484, -inf
  %v4366 = vrot.slane %v4365, 4
  %v4367 = vmax.f32 %v4365, %v4366
  %v4368 = vrot.slane %v4367, 2
  %v4369 = vmax.f32 %v4367, %v4368
  %v4370 = vrot.slane %v4369, 1
  %v4371 = vmax.f32 %v4369, %v4370
  %v4372 = vsel %vm1032, %v485, -inf
  %v4373 = vrot.slane %v4372, 4
  %v4374 = vmax.f32 %v4372, %v4373
  %v4375 = vrot.slane %v4374, 2
  %v4376 = vmax.f32 %v4374, %v4375
  %v4377 = vrot.slane %v4376, 1
  %v4378 = vmax.f32 %v4376, %v4377
  %v4379 = vsel %vm1032, %v486, -inf
  %v4380 = vrot.slane %v4379, 4
  %v4381 = vmax.f32 %v4379, %v4380
  %v4382 = vrot.slane %v4381, 2
  %v4383 = vmax.f32 %v4381, %v4382
  %v4384 = vrot.slane %v4383, 1
  %v4385 = vmax.f32 %v4383, %v4384
  %v4386 = vsel %vm1032, %v487, -inf
  %v4387 = vrot.slane %v4386, 4
  %v4388 = vmax.f32 %v4386, %v4387
  %v4389 = vrot.slane %v4388, 2
  %v4390 = vmax.f32 %v4388, %v4389
  %v4391 = vrot.slane %v4390, 1
  %v4392 = vmax.f32 %v4390, %v4391
  %v4393 = vsel %vm1032, %v488, -inf
  %v4394 = vrot.slane %v4393, 4
  %v4395 = vmax.f32 %v4393, %v4394
  %v4396 = vrot.slane %v4395, 2
  %v4397 = vmax.f32 %v4395, %v4396
  %v4398 = vrot.slane %v4397, 1
  %v4399 = vmax.f32 %v4397, %v4398
  %v4400 = vsel %vm1032, %v489, -inf
  %v4401 = vrot.slane %v4400, 4
  %v4402 = vmax.f32 %v4400, %v4401
  %v4403 = vrot.slane %v4402, 2
  %v4404 = vmax.f32 %v4402, %v4403
  %v4405 = vrot.slane %v4404, 1
  %v4406 = vmax.f32 %v4404, %v4405
  %v4407 = vsel %vm1032, %v490, -inf
  %v4408 = vrot.slane %v4407, 4
  %v4409 = vmax.f32 %v4407, %v4408
  %v4410 = vrot.slane %v4409, 2
  %v4411 = vmax.f32 %v4409, %v4410
  %v4412 = vrot.slane %v4411, 1
  %v4413 = vmax.f32 %v4411, %v4412
  %v4414 = vsel %vm1032, %v491, -inf
  %v4415 = vrot.slane %v4414, 4
  %v4416 = vmax.f32 %v4414, %v4415
  %v4417 = vrot.slane %v4416, 2
  %v4418 = vmax.f32 %v4416, %v4417
  %v4419 = vrot.slane %v4418, 1
  %v4420 = vmax.f32 %v4418, %v4419
  %v4421 = vsel %vm1032, %v492, -inf
  %v4422 = vrot.slane %v4421, 4
  %v4423 = vmax.f32 %v4421, %v4422
  %v4424 = vrot.slane %v4423, 2
  %v4425 = vmax.f32 %v4423, %v4424
  %v4426 = vrot.slane %v4425, 1
  %v4427 = vmax.f32 %v4425, %v4426
  %v4428 = vsel %vm1032, %v493, -inf
  %v4429 = vrot.slane %v4428, 4
  %v4430 = vmax.f32 %v4428, %v4429
  %v4431 = vrot.slane %v4430, 2
  %v4432 = vmax.f32 %v4430, %v4431
  %v4433 = vrot.slane %v4432, 1
  %v4434 = vmax.f32 %v4432, %v4433
  %v4435 = vsel %vm1032, %v494, -inf
  %v4436 = vrot.slane %v4435, 4
  %v4437 = vmax.f32 %v4435, %v4436
  %v4438 = vrot.slane %v4437, 2
  %v4439 = vmax.f32 %v4437, %v4438
  %v4440 = vrot.slane %v4439, 1
  %v4441 = vmax.f32 %v4439, %v4440
  %v4442 = vsel %vm1032, %v495, -inf
  %v4443 = vrot.slane %v4442, 4
  %v4444 = vmax.f32 %v4442, %v4443
  %v4445 = vrot.slane %v4444, 2
  %v4446 = vmax.f32 %v4444, %v4445
  %v4447 = vrot.slane %v4446, 1
  %v4448 = vmax.f32 %v4446, %v4447
  %v4449 = vsel %vm1032, %v496, -inf
  %v4450 = vrot.slane %v4449, 4
  %v4451 = vmax.f32 %v4449, %v4450
  %v4452 = vrot.slane %v4451, 2
  %v4453 = vmax.f32 %v4451, %v4452
  %v4454 = vrot.slane %v4453, 1
  %v4455 = vmax.f32 %v4453, %v4454
  %v4456 = vsel %vm1032, %v497, -inf
  %v4457 = vrot.slane %v4456, 4
  %v4458 = vmax.f32 %v4456, %v4457
  %v4459 = vrot.slane %v4458, 2
  %v4460 = vmax.f32 %v4458, %v4459
  %v4461 = vrot.slane %v4460, 1
  %v4462 = vmax.f32 %v4460, %v4461
  %v4463 = vsel %vm1032, %v498, -inf
  %v4464 = vrot.slane %v4463, 4
  %v4465 = vmax.f32 %v4463, %v4464
  %v4466 = vrot.slane %v4465, 2
  %v4467 = vmax.f32 %v4465, %v4466
  %v4468 = vrot.slane %v4467, 1
  %v4469 = vmax.f32 %v4467, %v4468
  %v4470 = vsel %vm1032, %v499, -inf
  %v4471 = vrot.slane %v4470, 4
  %v4472 = vmax.f32 %v4470, %v4471
  %v4473 = vrot.slane %v4472, 2
  %v4474 = vmax.f32 %v4472, %v4473
  %v4475 = vrot.slane %v4474, 1
  %v4476 = vmax.f32 %v4474, %v4475
  %v4477 = vsel %vm1032, %v500, -inf
  %v4478 = vrot.slane %v4477, 4
  %v4479 = vmax.f32 %v4477, %v4478
  %v4480 = vrot.slane %v4479, 2
  %v4481 = vmax.f32 %v4479, %v4480
  %v4482 = vrot.slane %v4481, 1
  %v4483 = vmax.f32 %v4481, %v4482
  %v4484 = vsel %vm1032, %v501, -inf
  %v4485 = vrot.slane %v4484, 4
  %v4486 = vmax.f32 %v4484, %v4485
  %v4487 = vrot.slane %v4486, 2
  %v4488 = vmax.f32 %v4486, %v4487
  %v4489 = vrot.slane %v4488, 1
  %v4490 = vmax.f32 %v4488, %v4489
  %v4491 = vsel %vm1032, %v502, -inf
  %v4492 = vrot.slane %v4491, 4
  %v4493 = vmax.f32 %v4491, %v4492
  %v4494 = vrot.slane %v4493, 2
  %v4495 = vmax.f32 %v4493, %v4494
  %v4496 = vrot.slane %v4495, 1
  %v4497 = vmax.f32 %v4495, %v4496
  %v4498 = vsel %vm1032, %v503, -inf
  %v4499 = vrot.slane %v4498, 4
  %v4500 = vmax.f32 %v4498, %v4499
  %v4501 = vrot.slane %v4500, 2
  %v4502 = vmax.f32 %v4500, %v4501
  %v4503 = vrot.slane %v4502, 1
  %v4504 = vmax.f32 %v4502, %v4503
  %v4505 = vsel %vm1032, %v504, -inf
  %v4506 = vrot.slane %v4505, 4
  %v4507 = vmax.f32 %v4505, %v4506
  %v4508 = vrot.slane %v4507, 2
  %v4509 = vmax.f32 %v4507, %v4508
  %v4510 = vrot.slane %v4509, 1
  %v4511 = vmax.f32 %v4509, %v4510
  %v4512 = vsel %vm1032, %v505, -inf
  %v4513 = vrot.slane %v4512, 4
  %v4514 = vmax.f32 %v4512, %v4513
  %v4515 = vrot.slane %v4514, 2
  %v4516 = vmax.f32 %v4514, %v4515
  %v4517 = vrot.slane %v4516, 1
  %v4518 = vmax.f32 %v4516, %v4517
  %v4519 = vsel %vm1032, %v506, -inf
  %v4520 = vrot.slane %v4519, 4
  %v4521 = vmax.f32 %v4519, %v4520
  %v4522 = vrot.slane %v4521, 2
  %v4523 = vmax.f32 %v4521, %v4522
  %v4524 = vrot.slane %v4523, 1
  %v4525 = vmax.f32 %v4523, %v4524
  %v4526 = vsel %vm1032, %v507, -inf
  %v4527 = vrot.slane %v4526, 4
  %v4528 = vmax.f32 %v4526, %v4527
  %v4529 = vrot.slane %v4528, 2
  %v4530 = vmax.f32 %v4528, %v4529
  %v4531 = vrot.slane %v4530, 1
  %v4532 = vmax.f32 %v4530, %v4531
  %v4533 = vsel %vm1032, %v508, -inf
  %v4534 = vrot.slane %v4533, 4
  %v4535 = vmax.f32 %v4533, %v4534
  %v4536 = vrot.slane %v4535, 2
  %v4537 = vmax.f32 %v4535, %v4536
  %v4538 = vrot.slane %v4537, 1
  %v4539 = vmax.f32 %v4537, %v4538
  %v4540 = vsel %vm1032, %v509, -inf
  %v4541 = vrot.slane %v4540, 4
  %v4542 = vmax.f32 %v4540, %v4541
  %v4543 = vrot.slane %v4542, 2
  %v4544 = vmax.f32 %v4542, %v4543
  %v4545 = vrot.slane %v4544, 1
  %v4546 = vmax.f32 %v4544, %v4545
  %v4547 = vsel %vm1032, %v510, -inf
  %v4548 = vrot.slane %v4547, 4
  %v4549 = vmax.f32 %v4547, %v4548
  %v4550 = vrot.slane %v4549, 2
  %v4551 = vmax.f32 %v4549, %v4550
  %v4552 = vrot.slane %v4551, 1
  %v4553 = vmax.f32 %v4551, %v4552
  %v4554 = vsel %vm1032, %v511, -inf
  %v4555 = vrot.slane %v4554, 4
  %v4556 = vmax.f32 %v4554, %v4555
  %v4557 = vrot.slane %v4556, 2
  %v4558 = vmax.f32 %v4556, %v4557
  %v4559 = vrot.slane %v4558, 1
  %v4560 = vmax.f32 %v4558, %v4559
  %v4561 = vsel %vm1032, %v512, -inf
  %v4562 = vrot.slane %v4561, 4
  %v4563 = vmax.f32 %v4561, %v4562
  %v4564 = vrot.slane %v4563, 2
  %v4565 = vmax.f32 %v4563, %v4564
  %v4566 = vrot.slane %v4565, 1
  %v4567 = vmax.f32 %v4565, %v4566
  %v4568 = vsel %vm1032, %v513, -inf
  %v4569 = vrot.slane %v4568, 4
  %v4570 = vmax.f32 %v4568, %v4569
  %v4571 = vrot.slane %v4570, 2
  %v4572 = vmax.f32 %v4570, %v4571
  %v4573 = vrot.slane %v4572, 1
  %v4574 = vmax.f32 %v4572, %v4573
  %v4575 = vsel %vm1032, %v514, -inf
  %v4576 = vrot.slane %v4575, 4
  %v4577 = vmax.f32 %v4575, %v4576
  %v4578 = vrot.slane %v4577, 2
  %v4579 = vmax.f32 %v4577, %v4578
  %v4580 = vrot.slane %v4579, 1
  %v4581 = vmax.f32 %v4579, %v4580
  %v4582 = vsel %vm1032, %v515, -inf
  %v4583 = vrot.slane %v4582, 4
  %v4584 = vmax.f32 %v4582, %v4583
  %v4585 = vrot.slane %v4584, 2
  %v4586 = vmax.f32 %v4584, %v4585
  %v4587 = vrot.slane %v4586, 1
  %v4588 = vmax.f32 %v4586, %v4587
  %v4589 = vsel %vm1032, %v516, -inf
  %v4590 = vrot.slane %v4589, 4
  %v4591 = vmax.f32 %v4589, %v4590
  %v4592 = vrot.slane %v4591, 2
  %v4593 = vmax.f32 %v4591, %v4592
  %v4594 = vrot.slane %v4593, 1
  %v4595 = vmax.f32 %v4593, %v4594
  %v4596 = vsel %vm1032, %v517, -inf
  %v4597 = vrot.slane %v4596, 4
  %v4598 = vmax.f32 %v4596, %v4597
  %v4599 = vrot.slane %v4598, 2
  %v4600 = vmax.f32 %v4598, %v4599
  %v4601 = vrot.slane %v4600, 1
  %v4602 = vmax.f32 %v4600, %v4601
  %v4603 = vsel %vm1032, %v518, -inf
  %v4604 = vrot.slane %v4603, 4
  %v4605 = vmax.f32 %v4603, %v4604
  %v4606 = vrot.slane %v4605, 2
  %v4607 = vmax.f32 %v4605, %v4606
  %v4608 = vrot.slane %v4607, 1
  %v4609 = vmax.f32 %v4607, %v4608
  %v4610 = vsel %vm1032, %v519, -inf
  %v4611 = vrot.slane %v4610, 4
  %v4612 = vmax.f32 %v4610, %v4611
  %v4613 = vrot.slane %v4612, 2
  %v4614 = vmax.f32 %v4612, %v4613
  %v4615 = vrot.slane %v4614, 1
  %v4616 = vmax.f32 %v4614, %v4615
  %v4617 = vsel %vm1032, %v520, -inf
  %v4618 = vrot.slane %v4617, 4
  %v4619 = vmax.f32 %v4617, %v4618
  %v4620 = vrot.slane %v4619, 2
  %v4621 = vmax.f32 %v4619, %v4620
  %v4622 = vrot.slane %v4621, 1
  %v4623 = vmax.f32 %v4621, %v4622
  %v4624 = vsel %vm1032, %v521, -inf
  %v4625 = vrot.slane %v4624, 4
  %v4626 = vmax.f32 %v4624, %v4625
  %v4627 = vrot.slane %v4626, 2
  %v4628 = vmax.f32 %v4626, %v4627
  %v4629 = vrot.slane %v4628, 1
  %v4630 = vmax.f32 %v4628, %v4629
  %v4631 = vsel %vm1032, %v522, -inf
  %v4632 = vrot.slane %v4631, 4
  %v4633 = vmax.f32 %v4631, %v4632
  %v4634 = vrot.slane %v4633, 2
  %v4635 = vmax.f32 %v4633, %v4634
  %v4636 = vrot.slane %v4635, 1
  %v4637 = vmax.f32 %v4635, %v4636
  %v4638 = vsel %vm1032, %v523, -inf
  %v4639 = vrot.slane %v4638, 4
  %v4640 = vmax.f32 %v4638, %v4639
  %v4641 = vrot.slane %v4640, 2
  %v4642 = vmax.f32 %v4640, %v4641
  %v4643 = vrot.slane %v4642, 1
  %v4644 = vmax.f32 %v4642, %v4643
  %v4645 = vsel %vm1032, %v524, -inf
  %v4646 = vrot.slane %v4645, 4
  %v4647 = vmax.f32 %v4645, %v4646
  %v4648 = vrot.slane %v4647, 2
  %v4649 = vmax.f32 %v4647, %v4648
  %v4650 = vrot.slane %v4649, 1
  %v4651 = vmax.f32 %v4649, %v4650
  %v4652 = vsel %vm1032, %v525, -inf
  %v4653 = vrot.slane %v4652, 4
  %v4654 = vmax.f32 %v4652, %v4653
  %v4655 = vrot.slane %v4654, 2
  %v4656 = vmax.f32 %v4654, %v4655
  %v4657 = vrot.slane %v4656, 1
  %v4658 = vmax.f32 %v4656, %v4657
  %v4659 = vsel %vm1032, %v526, -inf
  %v4660 = vrot.slane %v4659, 4
  %v4661 = vmax.f32 %v4659, %v4660
  %v4662 = vrot.slane %v4661, 2
  %v4663 = vmax.f32 %v4661, %v4662
  %v4664 = vrot.slane %v4663, 1
  %v4665 = vmax.f32 %v4663, %v4664
  %v4666 = vsel %vm1032, %v527, -inf
  %v4667 = vrot.slane %v4666, 4
  %v4668 = vmax.f32 %v4666, %v4667
  %v4669 = vrot.slane %v4668, 2
  %v4670 = vmax.f32 %v4668, %v4669
  %v4671 = vrot.slane %v4670, 1
  %v4672 = vmax.f32 %v4670, %v4671
  %v4673 = vsel %vm1032, %v528, -inf
  %v4674 = vrot.slane %v4673, 4
  %v4675 = vmax.f32 %v4673, %v4674
  %v4676 = vrot.slane %v4675, 2
  %v4677 = vmax.f32 %v4675, %v4676
  %v4678 = vrot.slane %v4677, 1
  %v4679 = vmax.f32 %v4677, %v4678
  %v4680 = vsel %vm1032, %v529, -inf
  %v4681 = vrot.slane %v4680, 4
  %v4682 = vmax.f32 %v4680, %v4681
  %v4683 = vrot.slane %v4682, 2
  %v4684 = vmax.f32 %v4682, %v4683
  %v4685 = vrot.slane %v4684, 1
  %v4686 = vmax.f32 %v4684, %v4685
  %v4687 = vsel %vm1032, %v530, -inf
  %v4688 = vrot.slane %v4687, 4
  %v4689 = vmax.f32 %v4687, %v4688
  %v4690 = vrot.slane %v4689, 2
  %v4691 = vmax.f32 %v4689, %v4690
  %v4692 = vrot.slane %v4691, 1
  %v4693 = vmax.f32 %v4691, %v4692
  %v4694 = vsel %vm1032, %v531, -inf
  %v4695 = vrot.slane %v4694, 4
  %v4696 = vmax.f32 %v4694, %v4695
  %v4697 = vrot.slane %v4696, 2
  %v4698 = vmax.f32 %v4696, %v4697
  %v4699 = vrot.slane %v4698, 1
  %v4700 = vmax.f32 %v4698, %v4699
  %v4701 = vsel %vm1032, %v532, -inf
  %v4702 = vrot.slane %v4701, 4
  %v4703 = vmax.f32 %v4701, %v4702
  %v4704 = vrot.slane %v4703, 2
  %v4705 = vmax.f32 %v4703, %v4704
  %v4706 = vrot.slane %v4705, 1
  %v4707 = vmax.f32 %v4705, %v4706
  %v4708 = vsel %vm1032, %v533, -inf
  %v4709 = vrot.slane %v4708, 4
  %v4710 = vmax.f32 %v4708, %v4709
  %v4711 = vrot.slane %v4710, 2
  %v4712 = vmax.f32 %v4710, %v4711
  %v4713 = vrot.slane %v4712, 1
  %v4714 = vmax.f32 %v4712, %v4713
  %v4715 = vsel %vm1032, %v534, -inf
  %v4716 = vrot.slane %v4715, 4
  %v4717 = vmax.f32 %v4715, %v4716
  %v4718 = vrot.slane %v4717, 2
  %v4719 = vmax.f32 %v4717, %v4718
  %v4720 = vrot.slane %v4719, 1
  %v4721 = vmax.f32 %v4719, %v4720
  %v4722 = vsel %vm1032, %v535, -inf
  %v4723 = vrot.slane %v4722, 4
  %v4724 = vmax.f32 %v4722, %v4723
  %v4725 = vrot.slane %v4724, 2
  %v4726 = vmax.f32 %v4724, %v4725
  %v4727 = vrot.slane %v4726, 1
  %v4728 = vmax.f32 %v4726, %v4727
  %v4729 = vsel %vm1032, %v536, -inf
  %v4730 = vrot.slane %v4729, 4
  %v4731 = vmax.f32 %v4729, %v4730
  %v4732 = vrot.slane %v4731, 2
  %v4733 = vmax.f32 %v4731, %v4732
  %v4734 = vrot.slane %v4733, 1
  %v4735 = vmax.f32 %v4733, %v4734
  %v4736 = vsel %vm1032, %v537, -inf
  %v4737 = vrot.slane %v4736, 4
  %v4738 = vmax.f32 %v4736, %v4737
  %v4739 = vrot.slane %v4738, 2
  %v4740 = vmax.f32 %v4738, %v4739
  %v4741 = vrot.slane %v4740, 1
  %v4742 = vmax.f32 %v4740, %v4741
  %v4743 = vsel %vm1032, %v538, -inf
  %v4744 = vrot.slane %v4743, 4
  %v4745 = vmax.f32 %v4743, %v4744
  %v4746 = vrot.slane %v4745, 2
  %v4747 = vmax.f32 %v4745, %v4746
  %v4748 = vrot.slane %v4747, 1
  %v4749 = vmax.f32 %v4747, %v4748
  %v4750 = vsel %vm1032, %v539, -inf
  %v4751 = vrot.slane %v4750, 4
  %v4752 = vmax.f32 %v4750, %v4751
  %v4753 = vrot.slane %v4752, 2
  %v4754 = vmax.f32 %v4752, %v4753
  %v4755 = vrot.slane %v4754, 1
  %v4756 = vmax.f32 %v4754, %v4755
  %v4757 = vsel %vm1032, %v540, -inf
  %v4758 = vrot.slane %v4757, 4
  %v4759 = vmax.f32 %v4757, %v4758
  %v4760 = vrot.slane %v4759, 2
  %v4761 = vmax.f32 %v4759, %v4760
  %v4762 = vrot.slane %v4761, 1
  %v4763 = vmax.f32 %v4761, %v4762
  %v4764 = vsel %vm1032, %v541, -inf
  %v4765 = vrot.slane %v4764, 4
  %v4766 = vmax.f32 %v4764, %v4765
  %v4767 = vrot.slane %v4766, 2
  %v4768 = vmax.f32 %v4766, %v4767
  %v4769 = vrot.slane %v4768, 1
  %v4770 = vmax.f32 %v4768, %v4769
  %v4771 = vsel %vm1032, %v542, -inf
  %v4772 = vrot.slane %v4771, 4
  %v4773 = vmax.f32 %v4771, %v4772
  %v4774 = vrot.slane %v4773, 2
  %v4775 = vmax.f32 %v4773, %v4774
  %v4776 = vrot.slane %v4775, 1
  %v4777 = vmax.f32 %v4775, %v4776
  %v4778 = vsel %vm1032, %v543, -inf
  %v4779 = vrot.slane %v4778, 4
  %v4780 = vmax.f32 %v4778, %v4779
  %v4781 = vrot.slane %v4780, 2
  %v4782 = vmax.f32 %v4780, %v4781
  %v4783 = vrot.slane %v4782, 1
  %v4784 = vmax.f32 %v4782, %v4783
  %v4785 = vsel %vm1032, %v544, -inf
  %v4786 = vrot.slane %v4785, 4
  %v4787 = vmax.f32 %v4785, %v4786
  %v4788 = vrot.slane %v4787, 2
  %v4789 = vmax.f32 %v4787, %v4788
  %v4790 = vrot.slane %v4789, 1
  %v4791 = vmax.f32 %v4789, %v4790
  %v4792 = vsel %vm1032, %v545, -inf
  %v4793 = vrot.slane %v4792, 4
  %v4794 = vmax.f32 %v4792, %v4793
  %v4795 = vrot.slane %v4794, 2
  %v4796 = vmax.f32 %v4794, %v4795
  %v4797 = vrot.slane %v4796, 1
  %v4798 = vmax.f32 %v4796, %v4797
  %v4799 = vsel %vm1032, %v546, -inf
  %v4800 = vrot.slane %v4799, 4
  %v4801 = vmax.f32 %v4799, %v4800
  %v4802 = vrot.slane %v4801, 2
  %v4803 = vmax.f32 %v4801, %v4802
  %v4804 = vrot.slane %v4803, 1
  %v4805 = vmax.f32 %v4803, %v4804
  %v4806 = vsel %vm1032, %v547, -inf
  %v4807 = vrot.slane %v4806, 4
  %v4808 = vmax.f32 %v4806, %v4807
  %v4809 = vrot.slane %v4808, 2
  %v4810 = vmax.f32 %v4808, %v4809
  %v4811 = vrot.slane %v4810, 1
  %v4812 = vmax.f32 %v4810, %v4811
  %v4813 = vsel %vm1032, %v548, -inf
  %v4814 = vrot.slane %v4813, 4
  %v4815 = vmax.f32 %v4813, %v4814
  %v4816 = vrot.slane %v4815, 2
  %v4817 = vmax.f32 %v4815, %v4816
  %v4818 = vrot.slane %v4817, 1
  %v4819 = vmax.f32 %v4817, %v4818
  %v4820 = vsel %vm1032, %v549, -inf
  %v4821 = vrot.slane %v4820, 4
  %v4822 = vmax.f32 %v4820, %v4821
  %v4823 = vrot.slane %v4822, 2
  %v4824 = vmax.f32 %v4822, %v4823
  %v4825 = vrot.slane %v4824, 1
  %v4826 = vmax.f32 %v4824, %v4825
  %v4827 = vsel %vm1032, %v550, -inf
  %v4828 = vrot.slane %v4827, 4
  %v4829 = vmax.f32 %v4827, %v4828
  %v4830 = vrot.slane %v4829, 2
  %v4831 = vmax.f32 %v4829, %v4830
  %v4832 = vrot.slane %v4831, 1
  %v4833 = vmax.f32 %v4831, %v4832
  %v4834 = vsel %vm1032, %v551, -inf
  %v4835 = vrot.slane %v4834, 4
  %v4836 = vmax.f32 %v4834, %v4835
  %v4837 = vrot.slane %v4836, 2
  %v4838 = vmax.f32 %v4836, %v4837
  %v4839 = vrot.slane %v4838, 1
  %v4840 = vmax.f32 %v4838, %v4839
  %v4841 = vsel %vm1032, %v552, -inf
  %v4842 = vrot.slane %v4841, 4
  %v4843 = vmax.f32 %v4841, %v4842
  %v4844 = vrot.slane %v4843, 2
  %v4845 = vmax.f32 %v4843, %v4844
  %v4846 = vrot.slane %v4845, 1
  %v4847 = vmax.f32 %v4845, %v4846
  %v4848 = vsel %vm1032, %v553, -inf
  %v4849 = vrot.slane %v4848, 4
  %v4850 = vmax.f32 %v4848, %v4849
  %v4851 = vrot.slane %v4850, 2
  %v4852 = vmax.f32 %v4850, %v4851
  %v4853 = vrot.slane %v4852, 1
  %v4854 = vmax.f32 %v4852, %v4853
  %v4855 = vsel %vm1032, %v554, -inf
  %v4856 = vrot.slane %v4855, 4
  %v4857 = vmax.f32 %v4855, %v4856
  %v4858 = vrot.slane %v4857, 2
  %v4859 = vmax.f32 %v4857, %v4858
  %v4860 = vrot.slane %v4859, 1
  %v4861 = vmax.f32 %v4859, %v4860
  %v4862 = vsel %vm1032, %v555, -inf
  %v4863 = vrot.slane %v4862, 4
  %v4864 = vmax.f32 %v4862, %v4863
  %v4865 = vrot.slane %v4864, 2
  %v4866 = vmax.f32 %v4864, %v4865
  %v4867 = vrot.slane %v4866, 1
  %v4868 = vmax.f32 %v4866, %v4867
  %v4869 = vsel %vm1032, %v556, -inf
  %v4870 = vrot.slane %v4869, 4
  %v4871 = vmax.f32 %v4869, %v4870
  %v4872 = vrot.slane %v4871, 2
  %v4873 = vmax.f32 %v4871, %v4872
  %v4874 = vrot.slane %v4873, 1
  %v4875 = vmax.f32 %v4873, %v4874
  %v4876 = vsel %vm1032, %v557, -inf
  %v4877 = vrot.slane %v4876, 4
  %v4878 = vmax.f32 %v4876, %v4877
  %v4879 = vrot.slane %v4878, 2
  %v4880 = vmax.f32 %v4878, %v4879
  %v4881 = vrot.slane %v4880, 1
  %v4882 = vmax.f32 %v4880, %v4881
  %v4883 = vsel %vm1032, %v558, -inf
  %v4884 = vrot.slane %v4883, 4
  %v4885 = vmax.f32 %v4883, %v4884
  %v4886 = vrot.slane %v4885, 2
  %v4887 = vmax.f32 %v4885, %v4886
  %v4888 = vrot.slane %v4887, 1
  %v4889 = vmax.f32 %v4887, %v4888
  %v4890 = vsel %vm1032, %v559, -inf
  %v4891 = vrot.slane %v4890, 4
  %v4892 = vmax.f32 %v4890, %v4891
  %v4893 = vrot.slane %v4892, 2
  %v4894 = vmax.f32 %v4892, %v4893
  %v4895 = vrot.slane %v4894, 1
  %v4896 = vmax.f32 %v4894, %v4895
  %v4897 = vsel %vm1032, %v560, -inf
  %v4898 = vrot.slane %v4897, 4
  %v4899 = vmax.f32 %v4897, %v4898
  %v4900 = vrot.slane %v4899, 2
  %v4901 = vmax.f32 %v4899, %v4900
  %v4902 = vrot.slane %v4901, 1
  %v4903 = vmax.f32 %v4901, %v4902
  %v4904 = vsel %vm1032, %v561, -inf
  %v4905 = vrot.slane %v4904, 4
  %v4906 = vmax.f32 %v4904, %v4905
  %v4907 = vrot.slane %v4906, 2
  %v4908 = vmax.f32 %v4906, %v4907
  %v4909 = vrot.slane %v4908, 1
  %v4910 = vmax.f32 %v4908, %v4909
  %v4911 = vsel %vm1032, %v562, -inf
  %v4912 = vrot.slane %v4911, 4
  %v4913 = vmax.f32 %v4911, %v4912
  %v4914 = vrot.slane %v4913, 2
  %v4915 = vmax.f32 %v4913, %v4914
  %v4916 = vrot.slane %v4915, 1
  %v4917 = vmax.f32 %v4915, %v4916
  %v4918 = vsel %vm1032, %v563, -inf
  %v4919 = vrot.slane %v4918, 4
  %v4920 = vmax.f32 %v4918, %v4919
  %v4921 = vrot.slane %v4920, 2
  %v4922 = vmax.f32 %v4920, %v4921
  %v4923 = vrot.slane %v4922, 1
  %v4924 = vmax.f32 %v4922, %v4923
  %v4925 = vsel %vm1032, %v564, -inf
  %v4926 = vrot.slane %v4925, 4
  %v4927 = vmax.f32 %v4925, %v4926
  %v4928 = vrot.slane %v4927, 2
  %v4929 = vmax.f32 %v4927, %v4928
  %v4930 = vrot.slane %v4929, 1
  %v4931 = vmax.f32 %v4929, %v4930
  %v4932 = vsel %vm1032, %v565, -inf
  %v4933 = vrot.slane %v4932, 4
  %v4934 = vmax.f32 %v4932, %v4933
  %v4935 = vrot.slane %v4934, 2
  %v4936 = vmax.f32 %v4934, %v4935
  %v4937 = vrot.slane %v4936, 1
  %v4938 = vmax.f32 %v4936, %v4937
  %v4939 = vsel %vm1032, %v566, -inf
  %v4940 = vrot.slane %v4939, 4
  %v4941 = vmax.f32 %v4939, %v4940
  %v4942 = vrot.slane %v4941, 2
  %v4943 = vmax.f32 %v4941, %v4942
  %v4944 = vrot.slane %v4943, 1
  %v4945 = vmax.f32 %v4943, %v4944
  %v4946 = vsel %vm1032, %v567, -inf
  %v4947 = vrot.slane %v4946, 4
  %v4948 = vmax.f32 %v4946, %v4947
  %v4949 = vrot.slane %v4948, 2
  %v4950 = vmax.f32 %v4948, %v4949
  %v4951 = vrot.slane %v4950, 1
  %v4952 = vmax.f32 %v4950, %v4951
  %v4953 = vsel %vm1032, %v568, -inf
  %v4954 = vrot.slane %v4953, 4
  %v4955 = vmax.f32 %v4953, %v4954
  %v4956 = vrot.slane %v4955, 2
  %v4957 = vmax.f32 %v4955, %v4956
  %v4958 = vrot.slane %v4957, 1
  %v4959 = vmax.f32 %v4957, %v4958
  %v4960 = vsel %vm1032, %v569, -inf
  %v4961 = vrot.slane %v4960, 4
  %v4962 = vmax.f32 %v4960, %v4961
  %v4963 = vrot.slane %v4962, 2
  %v4964 = vmax.f32 %v4962, %v4963
  %v4965 = vrot.slane %v4964, 1
  %v4966 = vmax.f32 %v4964, %v4965
  %v4967 = vsel %vm1032, %v570, -inf
  %v4968 = vrot.slane %v4967, 4
  %v4969 = vmax.f32 %v4967, %v4968
  %v4970 = vrot.slane %v4969, 2
  %v4971 = vmax.f32 %v4969, %v4970
  %v4972 = vrot.slane %v4971, 1
  %v4973 = vmax.f32 %v4971, %v4972
  %v4974 = vsel %vm1032, %v571, -inf
  %v4975 = vrot.slane %v4974, 4
  %v4976 = vmax.f32 %v4974, %v4975
  %v4977 = vrot.slane %v4976, 2
  %v4978 = vmax.f32 %v4976, %v4977
  %v4979 = vrot.slane %v4978, 1
  %v4980 = vmax.f32 %v4978, %v4979
  %v4981 = vsel %vm1032, %v572, -inf
  %v4982 = vrot.slane %v4981, 4
  %v4983 = vmax.f32 %v4981, %v4982
  %v4984 = vrot.slane %v4983, 2
  %v4985 = vmax.f32 %v4983, %v4984
  %v4986 = vrot.slane %v4985, 1
  %v4987 = vmax.f32 %v4985, %v4986
  %v4988 = vsel %vm1032, %v573, -inf
  %v4989 = vrot.slane %v4988, 4
  %v4990 = vmax.f32 %v4988, %v4989
  %v4991 = vrot.slane %v4990, 2
  %v4992 = vmax.f32 %v4990, %v4991
  %v4993 = vrot.slane %v4992, 1
  %v4994 = vmax.f32 %v4992, %v4993
  %v4995 = vsel %vm1032, %v574, -inf
  %v4996 = vrot.slane %v4995, 4
  %v4997 = vmax.f32 %v4995, %v4996
  %v4998 = vrot.slane %v4997, 2
  %v4999 = vmax.f32 %v4997, %v4998
  %v5000 = vrot.slane %v4999, 1
  %v5001 = vmax.f32 %v4999, %v5000
  %v5002 = vsel %vm1032, %v575, -inf
  %v5003 = vrot.slane %v5002, 4
  %v5004 = vmax.f32 %v5002, %v5003
  %v5005 = vrot.slane %v5004, 2
  %v5006 = vmax.f32 %v5004, %v5005
  %v5007 = vrot.slane %v5006, 1
  %v5008 = vmax.f32 %v5006, %v5007
  %v5009 = vsel %vm1032, %v576, -inf
  %v5010 = vrot.slane %v5009, 4
  %v5011 = vmax.f32 %v5009, %v5010
  %v5012 = vrot.slane %v5011, 2
  %v5013 = vmax.f32 %v5011, %v5012
  %v5014 = vrot.slane %v5013, 1
  %v5015 = vmax.f32 %v5013, %v5014
  %v5016 = vsel %vm1032, %v577, -inf
  %v5017 = vrot.slane %v5016, 4
  %v5018 = vmax.f32 %v5016, %v5017
  %v5019 = vrot.slane %v5018, 2
  %v5020 = vmax.f32 %v5018, %v5019
  %v5021 = vrot.slane %v5020, 1
  %v5022 = vmax.f32 %v5020, %v5021
  %v5023 = vsel %vm1032, %v578, -inf
  %v5024 = vrot.slane %v5023, 4
  %v5025 = vmax.f32 %v5023, %v5024
  %v5026 = vrot.slane %v5025, 2
  %v5027 = vmax.f32 %v5025, %v5026
  %v5028 = vrot.slane %v5027, 1
  %v5029 = vmax.f32 %v5027, %v5028
  %v5030 = vsel %vm1032, %v579, -inf
  %v5031 = vrot.slane %v5030, 4
  %v5032 = vmax.f32 %v5030, %v5031
  %v5033 = vrot.slane %v5032, 2
  %v5034 = vmax.f32 %v5032, %v5033
  %v5035 = vrot.slane %v5034, 1
  %v5036 = vmax.f32 %v5034, %v5035
  %v5037 = vsel %vm1032, %v580, -inf
  %v5038 = vrot.slane %v5037, 4
  %v5039 = vmax.f32 %v5037, %v5038
  %v5040 = vrot.slane %v5039, 2
  %v5041 = vmax.f32 %v5039, %v5040
  %v5042 = vrot.slane %v5041, 1
  %v5043 = vmax.f32 %v5041, %v5042
  %v5044 = vsel %vm1032, %v581, -inf
  %v5045 = vrot.slane %v5044, 4
  %v5046 = vmax.f32 %v5044, %v5045
  %v5047 = vrot.slane %v5046, 2
  %v5048 = vmax.f32 %v5046, %v5047
  %v5049 = vrot.slane %v5048, 1
  %v5050 = vmax.f32 %v5048, %v5049
  %v5051 = vsel %vm1032, %v582, -inf
  %v5052 = vrot.slane %v5051, 4
  %v5053 = vmax.f32 %v5051, %v5052
  %v5054 = vrot.slane %v5053, 2
  %v5055 = vmax.f32 %v5053, %v5054
  %v5056 = vrot.slane %v5055, 1
  %v5057 = vmax.f32 %v5055, %v5056
  %v5058 = vsel %vm1032, %v583, -inf
  %v5059 = vrot.slane %v5058, 4
  %v5060 = vmax.f32 %v5058, %v5059
  %v5061 = vrot.slane %v5060, 2
  %v5062 = vmax.f32 %v5060, %v5061
  %v5063 = vrot.slane %v5062, 1
  %v5064 = vmax.f32 %v5062, %v5063
  %v5065 = vsel %vm1032, %v584, -inf
  %v5066 = vrot.slane %v5065, 4
  %v5067 = vmax.f32 %v5065, %v5066
  %v5068 = vrot.slane %v5067, 2
  %v5069 = vmax.f32 %v5067, %v5068
  %v5070 = vrot.slane %v5069, 1
  %v5071 = vmax.f32 %v5069, %v5070
  %v5072 = vsel %vm1032, %v585, -inf
  %v5073 = vrot.slane %v5072, 4
  %v5074 = vmax.f32 %v5072, %v5073
  %v5075 = vrot.slane %v5074, 2
  %v5076 = vmax.f32 %v5074, %v5075
  %v5077 = vrot.slane %v5076, 1
  %v5078 = vmax.f32 %v5076, %v5077
  %v5079 = vsel %vm1032, %v586, -inf
  %v5080 = vrot.slane %v5079, 4
  %v5081 = vmax.f32 %v5079, %v5080
  %v5082 = vrot.slane %v5081, 2
  %v5083 = vmax.f32 %v5081, %v5082
  %v5084 = vrot.slane %v5083, 1
  %v5085 = vmax.f32 %v5083, %v5084
  %v5086 = vsel %vm1032, %v587, -inf
  %v5087 = vrot.slane %v5086, 4
  %v5088 = vmax.f32 %v5086, %v5087
  %v5089 = vrot.slane %v5088, 2
  %v5090 = vmax.f32 %v5088, %v5089
  %v5091 = vrot.slane %v5090, 1
  %v5092 = vmax.f32 %v5090, %v5091
  %v5093 = vsel %vm1032, %v588, -inf
  %v5094 = vrot.slane %v5093, 4
  %v5095 = vmax.f32 %v5093, %v5094
  %v5096 = vrot.slane %v5095, 2
  %v5097 = vmax.f32 %v5095, %v5096
  %v5098 = vrot.slane %v5097, 1
  %v5099 = vmax.f32 %v5097, %v5098
  %v5100 = vsel %vm1032, %v589, -inf
  %v5101 = vrot.slane %v5100, 4
  %v5102 = vmax.f32 %v5100, %v5101
  %v5103 = vrot.slane %v5102, 2
  %v5104 = vmax.f32 %v5102, %v5103
  %v5105 = vrot.slane %v5104, 1
  %v5106 = vmax.f32 %v5104, %v5105
  %v5107 = vsel %vm1032, %v590, -inf
  %v5108 = vrot.slane %v5107, 4
  %v5109 = vmax.f32 %v5107, %v5108
  %v5110 = vrot.slane %v5109, 2
  %v5111 = vmax.f32 %v5109, %v5110
  %v5112 = vrot.slane %v5111, 1
  %v5113 = vmax.f32 %v5111, %v5112
  %v5114 = vsel %vm1032, %v591, -inf
  %v5115 = vrot.slane %v5114, 4
  %v5116 = vmax.f32 %v5114, %v5115
  %v5117 = vrot.slane %v5116, 2
  %v5118 = vmax.f32 %v5116, %v5117
  %v5119 = vrot.slane %v5118, 1
  %v5120 = vmax.f32 %v5118, %v5119
  %v5121 = vsel %vm1032, %v592, -inf
  %v5122 = vrot.slane %v5121, 4
  %v5123 = vmax.f32 %v5121, %v5122
  %v5124 = vrot.slane %v5123, 2
  %v5125 = vmax.f32 %v5123, %v5124
  %v5126 = vrot.slane %v5125, 1
  %v5127 = vmax.f32 %v5125, %v5126
  %v5128 = vsel %vm1032, %v593, -inf
  %v5129 = vrot.slane %v5128, 4
  %v5130 = vmax.f32 %v5128, %v5129
  %v5131 = vrot.slane %v5130, 2
  %v5132 = vmax.f32 %v5130, %v5131
  %v5133 = vrot.slane %v5132, 1
  %v5134 = vmax.f32 %v5132, %v5133
  %v5135 = vsel %vm1032, %v594, -inf
  %v5136 = vrot.slane %v5135, 4
  %v5137 = vmax.f32 %v5135, %v5136
  %v5138 = vrot.slane %v5137, 2
  %v5139 = vmax.f32 %v5137, %v5138
  %v5140 = vrot.slane %v5139, 1
  %v5141 = vmax.f32 %v5139, %v5140
  %v5142 = vsel %vm1032, %v595, -inf
  %v5143 = vrot.slane %v5142, 4
  %v5144 = vmax.f32 %v5142, %v5143
  %v5145 = vrot.slane %v5144, 2
  %v5146 = vmax.f32 %v5144, %v5145
  %v5147 = vrot.slane %v5146, 1
  %v5148 = vmax.f32 %v5146, %v5147
  %v5149 = vsel %vm1032, %v596, -inf
  %v5150 = vrot.slane %v5149, 4
  %v5151 = vmax.f32 %v5149, %v5150
  %v5152 = vrot.slane %v5151, 2
  %v5153 = vmax.f32 %v5151, %v5152
  %v5154 = vrot.slane %v5153, 1
  %v5155 = vmax.f32 %v5153, %v5154
  %v5156 = vsel %vm1032, %v597, -inf
  %v5157 = vrot.slane %v5156, 4
  %v5158 = vmax.f32 %v5156, %v5157
  %v5159 = vrot.slane %v5158, 2
  %v5160 = vmax.f32 %v5158, %v5159
  %v5161 = vrot.slane %v5160, 1
  %v5162 = vmax.f32 %v5160, %v5161
  %v5163 = vsel %vm1032, %v598, -inf
  %v5164 = vrot.slane %v5163, 4
  %v5165 = vmax.f32 %v5163, %v5164
  %v5166 = vrot.slane %v5165, 2
  %v5167 = vmax.f32 %v5165, %v5166
  %v5168 = vrot.slane %v5167, 1
  %v5169 = vmax.f32 %v5167, %v5168
  %v5170 = vsel %vm1032, %v599, -inf
  %v5171 = vrot.slane %v5170, 4
  %v5172 = vmax.f32 %v5170, %v5171
  %v5173 = vrot.slane %v5172, 2
  %v5174 = vmax.f32 %v5172, %v5173
  %v5175 = vrot.slane %v5174, 1
  %v5176 = vmax.f32 %v5174, %v5175
  %v5177 = vsel %vm1032, %v600, -inf
  %v5178 = vrot.slane %v5177, 4
  %v5179 = vmax.f32 %v5177, %v5178
  %v5180 = vrot.slane %v5179, 2
  %v5181 = vmax.f32 %v5179, %v5180
  %v5182 = vrot.slane %v5181, 1
  %v5183 = vmax.f32 %v5181, %v5182
  %v5184 = vsel %vm1032, %v601, -inf
  %v5185 = vrot.slane %v5184, 4
  %v5186 = vmax.f32 %v5184, %v5185
  %v5187 = vrot.slane %v5186, 2
  %v5188 = vmax.f32 %v5186, %v5187
  %v5189 = vrot.slane %v5188, 1
  %v5190 = vmax.f32 %v5188, %v5189
  %v5191 = vsel %vm1032, %v602, -inf
  %v5192 = vrot.slane %v5191, 4
  %v5193 = vmax.f32 %v5191, %v5192
  %v5194 = vrot.slane %v5193, 2
  %v5195 = vmax.f32 %v5193, %v5194
  %v5196 = vrot.slane %v5195, 1
  %v5197 = vmax.f32 %v5195, %v5196
  %v5198 = vsel %vm1032, %v603, -inf
  %v5199 = vrot.slane %v5198, 4
  %v5200 = vmax.f32 %v5198, %v5199
  %v5201 = vrot.slane %v5200, 2
  %v5202 = vmax.f32 %v5200, %v5201
  %v5203 = vrot.slane %v5202, 1
  %v5204 = vmax.f32 %v5202, %v5203
  %v5205 = vsel %vm1032, %v604, -inf
  %v5206 = vrot.slane %v5205, 4
  %v5207 = vmax.f32 %v5205, %v5206
  %v5208 = vrot.slane %v5207, 2
  %v5209 = vmax.f32 %v5207, %v5208
  %v5210 = vrot.slane %v5209, 1
  %v5211 = vmax.f32 %v5209, %v5210
  %v5212 = vsel %vm1032, %v605, -inf
  %v5213 = vrot.slane %v5212, 4
  %v5214 = vmax.f32 %v5212, %v5213
  %v5215 = vrot.slane %v5214, 2
  %v5216 = vmax.f32 %v5214, %v5215
  %v5217 = vrot.slane %v5216, 1
  %v5218 = vmax.f32 %v5216, %v5217
  %v5219 = vsel %vm1032, %v606, -inf
  %v5220 = vrot.slane %v5219, 4
  %v5221 = vmax.f32 %v5219, %v5220
  %v5222 = vrot.slane %v5221, 2
  %v5223 = vmax.f32 %v5221, %v5222
  %v5224 = vrot.slane %v5223, 1
  %v5225 = vmax.f32 %v5223, %v5224
  %v5226 = vsel %vm1032, %v607, -inf
  %v5227 = vrot.slane %v5226, 4
  %v5228 = vmax.f32 %v5226, %v5227
  %v5229 = vrot.slane %v5228, 2
  %v5230 = vmax.f32 %v5228, %v5229
  %v5231 = vrot.slane %v5230, 1
  %v5232 = vmax.f32 %v5230, %v5231
  %v5233 = vsel %vm1032, %v608, -inf
  %v5234 = vrot.slane %v5233, 4
  %v5235 = vmax.f32 %v5233, %v5234
  %v5236 = vrot.slane %v5235, 2
  %v5237 = vmax.f32 %v5235, %v5236
  %v5238 = vrot.slane %v5237, 1
  %v5239 = vmax.f32 %v5237, %v5238
  %v5240 = vsel %vm1032, %v609, -inf
  %v5241 = vrot.slane %v5240, 4
  %v5242 = vmax.f32 %v5240, %v5241
  %v5243 = vrot.slane %v5242, 2
  %v5244 = vmax.f32 %v5242, %v5243
  %v5245 = vrot.slane %v5244, 1
  %v5246 = vmax.f32 %v5244, %v5245
  %v5247 = vsel %vm1032, %v610, -inf
  %v5248 = vrot.slane %v5247, 4
  %v5249 = vmax.f32 %v5247, %v5248
  %v5250 = vrot.slane %v5249, 2
  %v5251 = vmax.f32 %v5249, %v5250
  %v5252 = vrot.slane %v5251, 1
  %v5253 = vmax.f32 %v5251, %v5252
  %v5254 = vsel %vm1032, %v611, -inf
  %v5255 = vrot.slane %v5254, 4
  %v5256 = vmax.f32 %v5254, %v5255
  %v5257 = vrot.slane %v5256, 2
  %v5258 = vmax.f32 %v5256, %v5257
  %v5259 = vrot.slane %v5258, 1
  %v5260 = vmax.f32 %v5258, %v5259
  %v5261 = vsel %vm1032, %v612, -inf
  %v5262 = vrot.slane %v5261, 4
  %v5263 = vmax.f32 %v5261, %v5262
  %v5264 = vrot.slane %v5263, 2
  %v5265 = vmax.f32 %v5263, %v5264
  %v5266 = vrot.slane %v5265, 1
  %v5267 = vmax.f32 %v5265, %v5266
  %v5268 = vsel %vm1032, %v613, -inf
  %v5269 = vrot.slane %v5268, 4
  %v5270 = vmax.f32 %v5268, %v5269
  %v5271 = vrot.slane %v5270, 2
  %v5272 = vmax.f32 %v5270, %v5271
  %v5273 = vrot.slane %v5272, 1
  %v5274 = vmax.f32 %v5272, %v5273
  %v5275 = vsel %vm1032, %v614, -inf
  %v5276 = vrot.slane %v5275, 4
  %v5277 = vmax.f32 %v5275, %v5276
  %v5278 = vrot.slane %v5277, 2
  %v5279 = vmax.f32 %v5277, %v5278
  %v5280 = vrot.slane %v5279, 1
  %v5281 = vmax.f32 %v5279, %v5280
  %v5282 = vsel %vm1032, %v615, -inf
  %v5283 = vrot.slane %v5282, 4
  %v5284 = vmax.f32 %v5282, %v5283
  %v5285 = vrot.slane %v5284, 2
  %v5286 = vmax.f32 %v5284, %v5285
  %v5287 = vrot.slane %v5286, 1
  %v5288 = vmax.f32 %v5286, %v5287
  %v5289 = vsel %vm1032, %v616, -inf
  %v5290 = vrot.slane %v5289, 4
  %v5291 = vmax.f32 %v5289, %v5290
  %v5292 = vrot.slane %v5291, 2
  %v5293 = vmax.f32 %v5291, %v5292
  %v5294 = vrot.slane %v5293, 1
  %v5295 = vmax.f32 %v5293, %v5294
  %v5296 = vsel %vm1032, %v617, -inf
  %v5297 = vrot.slane %v5296, 4
  %v5298 = vmax.f32 %v5296, %v5297
  %v5299 = vrot.slane %v5298, 2
  %v5300 = vmax.f32 %v5298, %v5299
  %v5301 = vrot.slane %v5300, 1
  %v5302 = vmax.f32 %v5300, %v5301
  %v5303 = vsel %vm1032, %v618, -inf
  %v5304 = vrot.slane %v5303, 4
  %v5305 = vmax.f32 %v5303, %v5304
  %v5306 = vrot.slane %v5305, 2
  %v5307 = vmax.f32 %v5305, %v5306
  %v5308 = vrot.slane %v5307, 1
  %v5309 = vmax.f32 %v5307, %v5308
  %v5310 = vsel %vm1032, %v619, -inf
  %v5311 = vrot.slane %v5310, 4
  %v5312 = vmax.f32 %v5310, %v5311
  %v5313 = vrot.slane %v5312, 2
  %v5314 = vmax.f32 %v5312, %v5313
  %v5315 = vrot.slane %v5314, 1
  %v5316 = vmax.f32 %v5314, %v5315
  %v5317 = vsel %vm1032, %v620, -inf
  %v5318 = vrot.slane %v5317, 4
  %v5319 = vmax.f32 %v5317, %v5318
  %v5320 = vrot.slane %v5319, 2
  %v5321 = vmax.f32 %v5319, %v5320
  %v5322 = vrot.slane %v5321, 1
  %v5323 = vmax.f32 %v5321, %v5322
  %v5324 = vsel %vm1032, %v621, -inf
  %v5325 = vrot.slane %v5324, 4
  %v5326 = vmax.f32 %v5324, %v5325
  %v5327 = vrot.slane %v5326, 2
  %v5328 = vmax.f32 %v5326, %v5327
  %v5329 = vrot.slane %v5328, 1
  %v5330 = vmax.f32 %v5328, %v5329
  %v5331 = vsel %vm1032, %v622, -inf
  %v5332 = vrot.slane %v5331, 4
  %v5333 = vmax.f32 %v5331, %v5332
  %v5334 = vrot.slane %v5333, 2
  %v5335 = vmax.f32 %v5333, %v5334
  %v5336 = vrot.slane %v5335, 1
  %v5337 = vmax.f32 %v5335, %v5336
  %v5338 = vsel %vm1032, %v623, -inf
  %v5339 = vrot.slane %v5338, 4
  %v5340 = vmax.f32 %v5338, %v5339
  %v5341 = vrot.slane %v5340, 2
  %v5342 = vmax.f32 %v5340, %v5341
  %v5343 = vrot.slane %v5342, 1
  %v5344 = vmax.f32 %v5342, %v5343
  %v5345 = vsel %vm1032, %v624, -inf
  %v5346 = vrot.slane %v5345, 4
  %v5347 = vmax.f32 %v5345, %v5346
  %v5348 = vrot.slane %v5347, 2
  %v5349 = vmax.f32 %v5347, %v5348
  %v5350 = vrot.slane %v5349, 1
  %v5351 = vmax.f32 %v5349, %v5350
  %v5352 = vsel %vm1032, %v625, -inf
  %v5353 = vrot.slane %v5352, 4
  %v5354 = vmax.f32 %v5352, %v5353
  %v5355 = vrot.slane %v5354, 2
  %v5356 = vmax.f32 %v5354, %v5355
  %v5357 = vrot.slane %v5356, 1
  %v5358 = vmax.f32 %v5356, %v5357
  %v5359 = vsel %vm1032, %v626, -inf
  %v5360 = vrot.slane %v5359, 4
  %v5361 = vmax.f32 %v5359, %v5360
  %v5362 = vrot.slane %v5361, 2
  %v5363 = vmax.f32 %v5361, %v5362
  %v5364 = vrot.slane %v5363, 1
  %v5365 = vmax.f32 %v5363, %v5364
  %v5366 = vsel %vm1032, %v627, -inf
  %v5367 = vrot.slane %v5366, 4
  %v5368 = vmax.f32 %v5366, %v5367
  %v5369 = vrot.slane %v5368, 2
  %v5370 = vmax.f32 %v5368, %v5369
  %v5371 = vrot.slane %v5370, 1
  %v5372 = vmax.f32 %v5370, %v5371
  %v5373 = vsel %vm1032, %v628, -inf
  %v5374 = vrot.slane %v5373, 4
  %v5375 = vmax.f32 %v5373, %v5374
  %v5376 = vrot.slane %v5375, 2
  %v5377 = vmax.f32 %v5375, %v5376
  %v5378 = vrot.slane %v5377, 1
  %v5379 = vmax.f32 %v5377, %v5378
  %v5380 = vsel %vm1032, %v629, -inf
  %v5381 = vrot.slane %v5380, 4
  %v5382 = vmax.f32 %v5380, %v5381
  %v5383 = vrot.slane %v5382, 2
  %v5384 = vmax.f32 %v5382, %v5383
  %v5385 = vrot.slane %v5384, 1
  %v5386 = vmax.f32 %v5384, %v5385
  %v5387 = vsel %vm1032, %v630, -inf
  %v5388 = vrot.slane %v5387, 4
  %v5389 = vmax.f32 %v5387, %v5388
  %v5390 = vrot.slane %v5389, 2
  %v5391 = vmax.f32 %v5389, %v5390
  %v5392 = vrot.slane %v5391, 1
  %v5393 = vmax.f32 %v5391, %v5392
  %v5394 = vsel %vm1032, %v631, -inf
  %v5395 = vrot.slane %v5394, 4
  %v5396 = vmax.f32 %v5394, %v5395
  %v5397 = vrot.slane %v5396, 2
  %v5398 = vmax.f32 %v5396, %v5397
  %v5399 = vrot.slane %v5398, 1
  %v5400 = vmax.f32 %v5398, %v5399
  %v5401 = vsel %vm1032, %v632, -inf
  %v5402 = vrot.slane %v5401, 4
  %v5403 = vmax.f32 %v5401, %v5402
  %v5404 = vrot.slane %v5403, 2
  %v5405 = vmax.f32 %v5403, %v5404
  %v5406 = vrot.slane %v5405, 1
  %v5407 = vmax.f32 %v5405, %v5406
  %v5408 = vsel %vm1032, %v633, -inf
  %v5409 = vrot.slane %v5408, 4
  %v5410 = vmax.f32 %v5408, %v5409
  %v5411 = vrot.slane %v5410, 2
  %v5412 = vmax.f32 %v5410, %v5411
  %v5413 = vrot.slane %v5412, 1
  %v5414 = vmax.f32 %v5412, %v5413
  %v5415 = vsel %vm1032, %v634, -inf
  %v5416 = vrot.slane %v5415, 4
  %v5417 = vmax.f32 %v5415, %v5416
  %v5418 = vrot.slane %v5417, 2
  %v5419 = vmax.f32 %v5417, %v5418
  %v5420 = vrot.slane %v5419, 1
  %v5421 = vmax.f32 %v5419, %v5420
  %v5422 = vsel %vm1032, %v635, -inf
  %v5423 = vrot.slane %v5422, 4
  %v5424 = vmax.f32 %v5422, %v5423
  %v5425 = vrot.slane %v5424, 2
  %v5426 = vmax.f32 %v5424, %v5425
  %v5427 = vrot.slane %v5426, 1
  %v5428 = vmax.f32 %v5426, %v5427
  %v5429 = vsel %vm1032, %v636, -inf
  %v5430 = vrot.slane %v5429, 4
  %v5431 = vmax.f32 %v5429, %v5430
  %v5432 = vrot.slane %v5431, 2
  %v5433 = vmax.f32 %v5431, %v5432
  %v5434 = vrot.slane %v5433, 1
  %v5435 = vmax.f32 %v5433, %v5434
  %v5436 = vsel %vm1032, %v637, -inf
  %v5437 = vrot.slane %v5436, 4
  %v5438 = vmax.f32 %v5436, %v5437
  %v5439 = vrot.slane %v5438, 2
  %v5440 = vmax.f32 %v5438, %v5439
  %v5441 = vrot.slane %v5440, 1
  %v5442 = vmax.f32 %v5440, %v5441
  %v5443 = vsel %vm1032, %v638, -inf
  %v5444 = vrot.slane %v5443, 4
  %v5445 = vmax.f32 %v5443, %v5444
  %v5446 = vrot.slane %v5445, 2
  %v5447 = vmax.f32 %v5445, %v5446
  %v5448 = vrot.slane %v5447, 1
  %v5449 = vmax.f32 %v5447, %v5448
  %v5450 = vsel %vm1032, %v639, -inf
  %v5451 = vrot.slane %v5450, 4
  %v5452 = vmax.f32 %v5450, %v5451
  %v5453 = vrot.slane %v5452, 2
  %v5454 = vmax.f32 %v5452, %v5453
  %v5455 = vrot.slane %v5454, 1
  %v5456 = vmax.f32 %v5454, %v5455
  %v5457 = vsel %vm1032, %v640, -inf
  %v5458 = vrot.slane %v5457, 4
  %v5459 = vmax.f32 %v5457, %v5458
  %v5460 = vrot.slane %v5459, 2
  %v5461 = vmax.f32 %v5459, %v5460
  %v5462 = vrot.slane %v5461, 1
  %v5463 = vmax.f32 %v5461, %v5462
  %v5464 = vsel %vm1032, %v641, -inf
  %v5465 = vrot.slane %v5464, 4
  %v5466 = vmax.f32 %v5464, %v5465
  %v5467 = vrot.slane %v5466, 2
  %v5468 = vmax.f32 %v5466, %v5467
  %v5469 = vrot.slane %v5468, 1
  %v5470 = vmax.f32 %v5468, %v5469
  %v5471 = vsel %vm1032, %v642, -inf
  %v5472 = vrot.slane %v5471, 4
  %v5473 = vmax.f32 %v5471, %v5472
  %v5474 = vrot.slane %v5473, 2
  %v5475 = vmax.f32 %v5473, %v5474
  %v5476 = vrot.slane %v5475, 1
  %v5477 = vmax.f32 %v5475, %v5476
  %v5478 = vsel %vm1032, %v643, -inf
  %v5479 = vrot.slane %v5478, 4
  %v5480 = vmax.f32 %v5478, %v5479
  %v5481 = vrot.slane %v5480, 2
  %v5482 = vmax.f32 %v5480, %v5481
  %v5483 = vrot.slane %v5482, 1
  %v5484 = vmax.f32 %v5482, %v5483
  %v5485 = vsel %vm1032, %v644, -inf
  %v5486 = vrot.slane %v5485, 4
  %v5487 = vmax.f32 %v5485, %v5486
  %v5488 = vrot.slane %v5487, 2
  %v5489 = vmax.f32 %v5487, %v5488
  %v5490 = vrot.slane %v5489, 1
  %v5491 = vmax.f32 %v5489, %v5490
  %v5492 = vsel %vm1032, %v645, -inf
  %v5493 = vrot.slane %v5492, 4
  %v5494 = vmax.f32 %v5492, %v5493
  %v5495 = vrot.slane %v5494, 2
  %v5496 = vmax.f32 %v5494, %v5495
  %v5497 = vrot.slane %v5496, 1
  %v5498 = vmax.f32 %v5496, %v5497
  %v5499 = vsel %vm1032, %v646, -inf
  %v5500 = vrot.slane %v5499, 4
  %v5501 = vmax.f32 %v5499, %v5500
  %v5502 = vrot.slane %v5501, 2
  %v5503 = vmax.f32 %v5501, %v5502
  %v5504 = vrot.slane %v5503, 1
  %v5505 = vmax.f32 %v5503, %v5504
  %v5506 = vsel %vm1032, %v647, -inf
  %v5507 = vrot.slane %v5506, 4
  %v5508 = vmax.f32 %v5506, %v5507
  %v5509 = vrot.slane %v5508, 2
  %v5510 = vmax.f32 %v5508, %v5509
  %v5511 = vrot.slane %v5510, 1
  %v5512 = vmax.f32 %v5510, %v5511
  %v5513 = vsel %vm1032, %v648, -inf
  %v5514 = vrot.slane %v5513, 4
  %v5515 = vmax.f32 %v5513, %v5514
  %v5516 = vrot.slane %v5515, 2
  %v5517 = vmax.f32 %v5515, %v5516
  %v5518 = vrot.slane %v5517, 1
  %v5519 = vmax.f32 %v5517, %v5518
  %v5520 = vsel %vm1032, %v649, -inf
  %v5521 = vrot.slane %v5520, 4
  %v5522 = vmax.f32 %v5520, %v5521
  %v5523 = vrot.slane %v5522, 2
  %v5524 = vmax.f32 %v5522, %v5523
  %v5525 = vrot.slane %v5524, 1
  %v5526 = vmax.f32 %v5524, %v5525
  %v5527 = vsel %vm1032, %v650, -inf
  %v5528 = vrot.slane %v5527, 4
  %v5529 = vmax.f32 %v5527, %v5528
  %v5530 = vrot.slane %v5529, 2
  %v5531 = vmax.f32 %v5529, %v5530
  %v5532 = vrot.slane %v5531, 1
  %v5533 = vmax.f32 %v5531, %v5532
  %v5534 = vsel %vm1032, %v651, -inf
  %v5535 = vrot.slane %v5534, 4
  %v5536 = vmax.f32 %v5534, %v5535
  %v5537 = vrot.slane %v5536, 2
  %v5538 = vmax.f32 %v5536, %v5537
  %v5539 = vrot.slane %v5538, 1
  %v5540 = vmax.f32 %v5538, %v5539
  %v5541 = vsel %vm1032, %v652, -inf
  %v5542 = vrot.slane %v5541, 4
  %v5543 = vmax.f32 %v5541, %v5542
  %v5544 = vrot.slane %v5543, 2
  %v5545 = vmax.f32 %v5543, %v5544
  %v5546 = vrot.slane %v5545, 1
  %v5547 = vmax.f32 %v5545, %v5546
  %v5548 = vsel %vm1032, %v653, -inf
  %v5549 = vrot.slane %v5548, 4
  %v5550 = vmax.f32 %v5548, %v5549
  %v5551 = vrot.slane %v5550, 2
  %v5552 = vmax.f32 %v5550, %v5551
  %v5553 = vrot.slane %v5552, 1
  %v5554 = vmax.f32 %v5552, %v5553
  %v5555 = vsel %vm1032, %v654, -inf
  %v5556 = vrot.slane %v5555, 4
  %v5557 = vmax.f32 %v5555, %v5556
  %v5558 = vrot.slane %v5557, 2
  %v5559 = vmax.f32 %v5557, %v5558
  %v5560 = vrot.slane %v5559, 1
  %v5561 = vmax.f32 %v5559, %v5560
  %v5562 = vsel %vm1032, %v655, -inf
  %v5563 = vrot.slane %v5562, 4
  %v5564 = vmax.f32 %v5562, %v5563
  %v5565 = vrot.slane %v5564, 2
  %v5566 = vmax.f32 %v5564, %v5565
  %v5567 = vrot.slane %v5566, 1
  %v5568 = vmax.f32 %v5566, %v5567
  %v5569 = vsel %vm1032, %v656, -inf
  %v5570 = vrot.slane %v5569, 4
  %v5571 = vmax.f32 %v5569, %v5570
  %v5572 = vrot.slane %v5571, 2
  %v5573 = vmax.f32 %v5571, %v5572
  %v5574 = vrot.slane %v5573, 1
  %v5575 = vmax.f32 %v5573, %v5574
  %v5576 = vsel %vm1032, %v657, -inf
  %v5577 = vrot.slane %v5576, 4
  %v5578 = vmax.f32 %v5576, %v5577
  %v5579 = vrot.slane %v5578, 2
  %v5580 = vmax.f32 %v5578, %v5579
  %v5581 = vrot.slane %v5580, 1
  %v5582 = vmax.f32 %v5580, %v5581
  %v5583 = vsel %vm1032, %v658, -inf
  %v5584 = vrot.slane %v5583, 4
  %v5585 = vmax.f32 %v5583, %v5584
  %v5586 = vrot.slane %v5585, 2
  %v5587 = vmax.f32 %v5585, %v5586
  %v5588 = vrot.slane %v5587, 1
  %v5589 = vmax.f32 %v5587, %v5588
  %v5590 = vsel %vm1032, %v659, -inf
  %v5591 = vrot.slane %v5590, 4
  %v5592 = vmax.f32 %v5590, %v5591
  %v5593 = vrot.slane %v5592, 2
  %v5594 = vmax.f32 %v5592, %v5593
  %v5595 = vrot.slane %v5594, 1
  %v5596 = vmax.f32 %v5594, %v5595
  %v5597 = vsel %vm1032, %v660, -inf
  %v5598 = vrot.slane %v5597, 4
  %v5599 = vmax.f32 %v5597, %v5598
  %v5600 = vrot.slane %v5599, 2
  %v5601 = vmax.f32 %v5599, %v5600
  %v5602 = vrot.slane %v5601, 1
  %v5603 = vmax.f32 %v5601, %v5602
  %v5604 = vsel %vm1032, %v661, -inf
  %v5605 = vrot.slane %v5604, 4
  %v5606 = vmax.f32 %v5604, %v5605
  %v5607 = vrot.slane %v5606, 2
  %v5608 = vmax.f32 %v5606, %v5607
  %v5609 = vrot.slane %v5608, 1
  %v5610 = vmax.f32 %v5608, %v5609
  %v5611 = vsel %vm1032, %v662, -inf
  %v5612 = vrot.slane %v5611, 4
  %v5613 = vmax.f32 %v5611, %v5612
  %v5614 = vrot.slane %v5613, 2
  %v5615 = vmax.f32 %v5613, %v5614
  %v5616 = vrot.slane %v5615, 1
  %v5617 = vmax.f32 %v5615, %v5616
  %v5618 = vsel %vm1032, %v663, -inf
  %v5619 = vrot.slane %v5618, 4
  %v5620 = vmax.f32 %v5618, %v5619
  %v5621 = vrot.slane %v5620, 2
  %v5622 = vmax.f32 %v5620, %v5621
  %v5623 = vrot.slane %v5622, 1
  %v5624 = vmax.f32 %v5622, %v5623
  %v5625 = vsel %vm1032, %v664, -inf
  %v5626 = vrot.slane %v5625, 4
  %v5627 = vmax.f32 %v5625, %v5626
  %v5628 = vrot.slane %v5627, 2
  %v5629 = vmax.f32 %v5627, %v5628
  %v5630 = vrot.slane %v5629, 1
  %v5631 = vmax.f32 %v5629, %v5630
  %v5632 = vsel %vm1032, %v665, -inf
  %v5633 = vrot.slane %v5632, 4
  %v5634 = vmax.f32 %v5632, %v5633
  %v5635 = vrot.slane %v5634, 2
  %v5636 = vmax.f32 %v5634, %v5635
  %v5637 = vrot.slane %v5636, 1
  %v5638 = vmax.f32 %v5636, %v5637
  %v5639 = vsel %vm1032, %v666, -inf
  %v5640 = vrot.slane %v5639, 4
  %v5641 = vmax.f32 %v5639, %v5640
  %v5642 = vrot.slane %v5641, 2
  %v5643 = vmax.f32 %v5641, %v5642
  %v5644 = vrot.slane %v5643, 1
  %v5645 = vmax.f32 %v5643, %v5644
  %v5646 = vsel %vm1032, %v667, -inf
  %v5647 = vrot.slane %v5646, 4
  %v5648 = vmax.f32 %v5646, %v5647
  %v5649 = vrot.slane %v5648, 2
  %v5650 = vmax.f32 %v5648, %v5649
  %v5651 = vrot.slane %v5650, 1
  %v5652 = vmax.f32 %v5650, %v5651
  %v5653 = vsel %vm1032, %v668, -inf
  %v5654 = vrot.slane %v5653, 4
  %v5655 = vmax.f32 %v5653, %v5654
  %v5656 = vrot.slane %v5655, 2
  %v5657 = vmax.f32 %v5655, %v5656
  %v5658 = vrot.slane %v5657, 1
  %v5659 = vmax.f32 %v5657, %v5658
  %v5660 = vsel %vm1032, %v669, -inf
  %v5661 = vrot.slane %v5660, 4
  %v5662 = vmax.f32 %v5660, %v5661
  %v5663 = vrot.slane %v5662, 2
  %v5664 = vmax.f32 %v5662, %v5663
  %v5665 = vrot.slane %v5664, 1
  %v5666 = vmax.f32 %v5664, %v5665
  %v5667 = vsel %vm1032, %v670, -inf
  %v5668 = vrot.slane %v5667, 4
  %v5669 = vmax.f32 %v5667, %v5668
  %v5670 = vrot.slane %v5669, 2
  %v5671 = vmax.f32 %v5669, %v5670
  %v5672 = vrot.slane %v5671, 1
  %v5673 = vmax.f32 %v5671, %v5672
  %v5674 = vsel %vm1032, %v671, -inf
  %v5675 = vrot.slane %v5674, 4
  %v5676 = vmax.f32 %v5674, %v5675
  %v5677 = vrot.slane %v5676, 2
  %v5678 = vmax.f32 %v5676, %v5677
  %v5679 = vrot.slane %v5678, 1
  %v5680 = vmax.f32 %v5678, %v5679
  %v5681 = vsel %vm1032, %v672, -inf
  %v5682 = vrot.slane %v5681, 4
  %v5683 = vmax.f32 %v5681, %v5682
  %v5684 = vrot.slane %v5683, 2
  %v5685 = vmax.f32 %v5683, %v5684
  %v5686 = vrot.slane %v5685, 1
  %v5687 = vmax.f32 %v5685, %v5686
  %v5688 = vsel %vm1032, %v673, -inf
  %v5689 = vrot.slane %v5688, 4
  %v5690 = vmax.f32 %v5688, %v5689
  %v5691 = vrot.slane %v5690, 2
  %v5692 = vmax.f32 %v5690, %v5691
  %v5693 = vrot.slane %v5692, 1
  %v5694 = vmax.f32 %v5692, %v5693
  %v5695 = vsel %vm1032, %v674, -inf
  %v5696 = vrot.slane %v5695, 4
  %v5697 = vmax.f32 %v5695, %v5696
  %v5698 = vrot.slane %v5697, 2
  %v5699 = vmax.f32 %v5697, %v5698
  %v5700 = vrot.slane %v5699, 1
  %v5701 = vmax.f32 %v5699, %v5700
  %v5702 = vsel %vm1032, %v675, -inf
  %v5703 = vrot.slane %v5702, 4
  %v5704 = vmax.f32 %v5702, %v5703
  %v5705 = vrot.slane %v5704, 2
  %v5706 = vmax.f32 %v5704, %v5705
  %v5707 = vrot.slane %v5706, 1
  %v5708 = vmax.f32 %v5706, %v5707
  %v5709 = vsel %vm1032, %v676, -inf
  %v5710 = vrot.slane %v5709, 4
  %v5711 = vmax.f32 %v5709, %v5710
  %v5712 = vrot.slane %v5711, 2
  %v5713 = vmax.f32 %v5711, %v5712
  %v5714 = vrot.slane %v5713, 1
  %v5715 = vmax.f32 %v5713, %v5714
  %v5716 = vsel %vm1032, %v677, -inf
  %v5717 = vrot.slane %v5716, 4
  %v5718 = vmax.f32 %v5716, %v5717
  %v5719 = vrot.slane %v5718, 2
  %v5720 = vmax.f32 %v5718, %v5719
  %v5721 = vrot.slane %v5720, 1
  %v5722 = vmax.f32 %v5720, %v5721
  %v5723 = vsel %vm1032, %v678, -inf
  %v5724 = vrot.slane %v5723, 4
  %v5725 = vmax.f32 %v5723, %v5724
  %v5726 = vrot.slane %v5725, 2
  %v5727 = vmax.f32 %v5725, %v5726
  %v5728 = vrot.slane %v5727, 1
  %v5729 = vmax.f32 %v5727, %v5728
  %v5730 = vsel %vm1032, %v679, -inf
  %v5731 = vrot.slane %v5730, 4
  %v5732 = vmax.f32 %v5730, %v5731
  %v5733 = vrot.slane %v5732, 2
  %v5734 = vmax.f32 %v5732, %v5733
  %v5735 = vrot.slane %v5734, 1
  %v5736 = vmax.f32 %v5734, %v5735
  %v5737 = vsel %vm1032, %v680, -inf
  %v5738 = vrot.slane %v5737, 4
  %v5739 = vmax.f32 %v5737, %v5738
  %v5740 = vrot.slane %v5739, 2
  %v5741 = vmax.f32 %v5739, %v5740
  %v5742 = vrot.slane %v5741, 1
  %v5743 = vmax.f32 %v5741, %v5742
  %v5744 = vsel %vm1032, %v681, -inf
  %v5745 = vrot.slane %v5744, 4
  %v5746 = vmax.f32 %v5744, %v5745
  %v5747 = vrot.slane %v5746, 2
  %v5748 = vmax.f32 %v5746, %v5747
  %v5749 = vrot.slane %v5748, 1
  %v5750 = vmax.f32 %v5748, %v5749
  %v5751 = vsel %vm1032, %v682, -inf
  %v5752 = vrot.slane %v5751, 4
  %v5753 = vmax.f32 %v5751, %v5752
  %v5754 = vrot.slane %v5753, 2
  %v5755 = vmax.f32 %v5753, %v5754
  %v5756 = vrot.slane %v5755, 1
  %v5757 = vmax.f32 %v5755, %v5756
  %v5758 = vsel %vm1032, %v683, -inf
  %v5759 = vrot.slane %v5758, 4
  %v5760 = vmax.f32 %v5758, %v5759
  %v5761 = vrot.slane %v5760, 2
  %v5762 = vmax.f32 %v5760, %v5761
  %v5763 = vrot.slane %v5762, 1
  %v5764 = vmax.f32 %v5762, %v5763
  %v5765 = vsel %vm1032, %v684, -inf
  %v5766 = vrot.slane %v5765, 4
  %v5767 = vmax.f32 %v5765, %v5766
  %v5768 = vrot.slane %v5767, 2
  %v5769 = vmax.f32 %v5767, %v5768
  %v5770 = vrot.slane %v5769, 1
  %v5771 = vmax.f32 %v5769, %v5770
  %v5772 = vsel %vm1032, %v685, -inf
  %v5773 = vrot.slane %v5772, 4
  %v5774 = vmax.f32 %v5772, %v5773
  %v5775 = vrot.slane %v5774, 2
  %v5776 = vmax.f32 %v5774, %v5775
  %v5777 = vrot.slane %v5776, 1
  %v5778 = vmax.f32 %v5776, %v5777
  %v5779 = vsel %vm1032, %v686, -inf
  %v5780 = vrot.slane %v5779, 4
  %v5781 = vmax.f32 %v5779, %v5780
  %v5782 = vrot.slane %v5781, 2
  %v5783 = vmax.f32 %v5781, %v5782
  %v5784 = vrot.slane %v5783, 1
  %v5785 = vmax.f32 %v5783, %v5784
  %v5786 = vsel %vm1032, %v687, -inf
  %v5787 = vrot.slane %v5786, 4
  %v5788 = vmax.f32 %v5786, %v5787
  %v5789 = vrot.slane %v5788, 2
  %v5790 = vmax.f32 %v5788, %v5789
  %v5791 = vrot.slane %v5790, 1
  %v5792 = vmax.f32 %v5790, %v5791
  %v5793 = vsel %vm1032, %v688, -inf
  %v5794 = vrot.slane %v5793, 4
  %v5795 = vmax.f32 %v5793, %v5794
  %v5796 = vrot.slane %v5795, 2
  %v5797 = vmax.f32 %v5795, %v5796
  %v5798 = vrot.slane %v5797, 1
  %v5799 = vmax.f32 %v5797, %v5798
  %v5800 = vsel %vm1032, %v689, -inf
  %v5801 = vrot.slane %v5800, 4
  %v5802 = vmax.f32 %v5800, %v5801
  %v5803 = vrot.slane %v5802, 2
  %v5804 = vmax.f32 %v5802, %v5803
  %v5805 = vrot.slane %v5804, 1
  %v5806 = vmax.f32 %v5804, %v5805
  %v5807 = vsel %vm1032, %v690, -inf
  %v5808 = vrot.slane %v5807, 4
  %v5809 = vmax.f32 %v5807, %v5808
  %v5810 = vrot.slane %v5809, 2
  %v5811 = vmax.f32 %v5809, %v5810
  %v5812 = vrot.slane %v5811, 1
  %v5813 = vmax.f32 %v5811, %v5812
  %v5814 = vsel %vm1032, %v691, -inf
  %v5815 = vrot.slane %v5814, 4
  %v5816 = vmax.f32 %v5814, %v5815
  %v5817 = vrot.slane %v5816, 2
  %v5818 = vmax.f32 %v5816, %v5817
  %v5819 = vrot.slane %v5818, 1
  %v5820 = vmax.f32 %v5818, %v5819
  %v5821 = vsel %vm1032, %v692, -inf
  %v5822 = vrot.slane %v5821, 4
  %v5823 = vmax.f32 %v5821, %v5822
  %v5824 = vrot.slane %v5823, 2
  %v5825 = vmax.f32 %v5823, %v5824
  %v5826 = vrot.slane %v5825, 1
  %v5827 = vmax.f32 %v5825, %v5826
  %v5828 = vsel %vm1032, %v693, -inf
  %v5829 = vrot.slane %v5828, 4
  %v5830 = vmax.f32 %v5828, %v5829
  %v5831 = vrot.slane %v5830, 2
  %v5832 = vmax.f32 %v5830, %v5831
  %v5833 = vrot.slane %v5832, 1
  %v5834 = vmax.f32 %v5832, %v5833
  %v5835 = vsel %vm1032, %v694, -inf
  %v5836 = vrot.slane %v5835, 4
  %v5837 = vmax.f32 %v5835, %v5836
  %v5838 = vrot.slane %v5837, 2
  %v5839 = vmax.f32 %v5837, %v5838
  %v5840 = vrot.slane %v5839, 1
  %v5841 = vmax.f32 %v5839, %v5840
  %v5842 = vsel %vm1032, %v695, -inf
  %v5843 = vrot.slane %v5842, 4
  %v5844 = vmax.f32 %v5842, %v5843
  %v5845 = vrot.slane %v5844, 2
  %v5846 = vmax.f32 %v5844, %v5845
  %v5847 = vrot.slane %v5846, 1
  %v5848 = vmax.f32 %v5846, %v5847
  %v5849 = vsel %vm1032, %v696, -inf
  %v5850 = vrot.slane %v5849, 4
  %v5851 = vmax.f32 %v5849, %v5850
  %v5852 = vrot.slane %v5851, 2
  %v5853 = vmax.f32 %v5851, %v5852
  %v5854 = vrot.slane %v5853, 1
  %v5855 = vmax.f32 %v5853, %v5854
  %v5856 = vsel %vm1032, %v697, -inf
  %v5857 = vrot.slane %v5856, 4
  %v5858 = vmax.f32 %v5856, %v5857
  %v5859 = vrot.slane %v5858, 2
  %v5860 = vmax.f32 %v5858, %v5859
  %v5861 = vrot.slane %v5860, 1
  %v5862 = vmax.f32 %v5860, %v5861
  %v5863 = vsel %vm1032, %v698, -inf
  %v5864 = vrot.slane %v5863, 4
  %v5865 = vmax.f32 %v5863, %v5864
  %v5866 = vrot.slane %v5865, 2
  %v5867 = vmax.f32 %v5865, %v5866
  %v5868 = vrot.slane %v5867, 1
  %v5869 = vmax.f32 %v5867, %v5868
  %v5870 = vsel %vm1032, %v699, -inf
  %v5871 = vrot.slane %v5870, 4
  %v5872 = vmax.f32 %v5870, %v5871
  %v5873 = vrot.slane %v5872, 2
  %v5874 = vmax.f32 %v5872, %v5873
  %v5875 = vrot.slane %v5874, 1
  %v5876 = vmax.f32 %v5874, %v5875
  %v5877 = vsel %vm1032, %v700, -inf
  %v5878 = vrot.slane %v5877, 4
  %v5879 = vmax.f32 %v5877, %v5878
  %v5880 = vrot.slane %v5879, 2
  %v5881 = vmax.f32 %v5879, %v5880
  %v5882 = vrot.slane %v5881, 1
  %v5883 = vmax.f32 %v5881, %v5882
  %v5884 = vsel %vm1032, %v701, -inf
  %v5885 = vrot.slane %v5884, 4
  %v5886 = vmax.f32 %v5884, %v5885
  %v5887 = vrot.slane %v5886, 2
  %v5888 = vmax.f32 %v5886, %v5887
  %v5889 = vrot.slane %v5888, 1
  %v5890 = vmax.f32 %v5888, %v5889
  %v5891 = vsel %vm1032, %v702, -inf
  %v5892 = vrot.slane %v5891, 4
  %v5893 = vmax.f32 %v5891, %v5892
  %v5894 = vrot.slane %v5893, 2
  %v5895 = vmax.f32 %v5893, %v5894
  %v5896 = vrot.slane %v5895, 1
  %v5897 = vmax.f32 %v5895, %v5896
  %v5898 = vsel %vm1032, %v703, -inf
  %v5899 = vrot.slane %v5898, 4
  %v5900 = vmax.f32 %v5898, %v5899
  %v5901 = vrot.slane %v5900, 2
  %v5902 = vmax.f32 %v5900, %v5901
  %v5903 = vrot.slane %v5902, 1
  %v5904 = vmax.f32 %v5902, %v5903
  %v5905 = vsel %vm1032, %v704, -inf
  %v5906 = vrot.slane %v5905, 4
  %v5907 = vmax.f32 %v5905, %v5906
  %v5908 = vrot.slane %v5907, 2
  %v5909 = vmax.f32 %v5907, %v5908
  %v5910 = vrot.slane %v5909, 1
  %v5911 = vmax.f32 %v5909, %v5910
  %v5912 = vsel %vm1032, %v705, -inf
  %v5913 = vrot.slane %v5912, 4
  %v5914 = vmax.f32 %v5912, %v5913
  %v5915 = vrot.slane %v5914, 2
  %v5916 = vmax.f32 %v5914, %v5915
  %v5917 = vrot.slane %v5916, 1
  %v5918 = vmax.f32 %v5916, %v5917
  %v5919 = vsel %vm1032, %v706, -inf
  %v5920 = vrot.slane %v5919, 4
  %v5921 = vmax.f32 %v5919, %v5920
  %v5922 = vrot.slane %v5921, 2
  %v5923 = vmax.f32 %v5921, %v5922
  %v5924 = vrot.slane %v5923, 1
  %v5925 = vmax.f32 %v5923, %v5924
  %v5926 = vsel %vm1032, %v707, -inf
  %v5927 = vrot.slane %v5926, 4
  %v5928 = vmax.f32 %v5926, %v5927
  %v5929 = vrot.slane %v5928, 2
  %v5930 = vmax.f32 %v5928, %v5929
  %v5931 = vrot.slane %v5930, 1
  %v5932 = vmax.f32 %v5930, %v5931
  %v5933 = vsel %vm1032, %v708, -inf
  %v5934 = vrot.slane %v5933, 4
  %v5935 = vmax.f32 %v5933, %v5934
  %v5936 = vrot.slane %v5935, 2
  %v5937 = vmax.f32 %v5935, %v5936
  %v5938 = vrot.slane %v5937, 1
  %v5939 = vmax.f32 %v5937, %v5938
  %v5940 = vsel %vm1032, %v709, -inf
  %v5941 = vrot.slane %v5940, 4
  %v5942 = vmax.f32 %v5940, %v5941
  %v5943 = vrot.slane %v5942, 2
  %v5944 = vmax.f32 %v5942, %v5943
  %v5945 = vrot.slane %v5944, 1
  %v5946 = vmax.f32 %v5944, %v5945
  %v5947 = vsel %vm1032, %v710, -inf
  %v5948 = vrot.slane %v5947, 4
  %v5949 = vmax.f32 %v5947, %v5948
  %v5950 = vrot.slane %v5949, 2
  %v5951 = vmax.f32 %v5949, %v5950
  %v5952 = vrot.slane %v5951, 1
  %v5953 = vmax.f32 %v5951, %v5952
  %v5954 = vsel %vm1032, %v711, -inf
  %v5955 = vrot.slane %v5954, 4
  %v5956 = vmax.f32 %v5954, %v5955
  %v5957 = vrot.slane %v5956, 2
  %v5958 = vmax.f32 %v5956, %v5957
  %v5959 = vrot.slane %v5958, 1
  %v5960 = vmax.f32 %v5958, %v5959
  %v5961 = vsel %vm1032, %v712, -inf
  %v5962 = vrot.slane %v5961, 4
  %v5963 = vmax.f32 %v5961, %v5962
  %v5964 = vrot.slane %v5963, 2
  %v5965 = vmax.f32 %v5963, %v5964
  %v5966 = vrot.slane %v5965, 1
  %v5967 = vmax.f32 %v5965, %v5966
  %v5968 = vsel %vm1032, %v713, -inf
  %v5969 = vrot.slane %v5968, 4
  %v5970 = vmax.f32 %v5968, %v5969
  %v5971 = vrot.slane %v5970, 2
  %v5972 = vmax.f32 %v5970, %v5971
  %v5973 = vrot.slane %v5972, 1
  %v5974 = vmax.f32 %v5972, %v5973
  %v5975 = vsel %vm1032, %v714, -inf
  %v5976 = vrot.slane %v5975, 4
  %v5977 = vmax.f32 %v5975, %v5976
  %v5978 = vrot.slane %v5977, 2
  %v5979 = vmax.f32 %v5977, %v5978
  %v5980 = vrot.slane %v5979, 1
  %v5981 = vmax.f32 %v5979, %v5980
  %v5982 = vsel %vm1032, %v715, -inf
  %v5983 = vrot.slane %v5982, 4
  %v5984 = vmax.f32 %v5982, %v5983
  %v5985 = vrot.slane %v5984, 2
  %v5986 = vmax.f32 %v5984, %v5985
  %v5987 = vrot.slane %v5986, 1
  %v5988 = vmax.f32 %v5986, %v5987
  %v5989 = vsel %vm1032, %v716, -inf
  %v5990 = vrot.slane %v5989, 4
  %v5991 = vmax.f32 %v5989, %v5990
  %v5992 = vrot.slane %v5991, 2
  %v5993 = vmax.f32 %v5991, %v5992
  %v5994 = vrot.slane %v5993, 1
  %v5995 = vmax.f32 %v5993, %v5994
  %v5996 = vsel %vm1032, %v717, -inf
  %v5997 = vrot.slane %v5996, 4
  %v5998 = vmax.f32 %v5996, %v5997
  %v5999 = vrot.slane %v5998, 2
  %v6000 = vmax.f32 %v5998, %v5999
  %v6001 = vrot.slane %v6000, 1
  %v6002 = vmax.f32 %v6000, %v6001
  %v6003 = vsel %vm1032, %v718, -inf
  %v6004 = vrot.slane %v6003, 4
  %v6005 = vmax.f32 %v6003, %v6004
  %v6006 = vrot.slane %v6005, 2
  %v6007 = vmax.f32 %v6005, %v6006
  %v6008 = vrot.slane %v6007, 1
  %v6009 = vmax.f32 %v6007, %v6008
  %v6010 = vsel %vm1032, %v719, -inf
  %v6011 = vrot.slane %v6010, 4
  %v6012 = vmax.f32 %v6010, %v6011
  %v6013 = vrot.slane %v6012, 2
  %v6014 = vmax.f32 %v6012, %v6013
  %v6015 = vrot.slane %v6014, 1
  %v6016 = vmax.f32 %v6014, %v6015
  %v6017 = vsel %vm1032, %v720, -inf
  %v6018 = vrot.slane %v6017, 4
  %v6019 = vmax.f32 %v6017, %v6018
  %v6020 = vrot.slane %v6019, 2
  %v6021 = vmax.f32 %v6019, %v6020
  %v6022 = vrot.slane %v6021, 1
  %v6023 = vmax.f32 %v6021, %v6022
  %v6024 = vsel %vm1032, %v721, -inf
  %v6025 = vrot.slane %v6024, 4
  %v6026 = vmax.f32 %v6024, %v6025
  %v6027 = vrot.slane %v6026, 2
  %v6028 = vmax.f32 %v6026, %v6027
  %v6029 = vrot.slane %v6028, 1
  %v6030 = vmax.f32 %v6028, %v6029
  %v6031 = vsel %vm1032, %v722, -inf
  %v6032 = vrot.slane %v6031, 4
  %v6033 = vmax.f32 %v6031, %v6032
  %v6034 = vrot.slane %v6033, 2
  %v6035 = vmax.f32 %v6033, %v6034
  %v6036 = vrot.slane %v6035, 1
  %v6037 = vmax.f32 %v6035, %v6036
  %v6038 = vsel %vm1032, %v723, -inf
  %v6039 = vrot.slane %v6038, 4
  %v6040 = vmax.f32 %v6038, %v6039
  %v6041 = vrot.slane %v6040, 2
  %v6042 = vmax.f32 %v6040, %v6041
  %v6043 = vrot.slane %v6042, 1
  %v6044 = vmax.f32 %v6042, %v6043
  %v6045 = vsel %vm1032, %v724, -inf
  %v6046 = vrot.slane %v6045, 4
  %v6047 = vmax.f32 %v6045, %v6046
  %v6048 = vrot.slane %v6047, 2
  %v6049 = vmax.f32 %v6047, %v6048
  %v6050 = vrot.slane %v6049, 1
  %v6051 = vmax.f32 %v6049, %v6050
  %v6052 = vsel %vm1032, %v725, -inf
  %v6053 = vrot.slane %v6052, 4
  %v6054 = vmax.f32 %v6052, %v6053
  %v6055 = vrot.slane %v6054, 2
  %v6056 = vmax.f32 %v6054, %v6055
  %v6057 = vrot.slane %v6056, 1
  %v6058 = vmax.f32 %v6056, %v6057
  %v6059 = vsel %vm1032, %v726, -inf
  %v6060 = vrot.slane %v6059, 4
  %v6061 = vmax.f32 %v6059, %v6060
  %v6062 = vrot.slane %v6061, 2
  %v6063 = vmax.f32 %v6061, %v6062
  %v6064 = vrot.slane %v6063, 1
  %v6065 = vmax.f32 %v6063, %v6064
  %v6066 = vsel %vm1032, %v727, -inf
  %v6067 = vrot.slane %v6066, 4
  %v6068 = vmax.f32 %v6066, %v6067
  %v6069 = vrot.slane %v6068, 2
  %v6070 = vmax.f32 %v6068, %v6069
  %v6071 = vrot.slane %v6070, 1
  %v6072 = vmax.f32 %v6070, %v6071
  %v6073 = vsel %vm1032, %v728, -inf
  %v6074 = vrot.slane %v6073, 4
  %v6075 = vmax.f32 %v6073, %v6074
  %v6076 = vrot.slane %v6075, 2
  %v6077 = vmax.f32 %v6075, %v6076
  %v6078 = vrot.slane %v6077, 1
  %v6079 = vmax.f32 %v6077, %v6078
  %v6080 = vsel %vm1032, %v729, -inf
  %v6081 = vrot.slane %v6080, 4
  %v6082 = vmax.f32 %v6080, %v6081
  %v6083 = vrot.slane %v6082, 2
  %v6084 = vmax.f32 %v6082, %v6083
  %v6085 = vrot.slane %v6084, 1
  %v6086 = vmax.f32 %v6084, %v6085
  %v6087 = vsel %vm1032, %v730, -inf
  %v6088 = vrot.slane %v6087, 4
  %v6089 = vmax.f32 %v6087, %v6088
  %v6090 = vrot.slane %v6089, 2
  %v6091 = vmax.f32 %v6089, %v6090
  %v6092 = vrot.slane %v6091, 1
  %v6093 = vmax.f32 %v6091, %v6092
  %v6094 = vsel %vm1032, %v731, -inf
  %v6095 = vrot.slane %v6094, 4
  %v6096 = vmax.f32 %v6094, %v6095
  %v6097 = vrot.slane %v6096, 2
  %v6098 = vmax.f32 %v6096, %v6097
  %v6099 = vrot.slane %v6098, 1
  %v6100 = vmax.f32 %v6098, %v6099
  %v6101 = vsel %vm1032, %v732, -inf
  %v6102 = vrot.slane %v6101, 4
  %v6103 = vmax.f32 %v6101, %v6102
  %v6104 = vrot.slane %v6103, 2
  %v6105 = vmax.f32 %v6103, %v6104
  %v6106 = vrot.slane %v6105, 1
  %v6107 = vmax.f32 %v6105, %v6106
  %v6108 = vsel %vm1032, %v733, -inf
  %v6109 = vrot.slane %v6108, 4
  %v6110 = vmax.f32 %v6108, %v6109
  %v6111 = vrot.slane %v6110, 2
  %v6112 = vmax.f32 %v6110, %v6111
  %v6113 = vrot.slane %v6112, 1
  %v6114 = vmax.f32 %v6112, %v6113
  %v6115 = vsel %vm1032, %v734, -inf
  %v6116 = vrot.slane %v6115, 4
  %v6117 = vmax.f32 %v6115, %v6116
  %v6118 = vrot.slane %v6117, 2
  %v6119 = vmax.f32 %v6117, %v6118
  %v6120 = vrot.slane %v6119, 1
  %v6121 = vmax.f32 %v6119, %v6120
  %v6122 = vsel %vm1032, %v735, -inf
  %v6123 = vrot.slane %v6122, 4
  %v6124 = vmax.f32 %v6122, %v6123
  %v6125 = vrot.slane %v6124, 2
  %v6126 = vmax.f32 %v6124, %v6125
  %v6127 = vrot.slane %v6126, 1
  %v6128 = vmax.f32 %v6126, %v6127
  %v6129 = vsel %vm1032, %v736, -inf
  %v6130 = vrot.slane %v6129, 4
  %v6131 = vmax.f32 %v6129, %v6130
  %v6132 = vrot.slane %v6131, 2
  %v6133 = vmax.f32 %v6131, %v6132
  %v6134 = vrot.slane %v6133, 1
  %v6135 = vmax.f32 %v6133, %v6134
  %v6136 = vsel %vm1032, %v737, -inf
  %v6137 = vrot.slane %v6136, 4
  %v6138 = vmax.f32 %v6136, %v6137
  %v6139 = vrot.slane %v6138, 2
  %v6140 = vmax.f32 %v6138, %v6139
  %v6141 = vrot.slane %v6140, 1
  %v6142 = vmax.f32 %v6140, %v6141
  %v6143 = vsel %vm1032, %v738, -inf
  %v6144 = vrot.slane %v6143, 4
  %v6145 = vmax.f32 %v6143, %v6144
  %v6146 = vrot.slane %v6145, 2
  %v6147 = vmax.f32 %v6145, %v6146
  %v6148 = vrot.slane %v6147, 1
  %v6149 = vmax.f32 %v6147, %v6148
  %v6150 = vsel %vm1032, %v739, -inf
  %v6151 = vrot.slane %v6150, 4
  %v6152 = vmax.f32 %v6150, %v6151
  %v6153 = vrot.slane %v6152, 2
  %v6154 = vmax.f32 %v6152, %v6153
  %v6155 = vrot.slane %v6154, 1
  %v6156 = vmax.f32 %v6154, %v6155
  %v6157 = vsel %vm1032, %v740, -inf
  %v6158 = vrot.slane %v6157, 4
  %v6159 = vmax.f32 %v6157, %v6158
  %v6160 = vrot.slane %v6159, 2
  %v6161 = vmax.f32 %v6159, %v6160
  %v6162 = vrot.slane %v6161, 1
  %v6163 = vmax.f32 %v6161, %v6162
  %v6164 = vsel %vm1032, %v741, -inf
  %v6165 = vrot.slane %v6164, 4
  %v6166 = vmax.f32 %v6164, %v6165
  %v6167 = vrot.slane %v6166, 2
  %v6168 = vmax.f32 %v6166, %v6167
  %v6169 = vrot.slane %v6168, 1
  %v6170 = vmax.f32 %v6168, %v6169
  %v6171 = vsel %vm1032, %v742, -inf
  %v6172 = vrot.slane %v6171, 4
  %v6173 = vmax.f32 %v6171, %v6172
  %v6174 = vrot.slane %v6173, 2
  %v6175 = vmax.f32 %v6173, %v6174
  %v6176 = vrot.slane %v6175, 1
  %v6177 = vmax.f32 %v6175, %v6176
  %v6178 = vsel %vm1032, %v743, -inf
  %v6179 = vrot.slane %v6178, 4
  %v6180 = vmax.f32 %v6178, %v6179
  %v6181 = vrot.slane %v6180, 2
  %v6182 = vmax.f32 %v6180, %v6181
  %v6183 = vrot.slane %v6182, 1
  %v6184 = vmax.f32 %v6182, %v6183
  %v6185 = vsel %vm1032, %v744, -inf
  %v6186 = vrot.slane %v6185, 4
  %v6187 = vmax.f32 %v6185, %v6186
  %v6188 = vrot.slane %v6187, 2
  %v6189 = vmax.f32 %v6187, %v6188
  %v6190 = vrot.slane %v6189, 1
  %v6191 = vmax.f32 %v6189, %v6190
  %v6192 = vsel %vm1032, %v745, -inf
  %v6193 = vrot.slane %v6192, 4
  %v6194 = vmax.f32 %v6192, %v6193
  %v6195 = vrot.slane %v6194, 2
  %v6196 = vmax.f32 %v6194, %v6195
  %v6197 = vrot.slane %v6196, 1
  %v6198 = vmax.f32 %v6196, %v6197
  %v6199 = vsel %vm1032, %v746, -inf
  %v6200 = vrot.slane %v6199, 4
  %v6201 = vmax.f32 %v6199, %v6200
  %v6202 = vrot.slane %v6201, 2
  %v6203 = vmax.f32 %v6201, %v6202
  %v6204 = vrot.slane %v6203, 1
  %v6205 = vmax.f32 %v6203, %v6204
  %v6206 = vsel %vm1032, %v747, -inf
  %v6207 = vrot.slane %v6206, 4
  %v6208 = vmax.f32 %v6206, %v6207
  %v6209 = vrot.slane %v6208, 2
  %v6210 = vmax.f32 %v6208, %v6209
  %v6211 = vrot.slane %v6210, 1
  %v6212 = vmax.f32 %v6210, %v6211
  %v6213 = vsel %vm1032, %v748, -inf
  %v6214 = vrot.slane %v6213, 4
  %v6215 = vmax.f32 %v6213, %v6214
  %v6216 = vrot.slane %v6215, 2
  %v6217 = vmax.f32 %v6215, %v6216
  %v6218 = vrot.slane %v6217, 1
  %v6219 = vmax.f32 %v6217, %v6218
  %v6220 = vsel %vm1032, %v749, -inf
  %v6221 = vrot.slane %v6220, 4
  %v6222 = vmax.f32 %v6220, %v6221
  %v6223 = vrot.slane %v6222, 2
  %v6224 = vmax.f32 %v6222, %v6223
  %v6225 = vrot.slane %v6224, 1
  %v6226 = vmax.f32 %v6224, %v6225
  %v6227 = vsel %vm1032, %v750, -inf
  %v6228 = vrot.slane %v6227, 4
  %v6229 = vmax.f32 %v6227, %v6228
  %v6230 = vrot.slane %v6229, 2
  %v6231 = vmax.f32 %v6229, %v6230
  %v6232 = vrot.slane %v6231, 1
  %v6233 = vmax.f32 %v6231, %v6232
  %v6234 = vsel %vm1032, %v751, -inf
  %v6235 = vrot.slane %v6234, 4
  %v6236 = vmax.f32 %v6234, %v6235
  %v6237 = vrot.slane %v6236, 2
  %v6238 = vmax.f32 %v6236, %v6237
  %v6239 = vrot.slane %v6238, 1
  %v6240 = vmax.f32 %v6238, %v6239
  %v6241 = vsel %vm1032, %v752, -inf
  %v6242 = vrot.slane %v6241, 4
  %v6243 = vmax.f32 %v6241, %v6242
  %v6244 = vrot.slane %v6243, 2
  %v6245 = vmax.f32 %v6243, %v6244
  %v6246 = vrot.slane %v6245, 1
  %v6247 = vmax.f32 %v6245, %v6246
  %v6248 = vsel %vm1032, %v753, -inf
  %v6249 = vrot.slane %v6248, 4
  %v6250 = vmax.f32 %v6248, %v6249
  %v6251 = vrot.slane %v6250, 2
  %v6252 = vmax.f32 %v6250, %v6251
  %v6253 = vrot.slane %v6252, 1
  %v6254 = vmax.f32 %v6252, %v6253
  %v6255 = vsel %vm1032, %v754, -inf
  %v6256 = vrot.slane %v6255, 4
  %v6257 = vmax.f32 %v6255, %v6256
  %v6258 = vrot.slane %v6257, 2
  %v6259 = vmax.f32 %v6257, %v6258
  %v6260 = vrot.slane %v6259, 1
  %v6261 = vmax.f32 %v6259, %v6260
  %v6262 = vsel %vm1032, %v755, -inf
  %v6263 = vrot.slane %v6262, 4
  %v6264 = vmax.f32 %v6262, %v6263
  %v6265 = vrot.slane %v6264, 2
  %v6266 = vmax.f32 %v6264, %v6265
  %v6267 = vrot.slane %v6266, 1
  %v6268 = vmax.f32 %v6266, %v6267
  %v6269 = vsel %vm1032, %v756, -inf
  %v6270 = vrot.slane %v6269, 4
  %v6271 = vmax.f32 %v6269, %v6270
  %v6272 = vrot.slane %v6271, 2
  %v6273 = vmax.f32 %v6271, %v6272
  %v6274 = vrot.slane %v6273, 1
  %v6275 = vmax.f32 %v6273, %v6274
  %v6276 = vsel %vm1032, %v757, -inf
  %v6277 = vrot.slane %v6276, 4
  %v6278 = vmax.f32 %v6276, %v6277
  %v6279 = vrot.slane %v6278, 2
  %v6280 = vmax.f32 %v6278, %v6279
  %v6281 = vrot.slane %v6280, 1
  %v6282 = vmax.f32 %v6280, %v6281
  %v6283 = vsel %vm1032, %v758, -inf
  %v6284 = vrot.slane %v6283, 4
  %v6285 = vmax.f32 %v6283, %v6284
  %v6286 = vrot.slane %v6285, 2
  %v6287 = vmax.f32 %v6285, %v6286
  %v6288 = vrot.slane %v6287, 1
  %v6289 = vmax.f32 %v6287, %v6288
  %v6290 = vsel %vm1032, %v759, -inf
  %v6291 = vrot.slane %v6290, 4
  %v6292 = vmax.f32 %v6290, %v6291
  %v6293 = vrot.slane %v6292, 2
  %v6294 = vmax.f32 %v6292, %v6293
  %v6295 = vrot.slane %v6294, 1
  %v6296 = vmax.f32 %v6294, %v6295
  %v6297 = vsel %vm1032, %v760, -inf
  %v6298 = vrot.slane %v6297, 4
  %v6299 = vmax.f32 %v6297, %v6298
  %v6300 = vrot.slane %v6299, 2
  %v6301 = vmax.f32 %v6299, %v6300
  %v6302 = vrot.slane %v6301, 1
  %v6303 = vmax.f32 %v6301, %v6302
  %v6304 = vsel %vm1032, %v761, -inf
  %v6305 = vrot.slane %v6304, 4
  %v6306 = vmax.f32 %v6304, %v6305
  %v6307 = vrot.slane %v6306, 2
  %v6308 = vmax.f32 %v6306, %v6307
  %v6309 = vrot.slane %v6308, 1
  %v6310 = vmax.f32 %v6308, %v6309
  %v6311 = vsel %vm1032, %v762, -inf
  %v6312 = vrot.slane %v6311, 4
  %v6313 = vmax.f32 %v6311, %v6312
  %v6314 = vrot.slane %v6313, 2
  %v6315 = vmax.f32 %v6313, %v6314
  %v6316 = vrot.slane %v6315, 1
  %v6317 = vmax.f32 %v6315, %v6316
  %v6318 = vsel %vm1032, %v763, -inf
  %v6319 = vrot.slane %v6318, 4
  %v6320 = vmax.f32 %v6318, %v6319
  %v6321 = vrot.slane %v6320, 2
  %v6322 = vmax.f32 %v6320, %v6321
  %v6323 = vrot.slane %v6322, 1
  %v6324 = vmax.f32 %v6322, %v6323
  %v6325 = vsel %vm1032, %v764, -inf
  %v6326 = vrot.slane %v6325, 4
  %v6327 = vmax.f32 %v6325, %v6326
  %v6328 = vrot.slane %v6327, 2
  %v6329 = vmax.f32 %v6327, %v6328
  %v6330 = vrot.slane %v6329, 1
  %v6331 = vmax.f32 %v6329, %v6330
  %v6332 = vsel %vm1032, %v765, -inf
  %v6333 = vrot.slane %v6332, 4
  %v6334 = vmax.f32 %v6332, %v6333
  %v6335 = vrot.slane %v6334, 2
  %v6336 = vmax.f32 %v6334, %v6335
  %v6337 = vrot.slane %v6336, 1
  %v6338 = vmax.f32 %v6336, %v6337
  %v6339 = vsel %vm1032, %v766, -inf
  %v6340 = vrot.slane %v6339, 4
  %v6341 = vmax.f32 %v6339, %v6340
  %v6342 = vrot.slane %v6341, 2
  %v6343 = vmax.f32 %v6341, %v6342
  %v6344 = vrot.slane %v6343, 1
  %v6345 = vmax.f32 %v6343, %v6344
  %v6346 = vsel %vm1032, %v767, -inf
  %v6347 = vrot.slane %v6346, 4
  %v6348 = vmax.f32 %v6346, %v6347
  %v6349 = vrot.slane %v6348, 2
  %v6350 = vmax.f32 %v6348, %v6349
  %v6351 = vrot.slane %v6350, 1
  %v6352 = vmax.f32 %v6350, %v6351
  %v6353 = vsel %vm1032, %v768, -inf
  %v6354 = vrot.slane %v6353, 4
  %v6355 = vmax.f32 %v6353, %v6354
  %v6356 = vrot.slane %v6355, 2
  %v6357 = vmax.f32 %v6355, %v6356
  %v6358 = vrot.slane %v6357, 1
  %v6359 = vmax.f32 %v6357, %v6358
  %v6360 = vsel %vm1032, %v769, -inf
  %v6361 = vrot.slane %v6360, 4
  %v6362 = vmax.f32 %v6360, %v6361
  %v6363 = vrot.slane %v6362, 2
  %v6364 = vmax.f32 %v6362, %v6363
  %v6365 = vrot.slane %v6364, 1
  %v6366 = vmax.f32 %v6364, %v6365
  %v6367 = vsel %vm1032, %v770, -inf
  %v6368 = vrot.slane %v6367, 4
  %v6369 = vmax.f32 %v6367, %v6368
  %v6370 = vrot.slane %v6369, 2
  %v6371 = vmax.f32 %v6369, %v6370
  %v6372 = vrot.slane %v6371, 1
  %v6373 = vmax.f32 %v6371, %v6372
  %v6374 = vsel %vm1032, %v771, -inf
  %v6375 = vrot.slane %v6374, 4
  %v6376 = vmax.f32 %v6374, %v6375
  %v6377 = vrot.slane %v6376, 2
  %v6378 = vmax.f32 %v6376, %v6377
  %v6379 = vrot.slane %v6378, 1
  %v6380 = vmax.f32 %v6378, %v6379
  %v6381 = vsel %vm1032, %v772, -inf
  %v6382 = vrot.slane %v6381, 4
  %v6383 = vmax.f32 %v6381, %v6382
  %v6384 = vrot.slane %v6383, 2
  %v6385 = vmax.f32 %v6383, %v6384
  %v6386 = vrot.slane %v6385, 1
  %v6387 = vmax.f32 %v6385, %v6386
  %v6388 = vsel %vm1032, %v773, -inf
  %v6389 = vrot.slane %v6388, 4
  %v6390 = vmax.f32 %v6388, %v6389
  %v6391 = vrot.slane %v6390, 2
  %v6392 = vmax.f32 %v6390, %v6391
  %v6393 = vrot.slane %v6392, 1
  %v6394 = vmax.f32 %v6392, %v6393
  %v6395 = vsel %vm1032, %v774, -inf
  %v6396 = vrot.slane %v6395, 4
  %v6397 = vmax.f32 %v6395, %v6396
  %v6398 = vrot.slane %v6397, 2
  %v6399 = vmax.f32 %v6397, %v6398
  %v6400 = vrot.slane %v6399, 1
  %v6401 = vmax.f32 %v6399, %v6400
  %v6402 = vsel %vm1032, %v775, -inf
  %v6403 = vrot.slane %v6402, 4
  %v6404 = vmax.f32 %v6402, %v6403
  %v6405 = vrot.slane %v6404, 2
  %v6406 = vmax.f32 %v6404, %v6405
  %v6407 = vrot.slane %v6406, 1
  %v6408 = vmax.f32 %v6406, %v6407
  %v6409 = vsel %vm1032, %v776, -inf
  %v6410 = vrot.slane %v6409, 4
  %v6411 = vmax.f32 %v6409, %v6410
  %v6412 = vrot.slane %v6411, 2
  %v6413 = vmax.f32 %v6411, %v6412
  %v6414 = vrot.slane %v6413, 1
  %v6415 = vmax.f32 %v6413, %v6414
  %v6416 = vsel %vm1032, %v777, -inf
  %v6417 = vrot.slane %v6416, 4
  %v6418 = vmax.f32 %v6416, %v6417
  %v6419 = vrot.slane %v6418, 2
  %v6420 = vmax.f32 %v6418, %v6419
  %v6421 = vrot.slane %v6420, 1
  %v6422 = vmax.f32 %v6420, %v6421
  %v6423 = vsel %vm1032, %v778, -inf
  %v6424 = vrot.slane %v6423, 4
  %v6425 = vmax.f32 %v6423, %v6424
  %v6426 = vrot.slane %v6425, 2
  %v6427 = vmax.f32 %v6425, %v6426
  %v6428 = vrot.slane %v6427, 1
  %v6429 = vmax.f32 %v6427, %v6428
  %v6430 = vsel %vm1032, %v779, -inf
  %v6431 = vrot.slane %v6430, 4
  %v6432 = vmax.f32 %v6430, %v6431
  %v6433 = vrot.slane %v6432, 2
  %v6434 = vmax.f32 %v6432, %v6433
  %v6435 = vrot.slane %v6434, 1
  %v6436 = vmax.f32 %v6434, %v6435
  %v6437 = vsel %vm1032, %v780, -inf
  %v6438 = vrot.slane %v6437, 4
  %v6439 = vmax.f32 %v6437, %v6438
  %v6440 = vrot.slane %v6439, 2
  %v6441 = vmax.f32 %v6439, %v6440
  %v6442 = vrot.slane %v6441, 1
  %v6443 = vmax.f32 %v6441, %v6442
  %v6444 = vsel %vm1032, %v781, -inf
  %v6445 = vrot.slane %v6444, 4
  %v6446 = vmax.f32 %v6444, %v6445
  %v6447 = vrot.slane %v6446, 2
  %v6448 = vmax.f32 %v6446, %v6447
  %v6449 = vrot.slane %v6448, 1
  %v6450 = vmax.f32 %v6448, %v6449
  %v6451 = vsel %vm1032, %v782, -inf
  %v6452 = vrot.slane %v6451, 4
  %v6453 = vmax.f32 %v6451, %v6452
  %v6454 = vrot.slane %v6453, 2
  %v6455 = vmax.f32 %v6453, %v6454
  %v6456 = vrot.slane %v6455, 1
  %v6457 = vmax.f32 %v6455, %v6456
  %v6458 = vsel %vm1032, %v783, -inf
  %v6459 = vrot.slane %v6458, 4
  %v6460 = vmax.f32 %v6458, %v6459
  %v6461 = vrot.slane %v6460, 2
  %v6462 = vmax.f32 %v6460, %v6461
  %v6463 = vrot.slane %v6462, 1
  %v6464 = vmax.f32 %v6462, %v6463
  %v6465 = vsel %vm1032, %v784, -inf
  %v6466 = vrot.slane %v6465, 4
  %v6467 = vmax.f32 %v6465, %v6466
  %v6468 = vrot.slane %v6467, 2
  %v6469 = vmax.f32 %v6467, %v6468
  %v6470 = vrot.slane %v6469, 1
  %v6471 = vmax.f32 %v6469, %v6470
  %v6472 = vsel %vm1032, %v785, -inf
  %v6473 = vrot.slane %v6472, 4
  %v6474 = vmax.f32 %v6472, %v6473
  %v6475 = vrot.slane %v6474, 2
  %v6476 = vmax.f32 %v6474, %v6475
  %v6477 = vrot.slane %v6476, 1
  %v6478 = vmax.f32 %v6476, %v6477
  %v6479 = vsel %vm1032, %v786, -inf
  %v6480 = vrot.slane %v6479, 4
  %v6481 = vmax.f32 %v6479, %v6480
  %v6482 = vrot.slane %v6481, 2
  %v6483 = vmax.f32 %v6481, %v6482
  %v6484 = vrot.slane %v6483, 1
  %v6485 = vmax.f32 %v6483, %v6484
  %v6486 = vsel %vm1032, %v787, -inf
  %v6487 = vrot.slane %v6486, 4
  %v6488 = vmax.f32 %v6486, %v6487
  %v6489 = vrot.slane %v6488, 2
  %v6490 = vmax.f32 %v6488, %v6489
  %v6491 = vrot.slane %v6490, 1
  %v6492 = vmax.f32 %v6490, %v6491
  %v6493 = vsel %vm1032, %v788, -inf
  %v6494 = vrot.slane %v6493, 4
  %v6495 = vmax.f32 %v6493, %v6494
  %v6496 = vrot.slane %v6495, 2
  %v6497 = vmax.f32 %v6495, %v6496
  %v6498 = vrot.slane %v6497, 1
  %v6499 = vmax.f32 %v6497, %v6498
  %v6500 = vsel %vm1032, %v789, -inf
  %v6501 = vrot.slane %v6500, 4
  %v6502 = vmax.f32 %v6500, %v6501
  %v6503 = vrot.slane %v6502, 2
  %v6504 = vmax.f32 %v6502, %v6503
  %v6505 = vrot.slane %v6504, 1
  %v6506 = vmax.f32 %v6504, %v6505
  %v6507 = vsel %vm1032, %v790, -inf
  %v6508 = vrot.slane %v6507, 4
  %v6509 = vmax.f32 %v6507, %v6508
  %v6510 = vrot.slane %v6509, 2
  %v6511 = vmax.f32 %v6509, %v6510
  %v6512 = vrot.slane %v6511, 1
  %v6513 = vmax.f32 %v6511, %v6512
  %v6514 = vsel %vm1032, %v791, -inf
  %v6515 = vrot.slane %v6514, 4
  %v6516 = vmax.f32 %v6514, %v6515
  %v6517 = vrot.slane %v6516, 2
  %v6518 = vmax.f32 %v6516, %v6517
  %v6519 = vrot.slane %v6518, 1
  %v6520 = vmax.f32 %v6518, %v6519
  %v6521 = vsel %vm1032, %v792, -inf
  %v6522 = vrot.slane %v6521, 4
  %v6523 = vmax.f32 %v6521, %v6522
  %v6524 = vrot.slane %v6523, 2
  %v6525 = vmax.f32 %v6523, %v6524
  %v6526 = vrot.slane %v6525, 1
  %v6527 = vmax.f32 %v6525, %v6526
  %v6528 = vsel %vm1032, %v793, -inf
  %v6529 = vrot.slane %v6528, 4
  %v6530 = vmax.f32 %v6528, %v6529
  %v6531 = vrot.slane %v6530, 2
  %v6532 = vmax.f32 %v6530, %v6531
  %v6533 = vrot.slane %v6532, 1
  %v6534 = vmax.f32 %v6532, %v6533
  %v6535 = vsel %vm1032, %v794, -inf
  %v6536 = vrot.slane %v6535, 4
  %v6537 = vmax.f32 %v6535, %v6536
  %v6538 = vrot.slane %v6537, 2
  %v6539 = vmax.f32 %v6537, %v6538
  %v6540 = vrot.slane %v6539, 1
  %v6541 = vmax.f32 %v6539, %v6540
  %v6542 = vsel %vm1032, %v795, -inf
  %v6543 = vrot.slane %v6542, 4
  %v6544 = vmax.f32 %v6542, %v6543
  %v6545 = vrot.slane %v6544, 2
  %v6546 = vmax.f32 %v6544, %v6545
  %v6547 = vrot.slane %v6546, 1
  %v6548 = vmax.f32 %v6546, %v6547
  %v6549 = vsel %vm1032, %v796, -inf
  %v6550 = vrot.slane %v6549, 4
  %v6551 = vmax.f32 %v6549, %v6550
  %v6552 = vrot.slane %v6551, 2
  %v6553 = vmax.f32 %v6551, %v6552
  %v6554 = vrot.slane %v6553, 1
  %v6555 = vmax.f32 %v6553, %v6554
  %v6556 = vsel %vm1032, %v797, -inf
  %v6557 = vrot.slane %v6556, 4
  %v6558 = vmax.f32 %v6556, %v6557
  %v6559 = vrot.slane %v6558, 2
  %v6560 = vmax.f32 %v6558, %v6559
  %v6561 = vrot.slane %v6560, 1
  %v6562 = vmax.f32 %v6560, %v6561
  %v6563 = vsel %vm1032, %v798, -inf
  %v6564 = vrot.slane %v6563, 4
  %v6565 = vmax.f32 %v6563, %v6564
  %v6566 = vrot.slane %v6565, 2
  %v6567 = vmax.f32 %v6565, %v6566
  %v6568 = vrot.slane %v6567, 1
  %v6569 = vmax.f32 %v6567, %v6568
  %v6570 = vsel %vm1032, %v799, -inf
  %v6571 = vrot.slane %v6570, 4
  %v6572 = vmax.f32 %v6570, %v6571
  %v6573 = vrot.slane %v6572, 2
  %v6574 = vmax.f32 %v6572, %v6573
  %v6575 = vrot.slane %v6574, 1
  %v6576 = vmax.f32 %v6574, %v6575
  %v6577 = vsel %vm1032, %v800, -inf
  %v6578 = vrot.slane %v6577, 4
  %v6579 = vmax.f32 %v6577, %v6578
  %v6580 = vrot.slane %v6579, 2
  %v6581 = vmax.f32 %v6579, %v6580
  %v6582 = vrot.slane %v6581, 1
  %v6583 = vmax.f32 %v6581, %v6582
  %v6584 = vsel %vm1032, %v801, -inf
  %v6585 = vrot.slane %v6584, 4
  %v6586 = vmax.f32 %v6584, %v6585
  %v6587 = vrot.slane %v6586, 2
  %v6588 = vmax.f32 %v6586, %v6587
  %v6589 = vrot.slane %v6588, 1
  %v6590 = vmax.f32 %v6588, %v6589
  %v6591 = vsel %vm1032, %v802, -inf
  %v6592 = vrot.slane %v6591, 4
  %v6593 = vmax.f32 %v6591, %v6592
  %v6594 = vrot.slane %v6593, 2
  %v6595 = vmax.f32 %v6593, %v6594
  %v6596 = vrot.slane %v6595, 1
  %v6597 = vmax.f32 %v6595, %v6596
  %v6598 = vsel %vm1032, %v803, -inf
  %v6599 = vrot.slane %v6598, 4
  %v6600 = vmax.f32 %v6598, %v6599
  %v6601 = vrot.slane %v6600, 2
  %v6602 = vmax.f32 %v6600, %v6601
  %v6603 = vrot.slane %v6602, 1
  %v6604 = vmax.f32 %v6602, %v6603
  %v6605 = vsel %vm1032, %v804, -inf
  %v6606 = vrot.slane %v6605, 4
  %v6607 = vmax.f32 %v6605, %v6606
  %v6608 = vrot.slane %v6607, 2
  %v6609 = vmax.f32 %v6607, %v6608
  %v6610 = vrot.slane %v6609, 1
  %v6611 = vmax.f32 %v6609, %v6610
  %v6612 = vsel %vm1032, %v805, -inf
  %v6613 = vrot.slane %v6612, 4
  %v6614 = vmax.f32 %v6612, %v6613
  %v6615 = vrot.slane %v6614, 2
  %v6616 = vmax.f32 %v6614, %v6615
  %v6617 = vrot.slane %v6616, 1
  %v6618 = vmax.f32 %v6616, %v6617
  %v6619 = vsel %vm1032, %v806, -inf
  %v6620 = vrot.slane %v6619, 4
  %v6621 = vmax.f32 %v6619, %v6620
  %v6622 = vrot.slane %v6621, 2
  %v6623 = vmax.f32 %v6621, %v6622
  %v6624 = vrot.slane %v6623, 1
  %v6625 = vmax.f32 %v6623, %v6624
  %v6626 = vsel %vm1032, %v807, -inf
  %v6627 = vrot.slane %v6626, 4
  %v6628 = vmax.f32 %v6626, %v6627
  %v6629 = vrot.slane %v6628, 2
  %v6630 = vmax.f32 %v6628, %v6629
  %v6631 = vrot.slane %v6630, 1
  %v6632 = vmax.f32 %v6630, %v6631
  %v6633 = vsel %vm1032, %v808, -inf
  %v6634 = vrot.slane %v6633, 4
  %v6635 = vmax.f32 %v6633, %v6634
  %v6636 = vrot.slane %v6635, 2
  %v6637 = vmax.f32 %v6635, %v6636
  %v6638 = vrot.slane %v6637, 1
  %v6639 = vmax.f32 %v6637, %v6638
  %v6640 = vsel %vm1032, %v809, -inf
  %v6641 = vrot.slane %v6640, 4
  %v6642 = vmax.f32 %v6640, %v6641
  %v6643 = vrot.slane %v6642, 2
  %v6644 = vmax.f32 %v6642, %v6643
  %v6645 = vrot.slane %v6644, 1
  %v6646 = vmax.f32 %v6644, %v6645
  %v6647 = vsel %vm1032, %v810, -inf
  %v6648 = vrot.slane %v6647, 4
  %v6649 = vmax.f32 %v6647, %v6648
  %v6650 = vrot.slane %v6649, 2
  %v6651 = vmax.f32 %v6649, %v6650
  %v6652 = vrot.slane %v6651, 1
  %v6653 = vmax.f32 %v6651, %v6652
  %v6654 = vsel %vm1032, %v811, -inf
  %v6655 = vrot.slane %v6654, 4
  %v6656 = vmax.f32 %v6654, %v6655
  %v6657 = vrot.slane %v6656, 2
  %v6658 = vmax.f32 %v6656, %v6657
  %v6659 = vrot.slane %v6658, 1
  %v6660 = vmax.f32 %v6658, %v6659
  %v6661 = vsel %vm1032, %v812, -inf
  %v6662 = vrot.slane %v6661, 4
  %v6663 = vmax.f32 %v6661, %v6662
  %v6664 = vrot.slane %v6663, 2
  %v6665 = vmax.f32 %v6663, %v6664
  %v6666 = vrot.slane %v6665, 1
  %v6667 = vmax.f32 %v6665, %v6666
  %v6668 = vsel %vm1032, %v813, -inf
  %v6669 = vrot.slane %v6668, 4
  %v6670 = vmax.f32 %v6668, %v6669
  %v6671 = vrot.slane %v6670, 2
  %v6672 = vmax.f32 %v6670, %v6671
  %v6673 = vrot.slane %v6672, 1
  %v6674 = vmax.f32 %v6672, %v6673
  %v6675 = vsel %vm1032, %v814, -inf
  %v6676 = vrot.slane %v6675, 4
  %v6677 = vmax.f32 %v6675, %v6676
  %v6678 = vrot.slane %v6677, 2
  %v6679 = vmax.f32 %v6677, %v6678
  %v6680 = vrot.slane %v6679, 1
  %v6681 = vmax.f32 %v6679, %v6680
  %v6682 = vsel %vm1032, %v815, -inf
  %v6683 = vrot.slane %v6682, 4
  %v6684 = vmax.f32 %v6682, %v6683
  %v6685 = vrot.slane %v6684, 2
  %v6686 = vmax.f32 %v6684, %v6685
  %v6687 = vrot.slane %v6686, 1
  %v6688 = vmax.f32 %v6686, %v6687
  %v6689 = vsel %vm1032, %v816, -inf
  %v6690 = vrot.slane %v6689, 4
  %v6691 = vmax.f32 %v6689, %v6690
  %v6692 = vrot.slane %v6691, 2
  %v6693 = vmax.f32 %v6691, %v6692
  %v6694 = vrot.slane %v6693, 1
  %v6695 = vmax.f32 %v6693, %v6694
  %v6696 = vsel %vm1032, %v817, -inf
  %v6697 = vrot.slane %v6696, 4
  %v6698 = vmax.f32 %v6696, %v6697
  %v6699 = vrot.slane %v6698, 2
  %v6700 = vmax.f32 %v6698, %v6699
  %v6701 = vrot.slane %v6700, 1
  %v6702 = vmax.f32 %v6700, %v6701
  %v6703 = vsel %vm1032, %v818, -inf
  %v6704 = vrot.slane %v6703, 4
  %v6705 = vmax.f32 %v6703, %v6704
  %v6706 = vrot.slane %v6705, 2
  %v6707 = vmax.f32 %v6705, %v6706
  %v6708 = vrot.slane %v6707, 1
  %v6709 = vmax.f32 %v6707, %v6708
  %v6710 = vsel %vm1032, %v819, -inf
  %v6711 = vrot.slane %v6710, 4
  %v6712 = vmax.f32 %v6710, %v6711
  %v6713 = vrot.slane %v6712, 2
  %v6714 = vmax.f32 %v6712, %v6713
  %v6715 = vrot.slane %v6714, 1
  %v6716 = vmax.f32 %v6714, %v6715
  %v6717 = vsel %vm1032, %v820, -inf
  %v6718 = vrot.slane %v6717, 4
  %v6719 = vmax.f32 %v6717, %v6718
  %v6720 = vrot.slane %v6719, 2
  %v6721 = vmax.f32 %v6719, %v6720
  %v6722 = vrot.slane %v6721, 1
  %v6723 = vmax.f32 %v6721, %v6722
  %v6724 = vsel %vm1032, %v821, -inf
  %v6725 = vrot.slane %v6724, 4
  %v6726 = vmax.f32 %v6724, %v6725
  %v6727 = vrot.slane %v6726, 2
  %v6728 = vmax.f32 %v6726, %v6727
  %v6729 = vrot.slane %v6728, 1
  %v6730 = vmax.f32 %v6728, %v6729
  %v6731 = vsel %vm1032, %v822, -inf
  %v6732 = vrot.slane %v6731, 4
  %v6733 = vmax.f32 %v6731, %v6732
  %v6734 = vrot.slane %v6733, 2
  %v6735 = vmax.f32 %v6733, %v6734
  %v6736 = vrot.slane %v6735, 1
  %v6737 = vmax.f32 %v6735, %v6736
  %v6738 = vsel %vm1032, %v823, -inf
  %v6739 = vrot.slane %v6738, 4
  %v6740 = vmax.f32 %v6738, %v6739
  %v6741 = vrot.slane %v6740, 2
  %v6742 = vmax.f32 %v6740, %v6741
  %v6743 = vrot.slane %v6742, 1
  %v6744 = vmax.f32 %v6742, %v6743
  %v6745 = vsel %vm1032, %v824, -inf
  %v6746 = vrot.slane %v6745, 4
  %v6747 = vmax.f32 %v6745, %v6746
  %v6748 = vrot.slane %v6747, 2
  %v6749 = vmax.f32 %v6747, %v6748
  %v6750 = vrot.slane %v6749, 1
  %v6751 = vmax.f32 %v6749, %v6750
  %v6752 = vsel %vm1032, %v825, -inf
  %v6753 = vrot.slane %v6752, 4
  %v6754 = vmax.f32 %v6752, %v6753
  %v6755 = vrot.slane %v6754, 2
  %v6756 = vmax.f32 %v6754, %v6755
  %v6757 = vrot.slane %v6756, 1
  %v6758 = vmax.f32 %v6756, %v6757
  %v6759 = vsel %vm1032, %v826, -inf
  %v6760 = vrot.slane %v6759, 4
  %v6761 = vmax.f32 %v6759, %v6760
  %v6762 = vrot.slane %v6761, 2
  %v6763 = vmax.f32 %v6761, %v6762
  %v6764 = vrot.slane %v6763, 1
  %v6765 = vmax.f32 %v6763, %v6764
  %v6766 = vsel %vm1032, %v827, -inf
  %v6767 = vrot.slane %v6766, 4
  %v6768 = vmax.f32 %v6766, %v6767
  %v6769 = vrot.slane %v6768, 2
  %v6770 = vmax.f32 %v6768, %v6769
  %v6771 = vrot.slane %v6770, 1
  %v6772 = vmax.f32 %v6770, %v6771
  %v6773 = vsel %vm1032, %v828, -inf
  %v6774 = vrot.slane %v6773, 4
  %v6775 = vmax.f32 %v6773, %v6774
  %v6776 = vrot.slane %v6775, 2
  %v6777 = vmax.f32 %v6775, %v6776
  %v6778 = vrot.slane %v6777, 1
  %v6779 = vmax.f32 %v6777, %v6778
  %v6780 = vsel %vm1032, %v829, -inf
  %v6781 = vrot.slane %v6780, 4
  %v6782 = vmax.f32 %v6780, %v6781
  %v6783 = vrot.slane %v6782, 2
  %v6784 = vmax.f32 %v6782, %v6783
  %v6785 = vrot.slane %v6784, 1
  %v6786 = vmax.f32 %v6784, %v6785
  %v6787 = vsel %vm1032, %v830, -inf
  %v6788 = vrot.slane %v6787, 4
  %v6789 = vmax.f32 %v6787, %v6788
  %v6790 = vrot.slane %v6789, 2
  %v6791 = vmax.f32 %v6789, %v6790
  %v6792 = vrot.slane %v6791, 1
  %v6793 = vmax.f32 %v6791, %v6792
  %v6794 = vsel %vm1032, %v831, -inf
  %v6795 = vrot.slane %v6794, 4
  %v6796 = vmax.f32 %v6794, %v6795
  %v6797 = vrot.slane %v6796, 2
  %v6798 = vmax.f32 %v6796, %v6797
  %v6799 = vrot.slane %v6798, 1
  %v6800 = vmax.f32 %v6798, %v6799
  %v6801 = vsel %vm1032, %v832, -inf
  %v6802 = vrot.slane %v6801, 4
  %v6803 = vmax.f32 %v6801, %v6802
  %v6804 = vrot.slane %v6803, 2
  %v6805 = vmax.f32 %v6803, %v6804
  %v6806 = vrot.slane %v6805, 1
  %v6807 = vmax.f32 %v6805, %v6806
  %v6808 = vsel %vm1032, %v833, -inf
  %v6809 = vrot.slane %v6808, 4
  %v6810 = vmax.f32 %v6808, %v6809
  %v6811 = vrot.slane %v6810, 2
  %v6812 = vmax.f32 %v6810, %v6811
  %v6813 = vrot.slane %v6812, 1
  %v6814 = vmax.f32 %v6812, %v6813
  %v6815 = vsel %vm1032, %v834, -inf
  %v6816 = vrot.slane %v6815, 4
  %v6817 = vmax.f32 %v6815, %v6816
  %v6818 = vrot.slane %v6817, 2
  %v6819 = vmax.f32 %v6817, %v6818
  %v6820 = vrot.slane %v6819, 1
  %v6821 = vmax.f32 %v6819, %v6820
  %v6822 = vsel %vm1032, %v835, -inf
  %v6823 = vrot.slane %v6822, 4
  %v6824 = vmax.f32 %v6822, %v6823
  %v6825 = vrot.slane %v6824, 2
  %v6826 = vmax.f32 %v6824, %v6825
  %v6827 = vrot.slane %v6826, 1
  %v6828 = vmax.f32 %v6826, %v6827
  %v6829 = vsel %vm1032, %v836, -inf
  %v6830 = vrot.slane %v6829, 4
  %v6831 = vmax.f32 %v6829, %v6830
  %v6832 = vrot.slane %v6831, 2
  %v6833 = vmax.f32 %v6831, %v6832
  %v6834 = vrot.slane %v6833, 1
  %v6835 = vmax.f32 %v6833, %v6834
  %v6836 = vsel %vm1032, %v837, -inf
  %v6837 = vrot.slane %v6836, 4
  %v6838 = vmax.f32 %v6836, %v6837
  %v6839 = vrot.slane %v6838, 2
  %v6840 = vmax.f32 %v6838, %v6839
  %v6841 = vrot.slane %v6840, 1
  %v6842 = vmax.f32 %v6840, %v6841
  %v6843 = vsel %vm1032, %v838, -inf
  %v6844 = vrot.slane %v6843, 4
  %v6845 = vmax.f32 %v6843, %v6844
  %v6846 = vrot.slane %v6845, 2
  %v6847 = vmax.f32 %v6845, %v6846
  %v6848 = vrot.slane %v6847, 1
  %v6849 = vmax.f32 %v6847, %v6848
  %v6850 = vsel %vm1032, %v839, -inf
  %v6851 = vrot.slane %v6850, 4
  %v6852 = vmax.f32 %v6850, %v6851
  %v6853 = vrot.slane %v6852, 2
  %v6854 = vmax.f32 %v6852, %v6853
  %v6855 = vrot.slane %v6854, 1
  %v6856 = vmax.f32 %v6854, %v6855
  %v6857 = vsel %vm1032, %v840, -inf
  %v6858 = vrot.slane %v6857, 4
  %v6859 = vmax.f32 %v6857, %v6858
  %v6860 = vrot.slane %v6859, 2
  %v6861 = vmax.f32 %v6859, %v6860
  %v6862 = vrot.slane %v6861, 1
  %v6863 = vmax.f32 %v6861, %v6862
  %v6864 = vsel %vm1032, %v841, -inf
  %v6865 = vrot.slane %v6864, 4
  %v6866 = vmax.f32 %v6864, %v6865
  %v6867 = vrot.slane %v6866, 2
  %v6868 = vmax.f32 %v6866, %v6867
  %v6869 = vrot.slane %v6868, 1
  %v6870 = vmax.f32 %v6868, %v6869
  %v6871 = vsel %vm1032, %v842, -inf
  %v6872 = vrot.slane %v6871, 4
  %v6873 = vmax.f32 %v6871, %v6872
  %v6874 = vrot.slane %v6873, 2
  %v6875 = vmax.f32 %v6873, %v6874
  %v6876 = vrot.slane %v6875, 1
  %v6877 = vmax.f32 %v6875, %v6876
  %v6878 = vsel %vm1032, %v843, -inf
  %v6879 = vrot.slane %v6878, 4
  %v6880 = vmax.f32 %v6878, %v6879
  %v6881 = vrot.slane %v6880, 2
  %v6882 = vmax.f32 %v6880, %v6881
  %v6883 = vrot.slane %v6882, 1
  %v6884 = vmax.f32 %v6882, %v6883
  %v6885 = vsel %vm1032, %v844, -inf
  %v6886 = vrot.slane %v6885, 4
  %v6887 = vmax.f32 %v6885, %v6886
  %v6888 = vrot.slane %v6887, 2
  %v6889 = vmax.f32 %v6887, %v6888
  %v6890 = vrot.slane %v6889, 1
  %v6891 = vmax.f32 %v6889, %v6890
  %v6892 = vsel %vm1032, %v845, -inf
  %v6893 = vrot.slane %v6892, 4
  %v6894 = vmax.f32 %v6892, %v6893
  %v6895 = vrot.slane %v6894, 2
  %v6896 = vmax.f32 %v6894, %v6895
  %v6897 = vrot.slane %v6896, 1
  %v6898 = vmax.f32 %v6896, %v6897
  %v6899 = vsel %vm1032, %v846, -inf
  %v6900 = vrot.slane %v6899, 4
  %v6901 = vmax.f32 %v6899, %v6900
  %v6902 = vrot.slane %v6901, 2
  %v6903 = vmax.f32 %v6901, %v6902
  %v6904 = vrot.slane %v6903, 1
  %v6905 = vmax.f32 %v6903, %v6904
  %v6906 = vsel %vm1032, %v847, -inf
  %v6907 = vrot.slane %v6906, 4
  %v6908 = vmax.f32 %v6906, %v6907
  %v6909 = vrot.slane %v6908, 2
  %v6910 = vmax.f32 %v6908, %v6909
  %v6911 = vrot.slane %v6910, 1
  %v6912 = vmax.f32 %v6910, %v6911
  %v6913 = vsel %vm1032, %v848, -inf
  %v6914 = vrot.slane %v6913, 4
  %v6915 = vmax.f32 %v6913, %v6914
  %v6916 = vrot.slane %v6915, 2
  %v6917 = vmax.f32 %v6915, %v6916
  %v6918 = vrot.slane %v6917, 1
  %v6919 = vmax.f32 %v6917, %v6918
  %v6920 = vsel %vm1032, %v849, -inf
  %v6921 = vrot.slane %v6920, 4
  %v6922 = vmax.f32 %v6920, %v6921
  %v6923 = vrot.slane %v6922, 2
  %v6924 = vmax.f32 %v6922, %v6923
  %v6925 = vrot.slane %v6924, 1
  %v6926 = vmax.f32 %v6924, %v6925
  %v6927 = vsel %vm1032, %v850, -inf
  %v6928 = vrot.slane %v6927, 4
  %v6929 = vmax.f32 %v6927, %v6928
  %v6930 = vrot.slane %v6929, 2
  %v6931 = vmax.f32 %v6929, %v6930
  %v6932 = vrot.slane %v6931, 1
  %v6933 = vmax.f32 %v6931, %v6932
  %v6934 = vsel %vm1032, %v851, -inf
  %v6935 = vrot.slane %v6934, 4
  %v6936 = vmax.f32 %v6934, %v6935
  %v6937 = vrot.slane %v6936, 2
  %v6938 = vmax.f32 %v6936, %v6937
  %v6939 = vrot.slane %v6938, 1
  %v6940 = vmax.f32 %v6938, %v6939
  %v6941 = vsel %vm1032, %v852, -inf
  %v6942 = vrot.slane %v6941, 4
  %v6943 = vmax.f32 %v6941, %v6942
  %v6944 = vrot.slane %v6943, 2
  %v6945 = vmax.f32 %v6943, %v6944
  %v6946 = vrot.slane %v6945, 1
  %v6947 = vmax.f32 %v6945, %v6946
  %v6948 = vsel %vm1032, %v853, -inf
  %v6949 = vrot.slane %v6948, 4
  %v6950 = vmax.f32 %v6948, %v6949
  %v6951 = vrot.slane %v6950, 2
  %v6952 = vmax.f32 %v6950, %v6951
  %v6953 = vrot.slane %v6952, 1
  %v6954 = vmax.f32 %v6952, %v6953
  %v6955 = vsel %vm1032, %v854, -inf
  %v6956 = vrot.slane %v6955, 4
  %v6957 = vmax.f32 %v6955, %v6956
  %v6958 = vrot.slane %v6957, 2
  %v6959 = vmax.f32 %v6957, %v6958
  %v6960 = vrot.slane %v6959, 1
  %v6961 = vmax.f32 %v6959, %v6960
  %v6962 = vsel %vm1032, %v855, -inf
  %v6963 = vrot.slane %v6962, 4
  %v6964 = vmax.f32 %v6962, %v6963
  %v6965 = vrot.slane %v6964, 2
  %v6966 = vmax.f32 %v6964, %v6965
  %v6967 = vrot.slane %v6966, 1
  %v6968 = vmax.f32 %v6966, %v6967
  %v6969 = vsel %vm1032, %v856, -inf
  %v6970 = vrot.slane %v6969, 4
  %v6971 = vmax.f32 %v6969, %v6970
  %v6972 = vrot.slane %v6971, 2
  %v6973 = vmax.f32 %v6971, %v6972
  %v6974 = vrot.slane %v6973, 1
  %v6975 = vmax.f32 %v6973, %v6974
  %v6976 = vsel %vm1032, %v857, -inf
  %v6977 = vrot.slane %v6976, 4
  %v6978 = vmax.f32 %v6976, %v6977
  %v6979 = vrot.slane %v6978, 2
  %v6980 = vmax.f32 %v6978, %v6979
  %v6981 = vrot.slane %v6980, 1
  %v6982 = vmax.f32 %v6980, %v6981
  %v6983 = vsel %vm1032, %v858, -inf
  %v6984 = vrot.slane %v6983, 4
  %v6985 = vmax.f32 %v6983, %v6984
  %v6986 = vrot.slane %v6985, 2
  %v6987 = vmax.f32 %v6985, %v6986
  %v6988 = vrot.slane %v6987, 1
  %v6989 = vmax.f32 %v6987, %v6988
  %v6990 = vsel %vm1032, %v859, -inf
  %v6991 = vrot.slane %v6990, 4
  %v6992 = vmax.f32 %v6990, %v6991
  %v6993 = vrot.slane %v6992, 2
  %v6994 = vmax.f32 %v6992, %v6993
  %v6995 = vrot.slane %v6994, 1
  %v6996 = vmax.f32 %v6994, %v6995
  %v6997 = vsel %vm1032, %v860, -inf
  %v6998 = vrot.slane %v6997, 4
  %v6999 = vmax.f32 %v6997, %v6998
  %v7000 = vrot.slane %v6999, 2
  %v7001 = vmax.f32 %v6999, %v7000
  %v7002 = vrot.slane %v7001, 1
  %v7003 = vmax.f32 %v7001, %v7002
  %v7004 = vsel %vm1032, %v861, -inf
  %v7005 = vrot.slane %v7004, 4
  %v7006 = vmax.f32 %v7004, %v7005
  %v7007 = vrot.slane %v7006, 2
  %v7008 = vmax.f32 %v7006, %v7007
  %v7009 = vrot.slane %v7008, 1
  %v7010 = vmax.f32 %v7008, %v7009
  %v7011 = vsel %vm1032, %v862, -inf
  %v7012 = vrot.slane %v7011, 4
  %v7013 = vmax.f32 %v7011, %v7012
  %v7014 = vrot.slane %v7013, 2
  %v7015 = vmax.f32 %v7013, %v7014
  %v7016 = vrot.slane %v7015, 1
  %v7017 = vmax.f32 %v7015, %v7016
  %v7018 = vsel %vm1032, %v863, -inf
  %v7019 = vrot.slane %v7018, 4
  %v7020 = vmax.f32 %v7018, %v7019
  %v7021 = vrot.slane %v7020, 2
  %v7022 = vmax.f32 %v7020, %v7021
  %v7023 = vrot.slane %v7022, 1
  %v7024 = vmax.f32 %v7022, %v7023
  %v7025 = vsel %vm1032, %v864, -inf
  %v7026 = vrot.slane %v7025, 4
  %v7027 = vmax.f32 %v7025, %v7026
  %v7028 = vrot.slane %v7027, 2
  %v7029 = vmax.f32 %v7027, %v7028
  %v7030 = vrot.slane %v7029, 1
  %v7031 = vmax.f32 %v7029, %v7030
  %v7032 = vsel %vm1032, %v865, -inf
  %v7033 = vrot.slane %v7032, 4
  %v7034 = vmax.f32 %v7032, %v7033
  %v7035 = vrot.slane %v7034, 2
  %v7036 = vmax.f32 %v7034, %v7035
  %v7037 = vrot.slane %v7036, 1
  %v7038 = vmax.f32 %v7036, %v7037
  %v7039 = vsel %vm1032, %v866, -inf
  %v7040 = vrot.slane %v7039, 4
  %v7041 = vmax.f32 %v7039, %v7040
  %v7042 = vrot.slane %v7041, 2
  %v7043 = vmax.f32 %v7041, %v7042
  %v7044 = vrot.slane %v7043, 1
  %v7045 = vmax.f32 %v7043, %v7044
  %v7046 = vsel %vm1032, %v867, -inf
  %v7047 = vrot.slane %v7046, 4
  %v7048 = vmax.f32 %v7046, %v7047
  %v7049 = vrot.slane %v7048, 2
  %v7050 = vmax.f32 %v7048, %v7049
  %v7051 = vrot.slane %v7050, 1
  %v7052 = vmax.f32 %v7050, %v7051
  %v7053 = vsel %vm1032, %v868, -inf
  %v7054 = vrot.slane %v7053, 4
  %v7055 = vmax.f32 %v7053, %v7054
  %v7056 = vrot.slane %v7055, 2
  %v7057 = vmax.f32 %v7055, %v7056
  %v7058 = vrot.slane %v7057, 1
  %v7059 = vmax.f32 %v7057, %v7058
  %v7060 = vsel %vm1032, %v869, -inf
  %v7061 = vrot.slane %v7060, 4
  %v7062 = vmax.f32 %v7060, %v7061
  %v7063 = vrot.slane %v7062, 2
  %v7064 = vmax.f32 %v7062, %v7063
  %v7065 = vrot.slane %v7064, 1
  %v7066 = vmax.f32 %v7064, %v7065
  %v7067 = vsel %vm1032, %v870, -inf
  %v7068 = vrot.slane %v7067, 4
  %v7069 = vmax.f32 %v7067, %v7068
  %v7070 = vrot.slane %v7069, 2
  %v7071 = vmax.f32 %v7069, %v7070
  %v7072 = vrot.slane %v7071, 1
  %v7073 = vmax.f32 %v7071, %v7072
  %v7074 = vsel %vm1032, %v871, -inf
  %v7075 = vrot.slane %v7074, 4
  %v7076 = vmax.f32 %v7074, %v7075
  %v7077 = vrot.slane %v7076, 2
  %v7078 = vmax.f32 %v7076, %v7077
  %v7079 = vrot.slane %v7078, 1
  %v7080 = vmax.f32 %v7078, %v7079
  %v7081 = vsel %vm1032, %v872, -inf
  %v7082 = vrot.slane %v7081, 4
  %v7083 = vmax.f32 %v7081, %v7082
  %v7084 = vrot.slane %v7083, 2
  %v7085 = vmax.f32 %v7083, %v7084
  %v7086 = vrot.slane %v7085, 1
  %v7087 = vmax.f32 %v7085, %v7086
  %v7088 = vsel %vm1032, %v873, -inf
  %v7089 = vrot.slane %v7088, 4
  %v7090 = vmax.f32 %v7088, %v7089
  %v7091 = vrot.slane %v7090, 2
  %v7092 = vmax.f32 %v7090, %v7091
  %v7093 = vrot.slane %v7092, 1
  %v7094 = vmax.f32 %v7092, %v7093
  %v7095 = vsel %vm1032, %v874, -inf
  %v7096 = vrot.slane %v7095, 4
  %v7097 = vmax.f32 %v7095, %v7096
  %v7098 = vrot.slane %v7097, 2
  %v7099 = vmax.f32 %v7097, %v7098
  %v7100 = vrot.slane %v7099, 1
  %v7101 = vmax.f32 %v7099, %v7100
  %v7102 = vsel %vm1032, %v875, -inf
  %v7103 = vrot.slane %v7102, 4
  %v7104 = vmax.f32 %v7102, %v7103
  %v7105 = vrot.slane %v7104, 2
  %v7106 = vmax.f32 %v7104, %v7105
  %v7107 = vrot.slane %v7106, 1
  %v7108 = vmax.f32 %v7106, %v7107
  %v7109 = vsel %vm1032, %v876, -inf
  %v7110 = vrot.slane %v7109, 4
  %v7111 = vmax.f32 %v7109, %v7110
  %v7112 = vrot.slane %v7111, 2
  %v7113 = vmax.f32 %v7111, %v7112
  %v7114 = vrot.slane %v7113, 1
  %v7115 = vmax.f32 %v7113, %v7114
  %v7116 = vsel %vm1032, %v877, -inf
  %v7117 = vrot.slane %v7116, 4
  %v7118 = vmax.f32 %v7116, %v7117
  %v7119 = vrot.slane %v7118, 2
  %v7120 = vmax.f32 %v7118, %v7119
  %v7121 = vrot.slane %v7120, 1
  %v7122 = vmax.f32 %v7120, %v7121
  %v7123 = vsel %vm1032, %v878, -inf
  %v7124 = vrot.slane %v7123, 4
  %v7125 = vmax.f32 %v7123, %v7124
  %v7126 = vrot.slane %v7125, 2
  %v7127 = vmax.f32 %v7125, %v7126
  %v7128 = vrot.slane %v7127, 1
  %v7129 = vmax.f32 %v7127, %v7128
  %v7130 = vsel %vm1032, %v879, -inf
  %v7131 = vrot.slane %v7130, 4
  %v7132 = vmax.f32 %v7130, %v7131
  %v7133 = vrot.slane %v7132, 2
  %v7134 = vmax.f32 %v7132, %v7133
  %v7135 = vrot.slane %v7134, 1
  %v7136 = vmax.f32 %v7134, %v7135
  %v7137 = vsel %vm1032, %v880, -inf
  %v7138 = vrot.slane %v7137, 4
  %v7139 = vmax.f32 %v7137, %v7138
  %v7140 = vrot.slane %v7139, 2
  %v7141 = vmax.f32 %v7139, %v7140
  %v7142 = vrot.slane %v7141, 1
  %v7143 = vmax.f32 %v7141, %v7142
  %v7144 = vsel %vm1032, %v881, -inf
  %v7145 = vrot.slane %v7144, 4
  %v7146 = vmax.f32 %v7144, %v7145
  %v7147 = vrot.slane %v7146, 2
  %v7148 = vmax.f32 %v7146, %v7147
  %v7149 = vrot.slane %v7148, 1
  %v7150 = vmax.f32 %v7148, %v7149
  %v7151 = vsel %vm1032, %v882, -inf
  %v7152 = vrot.slane %v7151, 4
  %v7153 = vmax.f32 %v7151, %v7152
  %v7154 = vrot.slane %v7153, 2
  %v7155 = vmax.f32 %v7153, %v7154
  %v7156 = vrot.slane %v7155, 1
  %v7157 = vmax.f32 %v7155, %v7156
  %v7158 = vsel %vm1032, %v883, -inf
  %v7159 = vrot.slane %v7158, 4
  %v7160 = vmax.f32 %v7158, %v7159
  %v7161 = vrot.slane %v7160, 2
  %v7162 = vmax.f32 %v7160, %v7161
  %v7163 = vrot.slane %v7162, 1
  %v7164 = vmax.f32 %v7162, %v7163
  %v7165 = vsel %vm1032, %v884, -inf
  %v7166 = vrot.slane %v7165, 4
  %v7167 = vmax.f32 %v7165, %v7166
  %v7168 = vrot.slane %v7167, 2
  %v7169 = vmax.f32 %v7167, %v7168
  %v7170 = vrot.slane %v7169, 1
  %v7171 = vmax.f32 %v7169, %v7170
  %v7172 = vsel %vm1032, %v885, -inf
  %v7173 = vrot.slane %v7172, 4
  %v7174 = vmax.f32 %v7172, %v7173
  %v7175 = vrot.slane %v7174, 2
  %v7176 = vmax.f32 %v7174, %v7175
  %v7177 = vrot.slane %v7176, 1
  %v7178 = vmax.f32 %v7176, %v7177
  %v7179 = vsel %vm1032, %v886, -inf
  %v7180 = vrot.slane %v7179, 4
  %v7181 = vmax.f32 %v7179, %v7180
  %v7182 = vrot.slane %v7181, 2
  %v7183 = vmax.f32 %v7181, %v7182
  %v7184 = vrot.slane %v7183, 1
  %v7185 = vmax.f32 %v7183, %v7184
  %v7186 = vsel %vm1032, %v887, -inf
  %v7187 = vrot.slane %v7186, 4
  %v7188 = vmax.f32 %v7186, %v7187
  %v7189 = vrot.slane %v7188, 2
  %v7190 = vmax.f32 %v7188, %v7189
  %v7191 = vrot.slane %v7190, 1
  %v7192 = vmax.f32 %v7190, %v7191
  %v7193 = vsel %vm1032, %v888, -inf
  %v7194 = vrot.slane %v7193, 4
  %v7195 = vmax.f32 %v7193, %v7194
  %v7196 = vrot.slane %v7195, 2
  %v7197 = vmax.f32 %v7195, %v7196
  %v7198 = vrot.slane %v7197, 1
  %v7199 = vmax.f32 %v7197, %v7198
  %v7200 = vsel %vm1032, %v889, -inf
  %v7201 = vrot.slane %v7200, 4
  %v7202 = vmax.f32 %v7200, %v7201
  %v7203 = vrot.slane %v7202, 2
  %v7204 = vmax.f32 %v7202, %v7203
  %v7205 = vrot.slane %v7204, 1
  %v7206 = vmax.f32 %v7204, %v7205
  %v7207 = vsel %vm1032, %v890, -inf
  %v7208 = vrot.slane %v7207, 4
  %v7209 = vmax.f32 %v7207, %v7208
  %v7210 = vrot.slane %v7209, 2
  %v7211 = vmax.f32 %v7209, %v7210
  %v7212 = vrot.slane %v7211, 1
  %v7213 = vmax.f32 %v7211, %v7212
  %v7214 = vsel %vm1032, %v891, -inf
  %v7215 = vrot.slane %v7214, 4
  %v7216 = vmax.f32 %v7214, %v7215
  %v7217 = vrot.slane %v7216, 2
  %v7218 = vmax.f32 %v7216, %v7217
  %v7219 = vrot.slane %v7218, 1
  %v7220 = vmax.f32 %v7218, %v7219
  %v7221 = vsel %vm1032, %v892, -inf
  %v7222 = vrot.slane %v7221, 4
  %v7223 = vmax.f32 %v7221, %v7222
  %v7224 = vrot.slane %v7223, 2
  %v7225 = vmax.f32 %v7223, %v7224
  %v7226 = vrot.slane %v7225, 1
  %v7227 = vmax.f32 %v7225, %v7226
  %v7228 = vsel %vm1032, %v893, -inf
  %v7229 = vrot.slane %v7228, 4
  %v7230 = vmax.f32 %v7228, %v7229
  %v7231 = vrot.slane %v7230, 2
  %v7232 = vmax.f32 %v7230, %v7231
  %v7233 = vrot.slane %v7232, 1
  %v7234 = vmax.f32 %v7232, %v7233
  %v7235 = vsel %vm1032, %v894, -inf
  %v7236 = vrot.slane %v7235, 4
  %v7237 = vmax.f32 %v7235, %v7236
  %v7238 = vrot.slane %v7237, 2
  %v7239 = vmax.f32 %v7237, %v7238
  %v7240 = vrot.slane %v7239, 1
  %v7241 = vmax.f32 %v7239, %v7240
  %v7242 = vsel %vm1032, %v895, -inf
  %v7243 = vrot.slane %v7242, 4
  %v7244 = vmax.f32 %v7242, %v7243
  %v7245 = vrot.slane %v7244, 2
  %v7246 = vmax.f32 %v7244, %v7245
  %v7247 = vrot.slane %v7246, 1
  %v7248 = vmax.f32 %v7246, %v7247
  %v7249 = vsel %vm1032, %v896, -inf
  %v7250 = vrot.slane %v7249, 4
  %v7251 = vmax.f32 %v7249, %v7250
  %v7252 = vrot.slane %v7251, 2
  %v7253 = vmax.f32 %v7251, %v7252
  %v7254 = vrot.slane %v7253, 1
  %v7255 = vmax.f32 %v7253, %v7254
  %v7256 = vsel %vm1032, %v897, -inf
  %v7257 = vrot.slane %v7256, 4
  %v7258 = vmax.f32 %v7256, %v7257
  %v7259 = vrot.slane %v7258, 2
  %v7260 = vmax.f32 %v7258, %v7259
  %v7261 = vrot.slane %v7260, 1
  %v7262 = vmax.f32 %v7260, %v7261
  %v7263 = vsel %vm1032, %v898, -inf
  %v7264 = vrot.slane %v7263, 4
  %v7265 = vmax.f32 %v7263, %v7264
  %v7266 = vrot.slane %v7265, 2
  %v7267 = vmax.f32 %v7265, %v7266
  %v7268 = vrot.slane %v7267, 1
  %v7269 = vmax.f32 %v7267, %v7268
  %v7270 = vsel %vm1032, %v899, -inf
  %v7271 = vrot.slane %v7270, 4
  %v7272 = vmax.f32 %v7270, %v7271
  %v7273 = vrot.slane %v7272, 2
  %v7274 = vmax.f32 %v7272, %v7273
  %v7275 = vrot.slane %v7274, 1
  %v7276 = vmax.f32 %v7274, %v7275
  %v7277 = vsel %vm1032, %v900, -inf
  %v7278 = vrot.slane %v7277, 4
  %v7279 = vmax.f32 %v7277, %v7278
  %v7280 = vrot.slane %v7279, 2
  %v7281 = vmax.f32 %v7279, %v7280
  %v7282 = vrot.slane %v7281, 1
  %v7283 = vmax.f32 %v7281, %v7282
  %v7284 = vsel %vm1032, %v901, -inf
  %v7285 = vrot.slane %v7284, 4
  %v7286 = vmax.f32 %v7284, %v7285
  %v7287 = vrot.slane %v7286, 2
  %v7288 = vmax.f32 %v7286, %v7287
  %v7289 = vrot.slane %v7288, 1
  %v7290 = vmax.f32 %v7288, %v7289
  %v7291 = vsel %vm1032, %v902, -inf
  %v7292 = vrot.slane %v7291, 4
  %v7293 = vmax.f32 %v7291, %v7292
  %v7294 = vrot.slane %v7293, 2
  %v7295 = vmax.f32 %v7293, %v7294
  %v7296 = vrot.slane %v7295, 1
  %v7297 = vmax.f32 %v7295, %v7296
  %v7298 = vsel %vm1032, %v903, -inf
  %v7299 = vrot.slane %v7298, 4
  %v7300 = vmax.f32 %v7298, %v7299
  %v7301 = vrot.slane %v7300, 2
  %v7302 = vmax.f32 %v7300, %v7301
  %v7303 = vrot.slane %v7302, 1
  %v7304 = vmax.f32 %v7302, %v7303
  %v7305 = vsel %vm1032, %v904, -inf
  %v7306 = vrot.slane %v7305, 4
  %v7307 = vmax.f32 %v7305, %v7306
  %v7308 = vrot.slane %v7307, 2
  %v7309 = vmax.f32 %v7307, %v7308
  %v7310 = vrot.slane %v7309, 1
  %v7311 = vmax.f32 %v7309, %v7310
  %v7312 = vsel %vm1032, %v905, -inf
  %v7313 = vrot.slane %v7312, 4
  %v7314 = vmax.f32 %v7312, %v7313
  %v7315 = vrot.slane %v7314, 2
  %v7316 = vmax.f32 %v7314, %v7315
  %v7317 = vrot.slane %v7316, 1
  %v7318 = vmax.f32 %v7316, %v7317
  %v7319 = vsel %vm1032, %v906, -inf
  %v7320 = vrot.slane %v7319, 4
  %v7321 = vmax.f32 %v7319, %v7320
  %v7322 = vrot.slane %v7321, 2
  %v7323 = vmax.f32 %v7321, %v7322
  %v7324 = vrot.slane %v7323, 1
  %v7325 = vmax.f32 %v7323, %v7324
  %v7326 = vsel %vm1032, %v907, -inf
  %v7327 = vrot.slane %v7326, 4
  %v7328 = vmax.f32 %v7326, %v7327
  %v7329 = vrot.slane %v7328, 2
  %v7330 = vmax.f32 %v7328, %v7329
  %v7331 = vrot.slane %v7330, 1
  %v7332 = vmax.f32 %v7330, %v7331
  %v7333 = vsel %vm1032, %v908, -inf
  %v7334 = vrot.slane %v7333, 4
  %v7335 = vmax.f32 %v7333, %v7334
  %v7336 = vrot.slane %v7335, 2
  %v7337 = vmax.f32 %v7335, %v7336
  %v7338 = vrot.slane %v7337, 1
  %v7339 = vmax.f32 %v7337, %v7338
  %v7340 = vsel %vm1032, %v909, -inf
  %v7341 = vrot.slane %v7340, 4
  %v7342 = vmax.f32 %v7340, %v7341
  %v7343 = vrot.slane %v7342, 2
  %v7344 = vmax.f32 %v7342, %v7343
  %v7345 = vrot.slane %v7344, 1
  %v7346 = vmax.f32 %v7344, %v7345
  %v7347 = vsel %vm1032, %v910, -inf
  %v7348 = vrot.slane %v7347, 4
  %v7349 = vmax.f32 %v7347, %v7348
  %v7350 = vrot.slane %v7349, 2
  %v7351 = vmax.f32 %v7349, %v7350
  %v7352 = vrot.slane %v7351, 1
  %v7353 = vmax.f32 %v7351, %v7352
  %v7354 = vsel %vm1032, %v911, -inf
  %v7355 = vrot.slane %v7354, 4
  %v7356 = vmax.f32 %v7354, %v7355
  %v7357 = vrot.slane %v7356, 2
  %v7358 = vmax.f32 %v7356, %v7357
  %v7359 = vrot.slane %v7358, 1
  %v7360 = vmax.f32 %v7358, %v7359
  %v7361 = vsel %vm1032, %v912, -inf
  %v7362 = vrot.slane %v7361, 4
  %v7363 = vmax.f32 %v7361, %v7362
  %v7364 = vrot.slane %v7363, 2
  %v7365 = vmax.f32 %v7363, %v7364
  %v7366 = vrot.slane %v7365, 1
  %v7367 = vmax.f32 %v7365, %v7366
  %v7368 = vsel %vm1032, %v913, -inf
  %v7369 = vrot.slane %v7368, 4
  %v7370 = vmax.f32 %v7368, %v7369
  %v7371 = vrot.slane %v7370, 2
  %v7372 = vmax.f32 %v7370, %v7371
  %v7373 = vrot.slane %v7372, 1
  %v7374 = vmax.f32 %v7372, %v7373
  %v7375 = vsel %vm1032, %v914, -inf
  %v7376 = vrot.slane %v7375, 4
  %v7377 = vmax.f32 %v7375, %v7376
  %v7378 = vrot.slane %v7377, 2
  %v7379 = vmax.f32 %v7377, %v7378
  %v7380 = vrot.slane %v7379, 1
  %v7381 = vmax.f32 %v7379, %v7380
  %v7382 = vsel %vm1032, %v915, -inf
  %v7383 = vrot.slane %v7382, 4
  %v7384 = vmax.f32 %v7382, %v7383
  %v7385 = vrot.slane %v7384, 2
  %v7386 = vmax.f32 %v7384, %v7385
  %v7387 = vrot.slane %v7386, 1
  %v7388 = vmax.f32 %v7386, %v7387
  %v7389 = vsel %vm1032, %v916, -inf
  %v7390 = vrot.slane %v7389, 4
  %v7391 = vmax.f32 %v7389, %v7390
  %v7392 = vrot.slane %v7391, 2
  %v7393 = vmax.f32 %v7391, %v7392
  %v7394 = vrot.slane %v7393, 1
  %v7395 = vmax.f32 %v7393, %v7394
  %v7396 = vsel %vm1032, %v917, -inf
  %v7397 = vrot.slane %v7396, 4
  %v7398 = vmax.f32 %v7396, %v7397
  %v7399 = vrot.slane %v7398, 2
  %v7400 = vmax.f32 %v7398, %v7399
  %v7401 = vrot.slane %v7400, 1
  %v7402 = vmax.f32 %v7400, %v7401
  %v7403 = vsel %vm1032, %v918, -inf
  %v7404 = vrot.slane %v7403, 4
  %v7405 = vmax.f32 %v7403, %v7404
  %v7406 = vrot.slane %v7405, 2
  %v7407 = vmax.f32 %v7405, %v7406
  %v7408 = vrot.slane %v7407, 1
  %v7409 = vmax.f32 %v7407, %v7408
  %v7410 = vsel %vm1032, %v919, -inf
  %v7411 = vrot.slane %v7410, 4
  %v7412 = vmax.f32 %v7410, %v7411
  %v7413 = vrot.slane %v7412, 2
  %v7414 = vmax.f32 %v7412, %v7413
  %v7415 = vrot.slane %v7414, 1
  %v7416 = vmax.f32 %v7414, %v7415
  %v7417 = vsel %vm1032, %v920, -inf
  %v7418 = vrot.slane %v7417, 4
  %v7419 = vmax.f32 %v7417, %v7418
  %v7420 = vrot.slane %v7419, 2
  %v7421 = vmax.f32 %v7419, %v7420
  %v7422 = vrot.slane %v7421, 1
  %v7423 = vmax.f32 %v7421, %v7422
  %v7424 = vsel %vm1032, %v921, -inf
  %v7425 = vrot.slane %v7424, 4
  %v7426 = vmax.f32 %v7424, %v7425
  %v7427 = vrot.slane %v7426, 2
  %v7428 = vmax.f32 %v7426, %v7427
  %v7429 = vrot.slane %v7428, 1
  %v7430 = vmax.f32 %v7428, %v7429
  %v7431 = vsel %vm1032, %v922, -inf
  %v7432 = vrot.slane %v7431, 4
  %v7433 = vmax.f32 %v7431, %v7432
  %v7434 = vrot.slane %v7433, 2
  %v7435 = vmax.f32 %v7433, %v7434
  %v7436 = vrot.slane %v7435, 1
  %v7437 = vmax.f32 %v7435, %v7436
  %v7438 = vsel %vm1032, %v923, -inf
  %v7439 = vrot.slane %v7438, 4
  %v7440 = vmax.f32 %v7438, %v7439
  %v7441 = vrot.slane %v7440, 2
  %v7442 = vmax.f32 %v7440, %v7441
  %v7443 = vrot.slane %v7442, 1
  %v7444 = vmax.f32 %v7442, %v7443
  %v7445 = vsel %vm1032, %v924, -inf
  %v7446 = vrot.slane %v7445, 4
  %v7447 = vmax.f32 %v7445, %v7446
  %v7448 = vrot.slane %v7447, 2
  %v7449 = vmax.f32 %v7447, %v7448
  %v7450 = vrot.slane %v7449, 1
  %v7451 = vmax.f32 %v7449, %v7450
  %v7452 = vsel %vm1032, %v925, -inf
  %v7453 = vrot.slane %v7452, 4
  %v7454 = vmax.f32 %v7452, %v7453
  %v7455 = vrot.slane %v7454, 2
  %v7456 = vmax.f32 %v7454, %v7455
  %v7457 = vrot.slane %v7456, 1
  %v7458 = vmax.f32 %v7456, %v7457
  %v7459 = vsel %vm1032, %v926, -inf
  %v7460 = vrot.slane %v7459, 4
  %v7461 = vmax.f32 %v7459, %v7460
  %v7462 = vrot.slane %v7461, 2
  %v7463 = vmax.f32 %v7461, %v7462
  %v7464 = vrot.slane %v7463, 1
  %v7465 = vmax.f32 %v7463, %v7464
  %v7466 = vsel %vm1032, %v927, -inf
  %v7467 = vrot.slane %v7466, 4
  %v7468 = vmax.f32 %v7466, %v7467
  %v7469 = vrot.slane %v7468, 2
  %v7470 = vmax.f32 %v7468, %v7469
  %v7471 = vrot.slane %v7470, 1
  %v7472 = vmax.f32 %v7470, %v7471
  %v7473 = vsel %vm1032, %v928, -inf
  %v7474 = vrot.slane %v7473, 4
  %v7475 = vmax.f32 %v7473, %v7474
  %v7476 = vrot.slane %v7475, 2
  %v7477 = vmax.f32 %v7475, %v7476
  %v7478 = vrot.slane %v7477, 1
  %v7479 = vmax.f32 %v7477, %v7478
  %v7480 = vsel %vm1032, %v929, -inf
  %v7481 = vrot.slane %v7480, 4
  %v7482 = vmax.f32 %v7480, %v7481
  %v7483 = vrot.slane %v7482, 2
  %v7484 = vmax.f32 %v7482, %v7483
  %v7485 = vrot.slane %v7484, 1
  %v7486 = vmax.f32 %v7484, %v7485
  %v7487 = vsel %vm1032, %v930, -inf
  %v7488 = vrot.slane %v7487, 4
  %v7489 = vmax.f32 %v7487, %v7488
  %v7490 = vrot.slane %v7489, 2
  %v7491 = vmax.f32 %v7489, %v7490
  %v7492 = vrot.slane %v7491, 1
  %v7493 = vmax.f32 %v7491, %v7492
  %v7494 = vsel %vm1032, %v931, -inf
  %v7495 = vrot.slane %v7494, 4
  %v7496 = vmax.f32 %v7494, %v7495
  %v7497 = vrot.slane %v7496, 2
  %v7498 = vmax.f32 %v7496, %v7497
  %v7499 = vrot.slane %v7498, 1
  %v7500 = vmax.f32 %v7498, %v7499
  %v7501 = vsel %vm1032, %v932, -inf
  %v7502 = vrot.slane %v7501, 4
  %v7503 = vmax.f32 %v7501, %v7502
  %v7504 = vrot.slane %v7503, 2
  %v7505 = vmax.f32 %v7503, %v7504
  %v7506 = vrot.slane %v7505, 1
  %v7507 = vmax.f32 %v7505, %v7506
  %v7508 = vsel %vm1032, %v933, -inf
  %v7509 = vrot.slane %v7508, 4
  %v7510 = vmax.f32 %v7508, %v7509
  %v7511 = vrot.slane %v7510, 2
  %v7512 = vmax.f32 %v7510, %v7511
  %v7513 = vrot.slane %v7512, 1
  %v7514 = vmax.f32 %v7512, %v7513
  %v7515 = vsel %vm1032, %v934, -inf
  %v7516 = vrot.slane %v7515, 4
  %v7517 = vmax.f32 %v7515, %v7516
  %v7518 = vrot.slane %v7517, 2
  %v7519 = vmax.f32 %v7517, %v7518
  %v7520 = vrot.slane %v7519, 1
  %v7521 = vmax.f32 %v7519, %v7520
  %v7522 = vsel %vm1032, %v935, -inf
  %v7523 = vrot.slane %v7522, 4
  %v7524 = vmax.f32 %v7522, %v7523
  %v7525 = vrot.slane %v7524, 2
  %v7526 = vmax.f32 %v7524, %v7525
  %v7527 = vrot.slane %v7526, 1
  %v7528 = vmax.f32 %v7526, %v7527
  %v7529 = vsel %vm1032, %v936, -inf
  %v7530 = vrot.slane %v7529, 4
  %v7531 = vmax.f32 %v7529, %v7530
  %v7532 = vrot.slane %v7531, 2
  %v7533 = vmax.f32 %v7531, %v7532
  %v7534 = vrot.slane %v7533, 1
  %v7535 = vmax.f32 %v7533, %v7534
  %v7536 = vsel %vm1032, %v937, -inf
  %v7537 = vrot.slane %v7536, 4
  %v7538 = vmax.f32 %v7536, %v7537
  %v7539 = vrot.slane %v7538, 2
  %v7540 = vmax.f32 %v7538, %v7539
  %v7541 = vrot.slane %v7540, 1
  %v7542 = vmax.f32 %v7540, %v7541
  %v7543 = vsel %vm1032, %v938, -inf
  %v7544 = vrot.slane %v7543, 4
  %v7545 = vmax.f32 %v7543, %v7544
  %v7546 = vrot.slane %v7545, 2
  %v7547 = vmax.f32 %v7545, %v7546
  %v7548 = vrot.slane %v7547, 1
  %v7549 = vmax.f32 %v7547, %v7548
  %v7550 = vsel %vm1032, %v939, -inf
  %v7551 = vrot.slane %v7550, 4
  %v7552 = vmax.f32 %v7550, %v7551
  %v7553 = vrot.slane %v7552, 2
  %v7554 = vmax.f32 %v7552, %v7553
  %v7555 = vrot.slane %v7554, 1
  %v7556 = vmax.f32 %v7554, %v7555
  %v7557 = vsel %vm1032, %v940, -inf
  %v7558 = vrot.slane %v7557, 4
  %v7559 = vmax.f32 %v7557, %v7558
  %v7560 = vrot.slane %v7559, 2
  %v7561 = vmax.f32 %v7559, %v7560
  %v7562 = vrot.slane %v7561, 1
  %v7563 = vmax.f32 %v7561, %v7562
  %v7564 = vsel %vm1032, %v941, -inf
  %v7565 = vrot.slane %v7564, 4
  %v7566 = vmax.f32 %v7564, %v7565
  %v7567 = vrot.slane %v7566, 2
  %v7568 = vmax.f32 %v7566, %v7567
  %v7569 = vrot.slane %v7568, 1
  %v7570 = vmax.f32 %v7568, %v7569
  %v7571 = vsel %vm1032, %v942, -inf
  %v7572 = vrot.slane %v7571, 4
  %v7573 = vmax.f32 %v7571, %v7572
  %v7574 = vrot.slane %v7573, 2
  %v7575 = vmax.f32 %v7573, %v7574
  %v7576 = vrot.slane %v7575, 1
  %v7577 = vmax.f32 %v7575, %v7576
  %v7578 = vsel %vm1032, %v943, -inf
  %v7579 = vrot.slane %v7578, 4
  %v7580 = vmax.f32 %v7578, %v7579
  %v7581 = vrot.slane %v7580, 2
  %v7582 = vmax.f32 %v7580, %v7581
  %v7583 = vrot.slane %v7582, 1
  %v7584 = vmax.f32 %v7582, %v7583
  %v7585 = vsel %vm1032, %v944, -inf
  %v7586 = vrot.slane %v7585, 4
  %v7587 = vmax.f32 %v7585, %v7586
  %v7588 = vrot.slane %v7587, 2
  %v7589 = vmax.f32 %v7587, %v7588
  %v7590 = vrot.slane %v7589, 1
  %v7591 = vmax.f32 %v7589, %v7590
  %v7592 = vsel %vm1032, %v945, -inf
  %v7593 = vrot.slane %v7592, 4
  %v7594 = vmax.f32 %v7592, %v7593
  %v7595 = vrot.slane %v7594, 2
  %v7596 = vmax.f32 %v7594, %v7595
  %v7597 = vrot.slane %v7596, 1
  %v7598 = vmax.f32 %v7596, %v7597
  %v7599 = vsel %vm1032, %v946, -inf
  %v7600 = vrot.slane %v7599, 4
  %v7601 = vmax.f32 %v7599, %v7600
  %v7602 = vrot.slane %v7601, 2
  %v7603 = vmax.f32 %v7601, %v7602
  %v7604 = vrot.slane %v7603, 1
  %v7605 = vmax.f32 %v7603, %v7604
  %v7606 = vsel %vm1032, %v947, -inf
  %v7607 = vrot.slane %v7606, 4
  %v7608 = vmax.f32 %v7606, %v7607
  %v7609 = vrot.slane %v7608, 2
  %v7610 = vmax.f32 %v7608, %v7609
  %v7611 = vrot.slane %v7610, 1
  %v7612 = vmax.f32 %v7610, %v7611
  %v7613 = vsel %vm1032, %v948, -inf
  %v7614 = vrot.slane %v7613, 4
  %v7615 = vmax.f32 %v7613, %v7614
  %v7616 = vrot.slane %v7615, 2
  %v7617 = vmax.f32 %v7615, %v7616
  %v7618 = vrot.slane %v7617, 1
  %v7619 = vmax.f32 %v7617, %v7618
  %v7620 = vsel %vm1032, %v949, -inf
  %v7621 = vrot.slane %v7620, 4
  %v7622 = vmax.f32 %v7620, %v7621
  %v7623 = vrot.slane %v7622, 2
  %v7624 = vmax.f32 %v7622, %v7623
  %v7625 = vrot.slane %v7624, 1
  %v7626 = vmax.f32 %v7624, %v7625
  %v7627 = vsel %vm1032, %v950, -inf
  %v7628 = vrot.slane %v7627, 4
  %v7629 = vmax.f32 %v7627, %v7628
  %v7630 = vrot.slane %v7629, 2
  %v7631 = vmax.f32 %v7629, %v7630
  %v7632 = vrot.slane %v7631, 1
  %v7633 = vmax.f32 %v7631, %v7632
  %v7634 = vsel %vm1032, %v951, -inf
  %v7635 = vrot.slane %v7634, 4
  %v7636 = vmax.f32 %v7634, %v7635
  %v7637 = vrot.slane %v7636, 2
  %v7638 = vmax.f32 %v7636, %v7637
  %v7639 = vrot.slane %v7638, 1
  %v7640 = vmax.f32 %v7638, %v7639
  %v7641 = vsel %vm1032, %v952, -inf
  %v7642 = vrot.slane %v7641, 4
  %v7643 = vmax.f32 %v7641, %v7642
  %v7644 = vrot.slane %v7643, 2
  %v7645 = vmax.f32 %v7643, %v7644
  %v7646 = vrot.slane %v7645, 1
  %v7647 = vmax.f32 %v7645, %v7646
  %v7648 = vsel %vm1032, %v953, -inf
  %v7649 = vrot.slane %v7648, 4
  %v7650 = vmax.f32 %v7648, %v7649
  %v7651 = vrot.slane %v7650, 2
  %v7652 = vmax.f32 %v7650, %v7651
  %v7653 = vrot.slane %v7652, 1
  %v7654 = vmax.f32 %v7652, %v7653
  %v7655 = vsel %vm1032, %v954, -inf
  %v7656 = vrot.slane %v7655, 4
  %v7657 = vmax.f32 %v7655, %v7656
  %v7658 = vrot.slane %v7657, 2
  %v7659 = vmax.f32 %v7657, %v7658
  %v7660 = vrot.slane %v7659, 1
  %v7661 = vmax.f32 %v7659, %v7660
  %v7662 = vsel %vm1032, %v955, -inf
  %v7663 = vrot.slane %v7662, 4
  %v7664 = vmax.f32 %v7662, %v7663
  %v7665 = vrot.slane %v7664, 2
  %v7666 = vmax.f32 %v7664, %v7665
  %v7667 = vrot.slane %v7666, 1
  %v7668 = vmax.f32 %v7666, %v7667
  %v7669 = vsel %vm1032, %v956, -inf
  %v7670 = vrot.slane %v7669, 4
  %v7671 = vmax.f32 %v7669, %v7670
  %v7672 = vrot.slane %v7671, 2
  %v7673 = vmax.f32 %v7671, %v7672
  %v7674 = vrot.slane %v7673, 1
  %v7675 = vmax.f32 %v7673, %v7674
  %v7676 = vsel %vm1032, %v957, -inf
  %v7677 = vrot.slane %v7676, 4
  %v7678 = vmax.f32 %v7676, %v7677
  %v7679 = vrot.slane %v7678, 2
  %v7680 = vmax.f32 %v7678, %v7679
  %v7681 = vrot.slane %v7680, 1
  %v7682 = vmax.f32 %v7680, %v7681
  %v7683 = vsel %vm1032, %v958, -inf
  %v7684 = vrot.slane %v7683, 4
  %v7685 = vmax.f32 %v7683, %v7684
  %v7686 = vrot.slane %v7685, 2
  %v7687 = vmax.f32 %v7685, %v7686
  %v7688 = vrot.slane %v7687, 1
  %v7689 = vmax.f32 %v7687, %v7688
  %v7690 = vsel %vm1032, %v959, -inf
  %v7691 = vrot.slane %v7690, 4
  %v7692 = vmax.f32 %v7690, %v7691
  %v7693 = vrot.slane %v7692, 2
  %v7694 = vmax.f32 %v7692, %v7693
  %v7695 = vrot.slane %v7694, 1
  %v7696 = vmax.f32 %v7694, %v7695
  %v7697 = vsel %vm1032, %v960, -inf
  %v7698 = vrot.slane %v7697, 4
  %v7699 = vmax.f32 %v7697, %v7698
  %v7700 = vrot.slane %v7699, 2
  %v7701 = vmax.f32 %v7699, %v7700
  %v7702 = vrot.slane %v7701, 1
  %v7703 = vmax.f32 %v7701, %v7702
  %v7704 = vsel %vm1032, %v961, -inf
  %v7705 = vrot.slane %v7704, 4
  %v7706 = vmax.f32 %v7704, %v7705
  %v7707 = vrot.slane %v7706, 2
  %v7708 = vmax.f32 %v7706, %v7707
  %v7709 = vrot.slane %v7708, 1
  %v7710 = vmax.f32 %v7708, %v7709
  %v7711 = vsel %vm1032, %v962, -inf
  %v7712 = vrot.slane %v7711, 4
  %v7713 = vmax.f32 %v7711, %v7712
  %v7714 = vrot.slane %v7713, 2
  %v7715 = vmax.f32 %v7713, %v7714
  %v7716 = vrot.slane %v7715, 1
  %v7717 = vmax.f32 %v7715, %v7716
  %v7718 = vsel %vm1032, %v963, -inf
  %v7719 = vrot.slane %v7718, 4
  %v7720 = vmax.f32 %v7718, %v7719
  %v7721 = vrot.slane %v7720, 2
  %v7722 = vmax.f32 %v7720, %v7721
  %v7723 = vrot.slane %v7722, 1
  %v7724 = vmax.f32 %v7722, %v7723
  %v7725 = vsel %vm1032, %v964, -inf
  %v7726 = vrot.slane %v7725, 4
  %v7727 = vmax.f32 %v7725, %v7726
  %v7728 = vrot.slane %v7727, 2
  %v7729 = vmax.f32 %v7727, %v7728
  %v7730 = vrot.slane %v7729, 1
  %v7731 = vmax.f32 %v7729, %v7730
  %v7732 = vsel %vm1032, %v965, -inf
  %v7733 = vrot.slane %v7732, 4
  %v7734 = vmax.f32 %v7732, %v7733
  %v7735 = vrot.slane %v7734, 2
  %v7736 = vmax.f32 %v7734, %v7735
  %v7737 = vrot.slane %v7736, 1
  %v7738 = vmax.f32 %v7736, %v7737
  %v7739 = vsel %vm1032, %v966, -inf
  %v7740 = vrot.slane %v7739, 4
  %v7741 = vmax.f32 %v7739, %v7740
  %v7742 = vrot.slane %v7741, 2
  %v7743 = vmax.f32 %v7741, %v7742
  %v7744 = vrot.slane %v7743, 1
  %v7745 = vmax.f32 %v7743, %v7744
  %v7746 = vsel %vm1032, %v967, -inf
  %v7747 = vrot.slane %v7746, 4
  %v7748 = vmax.f32 %v7746, %v7747
  %v7749 = vrot.slane %v7748, 2
  %v7750 = vmax.f32 %v7748, %v7749
  %v7751 = vrot.slane %v7750, 1
  %v7752 = vmax.f32 %v7750, %v7751
  %v7753 = vsel %vm1032, %v968, -inf
  %v7754 = vrot.slane %v7753, 4
  %v7755 = vmax.f32 %v7753, %v7754
  %v7756 = vrot.slane %v7755, 2
  %v7757 = vmax.f32 %v7755, %v7756
  %v7758 = vrot.slane %v7757, 1
  %v7759 = vmax.f32 %v7757, %v7758
  %v7760 = vsel %vm1032, %v969, -inf
  %v7761 = vrot.slane %v7760, 4
  %v7762 = vmax.f32 %v7760, %v7761
  %v7763 = vrot.slane %v7762, 2
  %v7764 = vmax.f32 %v7762, %v7763
  %v7765 = vrot.slane %v7764, 1
  %v7766 = vmax.f32 %v7764, %v7765
  %v7767 = vsel %vm1032, %v970, -inf
  %v7768 = vrot.slane %v7767, 4
  %v7769 = vmax.f32 %v7767, %v7768
  %v7770 = vrot.slane %v7769, 2
  %v7771 = vmax.f32 %v7769, %v7770
  %v7772 = vrot.slane %v7771, 1
  %v7773 = vmax.f32 %v7771, %v7772
  %v7774 = vsel %vm1032, %v971, -inf
  %v7775 = vrot.slane %v7774, 4
  %v7776 = vmax.f32 %v7774, %v7775
  %v7777 = vrot.slane %v7776, 2
  %v7778 = vmax.f32 %v7776, %v7777
  %v7779 = vrot.slane %v7778, 1
  %v7780 = vmax.f32 %v7778, %v7779
  %v7781 = vsel %vm1032, %v972, -inf
  %v7782 = vrot.slane %v7781, 4
  %v7783 = vmax.f32 %v7781, %v7782
  %v7784 = vrot.slane %v7783, 2
  %v7785 = vmax.f32 %v7783, %v7784
  %v7786 = vrot.slane %v7785, 1
  %v7787 = vmax.f32 %v7785, %v7786
  %v7788 = vsel %vm1032, %v973, -inf
  %v7789 = vrot.slane %v7788, 4
  %v7790 = vmax.f32 %v7788, %v7789
  %v7791 = vrot.slane %v7790, 2
  %v7792 = vmax.f32 %v7790, %v7791
  %v7793 = vrot.slane %v7792, 1
  %v7794 = vmax.f32 %v7792, %v7793
  %v7795 = vsel %vm1032, %v974, -inf
  %v7796 = vrot.slane %v7795, 4
  %v7797 = vmax.f32 %v7795, %v7796
  %v7798 = vrot.slane %v7797, 2
  %v7799 = vmax.f32 %v7797, %v7798
  %v7800 = vrot.slane %v7799, 1
  %v7801 = vmax.f32 %v7799, %v7800
  %v7802 = vsel %vm1032, %v975, -inf
  %v7803 = vrot.slane %v7802, 4
  %v7804 = vmax.f32 %v7802, %v7803
  %v7805 = vrot.slane %v7804, 2
  %v7806 = vmax.f32 %v7804, %v7805
  %v7807 = vrot.slane %v7806, 1
  %v7808 = vmax.f32 %v7806, %v7807
  %v7809 = vsel %vm1032, %v976, -inf
  %v7810 = vrot.slane %v7809, 4
  %v7811 = vmax.f32 %v7809, %v7810
  %v7812 = vrot.slane %v7811, 2
  %v7813 = vmax.f32 %v7811, %v7812
  %v7814 = vrot.slane %v7813, 1
  %v7815 = vmax.f32 %v7813, %v7814
  %v7816 = vsel %vm1032, %v977, -inf
  %v7817 = vrot.slane %v7816, 4
  %v7818 = vmax.f32 %v7816, %v7817
  %v7819 = vrot.slane %v7818, 2
  %v7820 = vmax.f32 %v7818, %v7819
  %v7821 = vrot.slane %v7820, 1
  %v7822 = vmax.f32 %v7820, %v7821
  %v7823 = vsel %vm1032, %v978, -inf
  %v7824 = vrot.slane %v7823, 4
  %v7825 = vmax.f32 %v7823, %v7824
  %v7826 = vrot.slane %v7825, 2
  %v7827 = vmax.f32 %v7825, %v7826
  %v7828 = vrot.slane %v7827, 1
  %v7829 = vmax.f32 %v7827, %v7828
  %v7830 = vsel %vm1032, %v979, -inf
  %v7831 = vrot.slane %v7830, 4
  %v7832 = vmax.f32 %v7830, %v7831
  %v7833 = vrot.slane %v7832, 2
  %v7834 = vmax.f32 %v7832, %v7833
  %v7835 = vrot.slane %v7834, 1
  %v7836 = vmax.f32 %v7834, %v7835
  %v7837 = vsel %vm1032, %v980, -inf
  %v7838 = vrot.slane %v7837, 4
  %v7839 = vmax.f32 %v7837, %v7838
  %v7840 = vrot.slane %v7839, 2
  %v7841 = vmax.f32 %v7839, %v7840
  %v7842 = vrot.slane %v7841, 1
  %v7843 = vmax.f32 %v7841, %v7842
  %v7844 = vsel %vm1032, %v981, -inf
  %v7845 = vrot.slane %v7844, 4
  %v7846 = vmax.f32 %v7844, %v7845
  %v7847 = vrot.slane %v7846, 2
  %v7848 = vmax.f32 %v7846, %v7847
  %v7849 = vrot.slane %v7848, 1
  %v7850 = vmax.f32 %v7848, %v7849
  %v7851 = vsel %vm1032, %v982, -inf
  %v7852 = vrot.slane %v7851, 4
  %v7853 = vmax.f32 %v7851, %v7852
  %v7854 = vrot.slane %v7853, 2
  %v7855 = vmax.f32 %v7853, %v7854
  %v7856 = vrot.slane %v7855, 1
  %v7857 = vmax.f32 %v7855, %v7856
  %v7858 = vsel %vm1032, %v983, -inf
  %v7859 = vrot.slane %v7858, 4
  %v7860 = vmax.f32 %v7858, %v7859
  %v7861 = vrot.slane %v7860, 2
  %v7862 = vmax.f32 %v7860, %v7861
  %v7863 = vrot.slane %v7862, 1
  %v7864 = vmax.f32 %v7862, %v7863
  %v7865 = vsel %vm1032, %v984, -inf
  %v7866 = vrot.slane %v7865, 4
  %v7867 = vmax.f32 %v7865, %v7866
  %v7868 = vrot.slane %v7867, 2
  %v7869 = vmax.f32 %v7867, %v7868
  %v7870 = vrot.slane %v7869, 1
  %v7871 = vmax.f32 %v7869, %v7870
  %v7872 = vsel %vm1032, %v985, -inf
  %v7873 = vrot.slane %v7872, 4
  %v7874 = vmax.f32 %v7872, %v7873
  %v7875 = vrot.slane %v7874, 2
  %v7876 = vmax.f32 %v7874, %v7875
  %v7877 = vrot.slane %v7876, 1
  %v7878 = vmax.f32 %v7876, %v7877
  %v7879 = vsel %vm1032, %v986, -inf
  %v7880 = vrot.slane %v7879, 4
  %v7881 = vmax.f32 %v7879, %v7880
  %v7882 = vrot.slane %v7881, 2
  %v7883 = vmax.f32 %v7881, %v7882
  %v7884 = vrot.slane %v7883, 1
  %v7885 = vmax.f32 %v7883, %v7884
  %v7886 = vsel %vm1032, %v987, -inf
  %v7887 = vrot.slane %v7886, 4
  %v7888 = vmax.f32 %v7886, %v7887
  %v7889 = vrot.slane %v7888, 2
  %v7890 = vmax.f32 %v7888, %v7889
  %v7891 = vrot.slane %v7890, 1
  %v7892 = vmax.f32 %v7890, %v7891
  %v7893 = vsel %vm1032, %v988, -inf
  %v7894 = vrot.slane %v7893, 4
  %v7895 = vmax.f32 %v7893, %v7894
  %v7896 = vrot.slane %v7895, 2
  %v7897 = vmax.f32 %v7895, %v7896
  %v7898 = vrot.slane %v7897, 1
  %v7899 = vmax.f32 %v7897, %v7898
  %v7900 = vsel %vm1032, %v989, -inf
  %v7901 = vrot.slane %v7900, 4
  %v7902 = vmax.f32 %v7900, %v7901
  %v7903 = vrot.slane %v7902, 2
  %v7904 = vmax.f32 %v7902, %v7903
  %v7905 = vrot.slane %v7904, 1
  %v7906 = vmax.f32 %v7904, %v7905
  %v7907 = vsel %vm1032, %v990, -inf
  %v7908 = vrot.slane %v7907, 4
  %v7909 = vmax.f32 %v7907, %v7908
  %v7910 = vrot.slane %v7909, 2
  %v7911 = vmax.f32 %v7909, %v7910
  %v7912 = vrot.slane %v7911, 1
  %v7913 = vmax.f32 %v7911, %v7912
  %v7914 = vsel %vm1032, %v991, -inf
  %v7915 = vrot.slane %v7914, 4
  %v7916 = vmax.f32 %v7914, %v7915
  %v7917 = vrot.slane %v7916, 2
  %v7918 = vmax.f32 %v7916, %v7917
  %v7919 = vrot.slane %v7918, 1
  %v7920 = vmax.f32 %v7918, %v7919
  %v7921 = vsel %vm1032, %v992, -inf
  %v7922 = vrot.slane %v7921, 4
  %v7923 = vmax.f32 %v7921, %v7922
  %v7924 = vrot.slane %v7923, 2
  %v7925 = vmax.f32 %v7923, %v7924
  %v7926 = vrot.slane %v7925, 1
  %v7927 = vmax.f32 %v7925, %v7926
  %v7928 = vsel %vm1032, %v993, -inf
  %v7929 = vrot.slane %v7928, 4
  %v7930 = vmax.f32 %v7928, %v7929
  %v7931 = vrot.slane %v7930, 2
  %v7932 = vmax.f32 %v7930, %v7931
  %v7933 = vrot.slane %v7932, 1
  %v7934 = vmax.f32 %v7932, %v7933
  %v7935 = vsel %vm1032, %v994, -inf
  %v7936 = vrot.slane %v7935, 4
  %v7937 = vmax.f32 %v7935, %v7936
  %v7938 = vrot.slane %v7937, 2
  %v7939 = vmax.f32 %v7937, %v7938
  %v7940 = vrot.slane %v7939, 1
  %v7941 = vmax.f32 %v7939, %v7940
  %v7942 = vsel %vm1032, %v995, -inf
  %v7943 = vrot.slane %v7942, 4
  %v7944 = vmax.f32 %v7942, %v7943
  %v7945 = vrot.slane %v7944, 2
  %v7946 = vmax.f32 %v7944, %v7945
  %v7947 = vrot.slane %v7946, 1
  %v7948 = vmax.f32 %v7946, %v7947
  %v7949 = vsel %vm1032, %v996, -inf
  %v7950 = vrot.slane %v7949, 4
  %v7951 = vmax.f32 %v7949, %v7950
  %v7952 = vrot.slane %v7951, 2
  %v7953 = vmax.f32 %v7951, %v7952
  %v7954 = vrot.slane %v7953, 1
  %v7955 = vmax.f32 %v7953, %v7954
  %v7956 = vsel %vm1032, %v997, -inf
  %v7957 = vrot.slane %v7956, 4
  %v7958 = vmax.f32 %v7956, %v7957
  %v7959 = vrot.slane %v7958, 2
  %v7960 = vmax.f32 %v7958, %v7959
  %v7961 = vrot.slane %v7960, 1
  %v7962 = vmax.f32 %v7960, %v7961
  %v7963 = vsel %vm1032, %v998, -inf
  %v7964 = vrot.slane %v7963, 4
  %v7965 = vmax.f32 %v7963, %v7964
  %v7966 = vrot.slane %v7965, 2
  %v7967 = vmax.f32 %v7965, %v7966
  %v7968 = vrot.slane %v7967, 1
  %v7969 = vmax.f32 %v7967, %v7968
  %v7970 = vsel %vm1032, %v999, -inf
  %v7971 = vrot.slane %v7970, 4
  %v7972 = vmax.f32 %v7970, %v7971
  %v7973 = vrot.slane %v7972, 2
  %v7974 = vmax.f32 %v7972, %v7973
  %v7975 = vrot.slane %v7974, 1
  %v7976 = vmax.f32 %v7974, %v7975
  %v7977 = vsel %vm1032, %v1000, -inf
  %v7978 = vrot.slane %v7977, 4
  %v7979 = vmax.f32 %v7977, %v7978
  %v7980 = vrot.slane %v7979, 2
  %v7981 = vmax.f32 %v7979, %v7980
  %v7982 = vrot.slane %v7981, 1
  %v7983 = vmax.f32 %v7981, %v7982
  %v7984 = vsel %vm1032, %v1001, -inf
  %v7985 = vrot.slane %v7984, 4
  %v7986 = vmax.f32 %v7984, %v7985
  %v7987 = vrot.slane %v7986, 2
  %v7988 = vmax.f32 %v7986, %v7987
  %v7989 = vrot.slane %v7988, 1
  %v7990 = vmax.f32 %v7988, %v7989
  %v7991 = vsel %vm1032, %v1002, -inf
  %v7992 = vrot.slane %v7991, 4
  %v7993 = vmax.f32 %v7991, %v7992
  %v7994 = vrot.slane %v7993, 2
  %v7995 = vmax.f32 %v7993, %v7994
  %v7996 = vrot.slane %v7995, 1
  %v7997 = vmax.f32 %v7995, %v7996
  %v7998 = vsel %vm1032, %v1003, -inf
  %v7999 = vrot.slane %v7998, 4
  %v8000 = vmax.f32 %v7998, %v7999
  %v8001 = vrot.slane %v8000, 2
  %v8002 = vmax.f32 %v8000, %v8001
  %v8003 = vrot.slane %v8002, 1
  %v8004 = vmax.f32 %v8002, %v8003
  %v8005 = vsel %vm1032, %v1004, -inf
  %v8006 = vrot.slane %v8005, 4
  %v8007 = vmax.f32 %v8005, %v8006
  %v8008 = vrot.slane %v8007, 2
  %v8009 = vmax.f32 %v8007, %v8008
  %v8010 = vrot.slane %v8009, 1
  %v8011 = vmax.f32 %v8009, %v8010
  %v8012 = vsel %vm1032, %v1005, -inf
  %v8013 = vrot.slane %v8012, 4
  %v8014 = vmax.f32 %v8012, %v8013
  %v8015 = vrot.slane %v8014, 2
  %v8016 = vmax.f32 %v8014, %v8015
  %v8017 = vrot.slane %v8016, 1
  %v8018 = vmax.f32 %v8016, %v8017
  %v8019 = vsel %vm1032, %v1006, -inf
  %v8020 = vrot.slane %v8019, 4
  %v8021 = vmax.f32 %v8019, %v8020
  %v8022 = vrot.slane %v8021, 2
  %v8023 = vmax.f32 %v8021, %v8022
  %v8024 = vrot.slane %v8023, 1
  %v8025 = vmax.f32 %v8023, %v8024
  %v8026 = vsel %vm1032, %v1007, -inf
  %v8027 = vrot.slane %v8026, 4
  %v8028 = vmax.f32 %v8026, %v8027
  %v8029 = vrot.slane %v8028, 2
  %v8030 = vmax.f32 %v8028, %v8029
  %v8031 = vrot.slane %v8030, 1
  %v8032 = vmax.f32 %v8030, %v8031
  %v8033 = vsel %vm1032, %v1008, -inf
  %v8034 = vrot.slane %v8033, 4
  %v8035 = vmax.f32 %v8033, %v8034
  %v8036 = vrot.slane %v8035, 2
  %v8037 = vmax.f32 %v8035, %v8036
  %v8038 = vrot.slane %v8037, 1
  %v8039 = vmax.f32 %v8037, %v8038
  %v8040 = vsel %vm1032, %v1009, -inf
  %v8041 = vrot.slane %v8040, 4
  %v8042 = vmax.f32 %v8040, %v8041
  %v8043 = vrot.slane %v8042, 2
  %v8044 = vmax.f32 %v8042, %v8043
  %v8045 = vrot.slane %v8044, 1
  %v8046 = vmax.f32 %v8044, %v8045
  %v8047 = vsel %vm1032, %v1010, -inf
  %v8048 = vrot.slane %v8047, 4
  %v8049 = vmax.f32 %v8047, %v8048
  %v8050 = vrot.slane %v8049, 2
  %v8051 = vmax.f32 %v8049, %v8050
  %v8052 = vrot.slane %v8051, 1
  %v8053 = vmax.f32 %v8051, %v8052
  %v8054 = vsel %vm1032, %v1011, -inf
  %v8055 = vrot.slane %v8054, 4
  %v8056 = vmax.f32 %v8054, %v8055
  %v8057 = vrot.slane %v8056, 2
  %v8058 = vmax.f32 %v8056, %v8057
  %v8059 = vrot.slane %v8058, 1
  %v8060 = vmax.f32 %v8058, %v8059
  %v8061 = vsel %vm1032, %v1012, -inf
  %v8062 = vrot.slane %v8061, 4
  %v8063 = vmax.f32 %v8061, %v8062
  %v8064 = vrot.slane %v8063, 2
  %v8065 = vmax.f32 %v8063, %v8064
  %v8066 = vrot.slane %v8065, 1
  %v8067 = vmax.f32 %v8065, %v8066
  %v8068 = vsel %vm1032, %v1013, -inf
  %v8069 = vrot.slane %v8068, 4
  %v8070 = vmax.f32 %v8068, %v8069
  %v8071 = vrot.slane %v8070, 2
  %v8072 = vmax.f32 %v8070, %v8071
  %v8073 = vrot.slane %v8072, 1
  %v8074 = vmax.f32 %v8072, %v8073
  %v8075 = vsel %vm1032, %v1014, -inf
  %v8076 = vrot.slane %v8075, 4
  %v8077 = vmax.f32 %v8075, %v8076
  %v8078 = vrot.slane %v8077, 2
  %v8079 = vmax.f32 %v8077, %v8078
  %v8080 = vrot.slane %v8079, 1
  %v8081 = vmax.f32 %v8079, %v8080
  %v8082 = vsel %vm1032, %v1015, -inf
  %v8083 = vrot.slane %v8082, 4
  %v8084 = vmax.f32 %v8082, %v8083
  %v8085 = vrot.slane %v8084, 2
  %v8086 = vmax.f32 %v8084, %v8085
  %v8087 = vrot.slane %v8086, 1
  %v8088 = vmax.f32 %v8086, %v8087
  %v8089 = vsel %vm1032, %v1016, -inf
  %v8090 = vrot.slane %v8089, 4
  %v8091 = vmax.f32 %v8089, %v8090
  %v8092 = vrot.slane %v8091, 2
  %v8093 = vmax.f32 %v8091, %v8092
  %v8094 = vrot.slane %v8093, 1
  %v8095 = vmax.f32 %v8093, %v8094
  %v8096 = vsel %vm1032, %v1017, -inf
  %v8097 = vrot.slane %v8096, 4
  %v8098 = vmax.f32 %v8096, %v8097
  %v8099 = vrot.slane %v8098, 2
  %v8100 = vmax.f32 %v8098, %v8099
  %v8101 = vrot.slane %v8100, 1
  %v8102 = vmax.f32 %v8100, %v8101
  %v8103 = vsel %vm1032, %v1018, -inf
  %v8104 = vrot.slane %v8103, 4
  %v8105 = vmax.f32 %v8103, %v8104
  %v8106 = vrot.slane %v8105, 2
  %v8107 = vmax.f32 %v8105, %v8106
  %v8108 = vrot.slane %v8107, 1
  %v8109 = vmax.f32 %v8107, %v8108
  %v8110 = vsel %vm1032, %v1019, -inf
  %v8111 = vrot.slane %v8110, 4
  %v8112 = vmax.f32 %v8110, %v8111
  %v8113 = vrot.slane %v8112, 2
  %v8114 = vmax.f32 %v8112, %v8113
  %v8115 = vrot.slane %v8114, 1
  %v8116 = vmax.f32 %v8114, %v8115
  %v8117 = vsel %vm1032, %v1020, -inf
  %v8118 = vrot.slane %v8117, 4
  %v8119 = vmax.f32 %v8117, %v8118
  %v8120 = vrot.slane %v8119, 2
  %v8121 = vmax.f32 %v8119, %v8120
  %v8122 = vrot.slane %v8121, 1
  %v8123 = vmax.f32 %v8121, %v8122
  %v8124 = vsel %vm1032, %v1021, -inf
  %v8125 = vrot.slane %v8124, 4
  %v8126 = vmax.f32 %v8124, %v8125
  %v8127 = vrot.slane %v8126, 2
  %v8128 = vmax.f32 %v8126, %v8127
  %v8129 = vrot.slane %v8128, 1
  %v8130 = vmax.f32 %v8128, %v8129
  %v8131 = vsel %vm1032, %v1022, -inf
  %v8132 = vrot.slane %v8131, 4
  %v8133 = vmax.f32 %v8131, %v8132
  %v8134 = vrot.slane %v8133, 2
  %v8135 = vmax.f32 %v8133, %v8134
  %v8136 = vrot.slane %v8135, 1
  %v8137 = vmax.f32 %v8135, %v8136
  %v8138 = vsel %vm1032, %v1023, -inf
  %v8139 = vrot.slane %v8138, 4
  %v8140 = vmax.f32 %v8138, %v8139
  %v8141 = vrot.slane %v8140, 2
  %v8142 = vmax.f32 %v8140, %v8141
  %v8143 = vrot.slane %v8142, 1
  %v8144 = vmax.f32 %v8142, %v8143
  %v8145 = vsel %vm1032, %v1024, -inf
  %v8146 = vrot.slane %v8145, 4
  %v8147 = vmax.f32 %v8145, %v8146
  %v8148 = vrot.slane %v8147, 2
  %v8149 = vmax.f32 %v8147, %v8148
  %v8150 = vrot.slane %v8149, 1
  %v8151 = vmax.f32 %v8149, %v8150
  %v8152 = vsel %vm1032, %v1025, -inf
  %v8153 = vrot.slane %v8152, 4
  %v8154 = vmax.f32 %v8152, %v8153
  %v8155 = vrot.slane %v8154, 2
  %v8156 = vmax.f32 %v8154, %v8155
  %v8157 = vrot.slane %v8156, 1
  %v8158 = vmax.f32 %v8156, %v8157
  %v8159 = vsel %vm1032, %v1026, -inf
  %v8160 = vrot.slane %v8159, 4
  %v8161 = vmax.f32 %v8159, %v8160
  %v8162 = vrot.slane %v8161, 2
  %v8163 = vmax.f32 %v8161, %v8162
  %v8164 = vrot.slane %v8163, 1
  %v8165 = vmax.f32 %v8163, %v8164
  %v8166 = vsel %vm1032, %v1027, -inf
  %v8167 = vrot.slane %v8166, 4
  %v8168 = vmax.f32 %v8166, %v8167
  %v8169 = vrot.slane %v8168, 2
  %v8170 = vmax.f32 %v8168, %v8169
  %v8171 = vrot.slane %v8170, 1
  %v8172 = vmax.f32 %v8170, %v8171
  %v8173 = vsel %vm1032, %v1028, -inf
  %v8174 = vrot.slane %v8173, 4
  %v8175 = vmax.f32 %v8173, %v8174
  %v8176 = vrot.slane %v8175, 2
  %v8177 = vmax.f32 %v8175, %v8176
  %v8178 = vrot.slane %v8177, 1
  %v8179 = vmax.f32 %v8177, %v8178
  %v8180 = vsel %vm1032, %v1029, -inf
  %v8181 = vrot.slane %v8180, 4
  %v8182 = vmax.f32 %v8180, %v8181
  %v8183 = vrot.slane %v8182, 2
  %v8184 = vmax.f32 %v8182, %v8183
  %v8185 = vrot.slane %v8184, 1
  %v8186 = vmax.f32 %v8184, %v8185
  %v8187 = vsel %vm1032, %v1030, -inf
  %v8188 = vrot.slane %v8187, 4
  %v8189 = vmax.f32 %v8187, %v8188
  %v8190 = vrot.slane %v8189, 2
  %v8191 = vmax.f32 %v8189, %v8190
  %v8192 = vrot.slane %v8191, 1
  %v8193 = vmax.f32 %v8191, %v8192
  %v8194 = vsel %vm1032, %v1031, -inf
  %v8195 = vrot.slane %v8194, 4
  %v8196 = vmax.f32 %v8194, %v8195
  %v8197 = vrot.slane %v8196, 2
  %v8198 = vmax.f32 %v8196, %v8197
  %v8199 = vrot.slane %v8198, 1
  %v8200 = vmax.f32 %v8198, %v8199
  %vm9225 = vcmask 1041409
  %v9226 = vsel %vm9225, %v1046, %v1039
  %vm9227 = vcmask 1042434
  %v9228 = vsel %vm9227, %v1053, %v9226
  %vm9229 = vcmask 1043459
  %v9230 = vsel %vm9229, %v1060, %v9228
  %vm9231 = vcmask 1044484
  %v9232 = vsel %vm9231, %v1067, %v9230
  %vm9233 = vcmask 1045509
  %v9234 = vsel %vm9233, %v1074, %v9232
  %vm9235 = vcmask 1046534
  %v9236 = vsel %vm9235, %v1081, %v9234
  %vm9237 = vcmask 1047559
  %v9238 = vsel %vm9237, %v1088, %v9236
  %v9239 = vsel %vm9225, %v1102, %v1095
  %v9240 = vsel %vm9227, %v1109, %v9239
  %v9241 = vsel %vm9229, %v1116, %v9240
  %v9242 = vsel %vm9231, %v1123, %v9241
  %v9243 = vsel %vm9233, %v1130, %v9242
  %v9244 = vsel %vm9235, %v1137, %v9243
  %v9245 = vsel %vm9237, %v1144, %v9244
  %v9246 = vsel %vm9225, %v1158, %v1151
  %v9247 = vsel %vm9227, %v1165, %v9246
  %v9248 = vsel %vm9229, %v1172, %v9247
  %v9249 = vsel %vm9231, %v1179, %v9248
  %v9250 = vsel %vm9233, %v1186, %v9249
  %v9251 = vsel %vm9235, %v1193, %v9250
  %v9252 = vsel %vm9237, %v1200, %v9251
  %v9253 = vsel %vm9225, %v1214, %v1207
  %v9254 = vsel %vm9227, %v1221, %v9253
  %v9255 = vsel %vm9229, %v1228, %v9254
  %v9256 = vsel %vm9231, %v1235, %v9255
  %v9257 = vsel %vm9233, %v1242, %v9256
  %v9258 = vsel %vm9235, %v1249, %v9257
  %v9259 = vsel %vm9237, %v1256, %v9258
  %v9260 = vsel %vm9225, %v1270, %v1263
  %v9261 = vsel %vm9227, %v1277, %v9260
  %v9262 = vsel %vm9229, %v1284, %v9261
  %v9263 = vsel %vm9231, %v1291, %v9262
  %v9264 = vsel %vm9233, %v1298, %v9263
  %v9265 = vsel %vm9235, %v1305, %v9264
  %v9266 = vsel %vm9237, %v1312, %v9265
  %v9267 = vsel %vm9225, %v1326, %v1319
  %v9268 = vsel %vm9227, %v1333, %v9267
  %v9269 = vsel %vm9229, %v1340, %v9268
  %v9270 = vsel %vm9231, %v1347, %v9269
  %v9271 = vsel %vm9233, %v1354, %v9270
  %v9272 = vsel %vm9235, %v1361, %v9271
  %v9273 = vsel %vm9237, %v1368, %v9272
  %v9274 = vsel %vm9225, %v1382, %v1375
  %v9275 = vsel %vm9227, %v1389, %v9274
  %v9276 = vsel %vm9229, %v1396, %v9275
  %v9277 = vsel %vm9231, %v1403, %v9276
  %v9278 = vsel %vm9233, %v1410, %v9277
  %v9279 = vsel %vm9235, %v1417, %v9278
  %v9280 = vsel %vm9237, %v1424, %v9279
  %v9281 = vsel %vm9225, %v1438, %v1431
  %v9282 = vsel %vm9227, %v1445, %v9281
  %v9283 = vsel %vm9229, %v1452, %v9282
  %v9284 = vsel %vm9231, %v1459, %v9283
  %v9285 = vsel %vm9233, %v1466, %v9284
  %v9286 = vsel %vm9235, %v1473, %v9285
  %v9287 = vsel %vm9237, %v1480, %v9286
  %v9288 = vsel %vm9225, %v1494, %v1487
  %v9289 = vsel %vm9227, %v1501, %v9288
  %v9290 = vsel %vm9229, %v1508, %v9289
  %v9291 = vsel %vm9231, %v1515, %v9290
  %v9292 = vsel %vm9233, %v1522, %v9291
  %v9293 = vsel %vm9235, %v1529, %v9292
  %v9294 = vsel %vm9237, %v1536, %v9293
  %v9295 = vsel %vm9225, %v1550, %v1543
  %v9296 = vsel %vm9227, %v1557, %v9295
  %v9297 = vsel %vm9229, %v1564, %v9296
  %v9298 = vsel %vm9231, %v1571, %v9297
  %v9299 = vsel %vm9233, %v1578, %v9298
  %v9300 = vsel %vm9235, %v1585, %v9299
  %v9301 = vsel %vm9237, %v1592, %v9300
  %v9302 = vsel %vm9225, %v1606, %v1599
  %v9303 = vsel %vm9227, %v1613, %v9302
  %v9304 = vsel %vm9229, %v1620, %v9303
  %v9305 = vsel %vm9231, %v1627, %v9304
  %v9306 = vsel %vm9233, %v1634, %v9305
  %v9307 = vsel %vm9235, %v1641, %v9306
  %v9308 = vsel %vm9237, %v1648, %v9307
  %v9309 = vsel %vm9225, %v1662, %v1655
  %v9310 = vsel %vm9227, %v1669, %v9309
  %v9311 = vsel %vm9229, %v1676, %v9310
  %v9312 = vsel %vm9231, %v1683, %v9311
  %v9313 = vsel %vm9233, %v1690, %v9312
  %v9314 = vsel %vm9235, %v1697, %v9313
  %v9315 = vsel %vm9237, %v1704, %v9314
  %v9316 = vsel %vm9225, %v1718, %v1711
  %v9317 = vsel %vm9227, %v1725, %v9316
  %v9318 = vsel %vm9229, %v1732, %v9317
  %v9319 = vsel %vm9231, %v1739, %v9318
  %v9320 = vsel %vm9233, %v1746, %v9319
  %v9321 = vsel %vm9235, %v1753, %v9320
  %v9322 = vsel %vm9237, %v1760, %v9321
  %v9323 = vsel %vm9225, %v1774, %v1767
  %v9324 = vsel %vm9227, %v1781, %v9323
  %v9325 = vsel %vm9229, %v1788, %v9324
  %v9326 = vsel %vm9231, %v1795, %v9325
  %v9327 = vsel %vm9233, %v1802, %v9326
  %v9328 = vsel %vm9235, %v1809, %v9327
  %v9329 = vsel %vm9237, %v1816, %v9328
  %v9330 = vsel %vm9225, %v1830, %v1823
  %v9331 = vsel %vm9227, %v1837, %v9330
  %v9332 = vsel %vm9229, %v1844, %v9331
  %v9333 = vsel %vm9231, %v1851, %v9332
  %v9334 = vsel %vm9233, %v1858, %v9333
  %v9335 = vsel %vm9235, %v1865, %v9334
  %v9336 = vsel %vm9237, %v1872, %v9335
  %v9337 = vsel %vm9225, %v1886, %v1879
  %v9338 = vsel %vm9227, %v1893, %v9337
  %v9339 = vsel %vm9229, %v1900, %v9338
  %v9340 = vsel %vm9231, %v1907, %v9339
  %v9341 = vsel %vm9233, %v1914, %v9340
  %v9342 = vsel %vm9235, %v1921, %v9341
  %v9343 = vsel %vm9237, %v1928, %v9342
  %v9344 = vsel %vm9225, %v1942, %v1935
  %v9345 = vsel %vm9227, %v1949, %v9344
  %v9346 = vsel %vm9229, %v1956, %v9345
  %v9347 = vsel %vm9231, %v1963, %v9346
  %v9348 = vsel %vm9233, %v1970, %v9347
  %v9349 = vsel %vm9235, %v1977, %v9348
  %v9350 = vsel %vm9237, %v1984, %v9349
  %v9351 = vsel %vm9225, %v1998, %v1991
  %v9352 = vsel %vm9227, %v2005, %v9351
  %v9353 = vsel %vm9229, %v2012, %v9352
  %v9354 = vsel %vm9231, %v2019, %v9353
  %v9355 = vsel %vm9233, %v2026, %v9354
  %v9356 = vsel %vm9235, %v2033, %v9355
  %v9357 = vsel %vm9237, %v2040, %v9356
  %v9358 = vsel %vm9225, %v2054, %v2047
  %v9359 = vsel %vm9227, %v2061, %v9358
  %v9360 = vsel %vm9229, %v2068, %v9359
  %v9361 = vsel %vm9231, %v2075, %v9360
  %v9362 = vsel %vm9233, %v2082, %v9361
  %v9363 = vsel %vm9235, %v2089, %v9362
  %v9364 = vsel %vm9237, %v2096, %v9363
  %v9365 = vsel %vm9225, %v2110, %v2103
  %v9366 = vsel %vm9227, %v2117, %v9365
  %v9367 = vsel %vm9229, %v2124, %v9366
  %v9368 = vsel %vm9231, %v2131, %v9367
  %v9369 = vsel %vm9233, %v2138, %v9368
  %v9370 = vsel %vm9235, %v2145, %v9369
  %v9371 = vsel %vm9237, %v2152, %v9370
  %v9372 = vsel %vm9225, %v2166, %v2159
  %v9373 = vsel %vm9227, %v2173, %v9372
  %v9374 = vsel %vm9229, %v2180, %v9373
  %v9375 = vsel %vm9231, %v2187, %v9374
  %v9376 = vsel %vm9233, %v2194, %v9375
  %v9377 = vsel %vm9235, %v2201, %v9376
  %v9378 = vsel %vm9237, %v2208, %v9377
  %v9379 = vsel %vm9225, %v2222, %v2215
  %v9380 = vsel %vm9227, %v2229, %v9379
  %v9381 = vsel %vm9229, %v2236, %v9380
  %v9382 = vsel %vm9231, %v2243, %v9381
  %v9383 = vsel %vm9233, %v2250, %v9382
  %v9384 = vsel %vm9235, %v2257, %v9383
  %v9385 = vsel %vm9237, %v2264, %v9384
  %v9386 = vsel %vm9225, %v2278, %v2271
  %v9387 = vsel %vm9227, %v2285, %v9386
  %v9388 = vsel %vm9229, %v2292, %v9387
  %v9389 = vsel %vm9231, %v2299, %v9388
  %v9390 = vsel %vm9233, %v2306, %v9389
  %v9391 = vsel %vm9235, %v2313, %v9390
  %v9392 = vsel %vm9237, %v2320, %v9391
  %v9393 = vsel %vm9225, %v2334, %v2327
  %v9394 = vsel %vm9227, %v2341, %v9393
  %v9395 = vsel %vm9229, %v2348, %v9394
  %v9396 = vsel %vm9231, %v2355, %v9395
  %v9397 = vsel %vm9233, %v2362, %v9396
  %v9398 = vsel %vm9235, %v2369, %v9397
  %v9399 = vsel %vm9237, %v2376, %v9398
  %v9400 = vsel %vm9225, %v2390, %v2383
  %v9401 = vsel %vm9227, %v2397, %v9400
  %v9402 = vsel %vm9229, %v2404, %v9401
  %v9403 = vsel %vm9231, %v2411, %v9402
  %v9404 = vsel %vm9233, %v2418, %v9403
  %v9405 = vsel %vm9235, %v2425, %v9404
  %v9406 = vsel %vm9237, %v2432, %v9405
  %v9407 = vsel %vm9225, %v2446, %v2439
  %v9408 = vsel %vm9227, %v2453, %v9407
  %v9409 = vsel %vm9229, %v2460, %v9408
  %v9410 = vsel %vm9231, %v2467, %v9409
  %v9411 = vsel %vm9233, %v2474, %v9410
  %v9412 = vsel %vm9235, %v2481, %v9411
  %v9413 = vsel %vm9237, %v2488, %v9412
  %v9414 = vsel %vm9225, %v2502, %v2495
  %v9415 = vsel %vm9227, %v2509, %v9414
  %v9416 = vsel %vm9229, %v2516, %v9415
  %v9417 = vsel %vm9231, %v2523, %v9416
  %v9418 = vsel %vm9233, %v2530, %v9417
  %v9419 = vsel %vm9235, %v2537, %v9418
  %v9420 = vsel %vm9237, %v2544, %v9419
  %v9421 = vsel %vm9225, %v2558, %v2551
  %v9422 = vsel %vm9227, %v2565, %v9421
  %v9423 = vsel %vm9229, %v2572, %v9422
  %v9424 = vsel %vm9231, %v2579, %v9423
  %v9425 = vsel %vm9233, %v2586, %v9424
  %v9426 = vsel %vm9235, %v2593, %v9425
  %v9427 = vsel %vm9237, %v2600, %v9426
  %v9428 = vsel %vm9225, %v2614, %v2607
  %v9429 = vsel %vm9227, %v2621, %v9428
  %v9430 = vsel %vm9229, %v2628, %v9429
  %v9431 = vsel %vm9231, %v2635, %v9430
  %v9432 = vsel %vm9233, %v2642, %v9431
  %v9433 = vsel %vm9235, %v2649, %v9432
  %v9434 = vsel %vm9237, %v2656, %v9433
  %v9435 = vsel %vm9225, %v2670, %v2663
  %v9436 = vsel %vm9227, %v2677, %v9435
  %v9437 = vsel %vm9229, %v2684, %v9436
  %v9438 = vsel %vm9231, %v2691, %v9437
  %v9439 = vsel %vm9233, %v2698, %v9438
  %v9440 = vsel %vm9235, %v2705, %v9439
  %v9441 = vsel %vm9237, %v2712, %v9440
  %v9442 = vsel %vm9225, %v2726, %v2719
  %v9443 = vsel %vm9227, %v2733, %v9442
  %v9444 = vsel %vm9229, %v2740, %v9443
  %v9445 = vsel %vm9231, %v2747, %v9444
  %v9446 = vsel %vm9233, %v2754, %v9445
  %v9447 = vsel %vm9235, %v2761, %v9446
  %v9448 = vsel %vm9237, %v2768, %v9447
  %v9449 = vsel %vm9225, %v2782, %v2775
  %v9450 = vsel %vm9227, %v2789, %v9449
  %v9451 = vsel %vm9229, %v2796, %v9450
  %v9452 = vsel %vm9231, %v2803, %v9451
  %v9453 = vsel %vm9233, %v2810, %v9452
  %v9454 = vsel %vm9235, %v2817, %v9453
  %v9455 = vsel %vm9237, %v2824, %v9454
  %v9456 = vsel %vm9225, %v2838, %v2831
  %v9457 = vsel %vm9227, %v2845, %v9456
  %v9458 = vsel %vm9229, %v2852, %v9457
  %v9459 = vsel %vm9231, %v2859, %v9458
  %v9460 = vsel %vm9233, %v2866, %v9459
  %v9461 = vsel %vm9235, %v2873, %v9460
  %v9462 = vsel %vm9237, %v2880, %v9461
  %v9463 = vsel %vm9225, %v2894, %v2887
  %v9464 = vsel %vm9227, %v2901, %v9463
  %v9465 = vsel %vm9229, %v2908, %v9464
  %v9466 = vsel %vm9231, %v2915, %v9465
  %v9467 = vsel %vm9233, %v2922, %v9466
  %v9468 = vsel %vm9235, %v2929, %v9467
  %v9469 = vsel %vm9237, %v2936, %v9468
  %v9470 = vsel %vm9225, %v2950, %v2943
  %v9471 = vsel %vm9227, %v2957, %v9470
  %v9472 = vsel %vm9229, %v2964, %v9471
  %v9473 = vsel %vm9231, %v2971, %v9472
  %v9474 = vsel %vm9233, %v2978, %v9473
  %v9475 = vsel %vm9235, %v2985, %v9474
  %v9476 = vsel %vm9237, %v2992, %v9475
  %v9477 = vsel %vm9225, %v3006, %v2999
  %v9478 = vsel %vm9227, %v3013, %v9477
  %v9479 = vsel %vm9229, %v3020, %v9478
  %v9480 = vsel %vm9231, %v3027, %v9479
  %v9481 = vsel %vm9233, %v3034, %v9480
  %v9482 = vsel %vm9235, %v3041, %v9481
  %v9483 = vsel %vm9237, %v3048, %v9482
  %v9484 = vsel %vm9225, %v3062, %v3055
  %v9485 = vsel %vm9227, %v3069, %v9484
  %v9486 = vsel %vm9229, %v3076, %v9485
  %v9487 = vsel %vm9231, %v3083, %v9486
  %v9488 = vsel %vm9233, %v3090, %v9487
  %v9489 = vsel %vm9235, %v3097, %v9488
  %v9490 = vsel %vm9237, %v3104, %v9489
  %v9491 = vsel %vm9225, %v3118, %v3111
  %v9492 = vsel %vm9227, %v3125, %v9491
  %v9493 = vsel %vm9229, %v3132, %v9492
  %v9494 = vsel %vm9231, %v3139, %v9493
  %v9495 = vsel %vm9233, %v3146, %v9494
  %v9496 = vsel %vm9235, %v3153, %v9495
  %v9497 = vsel %vm9237, %v3160, %v9496
  %v9498 = vsel %vm9225, %v3174, %v3167
  %v9499 = vsel %vm9227, %v3181, %v9498
  %v9500 = vsel %vm9229, %v3188, %v9499
  %v9501 = vsel %vm9231, %v3195, %v9500
  %v9502 = vsel %vm9233, %v3202, %v9501
  %v9503 = vsel %vm9235, %v3209, %v9502
  %v9504 = vsel %vm9237, %v3216, %v9503
  %v9505 = vsel %vm9225, %v3230, %v3223
  %v9506 = vsel %vm9227, %v3237, %v9505
  %v9507 = vsel %vm9229, %v3244, %v9506
  %v9508 = vsel %vm9231, %v3251, %v9507
  %v9509 = vsel %vm9233, %v3258, %v9508
  %v9510 = vsel %vm9235, %v3265, %v9509
  %v9511 = vsel %vm9237, %v3272, %v9510
  %v9512 = vsel %vm9225, %v3286, %v3279
  %v9513 = vsel %vm9227, %v3293, %v9512
  %v9514 = vsel %vm9229, %v3300, %v9513
  %v9515 = vsel %vm9231, %v3307, %v9514
  %v9516 = vsel %vm9233, %v3314, %v9515
  %v9517 = vsel %vm9235, %v3321, %v9516
  %v9518 = vsel %vm9237, %v3328, %v9517
  %v9519 = vsel %vm9225, %v3342, %v3335
  %v9520 = vsel %vm9227, %v3349, %v9519
  %v9521 = vsel %vm9229, %v3356, %v9520
  %v9522 = vsel %vm9231, %v3363, %v9521
  %v9523 = vsel %vm9233, %v3370, %v9522
  %v9524 = vsel %vm9235, %v3377, %v9523
  %v9525 = vsel %vm9237, %v3384, %v9524
  %v9526 = vsel %vm9225, %v3398, %v3391
  %v9527 = vsel %vm9227, %v3405, %v9526
  %v9528 = vsel %vm9229, %v3412, %v9527
  %v9529 = vsel %vm9231, %v3419, %v9528
  %v9530 = vsel %vm9233, %v3426, %v9529
  %v9531 = vsel %vm9235, %v3433, %v9530
  %v9532 = vsel %vm9237, %v3440, %v9531
  %v9533 = vsel %vm9225, %v3454, %v3447
  %v9534 = vsel %vm9227, %v3461, %v9533
  %v9535 = vsel %vm9229, %v3468, %v9534
  %v9536 = vsel %vm9231, %v3475, %v9535
  %v9537 = vsel %vm9233, %v3482, %v9536
  %v9538 = vsel %vm9235, %v3489, %v9537
  %v9539 = vsel %vm9237, %v3496, %v9538
  %v9540 = vsel %vm9225, %v3510, %v3503
  %v9541 = vsel %vm9227, %v3517, %v9540
  %v9542 = vsel %vm9229, %v3524, %v9541
  %v9543 = vsel %vm9231, %v3531, %v9542
  %v9544 = vsel %vm9233, %v3538, %v9543
  %v9545 = vsel %vm9235, %v3545, %v9544
  %v9546 = vsel %vm9237, %v3552, %v9545
  %v9547 = vsel %vm9225, %v3566, %v3559
  %v9548 = vsel %vm9227, %v3573, %v9547
  %v9549 = vsel %vm9229, %v3580, %v9548
  %v9550 = vsel %vm9231, %v3587, %v9549
  %v9551 = vsel %vm9233, %v3594, %v9550
  %v9552 = vsel %vm9235, %v3601, %v9551
  %v9553 = vsel %vm9237, %v3608, %v9552
  %v9554 = vsel %vm9225, %v3622, %v3615
  %v9555 = vsel %vm9227, %v3629, %v9554
  %v9556 = vsel %vm9229, %v3636, %v9555
  %v9557 = vsel %vm9231, %v3643, %v9556
  %v9558 = vsel %vm9233, %v3650, %v9557
  %v9559 = vsel %vm9235, %v3657, %v9558
  %v9560 = vsel %vm9237, %v3664, %v9559
  %v9561 = vsel %vm9225, %v3678, %v3671
  %v9562 = vsel %vm9227, %v3685, %v9561
  %v9563 = vsel %vm9229, %v3692, %v9562
  %v9564 = vsel %vm9231, %v3699, %v9563
  %v9565 = vsel %vm9233, %v3706, %v9564
  %v9566 = vsel %vm9235, %v3713, %v9565
  %v9567 = vsel %vm9237, %v3720, %v9566
  %v9568 = vsel %vm9225, %v3734, %v3727
  %v9569 = vsel %vm9227, %v3741, %v9568
  %v9570 = vsel %vm9229, %v3748, %v9569
  %v9571 = vsel %vm9231, %v3755, %v9570
  %v9572 = vsel %vm9233, %v3762, %v9571
  %v9573 = vsel %vm9235, %v3769, %v9572
  %v9574 = vsel %vm9237, %v3776, %v9573
  %v9575 = vsel %vm9225, %v3790, %v3783
  %v9576 = vsel %vm9227, %v3797, %v9575
  %v9577 = vsel %vm9229, %v3804, %v9576
  %v9578 = vsel %vm9231, %v3811, %v9577
  %v9579 = vsel %vm9233, %v3818, %v9578
  %v9580 = vsel %vm9235, %v3825, %v9579
  %v9581 = vsel %vm9237, %v3832, %v9580
  %v9582 = vsel %vm9225, %v3846, %v3839
  %v9583 = vsel %vm9227, %v3853, %v9582
  %v9584 = vsel %vm9229, %v3860, %v9583
  %v9585 = vsel %vm9231, %v3867, %v9584
  %v9586 = vsel %vm9233, %v3874, %v9585
  %v9587 = vsel %vm9235, %v3881, %v9586
  %v9588 = vsel %vm9237, %v3888, %v9587
  %v9589 = vsel %vm9225, %v3902, %v3895
  %v9590 = vsel %vm9227, %v3909, %v9589
  %v9591 = vsel %vm9229, %v3916, %v9590
  %v9592 = vsel %vm9231, %v3923, %v9591
  %v9593 = vsel %vm9233, %v3930, %v9592
  %v9594 = vsel %vm9235, %v3937, %v9593
  %v9595 = vsel %vm9237, %v3944, %v9594
  %v9596 = vsel %vm9225, %v3958, %v3951
  %v9597 = vsel %vm9227, %v3965, %v9596
  %v9598 = vsel %vm9229, %v3972, %v9597
  %v9599 = vsel %vm9231, %v3979, %v9598
  %v9600 = vsel %vm9233, %v3986, %v9599
  %v9601 = vsel %vm9235, %v3993, %v9600
  %v9602 = vsel %vm9237, %v4000, %v9601
  %v9603 = vsel %vm9225, %v4014, %v4007
  %v9604 = vsel %vm9227, %v4021, %v9603
  %v9605 = vsel %vm9229, %v4028, %v9604
  %v9606 = vsel %vm9231, %v4035, %v9605
  %v9607 = vsel %vm9233, %v4042, %v9606
  %v9608 = vsel %vm9235, %v4049, %v9607
  %v9609 = vsel %vm9237, %v4056, %v9608
  %v9610 = vsel %vm9225, %v4070, %v4063
  %v9611 = vsel %vm9227, %v4077, %v9610
  %v9612 = vsel %vm9229, %v4084, %v9611
  %v9613 = vsel %vm9231, %v4091, %v9612
  %v9614 = vsel %vm9233, %v4098, %v9613
  %v9615 = vsel %vm9235, %v4105, %v9614
  %v9616 = vsel %vm9237, %v4112, %v9615
  %v9617 = vsel %vm9225, %v4126, %v4119
  %v9618 = vsel %vm9227, %v4133, %v9617
  %v9619 = vsel %vm9229, %v4140, %v9618
  %v9620 = vsel %vm9231, %v4147, %v9619
  %v9621 = vsel %vm9233, %v4154, %v9620
  %v9622 = vsel %vm9235, %v4161, %v9621
  %v9623 = vsel %vm9237, %v4168, %v9622
  %v9624 = vsel %vm9225, %v4182, %v4175
  %v9625 = vsel %vm9227, %v4189, %v9624
  %v9626 = vsel %vm9229, %v4196, %v9625
  %v9627 = vsel %vm9231, %v4203, %v9626
  %v9628 = vsel %vm9233, %v4210, %v9627
  %v9629 = vsel %vm9235, %v4217, %v9628
  %v9630 = vsel %vm9237, %v4224, %v9629
  %v9631 = vsel %vm9225, %v4238, %v4231
  %v9632 = vsel %vm9227, %v4245, %v9631
  %v9633 = vsel %vm9229, %v4252, %v9632
  %v9634 = vsel %vm9231, %v4259, %v9633
  %v9635 = vsel %vm9233, %v4266, %v9634
  %v9636 = vsel %vm9235, %v4273, %v9635
  %v9637 = vsel %vm9237, %v4280, %v9636
  %v9638 = vsel %vm9225, %v4294, %v4287
  %v9639 = vsel %vm9227, %v4301, %v9638
  %v9640 = vsel %vm9229, %v4308, %v9639
  %v9641 = vsel %vm9231, %v4315, %v9640
  %v9642 = vsel %vm9233, %v4322, %v9641
  %v9643 = vsel %vm9235, %v4329, %v9642
  %v9644 = vsel %vm9237, %v4336, %v9643
  %v9645 = vsel %vm9225, %v4350, %v4343
  %v9646 = vsel %vm9227, %v4357, %v9645
  %v9647 = vsel %vm9229, %v4364, %v9646
  %v9648 = vsel %vm9231, %v4371, %v9647
  %v9649 = vsel %vm9233, %v4378, %v9648
  %v9650 = vsel %vm9235, %v4385, %v9649
  %v9651 = vsel %vm9237, %v4392, %v9650
  %v9652 = vsel %vm9225, %v4406, %v4399
  %v9653 = vsel %vm9227, %v4413, %v9652
  %v9654 = vsel %vm9229, %v4420, %v9653
  %v9655 = vsel %vm9231, %v4427, %v9654
  %v9656 = vsel %vm9233, %v4434, %v9655
  %v9657 = vsel %vm9235, %v4441, %v9656
  %v9658 = vsel %vm9237, %v4448, %v9657
  %v9659 = vsel %vm9225, %v4462, %v4455
  %v9660 = vsel %vm9227, %v4469, %v9659
  %v9661 = vsel %vm9229, %v4476, %v9660
  %v9662 = vsel %vm9231, %v4483, %v9661
  %v9663 = vsel %vm9233, %v4490, %v9662
  %v9664 = vsel %vm9235, %v4497, %v9663
  %v9665 = vsel %vm9237, %v4504, %v9664
  %v9666 = vsel %vm9225, %v4518, %v4511
  %v9667 = vsel %vm9227, %v4525, %v9666
  %v9668 = vsel %vm9229, %v4532, %v9667
  %v9669 = vsel %vm9231, %v4539, %v9668
  %v9670 = vsel %vm9233, %v4546, %v9669
  %v9671 = vsel %vm9235, %v4553, %v9670
  %v9672 = vsel %vm9237, %v4560, %v9671
  %v9673 = vsel %vm9225, %v4574, %v4567
  %v9674 = vsel %vm9227, %v4581, %v9673
  %v9675 = vsel %vm9229, %v4588, %v9674
  %v9676 = vsel %vm9231, %v4595, %v9675
  %v9677 = vsel %vm9233, %v4602, %v9676
  %v9678 = vsel %vm9235, %v4609, %v9677
  %v9679 = vsel %vm9237, %v4616, %v9678
  %v9680 = vsel %vm9225, %v4630, %v4623
  %v9681 = vsel %vm9227, %v4637, %v9680
  %v9682 = vsel %vm9229, %v4644, %v9681
  %v9683 = vsel %vm9231, %v4651, %v9682
  %v9684 = vsel %vm9233, %v4658, %v9683
  %v9685 = vsel %vm9235, %v4665, %v9684
  %v9686 = vsel %vm9237, %v4672, %v9685
  %v9687 = vsel %vm9225, %v4686, %v4679
  %v9688 = vsel %vm9227, %v4693, %v9687
  %v9689 = vsel %vm9229, %v4700, %v9688
  %v9690 = vsel %vm9231, %v4707, %v9689
  %v9691 = vsel %vm9233, %v4714, %v9690
  %v9692 = vsel %vm9235, %v4721, %v9691
  %v9693 = vsel %vm9237, %v4728, %v9692
  %v9694 = vsel %vm9225, %v4742, %v4735
  %v9695 = vsel %vm9227, %v4749, %v9694
  %v9696 = vsel %vm9229, %v4756, %v9695
  %v9697 = vsel %vm9231, %v4763, %v9696
  %v9698 = vsel %vm9233, %v4770, %v9697
  %v9699 = vsel %vm9235, %v4777, %v9698
  %v9700 = vsel %vm9237, %v4784, %v9699
  %v9701 = vsel %vm9225, %v4798, %v4791
  %v9702 = vsel %vm9227, %v4805, %v9701
  %v9703 = vsel %vm9229, %v4812, %v9702
  %v9704 = vsel %vm9231, %v4819, %v9703
  %v9705 = vsel %vm9233, %v4826, %v9704
  %v9706 = vsel %vm9235, %v4833, %v9705
  %v9707 = vsel %vm9237, %v4840, %v9706
  %v9708 = vsel %vm9225, %v4854, %v4847
  %v9709 = vsel %vm9227, %v4861, %v9708
  %v9710 = vsel %vm9229, %v4868, %v9709
  %v9711 = vsel %vm9231, %v4875, %v9710
  %v9712 = vsel %vm9233, %v4882, %v9711
  %v9713 = vsel %vm9235, %v4889, %v9712
  %v9714 = vsel %vm9237, %v4896, %v9713
  %v9715 = vsel %vm9225, %v4910, %v4903
  %v9716 = vsel %vm9227, %v4917, %v9715
  %v9717 = vsel %vm9229, %v4924, %v9716
  %v9718 = vsel %vm9231, %v4931, %v9717
  %v9719 = vsel %vm9233, %v4938, %v9718
  %v9720 = vsel %vm9235, %v4945, %v9719
  %v9721 = vsel %vm9237, %v4952, %v9720
  %v9722 = vsel %vm9225, %v4966, %v4959
  %v9723 = vsel %vm9227, %v4973, %v9722
  %v9724 = vsel %vm9229, %v4980, %v9723
  %v9725 = vsel %vm9231, %v4987, %v9724
  %v9726 = vsel %vm9233, %v4994, %v9725
  %v9727 = vsel %vm9235, %v5001, %v9726
  %v9728 = vsel %vm9237, %v5008, %v9727
  %v9729 = vsel %vm9225, %v5022, %v5015
  %v9730 = vsel %vm9227, %v5029, %v9729
  %v9731 = vsel %vm9229, %v5036, %v9730
  %v9732 = vsel %vm9231, %v5043, %v9731
  %v9733 = vsel %vm9233, %v5050, %v9732
  %v9734 = vsel %vm9235, %v5057, %v9733
  %v9735 = vsel %vm9237, %v5064, %v9734
  %v9736 = vsel %vm9225, %v5078, %v5071
  %v9737 = vsel %vm9227, %v5085, %v9736
  %v9738 = vsel %vm9229, %v5092, %v9737
  %v9739 = vsel %vm9231, %v5099, %v9738
  %v9740 = vsel %vm9233, %v5106, %v9739
  %v9741 = vsel %vm9235, %v5113, %v9740
  %v9742 = vsel %vm9237, %v5120, %v9741
  %v9743 = vsel %vm9225, %v5134, %v5127
  %v9744 = vsel %vm9227, %v5141, %v9743
  %v9745 = vsel %vm9229, %v5148, %v9744
  %v9746 = vsel %vm9231, %v5155, %v9745
  %v9747 = vsel %vm9233, %v5162, %v9746
  %v9748 = vsel %vm9235, %v5169, %v9747
  %v9749 = vsel %vm9237, %v5176, %v9748
  %v9750 = vsel %vm9225, %v5190, %v5183
  %v9751 = vsel %vm9227, %v5197, %v9750
  %v9752 = vsel %vm9229, %v5204, %v9751
  %v9753 = vsel %vm9231, %v5211, %v9752
  %v9754 = vsel %vm9233, %v5218, %v9753
  %v9755 = vsel %vm9235, %v5225, %v9754
  %v9756 = vsel %vm9237, %v5232, %v9755
  %v9757 = vsel %vm9225, %v5246, %v5239
  %v9758 = vsel %vm9227, %v5253, %v9757
  %v9759 = vsel %vm9229, %v5260, %v9758
  %v9760 = vsel %vm9231, %v5267, %v9759
  %v9761 = vsel %vm9233, %v5274, %v9760
  %v9762 = vsel %vm9235, %v5281, %v9761
  %v9763 = vsel %vm9237, %v5288, %v9762
  %v9764 = vsel %vm9225, %v5302, %v5295
  %v9765 = vsel %vm9227, %v5309, %v9764
  %v9766 = vsel %vm9229, %v5316, %v9765
  %v9767 = vsel %vm9231, %v5323, %v9766
  %v9768 = vsel %vm9233, %v5330, %v9767
  %v9769 = vsel %vm9235, %v5337, %v9768
  %v9770 = vsel %vm9237, %v5344, %v9769
  %v9771 = vsel %vm9225, %v5358, %v5351
  %v9772 = vsel %vm9227, %v5365, %v9771
  %v9773 = vsel %vm9229, %v5372, %v9772
  %v9774 = vsel %vm9231, %v5379, %v9773
  %v9775 = vsel %vm9233, %v5386, %v9774
  %v9776 = vsel %vm9235, %v5393, %v9775
  %v9777 = vsel %vm9237, %v5400, %v9776
  %v9778 = vsel %vm9225, %v5414, %v5407
  %v9779 = vsel %vm9227, %v5421, %v9778
  %v9780 = vsel %vm9229, %v5428, %v9779
  %v9781 = vsel %vm9231, %v5435, %v9780
  %v9782 = vsel %vm9233, %v5442, %v9781
  %v9783 = vsel %vm9235, %v5449, %v9782
  %v9784 = vsel %vm9237, %v5456, %v9783
  %v9785 = vsel %vm9225, %v5470, %v5463
  %v9786 = vsel %vm9227, %v5477, %v9785
  %v9787 = vsel %vm9229, %v5484, %v9786
  %v9788 = vsel %vm9231, %v5491, %v9787
  %v9789 = vsel %vm9233, %v5498, %v9788
  %v9790 = vsel %vm9235, %v5505, %v9789
  %v9791 = vsel %vm9237, %v5512, %v9790
  %v9792 = vsel %vm9225, %v5526, %v5519
  %v9793 = vsel %vm9227, %v5533, %v9792
  %v9794 = vsel %vm9229, %v5540, %v9793
  %v9795 = vsel %vm9231, %v5547, %v9794
  %v9796 = vsel %vm9233, %v5554, %v9795
  %v9797 = vsel %vm9235, %v5561, %v9796
  %v9798 = vsel %vm9237, %v5568, %v9797
  %v9799 = vsel %vm9225, %v5582, %v5575
  %v9800 = vsel %vm9227, %v5589, %v9799
  %v9801 = vsel %vm9229, %v5596, %v9800
  %v9802 = vsel %vm9231, %v5603, %v9801
  %v9803 = vsel %vm9233, %v5610, %v9802
  %v9804 = vsel %vm9235, %v5617, %v9803
  %v9805 = vsel %vm9237, %v5624, %v9804
  %v9806 = vsel %vm9225, %v5638, %v5631
  %v9807 = vsel %vm9227, %v5645, %v9806
  %v9808 = vsel %vm9229, %v5652, %v9807
  %v9809 = vsel %vm9231, %v5659, %v9808
  %v9810 = vsel %vm9233, %v5666, %v9809
  %v9811 = vsel %vm9235, %v5673, %v9810
  %v9812 = vsel %vm9237, %v5680, %v9811
  %v9813 = vsel %vm9225, %v5694, %v5687
  %v9814 = vsel %vm9227, %v5701, %v9813
  %v9815 = vsel %vm9229, %v5708, %v9814
  %v9816 = vsel %vm9231, %v5715, %v9815
  %v9817 = vsel %vm9233, %v5722, %v9816
  %v9818 = vsel %vm9235, %v5729, %v9817
  %v9819 = vsel %vm9237, %v5736, %v9818
  %v9820 = vsel %vm9225, %v5750, %v5743
  %v9821 = vsel %vm9227, %v5757, %v9820
  %v9822 = vsel %vm9229, %v5764, %v9821
  %v9823 = vsel %vm9231, %v5771, %v9822
  %v9824 = vsel %vm9233, %v5778, %v9823
  %v9825 = vsel %vm9235, %v5785, %v9824
  %v9826 = vsel %vm9237, %v5792, %v9825
  %v9827 = vsel %vm9225, %v5806, %v5799
  %v9828 = vsel %vm9227, %v5813, %v9827
  %v9829 = vsel %vm9229, %v5820, %v9828
  %v9830 = vsel %vm9231, %v5827, %v9829
  %v9831 = vsel %vm9233, %v5834, %v9830
  %v9832 = vsel %vm9235, %v5841, %v9831
  %v9833 = vsel %vm9237, %v5848, %v9832
  %v9834 = vsel %vm9225, %v5862, %v5855
  %v9835 = vsel %vm9227, %v5869, %v9834
  %v9836 = vsel %vm9229, %v5876, %v9835
  %v9837 = vsel %vm9231, %v5883, %v9836
  %v9838 = vsel %vm9233, %v5890, %v9837
  %v9839 = vsel %vm9235, %v5897, %v9838
  %v9840 = vsel %vm9237, %v5904, %v9839
  %v9841 = vsel %vm9225, %v5918, %v5911
  %v9842 = vsel %vm9227, %v5925, %v9841
  %v9843 = vsel %vm9229, %v5932, %v9842
  %v9844 = vsel %vm9231, %v5939, %v9843
  %v9845 = vsel %vm9233, %v5946, %v9844
  %v9846 = vsel %vm9235, %v5953, %v9845
  %v9847 = vsel %vm9237, %v5960, %v9846
  %v9848 = vsel %vm9225, %v5974, %v5967
  %v9849 = vsel %vm9227, %v5981, %v9848
  %v9850 = vsel %vm9229, %v5988, %v9849
  %v9851 = vsel %vm9231, %v5995, %v9850
  %v9852 = vsel %vm9233, %v6002, %v9851
  %v9853 = vsel %vm9235, %v6009, %v9852
  %v9854 = vsel %vm9237, %v6016, %v9853
  %v9855 = vsel %vm9225, %v6030, %v6023
  %v9856 = vsel %vm9227, %v6037, %v9855
  %v9857 = vsel %vm9229, %v6044, %v9856
  %v9858 = vsel %vm9231, %v6051, %v9857
  %v9859 = vsel %vm9233, %v6058, %v9858
  %v9860 = vsel %vm9235, %v6065, %v9859
  %v9861 = vsel %vm9237, %v6072, %v9860
  %v9862 = vsel %vm9225, %v6086, %v6079
  %v9863 = vsel %vm9227, %v6093, %v9862
  %v9864 = vsel %vm9229, %v6100, %v9863
  %v9865 = vsel %vm9231, %v6107, %v9864
  %v9866 = vsel %vm9233, %v6114, %v9865
  %v9867 = vsel %vm9235, %v6121, %v9866
  %v9868 = vsel %vm9237, %v6128, %v9867
  %v9869 = vsel %vm9225, %v6142, %v6135
  %v9870 = vsel %vm9227, %v6149, %v9869
  %v9871 = vsel %vm9229, %v6156, %v9870
  %v9872 = vsel %vm9231, %v6163, %v9871
  %v9873 = vsel %vm9233, %v6170, %v9872
  %v9874 = vsel %vm9235, %v6177, %v9873
  %v9875 = vsel %vm9237, %v6184, %v9874
  %v9876 = vsel %vm9225, %v6198, %v6191
  %v9877 = vsel %vm9227, %v6205, %v9876
  %v9878 = vsel %vm9229, %v6212, %v9877
  %v9879 = vsel %vm9231, %v6219, %v9878
  %v9880 = vsel %vm9233, %v6226, %v9879
  %v9881 = vsel %vm9235, %v6233, %v9880
  %v9882 = vsel %vm9237, %v6240, %v9881
  %v9883 = vsel %vm9225, %v6254, %v6247
  %v9884 = vsel %vm9227, %v6261, %v9883
  %v9885 = vsel %vm9229, %v6268, %v9884
  %v9886 = vsel %vm9231, %v6275, %v9885
  %v9887 = vsel %vm9233, %v6282, %v9886
  %v9888 = vsel %vm9235, %v6289, %v9887
  %v9889 = vsel %vm9237, %v6296, %v9888
  %v9890 = vsel %vm9225, %v6310, %v6303
  %v9891 = vsel %vm9227, %v6317, %v9890
  %v9892 = vsel %vm9229, %v6324, %v9891
  %v9893 = vsel %vm9231, %v6331, %v9892
  %v9894 = vsel %vm9233, %v6338, %v9893
  %v9895 = vsel %vm9235, %v6345, %v9894
  %v9896 = vsel %vm9237, %v6352, %v9895
  %v9897 = vsel %vm9225, %v6366, %v6359
  %v9898 = vsel %vm9227, %v6373, %v9897
  %v9899 = vsel %vm9229, %v6380, %v9898
  %v9900 = vsel %vm9231, %v6387, %v9899
  %v9901 = vsel %vm9233, %v6394, %v9900
  %v9902 = vsel %vm9235, %v6401, %v9901
  %v9903 = vsel %vm9237, %v6408, %v9902
  %v9904 = vsel %vm9225, %v6422, %v6415
  %v9905 = vsel %vm9227, %v6429, %v9904
  %v9906 = vsel %vm9229, %v6436, %v9905
  %v9907 = vsel %vm9231, %v6443, %v9906
  %v9908 = vsel %vm9233, %v6450, %v9907
  %v9909 = vsel %vm9235, %v6457, %v9908
  %v9910 = vsel %vm9237, %v6464, %v9909
  %v9911 = vsel %vm9225, %v6478, %v6471
  %v9912 = vsel %vm9227, %v6485, %v9911
  %v9913 = vsel %vm9229, %v6492, %v9912
  %v9914 = vsel %vm9231, %v6499, %v9913
  %v9915 = vsel %vm9233, %v6506, %v9914
  %v9916 = vsel %vm9235, %v6513, %v9915
  %v9917 = vsel %vm9237, %v6520, %v9916
  %v9918 = vsel %vm9225, %v6534, %v6527
  %v9919 = vsel %vm9227, %v6541, %v9918
  %v9920 = vsel %vm9229, %v6548, %v9919
  %v9921 = vsel %vm9231, %v6555, %v9920
  %v9922 = vsel %vm9233, %v6562, %v9921
  %v9923 = vsel %vm9235, %v6569, %v9922
  %v9924 = vsel %vm9237, %v6576, %v9923
  %v9925 = vsel %vm9225, %v6590, %v6583
  %v9926 = vsel %vm9227, %v6597, %v9925
  %v9927 = vsel %vm9229, %v6604, %v9926
  %v9928 = vsel %vm9231, %v6611, %v9927
  %v9929 = vsel %vm9233, %v6618, %v9928
  %v9930 = vsel %vm9235, %v6625, %v9929
  %v9931 = vsel %vm9237, %v6632, %v9930
  %v9932 = vsel %vm9225, %v6646, %v6639
  %v9933 = vsel %vm9227, %v6653, %v9932
  %v9934 = vsel %vm9229, %v6660, %v9933
  %v9935 = vsel %vm9231, %v6667, %v9934
  %v9936 = vsel %vm9233, %v6674, %v9935
  %v9937 = vsel %vm9235, %v6681, %v9936
  %v9938 = vsel %vm9237, %v6688, %v9937
  %v9939 = vsel %vm9225, %v6702, %v6695
  %v9940 = vsel %vm9227, %v6709, %v9939
  %v9941 = vsel %vm9229, %v6716, %v9940
  %v9942 = vsel %vm9231, %v6723, %v9941
  %v9943 = vsel %vm9233, %v6730, %v9942
  %v9944 = vsel %vm9235, %v6737, %v9943
  %v9945 = vsel %vm9237, %v6744, %v9944
  %v9946 = vsel %vm9225, %v6758, %v6751
  %v9947 = vsel %vm9227, %v6765, %v9946
  %v9948 = vsel %vm9229, %v6772, %v9947
  %v9949 = vsel %vm9231, %v6779, %v9948
  %v9950 = vsel %vm9233, %v6786, %v9949
  %v9951 = vsel %vm9235, %v6793, %v9950
  %v9952 = vsel %vm9237, %v6800, %v9951
  %v9953 = vsel %vm9225, %v6814, %v6807
  %v9954 = vsel %vm9227, %v6821, %v9953
  %v9955 = vsel %vm9229, %v6828, %v9954
  %v9956 = vsel %vm9231, %v6835, %v9955
  %v9957 = vsel %vm9233, %v6842, %v9956
  %v9958 = vsel %vm9235, %v6849, %v9957
  %v9959 = vsel %vm9237, %v6856, %v9958
  %v9960 = vsel %vm9225, %v6870, %v6863
  %v9961 = vsel %vm9227, %v6877, %v9960
  %v9962 = vsel %vm9229, %v6884, %v9961
  %v9963 = vsel %vm9231, %v6891, %v9962
  %v9964 = vsel %vm9233, %v6898, %v9963
  %v9965 = vsel %vm9235, %v6905, %v9964
  %v9966 = vsel %vm9237, %v6912, %v9965
  %v9967 = vsel %vm9225, %v6926, %v6919
  %v9968 = vsel %vm9227, %v6933, %v9967
  %v9969 = vsel %vm9229, %v6940, %v9968
  %v9970 = vsel %vm9231, %v6947, %v9969
  %v9971 = vsel %vm9233, %v6954, %v9970
  %v9972 = vsel %vm9235, %v6961, %v9971
  %v9973 = vsel %vm9237, %v6968, %v9972
  %v9974 = vsel %vm9225, %v6982, %v6975
  %v9975 = vsel %vm9227, %v6989, %v9974
  %v9976 = vsel %vm9229, %v6996, %v9975
  %v9977 = vsel %vm9231, %v7003, %v9976
  %v9978 = vsel %vm9233, %v7010, %v9977
  %v9979 = vsel %vm9235, %v7017, %v9978
  %v9980 = vsel %vm9237, %v7024, %v9979
  %v9981 = vsel %vm9225, %v7038, %v7031
  %v9982 = vsel %vm9227, %v7045, %v9981
  %v9983 = vsel %vm9229, %v7052, %v9982
  %v9984 = vsel %vm9231, %v7059, %v9983
  %v9985 = vsel %vm9233, %v7066, %v9984
  %v9986 = vsel %vm9235, %v7073, %v9985
  %v9987 = vsel %vm9237, %v7080, %v9986
  %v9988 = vsel %vm9225, %v7094, %v7087
  %v9989 = vsel %vm9227, %v7101, %v9988
  %v9990 = vsel %vm9229, %v7108, %v9989
  %v9991 = vsel %vm9231, %v7115, %v9990
  %v9992 = vsel %vm9233, %v7122, %v9991
  %v9993 = vsel %vm9235, %v7129, %v9992
  %v9994 = vsel %vm9237, %v7136, %v9993
  %v9995 = vsel %vm9225, %v7150, %v7143
  %v9996 = vsel %vm9227, %v7157, %v9995
  %v9997 = vsel %vm9229, %v7164, %v9996
  %v9998 = vsel %vm9231, %v7171, %v9997
  %v9999 = vsel %vm9233, %v7178, %v9998
  %v10000 = vsel %vm9235, %v7185, %v9999
  %v10001 = vsel %vm9237, %v7192, %v10000
  %v10002 = vsel %vm9225, %v7206, %v7199
  %v10003 = vsel %vm9227, %v7213, %v10002
  %v10004 = vsel %vm9229, %v7220, %v10003
  %v10005 = vsel %vm9231, %v7227, %v10004
  %v10006 = vsel %vm9233, %v7234, %v10005
  %v10007 = vsel %vm9235, %v7241, %v10006
  %v10008 = vsel %vm9237, %v7248, %v10007
  %v10009 = vsel %vm9225, %v7262, %v7255
  %v10010 = vsel %vm9227, %v7269, %v10009
  %v10011 = vsel %vm9229, %v7276, %v10010
  %v10012 = vsel %vm9231, %v7283, %v10011
  %v10013 = vsel %vm9233, %v7290, %v10012
  %v10014 = vsel %vm9235, %v7297, %v10013
  %v10015 = vsel %vm9237, %v7304, %v10014
  %v10016 = vsel %vm9225, %v7318, %v7311
  %v10017 = vsel %vm9227, %v7325, %v10016
  %v10018 = vsel %vm9229, %v7332, %v10017
  %v10019 = vsel %vm9231, %v7339, %v10018
  %v10020 = vsel %vm9233, %v7346, %v10019
  %v10021 = vsel %vm9235, %v7353, %v10020
  %v10022 = vsel %vm9237, %v7360, %v10021
  %v10023 = vsel %vm9225, %v7374, %v7367
  %v10024 = vsel %vm9227, %v7381, %v10023
  %v10025 = vsel %vm9229, %v7388, %v10024
  %v10026 = vsel %vm9231, %v7395, %v10025
  %v10027 = vsel %vm9233, %v7402, %v10026
  %v10028 = vsel %vm9235, %v7409, %v10027
  %v10029 = vsel %vm9237, %v7416, %v10028
  %v10030 = vsel %vm9225, %v7430, %v7423
  %v10031 = vsel %vm9227, %v7437, %v10030
  %v10032 = vsel %vm9229, %v7444, %v10031
  %v10033 = vsel %vm9231, %v7451, %v10032
  %v10034 = vsel %vm9233, %v7458, %v10033
  %v10035 = vsel %vm9235, %v7465, %v10034
  %v10036 = vsel %vm9237, %v7472, %v10035
  %v10037 = vsel %vm9225, %v7486, %v7479
  %v10038 = vsel %vm9227, %v7493, %v10037
  %v10039 = vsel %vm9229, %v7500, %v10038
  %v10040 = vsel %vm9231, %v7507, %v10039
  %v10041 = vsel %vm9233, %v7514, %v10040
  %v10042 = vsel %vm9235, %v7521, %v10041
  %v10043 = vsel %vm9237, %v7528, %v10042
  %v10044 = vsel %vm9225, %v7542, %v7535
  %v10045 = vsel %vm9227, %v7549, %v10044
  %v10046 = vsel %vm9229, %v7556, %v10045
  %v10047 = vsel %vm9231, %v7563, %v10046
  %v10048 = vsel %vm9233, %v7570, %v10047
  %v10049 = vsel %vm9235, %v7577, %v10048
  %v10050 = vsel %vm9237, %v7584, %v10049
  %v10051 = vsel %vm9225, %v7598, %v7591
  %v10052 = vsel %vm9227, %v7605, %v10051
  %v10053 = vsel %vm9229, %v7612, %v10052
  %v10054 = vsel %vm9231, %v7619, %v10053
  %v10055 = vsel %vm9233, %v7626, %v10054
  %v10056 = vsel %vm9235, %v7633, %v10055
  %v10057 = vsel %vm9237, %v7640, %v10056
  %v10058 = vsel %vm9225, %v7654, %v7647
  %v10059 = vsel %vm9227, %v7661, %v10058
  %v10060 = vsel %vm9229, %v7668, %v10059
  %v10061 = vsel %vm9231, %v7675, %v10060
  %v10062 = vsel %vm9233, %v7682, %v10061
  %v10063 = vsel %vm9235, %v7689, %v10062
  %v10064 = vsel %vm9237, %v7696, %v10063
  %v10065 = vsel %vm9225, %v7710, %v7703
  %v10066 = vsel %vm9227, %v7717, %v10065
  %v10067 = vsel %vm9229, %v7724, %v10066
  %v10068 = vsel %vm9231, %v7731, %v10067
  %v10069 = vsel %vm9233, %v7738, %v10068
  %v10070 = vsel %vm9235, %v7745, %v10069
  %v10071 = vsel %vm9237, %v7752, %v10070
  %v10072 = vsel %vm9225, %v7766, %v7759
  %v10073 = vsel %vm9227, %v7773, %v10072
  %v10074 = vsel %vm9229, %v7780, %v10073
  %v10075 = vsel %vm9231, %v7787, %v10074
  %v10076 = vsel %vm9233, %v7794, %v10075
  %v10077 = vsel %vm9235, %v7801, %v10076
  %v10078 = vsel %vm9237, %v7808, %v10077
  %v10079 = vsel %vm9225, %v7822, %v7815
  %v10080 = vsel %vm9227, %v7829, %v10079
  %v10081 = vsel %vm9229, %v7836, %v10080
  %v10082 = vsel %vm9231, %v7843, %v10081
  %v10083 = vsel %vm9233, %v7850, %v10082
  %v10084 = vsel %vm9235, %v7857, %v10083
  %v10085 = vsel %vm9237, %v7864, %v10084
  %v10086 = vsel %vm9225, %v7878, %v7871
  %v10087 = vsel %vm9227, %v7885, %v10086
  %v10088 = vsel %vm9229, %v7892, %v10087
  %v10089 = vsel %vm9231, %v7899, %v10088
  %v10090 = vsel %vm9233, %v7906, %v10089
  %v10091 = vsel %vm9235, %v7913, %v10090
  %v10092 = vsel %vm9237, %v7920, %v10091
  %v10093 = vsel %vm9225, %v7934, %v7927
  %v10094 = vsel %vm9227, %v7941, %v10093
  %v10095 = vsel %vm9229, %v7948, %v10094
  %v10096 = vsel %vm9231, %v7955, %v10095
  %v10097 = vsel %vm9233, %v7962, %v10096
  %v10098 = vsel %vm9235, %v7969, %v10097
  %v10099 = vsel %vm9237, %v7976, %v10098
  %v10100 = vsel %vm9225, %v7990, %v7983
  %v10101 = vsel %vm9227, %v7997, %v10100
  %v10102 = vsel %vm9229, %v8004, %v10101
  %v10103 = vsel %vm9231, %v8011, %v10102
  %v10104 = vsel %vm9233, %v8018, %v10103
  %v10105 = vsel %vm9235, %v8025, %v10104
  %v10106 = vsel %vm9237, %v8032, %v10105
  %v10107 = vsel %vm9225, %v8046, %v8039
  %v10108 = vsel %vm9227, %v8053, %v10107
  %v10109 = vsel %vm9229, %v8060, %v10108
  %v10110 = vsel %vm9231, %v8067, %v10109
  %v10111 = vsel %vm9233, %v8074, %v10110
  %v10112 = vsel %vm9235, %v8081, %v10111
  %v10113 = vsel %vm9237, %v8088, %v10112
  %v10114 = vsel %vm9225, %v8102, %v8095
  %v10115 = vsel %vm9227, %v8109, %v10114
  %v10116 = vsel %vm9229, %v8116, %v10115
  %v10117 = vsel %vm9231, %v8123, %v10116
  %v10118 = vsel %vm9233, %v8130, %v10117
  %v10119 = vsel %vm9235, %v8137, %v10118
  %v10120 = vsel %vm9237, %v8144, %v10119
  %v10121 = vsel %vm9225, %v8158, %v8151
  %v10122 = vsel %vm9227, %v8165, %v10121
  %v10123 = vsel %vm9229, %v8172, %v10122
  %v10124 = vsel %vm9231, %v8179, %v10123
  %v10125 = vsel %vm9233, %v8186, %v10124
  %v10126 = vsel %vm9235, %v8193, %v10125
  %v10127 = vsel %vm9237, %v8200, %v10126
  %10256 = vst.msk [vmem:[%s1] sm:$0xff] %vm1032, %v9238
  %10257 = vst.msk [vmem:[%s1 + $0x8] sm:$0xff] %vm1032, %v9245
  %10258 = vst.msk [vmem:[%s1 + $0x10] sm:$0xff] %vm1032, %v9252
  %10259 = vst.msk [vmem:[%s1 + $0x18] sm:$0xff] %vm1032, %v9259
  %10260 = vst.msk [vmem:[%s1 + $0x20] sm:$0xff] %vm1032, %v9266
  %10261 = vst.msk [vmem:[%s1 + $0x28] sm:$0xff] %vm1032, %v9273
  %10262 = vst.msk [vmem:[%s1 + $0x30] sm:$0xff] %vm1032, %v9280
  %10263 = vst.msk [vmem:[%s1 + $0x38] sm:$0xff] %vm1032, %v9287
  %10264 = vst.msk [vmem:[%s1 + $0x40] sm:$0xff] %vm1032, %v9294
  %10265 = vst.msk [vmem:[%s1 + $0x48] sm:$0xff] %vm1032, %v9301
  %10266 = vst.msk [vmem:[%s1 + $0x50] sm:$0xff] %vm1032, %v9308
  %10267 = vst.msk [vmem:[%s1 + $0x58] sm:$0xff] %vm1032, %v9315
  %10268 = vst.msk [vmem:[%s1 + $0x60] sm:$0xff] %vm1032, %v9322
  %10269 = vst.msk [vmem:[%s1 + $0x68] sm:$0xff] %vm1032, %v9329
  %10270 = vst.msk [vmem:[%s1 + $0x70] sm:$0xff] %vm1032, %v9336
  %10271 = vst.msk [vmem:[%s1 + $0x78] sm:$0xff] %vm1032, %v9343
  %10272 = vst.msk [vmem:[%s1 + $0x80] sm:$0xff] %vm1032, %v9350
  %10273 = vst.msk [vmem:[%s1 + $0x88] sm:$0xff] %vm1032, %v9357
  %10274 = vst.msk [vmem:[%s1 + $0x90] sm:$0xff] %vm1032, %v9364
  %10275 = vst.msk [vmem:[%s1 + $0x98] sm:$0xff] %vm1032, %v9371
  %10276 = vst.msk [vmem:[%s1 + $0xa0] sm:$0xff] %vm1032, %v9378
  %10277 = vst.msk [vmem:[%s1 + $0xa8] sm:$0xff] %vm1032, %v9385
  %10278 = vst.msk [vmem:[%s1 + $0xb0] sm:$0xff] %vm1032, %v9392
  %10279 = vst.msk [vmem:[%s1 + $0xb8] sm:$0xff] %vm1032, %v9399
  %10280 = vst.msk [vmem:[%s1 + $0xc0] sm:$0xff] %vm1032, %v9406
  %10281 = vst.msk [vmem:[%s1 + $0xc8] sm:$0xff] %vm1032, %v9413
  %10282 = vst.msk [vmem:[%s1 + $0xd0] sm:$0xff] %vm1032, %v9420
  %10283 = vst.msk [vmem:[%s1 + $0xd8] sm:$0xff] %vm1032, %v9427
  %10284 = vst.msk [vmem:[%s1 + $0xe0] sm:$0xff] %vm1032, %v9434
  %10285 = vst.msk [vmem:[%s1 + $0xe8] sm:$0xff] %vm1032, %v9441
  %10286 = vst.msk [vmem:[%s1 + $0xf0] sm:$0xff] %vm1032, %v9448
  %10287 = vst.msk [vmem:[%s1 + $0xf8] sm:$0xff] %vm1032, %v9455
  %10288 = vst.msk [vmem:[%s1 + $0x100] sm:$0xff] %vm1032, %v9462
  %10289 = vst.msk [vmem:[%s1 + $0x108] sm:$0xff] %vm1032, %v9469
  %10290 = vst.msk [vmem:[%s1 + $0x110] sm:$0xff] %vm1032, %v9476
  %10291 = vst.msk [vmem:[%s1 + $0x118] sm:$0xff] %vm1032, %v9483
  %10292 = vst.msk [vmem:[%s1 + $0x120] sm:$0xff] %vm1032, %v9490
  %10293 = vst.msk [vmem:[%s1 + $0x128] sm:$0xff] %vm1032, %v9497
  %10294 = vst.msk [vmem:[%s1 + $0x130] sm:$0xff] %vm1032, %v9504
  %10295 = vst.msk [vmem:[%s1 + $0x138] sm:$0xff] %vm1032, %v9511
  %10296 = vst.msk [vmem:[%s1 + $0x140] sm:$0xff] %vm1032, %v9518
  %10297 = vst.msk [vmem:[%s1 + $0x148] sm:$0xff] %vm1032, %v9525
  %10298 = vst.msk [vmem:[%s1 + $0x150] sm:$0xff] %vm1032, %v9532
  %10299 = vst.msk [vmem:[%s1 + $0x158] sm:$0xff] %vm1032, %v9539
  %10300 = vst.msk [vmem:[%s1 + $0x160] sm:$0xff] %vm1032, %v9546
  %10301 = vst.msk [vmem:[%s1 + $0x168] sm:$0xff] %vm1032, %v9553
  %10302 = vst.msk [vmem:[%s1 + $0x170] sm:$0xff] %vm1032, %v9560
  %10303 = vst.msk [vmem:[%s1 + $0x178] sm:$0xff] %vm1032, %v9567
  %10304 = vst.msk [vmem:[%s1 + $0x180] sm:$0xff] %vm1032, %v9574
  %10305 = vst.msk [vmem:[%s1 + $0x188] sm:$0xff] %vm1032, %v9581
  %10306 = vst.msk [vmem:[%s1 + $0x190] sm:$0xff] %vm1032, %v9588
  %10307 = vst.msk [vmem:[%s1 + $0x198] sm:$0xff] %vm1032, %v9595
  %10308 = vst.msk [vmem:[%s1 + $0x1a0] sm:$0xff] %vm1032, %v9602
  %10309 = vst.msk [vmem:[%s1 + $0x1a8] sm:$0xff] %vm1032, %v9609
  %10310 = vst.msk [vmem:[%s1 + $0x1b0] sm:$0xff] %vm1032, %v9616
  %10311 = vst.msk [vmem:[%s1 + $0x1b8] sm:$0xff] %vm1032, %v9623
  %10312 = vst.msk [vmem:[%s1 + $0x1c0] sm:$0xff] %vm1032, %v9630
  %10313 = vst.msk [vmem:[%s1 + $0x1c8] sm:$0xff] %vm1032, %v9637
  %10314 = vst.msk [vmem:[%s1 + $0x1d0] sm:$0xff] %vm1032, %v9644
  %10315 = vst.msk [vmem:[%s1 + $0x1d8] sm:$0xff] %vm1032, %v9651
  %10316 = vst.msk [vmem:[%s1 + $0x1e0] sm:$0xff] %vm1032, %v9658
  %10317 = vst.msk [vmem:[%s1 + $0x1e8] sm:$0xff] %vm1032, %v9665
  %10318 = vst.msk [vmem:[%s1 + $0x1f0] sm:$0xff] %vm1032, %v9672
  %10319 = vst.msk [vmem:[%s1 + $0x1f8] sm:$0xff] %vm1032, %v9679
  %10320 = vst.msk [vmem:[%s1 + $0x200] sm:$0xff] %vm1032, %v9686
  %10321 = vst.msk [vmem:[%s1 + $0x208] sm:$0xff] %vm1032, %v9693
  %10322 = vst.msk [vmem:[%s1 + $0x210] sm:$0xff] %vm1032, %v9700
  %10323 = vst.msk [vmem:[%s1 + $0x218] sm:$0xff] %vm1032, %v9707
  %10324 = vst.msk [vmem:[%s1 + $0x220] sm:$0xff] %vm1032, %v9714
  %10325 = vst.msk [vmem:[%s1 + $0x228] sm:$0xff] %vm1032, %v9721
  %10326 = vst.msk [vmem:[%s1 + $0x230] sm:$0xff] %vm1032, %v9728
  %10327 = vst.msk [vmem:[%s1 + $0x238] sm:$0xff] %vm1032, %v9735
  %10328 = vst.msk [vmem:[%s1 + $0x240] sm:$0xff] %vm1032, %v9742
  %10329 = vst.msk [vmem:[%s1 + $0x248] sm:$0xff] %vm1032, %v9749
  %10330 = vst.msk [vmem:[%s1 + $0x250] sm:$0xff] %vm1032, %v9756
  %10331 = vst.msk [vmem:[%s1 + $0x258] sm:$0xff] %vm1032, %v9763
  %10332 = vst.msk [vmem:[%s1 + $0x260] sm:$0xff] %vm1032, %v9770
  %10333 = vst.msk [vmem:[%s1 + $0x268] sm:$0xff] %vm1032, %v9777
  %10334 = vst.msk [vmem:[%s1 + $0x270] sm:$0xff] %vm1032, %v9784
  %10335 = vst.msk [vmem:[%s1 + $0x278] sm:$0xff] %vm1032, %v9791
  %10336 = vst.msk [vmem:[%s1 + $0x280] sm:$0xff] %vm1032, %v9798
  %10337 = vst.msk [vmem:[%s1 + $0x288] sm:$0xff] %vm1032, %v9805
  %10338 = vst.msk [vmem:[%s1 + $0x290] sm:$0xff] %vm1032, %v9812
  %10339 = vst.msk [vmem:[%s1 + $0x298] sm:$0xff] %vm1032, %v9819
  %10340 = vst.msk [vmem:[%s1 + $0x2a0] sm:$0xff] %vm1032, %v9826
  %10341 = vst.msk [vmem:[%s1 + $0x2a8] sm:$0xff] %vm1032, %v9833
  %10342 = vst.msk [vmem:[%s1 + $0x2b0] sm:$0xff] %vm1032, %v9840
  %10343 = vst.msk [vmem:[%s1 + $0x2b8] sm:$0xff] %vm1032, %v9847
  %10344 = vst.msk [vmem:[%s1 + $0x2c0] sm:$0xff] %vm1032, %v9854
  %10345 = vst.msk [vmem:[%s1 + $0x2c8] sm:$0xff] %vm1032, %v9861
  %10346 = vst.msk [vmem:[%s1 + $0x2d0] sm:$0xff] %vm1032, %v9868
  %10347 = vst.msk [vmem:[%s1 + $0x2d8] sm:$0xff] %vm1032, %v9875
  %10348 = vst.msk [vmem:[%s1 + $0x2e0] sm:$0xff] %vm1032, %v9882
  %10349 = vst.msk [vmem:[%s1 + $0x2e8] sm:$0xff] %vm1032, %v9889
  %10350 = vst.msk [vmem:[%s1 + $0x2f0] sm:$0xff] %vm1032, %v9896
  %10351 = vst.msk [vmem:[%s1 + $0x2f8] sm:$0xff] %vm1032, %v9903
  %10352 = vst.msk [vmem:[%s1 + $0x300] sm:$0xff] %vm1032, %v9910
  %10353 = vst.msk [vmem:[%s1 + $0x308] sm:$0xff] %vm1032, %v9917
  %10354 = vst.msk [vmem:[%s1 + $0x310] sm:$0xff] %vm1032, %v9924
  %10355 = vst.msk [vmem:[%s1 + $0x318] sm:$0xff] %vm1032, %v9931
  %10356 = vst.msk [vmem:[%s1 + $0x320] sm:$0xff] %vm1032, %v9938
  %10357 = vst.msk [vmem:[%s1 + $0x328] sm:$0xff] %vm1032, %v9945
  %10358 = vst.msk [vmem:[%s1 + $0x330] sm:$0xff] %vm1032, %v9952
  %10359 = vst.msk [vmem:[%s1 + $0x338] sm:$0xff] %vm1032, %v9959
  %10360 = vst.msk [vmem:[%s1 + $0x340] sm:$0xff] %vm1032, %v9966
  %10361 = vst.msk [vmem:[%s1 + $0x348] sm:$0xff] %vm1032, %v9973
  %10362 = vst.msk [vmem:[%s1 + $0x350] sm:$0xff] %vm1032, %v9980
  %10363 = vst.msk [vmem:[%s1 + $0x358] sm:$0xff] %vm1032, %v9987
  %10364 = vst.msk [vmem:[%s1 + $0x360] sm:$0xff] %vm1032, %v9994
  %10365 = vst.msk [vmem:[%s1 + $0x368] sm:$0xff] %vm1032, %v10001
  %10366 = vst.msk [vmem:[%s1 + $0x370] sm:$0xff] %vm1032, %v10008
  %10367 = vst.msk [vmem:[%s1 + $0x378] sm:$0xff] %vm1032, %v10015
  %10368 = vst.msk [vmem:[%s1 + $0x380] sm:$0xff] %vm1032, %v10022
  %10369 = vst.msk [vmem:[%s1 + $0x388] sm:$0xff] %vm1032, %v10029
  %10370 = vst.msk [vmem:[%s1 + $0x390] sm:$0xff] %vm1032, %v10036
  %10371 = vst.msk [vmem:[%s1 + $0x398] sm:$0xff] %vm1032, %v10043
  %10372 = vst.msk [vmem:[%s1 + $0x3a0] sm:$0xff] %vm1032, %v10050
  %10373 = vst.msk [vmem:[%s1 + $0x3a8] sm:$0xff] %vm1032, %v10057
  %10374 = vst.msk [vmem:[%s1 + $0x3b0] sm:$0xff] %vm1032, %v10064
  %10375 = vst.msk [vmem:[%s1 + $0x3b8] sm:$0xff] %vm1032, %v10071
  %10376 = vst.msk [vmem:[%s1 + $0x3c0] sm:$0xff] %vm1032, %v10078
  %10377 = vst.msk [vmem:[%s1 + $0x3c8] sm:$0xff] %vm1032, %v10085
  %10378 = vst.msk [vmem:[%s1 + $0x3d0] sm:$0xff] %vm1032, %v10092
  %10379 = vst.msk [vmem:[%s1 + $0x3d8] sm:$0xff] %vm1032, %v10099
  %10380 = vst.msk [vmem:[%s1 + $0x3e0] sm:$0xff] %vm1032, %v10106
  %10381 = vst.msk [vmem:[%s1 + $0x3e8] sm:$0xff] %vm1032, %v10113
  %10382 = vst.msk [vmem:[%s1 + $0x3f0] sm:$0xff] %vm1032, %v10120
  %10383 = vst.msk [vmem:[%s1 + $0x3f8] sm:$0xff] %vm1032, %v10127
  // Predicated region
  $region6: #{down_forward.4} parent=0 // pred_check
    _
  $region7: #{down_forward.4} parent=0 // pred_check_branch
    %10385 = sbr.rel (0) target = $region9
  $region8: #{down_forward.4} parent=0 // pred_region
    _
  $region9: #{down_forward.4} parent=0 // pred_fallthru
    _
  // Predicated region
  $region10: #{down_forward.4} parent=0 // pred_check
    _
  $region11: #{down_forward.4} parent=0 // pred_check_branch
    %10387 = sbr.rel (0) target = $region13
  $region12: #{down_forward.4} parent=0 // pred_region
    _
  $region13: #{down_forward.4} parent=0 // pred_fallthru
    _

// kernel: down_forward.5
$region0: #{down_forward.5}
  #allocation0 [shape = 'u32[]', space=smem, size = 0x4, offset = 0x4, fixed_abs, tag = 'smem constant byte address 0x4 - core index']
  #allocation1 [shape = 'u32[144,128]{1,0:T(1,128)}', space=vmem, size = 0x12000, scoped, tag = 'internal scratch']
  %s0 = inlined_call_operand.vmem [shape: bf16[1024,108], index: 0, kind: input, shape index: {}]
  %s1 = inlined_call_operand.vmem [shape: bf16[108,128], index: 1, kind: input, shape index: {}]
  %s2 = inlined_call_operand.vmem [shape: f32[1,128], index: 2, kind: input, shape index: {}]
  %s3 = inlined_call_operand.vmem [shape: f32[1024,128], index: 3, kind: output, shape index: {0}]
  %s4 = inlined_call_operand.vmem [shape: f32[8,128], index: 4, kind: output, shape index: {1}]
  %5 = xla_tuple %s3, %s4
  %s6 = sld [smem:[#allocation0]]
  $region30: #{down_forward.5} parent=0
    _
  %s8 = ssub.s32 1, %s6
  %s9 = scalar_select 0, %s8, %s6
  // Predicated region
  $region2: #{down_forward.5} parent=0 // pred_check
    _
  $region3: #{down_forward.5} parent=0 // pred_check_branch
    %11 = sbr.rel (0) target = $region5
  $region4: #{down_forward.5} parent=0 // pred_region
    _
  $region5: #{down_forward.5} parent=0 // pred_fallthru
    _
  // Predicated region
  $region6: #{down_forward.5} parent=0 // pred_check
    _
  $region7: #{down_forward.5} parent=0 // pred_check_branch
    %13 = sbr.rel (0) target = $region9
  $region8: #{down_forward.5} parent=0 // pred_region
    _
  $region9: #{down_forward.5} parent=0 // pred_fallthru
    _
  // Predicated region
  $region10: #{down_forward.5} parent=0 // pred_check
    _
  $region11: #{down_forward.5} parent=0 // pred_check_branch
    %15 = sbr.rel (0) target = $region13
  $region12: #{down_forward.5} parent=0 // pred_region
    _
  $region13: #{down_forward.5} parent=0 // pred_fallthru
    _
  %v17 = vld [vmem:[%s0] sm:$0xf]
  %v18 = vld [vmem:[%s0 + $0x4] sm:$0xf]
  %v19 = vld [vmem:[%s0 + $0x8] sm:$0xf]
  %v20 = vld [vmem:[%s0 + $0xc] sm:$0xf]
  %v21 = vld [vmem:[%s0 + $0x10] sm:$0xf]
  %v22 = vld [vmem:[%s0 + $0x14] sm:$0xf]
  %v23 = vld [vmem:[%s0 + $0x18] sm:$0xf]
  %v24 = vld [vmem:[%s0 + $0x1c] sm:$0xf]
  %v25 = vld [vmem:[%s0 + $0x20] sm:$0xf]
  %v26 = vld [vmem:[%s0 + $0x24] sm:$0xf]
  %v27 = vld [vmem:[%s0 + $0x28] sm:$0xf]
  %v28 = vld [vmem:[%s0 + $0x2c] sm:$0xf]
  %v29 = vld [vmem:[%s0 + $0x30] sm:$0xf]
  %v30 = vld [vmem:[%s0 + $0x34] sm:$0xf]
  %v31 = vld [vmem:[%s0 + $0x38] sm:$0xf]
  %v32 = vld [vmem:[%s0 + $0x3c] sm:$0xf]
  %v33 = vld [vmem:[%s0 + $0x40] sm:$0xf]
  %v34 = vld [vmem:[%s0 + $0x44] sm:$0xf]
  %v35 = vld [vmem:[%s0 + $0x48] sm:$0xf]
  %v36 = vld [vmem:[%s0 + $0x4c] sm:$0xf]
  %v37 = vld [vmem:[%s0 + $0x50] sm:$0xf]
  %v38 = vld [vmem:[%s0 + $0x54] sm:$0xf]
  %v39 = vld [vmem:[%s0 + $0x58] sm:$0xf]
  %v40 = vld [vmem:[%s0 + $0x5c] sm:$0xf]
  %v41 = vld [vmem:[%s0 + $0x60] sm:$0xf]
  %v42 = vld [vmem:[%s0 + $0x64] sm:$0xf]
  %v43 = vld [vmem:[%s0 + $0x68] sm:$0xf]
  %v44 = vld [vmem:[%s0 + $0x6c] sm:$0xf]
  %v45 = vld [vmem:[%s0 + $0x70] sm:$0xf]
  %v46 = vld [vmem:[%s0 + $0x74] sm:$0xf]
  %v47 = vld [vmem:[%s0 + $0x78] sm:$0xf]
  %v48 = vld [vmem:[%s0 + $0x7c] sm:$0xf]
  %v49 = vld [vmem:[%s0 + $0x80] sm:$0xf]
  %v50 = vld [vmem:[%s0 + $0x84] sm:$0xf]
  %v51 = vld [vmem:[%s0 + $0x88] sm:$0xf]
  %v52 = vld [vmem:[%s0 + $0x8c] sm:$0xf]
  %v53 = vld [vmem:[%s0 + $0x90] sm:$0xf]
  %v54 = vld [vmem:[%s0 + $0x94] sm:$0xf]
  %v55 = vld [vmem:[%s0 + $0x98] sm:$0xf]
  %v56 = vld [vmem:[%s0 + $0x9c] sm:$0xf]
  %v57 = vld [vmem:[%s0 + $0xa0] sm:$0xf]
  %v58 = vld [vmem:[%s0 + $0xa4] sm:$0xf]
  %v59 = vld [vmem:[%s0 + $0xa8] sm:$0xf]
  %v60 = vld [vmem:[%s0 + $0xac] sm:$0xf]
  %v61 = vld [vmem:[%s0 + $0xb0] sm:$0xf]
  %v62 = vld [vmem:[%s0 + $0xb4] sm:$0xf]
  %v63 = vld [vmem:[%s0 + $0xb8] sm:$0xf]
  %v64 = vld [vmem:[%s0 + $0xbc] sm:$0xf]
  %v65 = vld [vmem:[%s0 + $0xc0] sm:$0xf]
  %v66 = vld [vmem:[%s0 + $0xc4] sm:$0xf]
  %v67 = vld [vmem:[%s0 + $0xc8] sm:$0xf]
  %v68 = vld [vmem:[%s0 + $0xcc] sm:$0xf]
  %v69 = vld [vmem:[%s0 + $0xd0] sm:$0xf]
  %v70 = vld [vmem:[%s0 + $0xd4] sm:$0xf]
  %v71 = vld [vmem:[%s0 + $0xd8] sm:$0xf]
  %v72 = vld [vmem:[%s0 + $0xdc] sm:$0xf]
  %v73 = vld [vmem:[%s0 + $0xe0] sm:$0xf]
  %v74 = vld [vmem:[%s0 + $0xe4] sm:$0xf]
  %v75 = vld [vmem:[%s0 + $0xe8] sm:$0xf]
  %v76 = vld [vmem:[%s0 + $0xec] sm:$0xf]
  %v77 = vld [vmem:[%s0 + $0xf0] sm:$0xf]
  %v78 = vld [vmem:[%s0 + $0xf4] sm:$0xf]
  %v79 = vld [vmem:[%s0 + $0xf8] sm:$0xf]
  %v80 = vld [vmem:[%s0 + $0xfc] sm:$0xf]
  %v81 = vld [vmem:[%s0 + $0x100] sm:$0xf]
  %v82 = vld [vmem:[%s0 + $0x104] sm:$0xf]
  %v83 = vld [vmem:[%s0 + $0x108] sm:$0xf]
  %v84 = vld [vmem:[%s0 + $0x10c] sm:$0xf]
  %v85 = vld [vmem:[%s0 + $0x110] sm:$0xf]
  %v86 = vld [vmem:[%s0 + $0x114] sm:$0xf]
  %v87 = vld [vmem:[%s0 + $0x118] sm:$0xf]
  %v88 = vld [vmem:[%s0 + $0x11c] sm:$0xf]
  %v89 = vld [vmem:[%s0 + $0x120] sm:$0xf]
  %v90 = vld [vmem:[%s0 + $0x124] sm:$0xf]
  %v91 = vld [vmem:[%s0 + $0x128] sm:$0xf]
  %v92 = vld [vmem:[%s0 + $0x12c] sm:$0xf]
  %v93 = vld [vmem:[%s0 + $0x130] sm:$0xf]
  %v94 = vld [vmem:[%s0 + $0x134] sm:$0xf]
  %v95 = vld [vmem:[%s0 + $0x138] sm:$0xf]
  %v96 = vld [vmem:[%s0 + $0x13c] sm:$0xf]
  %v97 = vld [vmem:[%s0 + $0x140] sm:$0xf]
  %v98 = vld [vmem:[%s0 + $0x144] sm:$0xf]
  %v99 = vld [vmem:[%s0 + $0x148] sm:$0xf]
  %v100 = vld [vmem:[%s0 + $0x14c] sm:$0xf]
  %v101 = vld [vmem:[%s0 + $0x150] sm:$0xf]
  %v102 = vld [vmem:[%s0 + $0x154] sm:$0xf]
  %v103 = vld [vmem:[%s0 + $0x158] sm:$0xf]
  %v104 = vld [vmem:[%s0 + $0x15c] sm:$0xf]
  %v105 = vld [vmem:[%s0 + $0x160] sm:$0xf]
  %v106 = vld [vmem:[%s0 + $0x164] sm:$0xf]
  %v107 = vld [vmem:[%s0 + $0x168] sm:$0xf]
  %v108 = vld [vmem:[%s0 + $0x16c] sm:$0xf]
  %v109 = vld [vmem:[%s0 + $0x170] sm:$0xf]
  %v110 = vld [vmem:[%s0 + $0x174] sm:$0xf]
  %v111 = vld [vmem:[%s0 + $0x178] sm:$0xf]
  %v112 = vld [vmem:[%s0 + $0x17c] sm:$0xf]
  %v113 = vld [vmem:[%s0 + $0x180] sm:$0xf]
  %v114 = vld [vmem:[%s0 + $0x184] sm:$0xf]
  %v115 = vld [vmem:[%s0 + $0x188] sm:$0xf]
  %v116 = vld [vmem:[%s0 + $0x18c] sm:$0xf]
  %v117 = vld [vmem:[%s0 + $0x190] sm:$0xf]
  %v118 = vld [vmem:[%s0 + $0x194] sm:$0xf]
  %v119 = vld [vmem:[%s0 + $0x198] sm:$0xf]
  %v120 = vld [vmem:[%s0 + $0x19c] sm:$0xf]
  %v121 = vld [vmem:[%s0 + $0x1a0] sm:$0xf]
  %v122 = vld [vmem:[%s0 + $0x1a4] sm:$0xf]
  %v123 = vld [vmem:[%s0 + $0x1a8] sm:$0xf]
  %v124 = vld [vmem:[%s0 + $0x1ac] sm:$0xf]
  %v125 = vld [vmem:[%s0 + $0x1b0] sm:$0xf]
  %v126 = vld [vmem:[%s0 + $0x1b4] sm:$0xf]
  %v127 = vld [vmem:[%s0 + $0x1b8] sm:$0xf]
  %v128 = vld [vmem:[%s0 + $0x1bc] sm:$0xf]
  %v129 = vld [vmem:[%s0 + $0x1c0] sm:$0xf]
  %v130 = vld [vmem:[%s0 + $0x1c4] sm:$0xf]
  %v131 = vld [vmem:[%s0 + $0x1c8] sm:$0xf]
  %v132 = vld [vmem:[%s0 + $0x1cc] sm:$0xf]
  %v133 = vld [vmem:[%s0 + $0x1d0] sm:$0xf]
  %v134 = vld [vmem:[%s0 + $0x1d4] sm:$0xf]
  %v135 = vld [vmem:[%s0 + $0x1d8] sm:$0xf]
  %v136 = vld [vmem:[%s0 + $0x1dc] sm:$0xf]
  %v137 = vld [vmem:[%s0 + $0x1e0] sm:$0xf]
  %v138 = vld [vmem:[%s0 + $0x1e4] sm:$0xf]
  %v139 = vld [vmem:[%s0 + $0x1e8] sm:$0xf]
  %v140 = vld [vmem:[%s0 + $0x1ec] sm:$0xf]
  %v141 = vld [vmem:[%s0 + $0x1f0] sm:$0xf]
  %v142 = vld [vmem:[%s0 + $0x1f4] sm:$0xf]
  %v143 = vld [vmem:[%s0 + $0x1f8] sm:$0xf]
  %v144 = vld [vmem:[%s0 + $0x1fc] sm:$0xf]
  %v145 = vld [vmem:[%s1] sm:$0xf]
  %v146 = vld [vmem:[%s1 + $0x4] sm:$0xf]
  %v147 = vld [vmem:[%s1 + $0x8] sm:$0xf]
  %v148 = vld [vmem:[%s1 + $0xc] sm:$0xf]
  %v149 = vld [vmem:[%s1 + $0x10] sm:$0xf]
  %v150 = vld [vmem:[%s1 + $0x14] sm:$0xf]
  %v151 = vld [vmem:[%s1 + $0x18] sm:$0xf]
  %v152 = vld [vmem:[%s1 + $0x1c] sm:$0xf]
  %v153 = vld [vmem:[%s1 + $0x20] sm:$0xf]
  %v154 = vld [vmem:[%s1 + $0x24] sm:$0xf]
  %v155 = vld [vmem:[%s1 + $0x28] sm:$0xf]
  %v156 = vld [vmem:[%s1 + $0x2c] sm:$0xf]
  %v157 = vld [vmem:[%s1 + $0x30] sm:$0xf]
  %v158 = vld [vmem:[%s1 + $0x34] sm:$0x3]
  %v159 = vld [vmem:[%s2] sm:$0x1]
  %v161 = vlaneseq
  %v162 = vshrl.u32 %v161, 7
  %v163 = vsub.s32 0, %v162
  %v164 = vrot.slane %v159, %v163
  %v294 = vunpack.c.l.b16 %v17
  %v295 = vunpack.c.l.b16 %v18
  %v296 = vunpack.c.l.b16 %v19
  %v297 = vunpack.c.l.b16 %v20
  %v298 = vunpack.c.l.b16 %v21
  %v299 = vunpack.c.l.b16 %v22
  %v300 = vunpack.c.l.b16 %v23
  %v301 = vunpack.c.l.b16 %v24
  %v302 = vunpack.c.l.b16 %v25
  %v303 = vunpack.c.l.b16 %v26
  %v304 = vunpack.c.l.b16 %v27
  %v305 = vunpack.c.l.b16 %v28
  %v306 = vunpack.c.l.b16 %v29
  %v307 = vunpack.c.l.b16 %v30
  %v308 = vunpack.c.l.b16 %v31
  %v309 = vunpack.c.l.b16 %v32
  %v310 = vunpack.c.l.b16 %v33
  %v311 = vunpack.c.l.b16 %v34
  %v312 = vunpack.c.l.b16 %v35
  %v313 = vunpack.c.l.b16 %v36
  %v314 = vunpack.c.l.b16 %v37
  %v315 = vunpack.c.l.b16 %v38
  %v316 = vunpack.c.l.b16 %v39
  %v317 = vunpack.c.l.b16 %v40
  %v318 = vunpack.c.l.b16 %v41
  %v319 = vunpack.c.l.b16 %v42
  %v320 = vunpack.c.l.b16 %v43
  %v321 = vunpack.c.l.b16 %v44
  %v322 = vunpack.c.l.b16 %v45
  %v323 = vunpack.c.l.b16 %v46
  %v324 = vunpack.c.l.b16 %v47
  %v325 = vunpack.c.l.b16 %v48
  %v326 = vunpack.c.l.b16 %v49
  %v327 = vunpack.c.l.b16 %v50
  %v328 = vunpack.c.l.b16 %v51
  %v329 = vunpack.c.l.b16 %v52
  %v330 = vunpack.c.l.b16 %v53
  %v331 = vunpack.c.l.b16 %v54
  %v332 = vunpack.c.l.b16 %v55
  %v333 = vunpack.c.l.b16 %v56
  %v334 = vunpack.c.l.b16 %v57
  %v335 = vunpack.c.l.b16 %v58
  %v336 = vunpack.c.l.b16 %v59
  %v337 = vunpack.c.l.b16 %v60
  %v338 = vunpack.c.l.b16 %v61
  %v339 = vunpack.c.l.b16 %v62
  %v340 = vunpack.c.l.b16 %v63
  %v341 = vunpack.c.l.b16 %v64
  %v342 = vunpack.c.l.b16 %v65
  %v343 = vunpack.c.l.b16 %v66
  %v344 = vunpack.c.l.b16 %v67
  %v345 = vunpack.c.l.b16 %v68
  %v346 = vunpack.c.l.b16 %v69
  %v347 = vunpack.c.l.b16 %v70
  %v348 = vunpack.c.l.b16 %v71
  %v349 = vunpack.c.l.b16 %v72
  %v350 = vunpack.c.l.b16 %v73
  %v351 = vunpack.c.l.b16 %v74
  %v352 = vunpack.c.l.b16 %v75
  %v353 = vunpack.c.l.b16 %v76
  %v354 = vunpack.c.l.b16 %v77
  %v355 = vunpack.c.l.b16 %v78
  %v356 = vunpack.c.l.b16 %v79
  %v357 = vunpack.c.l.b16 %v80
  %v358 = vunpack.c.l.b16 %v81
  %v359 = vunpack.c.l.b16 %v82
  %v360 = vunpack.c.l.b16 %v83
  %v361 = vunpack.c.l.b16 %v84
  %v362 = vunpack.c.l.b16 %v85
  %v363 = vunpack.c.l.b16 %v86
  %v364 = vunpack.c.l.b16 %v87
  %v365 = vunpack.c.l.b16 %v88
  %v366 = vunpack.c.l.b16 %v89
  %v367 = vunpack.c.l.b16 %v90
  %v368 = vunpack.c.l.b16 %v91
  %v369 = vunpack.c.l.b16 %v92
  %v370 = vunpack.c.l.b16 %v93
  %v371 = vunpack.c.l.b16 %v94
  %v372 = vunpack.c.l.b16 %v95
  %v373 = vunpack.c.l.b16 %v96
  %v374 = vunpack.c.l.b16 %v97
  %v375 = vunpack.c.l.b16 %v98
  %v376 = vunpack.c.l.b16 %v99
  %v377 = vunpack.c.l.b16 %v100
  %v378 = vunpack.c.l.b16 %v101
  %v379 = vunpack.c.l.b16 %v102
  %v380 = vunpack.c.l.b16 %v103
  %v381 = vunpack.c.l.b16 %v104
  %v382 = vunpack.c.l.b16 %v105
  %v383 = vunpack.c.l.b16 %v106
  %v384 = vunpack.c.l.b16 %v107
  %v385 = vunpack.c.l.b16 %v108
  %v386 = vunpack.c.l.b16 %v109
  %v387 = vunpack.c.l.b16 %v110
  %v388 = vunpack.c.l.b16 %v111
  %v389 = vunpack.c.l.b16 %v112
  %v390 = vunpack.c.l.b16 %v113
  %v391 = vunpack.c.l.b16 %v114
  %v392 = vunpack.c.l.b16 %v115
  %v393 = vunpack.c.l.b16 %v116
  %v394 = vunpack.c.l.b16 %v117
  %v395 = vunpack.c.l.b16 %v118
  %v396 = vunpack.c.l.b16 %v119
  %v397 = vunpack.c.l.b16 %v120
  %v398 = vunpack.c.l.b16 %v121
  %v399 = vunpack.c.l.b16 %v122
  %v400 = vunpack.c.l.b16 %v123
  %v401 = vunpack.c.l.b16 %v124
  %v402 = vunpack.c.l.b16 %v125
  %v403 = vunpack.c.l.b16 %v126
  %v404 = vunpack.c.l.b16 %v127
  %v405 = vunpack.c.l.b16 %v128
  %v406 = vunpack.c.l.b16 %v129
  %v407 = vunpack.c.l.b16 %v130
  %v408 = vunpack.c.l.b16 %v131
  %v409 = vunpack.c.l.b16 %v132
  %v410 = vunpack.c.l.b16 %v133
  %v411 = vunpack.c.l.b16 %v134
  %v412 = vunpack.c.l.b16 %v135
  %v413 = vunpack.c.l.b16 %v136
  %v414 = vunpack.c.l.b16 %v137
  %v415 = vunpack.c.l.b16 %v138
  %v416 = vunpack.c.l.b16 %v139
  %v417 = vunpack.c.l.b16 %v140
  %v418 = vunpack.c.l.b16 %v141
  %v419 = vunpack.c.l.b16 %v142
  %v420 = vunpack.c.l.b16 %v143
  %v421 = vunpack.c.l.b16 %v144
  %v422 = vpack.c.b16 %v295, %v294
  %v423 = vpack.c.b16 %v297, %v296
  %v424 = vpack.c.b16 %v299, %v298
  %v425 = vpack.c.b16 %v301, %v300
  %v426 = vpack.c.b16 %v303, %v302
  %v427 = vpack.c.b16 %v305, %v304
  %v428 = vpack.c.b16 %v307, %v306
  %v429 = vpack.c.b16 %v309, %v308
  %v430 = vpack.c.b16 %v311, %v310
  %v431 = vpack.c.b16 %v313, %v312
  %v432 = vpack.c.b16 %v315, %v314
  %v433 = vpack.c.b16 %v317, %v316
  %v434 = vpack.c.b16 %v319, %v318
  %v435 = vpack.c.b16 %v321, %v320
  %v436 = vpack.c.b16 %v323, %v322
  %v437 = vpack.c.b16 %v325, %v324
  %v438 = vpack.c.b16 %v327, %v326
  %v439 = vpack.c.b16 %v329, %v328
  %v440 = vpack.c.b16 %v331, %v330
  %v441 = vpack.c.b16 %v333, %v332
  %v442 = vpack.c.b16 %v335, %v334
  %v443 = vpack.c.b16 %v337, %v336
  %v444 = vpack.c.b16 %v339, %v338
  %v445 = vpack.c.b16 %v341, %v340
  %v446 = vpack.c.b16 %v343, %v342
  %v447 = vpack.c.b16 %v345, %v344
  %v448 = vpack.c.b16 %v347, %v346
  %v449 = vpack.c.b16 %v349, %v348
  %v450 = vpack.c.b16 %v351, %v350
  %v451 = vpack.c.b16 %v353, %v352
  %v452 = vpack.c.b16 %v355, %v354
  %v453 = vpack.c.b16 %v357, %v356
  %v454 = vpack.c.b16 %v359, %v358
  %v455 = vpack.c.b16 %v361, %v360
  %v456 = vpack.c.b16 %v363, %v362
  %v457 = vpack.c.b16 %v365, %v364
  %v458 = vpack.c.b16 %v367, %v366
  %v459 = vpack.c.b16 %v369, %v368
  %v460 = vpack.c.b16 %v371, %v370
  %v461 = vpack.c.b16 %v373, %v372
  %v462 = vpack.c.b16 %v375, %v374
  %v463 = vpack.c.b16 %v377, %v376
  %v464 = vpack.c.b16 %v379, %v378
  %v465 = vpack.c.b16 %v381, %v380
  %v466 = vpack.c.b16 %v383, %v382
  %v467 = vpack.c.b16 %v385, %v384
  %v468 = vpack.c.b16 %v387, %v386
  %v469 = vpack.c.b16 %v389, %v388
  %v470 = vpack.c.b16 %v391, %v390
  %v471 = vpack.c.b16 %v393, %v392
  %v472 = vpack.c.b16 %v395, %v394
  %v473 = vpack.c.b16 %v397, %v396
  %v474 = vpack.c.b16 %v399, %v398
  %v475 = vpack.c.b16 %v401, %v400
  %v476 = vpack.c.b16 %v403, %v402
  %v477 = vpack.c.b16 %v405, %v404
  %v478 = vpack.c.b16 %v407, %v406
  %v479 = vpack.c.b16 %v409, %v408
  %v480 = vpack.c.b16 %v411, %v410
  %v481 = vpack.c.b16 %v413, %v412
  %v482 = vpack.c.b16 %v415, %v414
  %v483 = vpack.c.b16 %v417, %v416
  %v484 = vpack.c.b16 %v419, %v418
  %v485 = vpack.c.b16 %v421, %v420
  %v500 = vunpack.c.l.b16 %v145
  %v501 = vunpack.c.l.b16 %v146
  %v502 = vunpack.c.l.b16 %v147
  %v503 = vunpack.c.l.b16 %v148
  %v504 = vunpack.c.l.b16 %v149
  %v505 = vunpack.c.l.b16 %v150
  %v506 = vunpack.c.l.b16 %v151
  %v507 = vunpack.c.l.b16 %v152
  %v508 = vunpack.c.l.b16 %v153
  %v509 = vunpack.c.l.b16 %v154
  %v510 = vunpack.c.l.b16 %v155
  %v511 = vunpack.c.l.b16 %v156
  %v512 = vunpack.c.l.b16 %v157
  %v513 = vunpack.c.l.b16 %v158
  %v514 = vpack.c.b16 %v501, %v500
  %v515 = vpack.c.b16 %v503, %v502
  %v516 = vpack.c.b16 %v505, %v504
  %v517 = vpack.c.b16 %v507, %v506
  %v518 = vpack.c.b16 %v509, %v508
  %v519 = vpack.c.b16 %v511, %v510
  %v520 = vpack.c.b16 %v513, %v512
  %vm527 = vcmask 883712
  %v529 = vsel %vm527, %v422, 0
  %v532 = vsel %vm527, %v423, 0
  %v535 = vsel %vm527, %v424, 0
  %v538 = vsel %vm527, %v425, 0
  %v541 = vsel %vm527, %v426, 0
  %v544 = vsel %vm527, %v427, 0
  %v547 = vsel %vm527, %v428, 0
  %v550 = vsel %vm527, %v429, 0
  %v553 = vsel %vm527, %v430, 0
  %v556 = vsel %vm527, %v431, 0
  %v559 = vsel %vm527, %v432, 0
  %v562 = vsel %vm527, %v433, 0
  %v565 = vsel %vm527, %v434, 0
  %v568 = vsel %vm527, %v435, 0
  %v571 = vsel %vm527, %v436, 0
  %v574 = vsel %vm527, %v437, 0
  %v577 = vsel %vm527, %v438, 0
  %v580 = vsel %vm527, %v439, 0
  %v583 = vsel %vm527, %v440, 0
  %v586 = vsel %vm527, %v441, 0
  %v589 = vsel %vm527, %v442, 0
  %v592 = vsel %vm527, %v443, 0
  %v595 = vsel %vm527, %v444, 0
  %v598 = vsel %vm527, %v445, 0
  %v601 = vsel %vm527, %v446, 0
  %v604 = vsel %vm527, %v447, 0
  %v607 = vsel %vm527, %v448, 0
  %v610 = vsel %vm527, %v449, 0
  %v613 = vsel %vm527, %v450, 0
  %v616 = vsel %vm527, %v451, 0
  %v619 = vsel %vm527, %v452, 0
  %v622 = vsel %vm527, %v453, 0
  %v625 = vsel %vm527, %v454, 0
  %v628 = vsel %vm527, %v455, 0
  %v631 = vsel %vm527, %v456, 0
  %v634 = vsel %vm527, %v457, 0
  %v637 = vsel %vm527, %v458, 0
  %v640 = vsel %vm527, %v459, 0
  %v643 = vsel %vm527, %v460, 0
  %v646 = vsel %vm527, %v461, 0
  %v649 = vsel %vm527, %v462, 0
  %v652 = vsel %vm527, %v463, 0
  %v655 = vsel %vm527, %v464, 0
  %v658 = vsel %vm527, %v465, 0
  %v661 = vsel %vm527, %v466, 0
  %v664 = vsel %vm527, %v467, 0
  %v667 = vsel %vm527, %v468, 0
  %v670 = vsel %vm527, %v469, 0
  %v673 = vsel %vm527, %v470, 0
  %v676 = vsel %vm527, %v471, 0
  %v679 = vsel %vm527, %v472, 0
  %v682 = vsel %vm527, %v473, 0
  %v685 = vsel %vm527, %v474, 0
  %v688 = vsel %vm527, %v475, 0
  %v691 = vsel %vm527, %v476, 0
  %v694 = vsel %vm527, %v477, 0
  %v697 = vsel %vm527, %v478, 0
  %v700 = vsel %vm527, %v479, 0
  %v703 = vsel %vm527, %v480, 0
  %v706 = vsel %vm527, %v481, 0
  %v709 = vsel %vm527, %v482, 0
  %v712 = vsel %vm527, %v483, 0
  %v715 = vsel %vm527, %v484, 0
  %v718 = vsel %vm527, %v485, 0
  %vm720 = vcmask 1045504
  %v722 = vsel %vm720, %v520, 0
  %724 = vmatprep.subr.bf16.mxu0 0
  %725 = vmatpush1.bf16.msra.mxu0 %v514
  %726 = vmatprep.subr.bf16.mxu0 0
  %727 = vmatpush1.bf16.msra.mxu0 %v515
  %728 = vmatprep.subr.bf16.mxu0 0
  %729 = vmatpush1.bf16.msra.mxu0 %v516
  %730 = vmatprep.subr.bf16.mxu0 0
  %731 = vmatpush1.bf16.msra.mxu0 %v517
  %732 = vmatprep.subr.bf16.mxu0 0
  %733 = vmatpush1.bf16.msra.mxu0 %v518
  %734 = vmatprep.subr.bf16.mxu0 0
  %735 = vmatpush1.bf16.msra.mxu0 %v519
  %736 = vmatprep.subr.bf16.mxu0 0
  %737 = vmatpush1.bf16.msra.mxu0 %v722
  %738 = vmatprep.subr.bf16.mxu0 0
  %739 = vmatpush1.bf16.msra.mxu0 0
  %740 = vmatprep.subr.bf16.mxu0 0
  %741 = vmatpush1.bf16.msra.mxu0 0
  %742 = vmatprep.subr.bf16.mxu0 0
  %743 = vmatpush1.bf16.msra.mxu0 0
  %744 = vmatprep.subr.bf16.mxu0 0
  %745 = vmatpush1.bf16.msra.mxu0 0
  %746 = vmatprep.subr.bf16.mxu0 0
  %747 = vmatpush1.bf16.msra.mxu0 0
  %748 = vmatprep.subr.bf16.mxu0 0
  %749 = vmatpush1.bf16.msra.mxu0 0
  %750 = vmatprep.subr.bf16.mxu0 0
  %751 = vmatpush1.bf16.msra.mxu0 0
  %752 = vmatprep.subr.bf16.mxu0 0
  %753 = vmatpush1.bf16.msra.mxu0 0
  %754 = vmatprep.subr.bf16.mxu0 0
  %755 = vmatpush1.bf16.msra.mxu0 0
  %756 = vmatprep.mubr.bf16.mxu0 0
  %757 = vmatmul.mubr.bf16.gmra.mrb[0].mxu0 %v529
  %v758 = vpop.f32.mrb[0].mxu0
  %v759 = vadd.f32 %v164, %v758
  %v760 = vpop.f32.mrb[0].mxu0
  %v761 = vpop.f32.mrb[0].mxu0
  %v762 = vadd.f32 %v164, %v761
  %v763 = vpop.f32.mrb[0].mxu0
  %764 = vmatprep.mubr.bf16.mxu0 0
  %765 = vmatmul.mubr.bf16.gmra.mrb[0].mxu0 %v532
  %v766 = vpop.f32.mrb[0].mxu0
  %v767 = vadd.f32 %v164, %v766
  %v768 = vpop.f32.mrb[0].mxu0
  %v769 = vpop.f32.mrb[0].mxu0
  %v770 = vadd.f32 %v164, %v769
  %v771 = vpop.f32.mrb[0].mxu0
  %772 = vmatprep.mubr.bf16.mxu0 0
  %773 = vmatmul.mubr.bf16.gmra.mrb[0].mxu0 %v535
  %v774 = vpop.f32.mrb[0].mxu0
  %v775 = vadd.f32 %v164, %v774
  %v776 = vpop.f32.mrb[0].mxu0
  %v777 = vpop.f32.mrb[0].mxu0
  %v778 = vadd.f32 %v164, %v777
  %v779 = vpop.f32.mrb[0].mxu0
  %780 = vmatprep.mubr.bf16.mxu0 0
  %781 = vmatmul.mubr.bf16.gmra.mrb[0].mxu0 %v538
  %v782 = vpop.f32.mrb[0].mxu0
  %v783 = vadd.f32 %v164, %v782
  %v784 = vpop.f32.mrb[0].mxu0
  %v785 = vpop.f32.mrb[0].mxu0
  %v786 = vadd.f32 %v164, %v785
  %v787 = vpop.f32.mrb[0].mxu0
  %788 = vmatprep.mubr.bf16.mxu0 0
  %789 = vmatmul.mubr.bf16.gmra.mrb[0].mxu0 %v541
  %v790 = vpop.f32.mrb[0].mxu0
  %v791 = vadd.f32 %v164, %v790
  %v792 = vpop.f32.mrb[0].mxu0
  %v793 = vpop.f32.mrb[0].mxu0
  %v794 = vadd.f32 %v164, %v793
  %v795 = vpop.f32.mrb[0].mxu0
  %796 = vmatprep.mubr.bf16.mxu0 0
  %797 = vmatmul.mubr.bf16.gmra.mrb[0].mxu0 %v544
  %v798 = vpop.f32.mrb[0].mxu0
  %v799 = vadd.f32 %v164, %v798
  %v800 = vpop.f32.mrb[0].mxu0
  %v801 = vpop.f32.mrb[0].mxu0
  %v802 = vadd.f32 %v164, %v801
  %v803 = vpop.f32.mrb[0].mxu0
  %804 = vmatprep.mubr.bf16.mxu0 0
  %805 = vmatmul.mubr.bf16.gmra.mrb[0].mxu0 %v547
  %v806 = vpop.f32.mrb[0].mxu0
  %v807 = vadd.f32 %v164, %v806
  %v808 = vpop.f32.mrb[0].mxu0
  %v809 = vpop.f32.mrb[0].mxu0
  %v810 = vadd.f32 %v164, %v809
  %v811 = vpop.f32.mrb[0].mxu0
  %812 = vmatprep.mubr.bf16.mxu0 0
  %813 = vmatmul.mubr.bf16.gmra.mrb[0].mxu0 %v550
  %v814 = vpop.f32.mrb[0].mxu0
  %v815 = vadd.f32 %v164, %v814
  %v816 = vpop.f32.mrb[0].mxu0
  %v817 = vpop.f32.mrb[0].mxu0
  %v818 = vadd.f32 %v164, %v817
  %v819 = vpop.f32.mrb[0].mxu0
  %820 = vmatprep.mubr.bf16.mxu0 0
  %821 = vmatmul.mubr.bf16.gmra.mrb[0].mxu0 %v553
  %v822 = vpop.f32.mrb[0].mxu0
  %v823 = vadd.f32 %v164, %v822
  %v824 = vpop.f32.mrb[0].mxu0
  %v825 = vpop.f32.mrb[0].mxu0
  %v826 = vadd.f32 %v164, %v825
  %v827 = vpop.f32.mrb[0].mxu0
  %828 = vmatprep.mubr.bf16.mxu0 0
  %829 = vmatmul.mubr.bf16.gmra.mrb[0].mxu0 %v556
  %v830 = vpop.f32.mrb[0].mxu0
  %v831 = vadd.f32 %v164, %v830
  %v832 = vpop.f32.mrb[0].mxu0
  %v833 = vpop.f32.mrb[0].mxu0
  %v834 = vadd.f32 %v164, %v833
  %v835 = vpop.f32.mrb[0].mxu0
  %836 = vmatprep.mubr.bf16.mxu0 0
  %837 = vmatmul.mubr.bf16.gmra.mrb[0].mxu0 %v559
  %v838 = vpop.f32.mrb[0].mxu0
  %v839 = vadd.f32 %v164, %v838
  %v840 = vpop.f32.mrb[0].mxu0
  %v841 = vpop.f32.mrb[0].mxu0
  %v842 = vadd.f32 %v164, %v841
  %v843 = vpop.f32.mrb[0].mxu0
  %844 = vmatprep.mubr.bf16.mxu0 0
  %845 = vmatmul.mubr.bf16.gmra.mrb[0].mxu0 %v562
  %v846 = vpop.f32.mrb[0].mxu0
  %v847 = vadd.f32 %v164, %v846
  %v848 = vpop.f32.mrb[0].mxu0
  %v849 = vpop.f32.mrb[0].mxu0
  %v850 = vadd.f32 %v164, %v849
  %v851 = vpop.f32.mrb[0].mxu0
  %852 = vmatprep.mubr.bf16.mxu0 0
  %853 = vmatmul.mubr.bf16.gmra.mrb[0].mxu0 %v565
  %v854 = vpop.f32.mrb[0].mxu0
  %v855 = vadd.f32 %v164, %v854
  %v856 = vpop.f32.mrb[0].mxu0
  %v857 = vpop.f32.mrb[0].mxu0
  %v858 = vadd.f32 %v164, %v857
  %v859 = vpop.f32.mrb[0].mxu0
  %860 = vmatprep.mubr.bf16.mxu0 0
  %861 = vmatmul.mubr.bf16.gmra.mrb[0].mxu0 %v568
  %v862 = vpop.f32.mrb[0].mxu0
  %v863 = vadd.f32 %v164, %v862
  %v864 = vpop.f32.mrb[0].mxu0
  %v865 = vpop.f32.mrb[0].mxu0
  %v866 = vadd.f32 %v164, %v865
  %v867 = vpop.f32.mrb[0].mxu0
  %868 = vmatprep.mubr.bf16.mxu0 0
  %869 = vmatmul.mubr.bf16.gmra.mrb[0].mxu0 %v571
  %v870 = vpop.f32.mrb[0].mxu0
  %v871 = vadd.f32 %v164, %v870
  %v872 = vpop.f32.mrb[0].mxu0
  %v873 = vpop.f32.mrb[0].mxu0
  %v874 = vadd.f32 %v164, %v873
  %v875 = vpop.f32.mrb[0].mxu0
  %876 = vmatprep.mubr.bf16.mxu0 0
  %877 = vmatmul.mubr.bf16.gmra.mrb[0].mxu0 %v574
  %v878 = vpop.f32.mrb[0].mxu0
  %v879 = vadd.f32 %v164, %v878
  %v880 = vpop.f32.mrb[0].mxu0
  %v881 = vpop.f32.mrb[0].mxu0
  %v882 = vadd.f32 %v164, %v881
  %v883 = vpop.f32.mrb[0].mxu0
  %884 = vmatprep.mubr.bf16.mxu0 0
  %885 = vmatmul.mubr.bf16.gmra.mrb[0].mxu0 %v577
  %v886 = vpop.f32.mrb[0].mxu0
  %v887 = vadd.f32 %v164, %v886
  %v888 = vpop.f32.mrb[0].mxu0
  %v889 = vpop.f32.mrb[0].mxu0
  %v890 = vadd.f32 %v164, %v889
  %v891 = vpop.f32.mrb[0].mxu0
  %892 = vmatprep.mubr.bf16.mxu0 0
  %893 = vmatmul.mubr.bf16.gmra.mrb[0].mxu0 %v580
  %v894 = vpop.f32.mrb[0].mxu0
  %v895 = vadd.f32 %v164, %v894
  %v896 = vpop.f32.mrb[0].mxu0
  %v897 = vpop.f32.mrb[0].mxu0
  %v898 = vadd.f32 %v164, %v897
  %v899 = vpop.f32.mrb[0].mxu0
  %900 = vmatprep.mubr.bf16.mxu0 0
  %901 = vmatmul.mubr.bf16.gmra.mrb[0].mxu0 %v583
  %v902 = vpop.f32.mrb[0].mxu0
  %v903 = vadd.f32 %v164, %v902
  %v904 = vpop.f32.mrb[0].mxu0
  %v905 = vpop.f32.mrb[0].mxu0
  %v906 = vadd.f32 %v164, %v905
  %v907 = vpop.f32.mrb[0].mxu0
  %908 = vmatprep.mubr.bf16.mxu0 0
  %909 = vmatmul.mubr.bf16.gmra.mrb[0].mxu0 %v586
  %v910 = vpop.f32.mrb[0].mxu0
  %v911 = vadd.f32 %v164, %v910
  %v912 = vpop.f32.mrb[0].mxu0
  %v913 = vpop.f32.mrb[0].mxu0
  %v914 = vadd.f32 %v164, %v913
  %v915 = vpop.f32.mrb[0].mxu0
  %916 = vmatprep.mubr.bf16.mxu0 0
  %917 = vmatmul.mubr.bf16.gmra.mrb[0].mxu0 %v589
  %v918 = vpop.f32.mrb[0].mxu0
  %v919 = vadd.f32 %v164, %v918
  %v920 = vpop.f32.mrb[0].mxu0
  %v921 = vpop.f32.mrb[0].mxu0
  %v922 = vadd.f32 %v164, %v921
  %v923 = vpop.f32.mrb[0].mxu0
  %924 = vmatprep.mubr.bf16.mxu0 0
  %925 = vmatmul.mubr.bf16.gmra.mrb[0].mxu0 %v592
  %v926 = vpop.f32.mrb[0].mxu0
  %v927 = vadd.f32 %v164, %v926
  %v928 = vpop.f32.mrb[0].mxu0
  %v929 = vpop.f32.mrb[0].mxu0
  %v930 = vadd.f32 %v164, %v929
  %v931 = vpop.f32.mrb[0].mxu0
  %932 = vmatprep.mubr.bf16.mxu0 0
  %933 = vmatmul.mubr.bf16.gmra.mrb[0].mxu0 %v595
  %v934 = vpop.f32.mrb[0].mxu0
  %v935 = vadd.f32 %v164, %v934
  %v936 = vpop.f32.mrb[0].mxu0
  %v937 = vpop.f32.mrb[0].mxu0
  %v938 = vadd.f32 %v164, %v937
  %v939 = vpop.f32.mrb[0].mxu0
  %940 = vmatprep.mubr.bf16.mxu0 0
  %941 = vmatmul.mubr.bf16.gmra.mrb[0].mxu0 %v598
  %v942 = vpop.f32.mrb[0].mxu0
  %v943 = vadd.f32 %v164, %v942
  %v944 = vpop.f32.mrb[0].mxu0
  %v945 = vpop.f32.mrb[0].mxu0
  %v946 = vadd.f32 %v164, %v945
  %v947 = vpop.f32.mrb[0].mxu0
  %948 = vmatprep.mubr.bf16.mxu0 0
  %949 = vmatmul.mubr.bf16.gmra.mrb[0].mxu0 %v601
  %v950 = vpop.f32.mrb[0].mxu0
  %v951 = vadd.f32 %v164, %v950
  %v952 = vpop.f32.mrb[0].mxu0
  %v953 = vpop.f32.mrb[0].mxu0
  %v954 = vadd.f32 %v164, %v953
  %v955 = vpop.f32.mrb[0].mxu0
  %956 = vmatprep.mubr.bf16.mxu0 0
  %957 = vmatmul.mubr.bf16.gmra.mrb[0].mxu0 %v604
  %v958 = vpop.f32.mrb[0].mxu0
  %v959 = vadd.f32 %v164, %v958
  %v960 = vpop.f32.mrb[0].mxu0
  %v961 = vpop.f32.mrb[0].mxu0
  %v962 = vadd.f32 %v164, %v961
  %v963 = vpop.f32.mrb[0].mxu0
  %964 = vmatprep.mubr.bf16.mxu0 0
  %965 = vmatmul.mubr.bf16.gmra.mrb[0].mxu0 %v607
  %v966 = vpop.f32.mrb[0].mxu0
  %v967 = vadd.f32 %v164, %v966
  %v968 = vpop.f32.mrb[0].mxu0
  %v969 = vpop.f32.mrb[0].mxu0
  %v970 = vadd.f32 %v164, %v969
  %v971 = vpop.f32.mrb[0].mxu0
  %972 = vmatprep.mubr.bf16.mxu0 0
  %973 = vmatmul.mubr.bf16.gmra.mrb[0].mxu0 %v610
  %v974 = vpop.f32.mrb[0].mxu0
  %v975 = vadd.f32 %v164, %v974
  %v976 = vpop.f32.mrb[0].mxu0
  %v977 = vpop.f32.mrb[0].mxu0
  %v978 = vadd.f32 %v164, %v977
  %v979 = vpop.f32.mrb[0].mxu0
  %980 = vmatprep.mubr.bf16.mxu0 0
  %981 = vmatmul.mubr.bf16.gmra.mrb[0].mxu0 %v613
  %v982 = vpop.f32.mrb[0].mxu0
  %v983 = vadd.f32 %v164, %v982
  %v984 = vpop.f32.mrb[0].mxu0
  %v985 = vpop.f32.mrb[0].mxu0
  %v986 = vadd.f32 %v164, %v985
  %v987 = vpop.f32.mrb[0].mxu0
  %988 = vmatprep.mubr.bf16.mxu0 0
  %989 = vmatmul.mubr.bf16.gmra.mrb[0].mxu0 %v616
  %v990 = vpop.f32.mrb[0].mxu0
  %v991 = vadd.f32 %v164, %v990
  %v992 = vpop.f32.mrb[0].mxu0
  %v993 = vpop.f32.mrb[0].mxu0
  %v994 = vadd.f32 %v164, %v993
  %v995 = vpop.f32.mrb[0].mxu0
  %996 = vmatprep.mubr.bf16.mxu0 0
  %997 = vmatmul.mubr.bf16.gmra.mrb[0].mxu0 %v619
  %v998 = vpop.f32.mrb[0].mxu0
  %v999 = vadd.f32 %v164, %v998
  %v1000 = vpop.f32.mrb[0].mxu0
  %v1001 = vpop.f32.mrb[0].mxu0
  %v1002 = vadd.f32 %v164, %v1001
  %v1003 = vpop.f32.mrb[0].mxu0
  %1004 = vmatprep.mubr.bf16.mxu0 0
  %1005 = vmatmul.mubr.bf16.gmra.mrb[0].mxu0 %v622
  %v1006 = vpop.f32.mrb[0].mxu0
  %v1007 = vadd.f32 %v164, %v1006
  %v1008 = vpop.f32.mrb[0].mxu0
  %v1009 = vpop.f32.mrb[0].mxu0
  %v1010 = vadd.f32 %v164, %v1009
  %v1011 = vpop.f32.mrb[0].mxu0
  %1012 = vmatprep.mubr.bf16.mxu0 0
  %1013 = vmatmul.mubr.bf16.gmra.mrb[0].mxu0 %v625
  %v1014 = vpop.f32.mrb[0].mxu0
  %v1015 = vadd.f32 %v164, %v1014
  %v1016 = vpop.f32.mrb[0].mxu0
  %v1017 = vpop.f32.mrb[0].mxu0
  %v1018 = vadd.f32 %v164, %v1017
  %v1019 = vpop.f32.mrb[0].mxu0
  %1020 = vmatprep.mubr.bf16.mxu0 0
  %1021 = vmatmul.mubr.bf16.gmra.mrb[0].mxu0 %v628
  %v1022 = vpop.f32.mrb[0].mxu0
  %v1023 = vadd.f32 %v164, %v1022
  %v1024 = vpop.f32.mrb[0].mxu0
  %v1025 = vpop.f32.mrb[0].mxu0
  %v1026 = vadd.f32 %v164, %v1025
  %v1027 = vpop.f32.mrb[0].mxu0
  %1028 = vmatprep.mubr.bf16.mxu0 0
  %1029 = vmatmul.mubr.bf16.gmra.mrb[0].mxu0 %v631
  %v1030 = vpop.f32.mrb[0].mxu0
  %v1031 = vadd.f32 %v164, %v1030
  %v1032 = vpop.f32.mrb[0].mxu0
  %v1033 = vpop.f32.mrb[0].mxu0
  %v1034 = vadd.f32 %v164, %v1033
  %v1035 = vpop.f32.mrb[0].mxu0
  %1036 = vmatprep.mubr.bf16.mxu0 0
  %1037 = vmatmul.mubr.bf16.gmra.mrb[0].mxu0 %v634
  %v1038 = vpop.f32.mrb[0].mxu0
  %v1039 = vadd.f32 %v164, %v1038
  %v1040 = vpop.f32.mrb[0].mxu0
  %v1041 = vpop.f32.mrb[0].mxu0
  %v1042 = vadd.f32 %v164, %v1041
  %v1043 = vpop.f32.mrb[0].mxu0
  %1044 = vmatprep.mubr.bf16.mxu0 0
  %1045 = vmatmul.mubr.bf16.gmra.mrb[0].mxu0 %v637
  %v1046 = vpop.f32.mrb[0].mxu0
  %v1047 = vadd.f32 %v164, %v1046
  %v1048 = vpop.f32.mrb[0].mxu0
  %v1049 = vpop.f32.mrb[0].mxu0
  %v1050 = vadd.f32 %v164, %v1049
  %v1051 = vpop.f32.mrb[0].mxu0
  %1052 = vmatprep.mubr.bf16.mxu0 0
  %1053 = vmatmul.mubr.bf16.gmra.mrb[0].mxu0 %v640
  %v1054 = vpop.f32.mrb[0].mxu0
  %v1055 = vadd.f32 %v164, %v1054
  %v1056 = vpop.f32.mrb[0].mxu0
  %v1057 = vpop.f32.mrb[0].mxu0
  %v1058 = vadd.f32 %v164, %v1057
  %v1059 = vpop.f32.mrb[0].mxu0
  %1060 = vmatprep.mubr.bf16.mxu0 0
  %1061 = vmatmul.mubr.bf16.gmra.mrb[0].mxu0 %v643
  %v1062 = vpop.f32.mrb[0].mxu0
  %v1063 = vadd.f32 %v164, %v1062
  %v1064 = vpop.f32.mrb[0].mxu0
  %v1065 = vpop.f32.mrb[0].mxu0
  %v1066 = vadd.f32 %v164, %v1065
  %v1067 = vpop.f32.mrb[0].mxu0
  %1068 = vmatprep.mubr.bf16.mxu0 0
  %1069 = vmatmul.mubr.bf16.gmra.mrb[0].mxu0 %v646
  %v1070 = vpop.f32.mrb[0].mxu0
  %v1071 = vadd.f32 %v164, %v1070
  %v1072 = vpop.f32.mrb[0].mxu0
  %v1073 = vpop.f32.mrb[0].mxu0
  %v1074 = vadd.f32 %v164, %v1073
  %v1075 = vpop.f32.mrb[0].mxu0
  %1076 = vmatprep.mubr.bf16.mxu0 0
  %1077 = vmatmul.mubr.bf16.gmra.mrb[0].mxu0 %v649
  %v1078 = vpop.f32.mrb[0].mxu0
  %v1079 = vadd.f32 %v164, %v1078
  %v1080 = vpop.f32.mrb[0].mxu0
  %v1081 = vpop.f32.mrb[0].mxu0
  %v1082 = vadd.f32 %v164, %v1081
  %v1083 = vpop.f32.mrb[0].mxu0
  %1084 = vmatprep.mubr.bf16.mxu0 0
  %1085 = vmatmul.mubr.bf16.gmra.mrb[0].mxu0 %v652
  %v1086 = vpop.f32.mrb[0].mxu0
  %v1087 = vadd.f32 %v164, %v1086
  %v1088 = vpop.f32.mrb[0].mxu0
  %v1089 = vpop.f32.mrb[0].mxu0
  %v1090 = vadd.f32 %v164, %v1089
  %v1091 = vpop.f32.mrb[0].mxu0
  %1092 = vmatprep.mubr.bf16.mxu0 0
  %1093 = vmatmul.mubr.bf16.gmra.mrb[0].mxu0 %v655
  %v1094 = vpop.f32.mrb[0].mxu0
  %v1095 = vadd.f32 %v164, %v1094
  %v1096 = vpop.f32.mrb[0].mxu0
  %v1097 = vpop.f32.mrb[0].mxu0
  %v1098 = vadd.f32 %v164, %v1097
  %v1099 = vpop.f32.mrb[0].mxu0
  %1100 = vmatprep.mubr.bf16.mxu0 0
  %1101 = vmatmul.mubr.bf16.gmra.mrb[0].mxu0 %v658
  %v1102 = vpop.f32.mrb[0].mxu0
  %v1103 = vadd.f32 %v164, %v1102
  %v1104 = vpop.f32.mrb[0].mxu0
  %v1105 = vpop.f32.mrb[0].mxu0
  %v1106 = vadd.f32 %v164, %v1105
  %v1107 = vpop.f32.mrb[0].mxu0
  %1108 = vmatprep.mubr.bf16.mxu0 0
  %1109 = vmatmul.mubr.bf16.gmra.mrb[0].mxu0 %v661
  %v1110 = vpop.f32.mrb[0].mxu0
  %v1111 = vadd.f32 %v164, %v1110
  %v1112 = vpop.f32.mrb[0].mxu0
  %v1113 = vpop.f32.mrb[0].mxu0
  %v1114 = vadd.f32 %v164, %v1113
  %v1115 = vpop.f32.mrb[0].mxu0
  %1116 = vmatprep.mubr.bf16.mxu0 0
  %1117 = vmatmul.mubr.bf16.gmra.mrb[0].mxu0 %v664
  %v1118 = vpop.f32.mrb[0].mxu0
  %v1119 = vadd.f32 %v164, %v1118
  %v1120 = vpop.f32.mrb[0].mxu0
  %v1121 = vpop.f32.mrb[0].mxu0
  %v1122 = vadd.f32 %v164, %v1121
  %v1123 = vpop.f32.mrb[0].mxu0
  %1124 = vmatprep.mubr.bf16.mxu0 0
  %1125 = vmatmul.mubr.bf16.gmra.mrb[0].mxu0 %v667
  %v1126 = vpop.f32.mrb[0].mxu0
  %v1127 = vadd.f32 %v164, %v1126
  %v1128 = vpop.f32.mrb[0].mxu0
  %v1129 = vpop.f32.mrb[0].mxu0
  %v1130 = vadd.f32 %v164, %v1129
  %v1131 = vpop.f32.mrb[0].mxu0
  %1132 = vmatprep.mubr.bf16.mxu0 0
  %1133 = vmatmul.mubr.bf16.gmra.mrb[0].mxu0 %v670
  %v1134 = vpop.f32.mrb[0].mxu0
  %v1135 = vadd.f32 %v164, %v1134
  %v1136 = vpop.f32.mrb[0].mxu0
  %v1137 = vpop.f32.mrb[0].mxu0
  %v1138 = vadd.f32 %v164, %v1137
  %v1139 = vpop.f32.mrb[0].mxu0
  %1140 = vmatprep.mubr.bf16.mxu0 0
  %1141 = vmatmul.mubr.bf16.gmra.mrb[0].mxu0 %v673
  %v1142 = vpop.f32.mrb[0].mxu0
  %v1143 = vadd.f32 %v164, %v1142
  %v1144 = vpop.f32.mrb[0].mxu0
  %v1145 = vpop.f32.mrb[0].mxu0
  %v1146 = vadd.f32 %v164, %v1145
  %v1147 = vpop.f32.mrb[0].mxu0
  %1148 = vmatprep.mubr.bf16.mxu0 0
  %1149 = vmatmul.mubr.bf16.gmra.mrb[0].mxu0 %v676
  %v1150 = vpop.f32.mrb[0].mxu0
  %v1151 = vadd.f32 %v164, %v1150
  %v1152 = vpop.f32.mrb[0].mxu0
  %v1153 = vpop.f32.mrb[0].mxu0
  %v1154 = vadd.f32 %v164, %v1153
  %v1155 = vpop.f32.mrb[0].mxu0
  %1156 = vmatprep.mubr.bf16.mxu0 0
  %1157 = vmatmul.mubr.bf16.gmra.mrb[0].mxu0 %v679
  %v1158 = vpop.f32.mrb[0].mxu0
  %v1159 = vadd.f32 %v164, %v1158
  %v1160 = vpop.f32.mrb[0].mxu0
  %v1161 = vpop.f32.mrb[0].mxu0
  %v1162 = vadd.f32 %v164, %v1161
  %v1163 = vpop.f32.mrb[0].mxu0
  %1164 = vmatprep.mubr.bf16.mxu0 0
  %1165 = vmatmul.mubr.bf16.gmra.mrb[0].mxu0 %v682
  %v1166 = vpop.f32.mrb[0].mxu0
  %v1167 = vadd.f32 %v164, %v1166
  %v1168 = vpop.f32.mrb[0].mxu0
  %v1169 = vpop.f32.mrb[0].mxu0
  %v1170 = vadd.f32 %v164, %v1169
  %v1171 = vpop.f32.mrb[0].mxu0
  %1172 = vmatprep.mubr.bf16.mxu0 0
  %1173 = vmatmul.mubr.bf16.gmra.mrb[0].mxu0 %v685
  %v1174 = vpop.f32.mrb[0].mxu0
  %v1175 = vadd.f32 %v164, %v1174
  %v1176 = vpop.f32.mrb[0].mxu0
  %v1177 = vpop.f32.mrb[0].mxu0
  %v1178 = vadd.f32 %v164, %v1177
  %v1179 = vpop.f32.mrb[0].mxu0
  %1180 = vmatprep.mubr.bf16.mxu0 0
  %1181 = vmatmul.mubr.bf16.gmra.mrb[0].mxu0 %v688
  %v1182 = vpop.f32.mrb[0].mxu0
  %v1183 = vadd.f32 %v164, %v1182
  %v1184 = vpop.f32.mrb[0].mxu0
  %v1185 = vpop.f32.mrb[0].mxu0
  %v1186 = vadd.f32 %v164, %v1185
  %v1187 = vpop.f32.mrb[0].mxu0
  %1188 = vmatprep.mubr.bf16.mxu0 0
  %1189 = vmatmul.mubr.bf16.gmra.mrb[0].mxu0 %v691
  %v1190 = vpop.f32.mrb[0].mxu0
  %v1191 = vadd.f32 %v164, %v1190
  %v1192 = vpop.f32.mrb[0].mxu0
  %v1193 = vpop.f32.mrb[0].mxu0
  %v1194 = vadd.f32 %v164, %v1193
  %v1195 = vpop.f32.mrb[0].mxu0
  %1196 = vmatprep.mubr.bf16.mxu0 0
  %1197 = vmatmul.mubr.bf16.gmra.mrb[0].mxu0 %v694
  %v1198 = vpop.f32.mrb[0].mxu0
  %v1199 = vadd.f32 %v164, %v1198
  %v1200 = vpop.f32.mrb[0].mxu0
  %v1201 = vpop.f32.mrb[0].mxu0
  %v1202 = vadd.f32 %v164, %v1201
  %v1203 = vpop.f32.mrb[0].mxu0
  %1204 = vmatprep.mubr.bf16.mxu0 0
  %1205 = vmatmul.mubr.bf16.gmra.mrb[0].mxu0 %v697
  %v1206 = vpop.f32.mrb[0].mxu0
  %v1207 = vadd.f32 %v164, %v1206
  %v1208 = vpop.f32.mrb[0].mxu0
  %v1209 = vpop.f32.mrb[0].mxu0
  %v1210 = vadd.f32 %v164, %v1209
  %v1211 = vpop.f32.mrb[0].mxu0
  %1212 = vmatprep.mubr.bf16.mxu0 0
  %1213 = vmatmul.mubr.bf16.gmra.mrb[0].mxu0 %v700
  %v1214 = vpop.f32.mrb[0].mxu0
  %v1215 = vadd.f32 %v164, %v1214
  %v1216 = vpop.f32.mrb[0].mxu0
  %v1217 = vpop.f32.mrb[0].mxu0
  %v1218 = vadd.f32 %v164, %v1217
  %v1219 = vpop.f32.mrb[0].mxu0
  %1220 = vmatprep.mubr.bf16.mxu0 0
  %1221 = vmatmul.mubr.bf16.gmra.mrb[0].mxu0 %v703
  %v1222 = vpop.f32.mrb[0].mxu0
  %v1223 = vadd.f32 %v164, %v1222
  %v1224 = vpop.f32.mrb[0].mxu0
  %v1225 = vpop.f32.mrb[0].mxu0
  %v1226 = vadd.f32 %v164, %v1225
  %v1227 = vpop.f32.mrb[0].mxu0
  %1228 = vmatprep.mubr.bf16.mxu0 0
  %1229 = vmatmul.mubr.bf16.gmra.mrb[0].mxu0 %v706
  %v1230 = vpop.f32.mrb[0].mxu0
  %v1231 = vadd.f32 %v164, %v1230
  %v1232 = vpop.f32.mrb[0].mxu0
  %v1233 = vpop.f32.mrb[0].mxu0
  %v1234 = vadd.f32 %v164, %v1233
  %v1235 = vpop.f32.mrb[0].mxu0
  %1236 = vmatprep.mubr.bf16.mxu0 0
  %1237 = vmatmul.mubr.bf16.gmra.mrb[0].mxu0 %v709
  %v1238 = vpop.f32.mrb[0].mxu0
  %v1239 = vadd.f32 %v164, %v1238
  %v1240 = vpop.f32.mrb[0].mxu0
  %v1241 = vpop.f32.mrb[0].mxu0
  %v1242 = vadd.f32 %v164, %v1241
  %v1243 = vpop.f32.mrb[0].mxu0
  %1244 = vmatprep.mubr.bf16.mxu0 0
  %1245 = vmatmul.mubr.bf16.gmra.mrb[0].mxu0 %v712
  %v1246 = vpop.f32.mrb[0].mxu0
  %v1247 = vadd.f32 %v164, %v1246
  %v1248 = vpop.f32.mrb[0].mxu0
  %v1249 = vpop.f32.mrb[0].mxu0
  %v1250 = vadd.f32 %v164, %v1249
  %v1251 = vpop.f32.mrb[0].mxu0
  %1252 = vmatprep.mubr.bf16.mxu0 0
  %1253 = vmatmul.mubr.bf16.gmra.mrb[0].mxu0 %v715
  %v1254 = vpop.f32.mrb[0].mxu0
  %v1255 = vadd.f32 %v164, %v1254
  %v1256 = vpop.f32.mrb[0].mxu0
  %v1257 = vpop.f32.mrb[0].mxu0
  %v1258 = vadd.f32 %v164, %v1257
  %v1259 = vpop.f32.mrb[0].mxu0
  %1260 = vmatprep.mubr.bf16.mxu0 0
  %1261 = vmatmul.mubr.bf16.gmra.mrb[0].mxu0 %v718
  %v1262 = vpop.f32.mrb[0].mxu0
  %v1263 = vadd.f32 %v164, %v1262
  %v1264 = vpop.f32.mrb[0].mxu0
  %v1265 = vpop.f32.mrb[0].mxu0
  %v1266 = vadd.f32 %v164, %v1265
  %v1267 = vpop.f32.mrb[0].mxu0
  %1268 = vdwg.mxu0
  %v1269 = vmax.f32 %v759, 0.0
  %v1270 = vmax.f32 %v762, 0.0
  %v1271 = vmax.f32 %v767, 0.0
  %v1272 = vmax.f32 %v770, 0.0
  %v1273 = vmax.f32 %v775, 0.0
  %v1274 = vmax.f32 %v778, 0.0
  %v1275 = vmax.f32 %v783, 0.0
  %v1276 = vmax.f32 %v786, 0.0
  %v1277 = vmax.f32 %v791, 0.0
  %v1278 = vmax.f32 %v794, 0.0
  %v1279 = vmax.f32 %v799, 0.0
  %v1280 = vmax.f32 %v802, 0.0
  %v1281 = vmax.f32 %v807, 0.0
  %v1282 = vmax.f32 %v810, 0.0
  %v1283 = vmax.f32 %v815, 0.0
  %v1284 = vmax.f32 %v818, 0.0
  %v1285 = vmax.f32 %v823, 0.0
  %v1286 = vmax.f32 %v826, 0.0
  %v1287 = vmax.f32 %v831, 0.0
  %v1288 = vmax.f32 %v834, 0.0
  %v1289 = vmax.f32 %v839, 0.0
  %v1290 = vmax.f32 %v842, 0.0
  %v1291 = vmax.f32 %v847, 0.0
  %v1292 = vmax.f32 %v850, 0.0
  %v1293 = vmax.f32 %v855, 0.0
  %v1294 = vmax.f32 %v858, 0.0
  %v1295 = vmax.f32 %v863, 0.0
  %v1296 = vmax.f32 %v866, 0.0
  %v1297 = vmax.f32 %v871, 0.0
  %v1298 = vmax.f32 %v874, 0.0
  %v1299 = vmax.f32 %v879, 0.0
  %v1300 = vmax.f32 %v882, 0.0
  %v1301 = vmax.f32 %v887, 0.0
  %v1302 = vmax.f32 %v890, 0.0
  %v1303 = vmax.f32 %v895, 0.0
  %v1304 = vmax.f32 %v898, 0.0
  %v1305 = vmax.f32 %v903, 0.0
  %v1306 = vmax.f32 %v906, 0.0
  %v1307 = vmax.f32 %v911, 0.0
  %v1308 = vmax.f32 %v914, 0.0
  %v1309 = vmax.f32 %v919, 0.0
  %v1310 = vmax.f32 %v922, 0.0
  %v1311 = vmax.f32 %v927, 0.0
  %v1312 = vmax.f32 %v930, 0.0
  %v1313 = vmax.f32 %v935, 0.0
  %v1314 = vmax.f32 %v938, 0.0
  %v1315 = vmax.f32 %v943, 0.0
  %v1316 = vmax.f32 %v946, 0.0
  %v1317 = vmax.f32 %v951, 0.0
  %v1318 = vmax.f32 %v954, 0.0
  %v1319 = vmax.f32 %v959, 0.0
  %v1320 = vmax.f32 %v962, 0.0
  %v1321 = vmax.f32 %v967, 0.0
  %v1322 = vmax.f32 %v970, 0.0
  %v1323 = vmax.f32 %v975, 0.0
  %v1324 = vmax.f32 %v978, 0.0
  %v1325 = vmax.f32 %v983, 0.0
  %v1326 = vmax.f32 %v986, 0.0
  %v1327 = vmax.f32 %v991, 0.0
  %v1328 = vmax.f32 %v994, 0.0
  %v1329 = vmax.f32 %v999, 0.0
  %v1330 = vmax.f32 %v1002, 0.0
  %v1331 = vmax.f32 %v1007, 0.0
  %v1332 = vmax.f32 %v1010, 0.0
  %v1333 = vmax.f32 %v1015, 0.0
  %v1334 = vmax.f32 %v1018, 0.0
  %v1335 = vmax.f32 %v1023, 0.0
  %v1336 = vmax.f32 %v1026, 0.0
  %v1337 = vmax.f32 %v1031, 0.0
  %v1338 = vmax.f32 %v1034, 0.0
  %v1339 = vmax.f32 %v1039, 0.0
  %v1340 = vmax.f32 %v1042, 0.0
  %v1341 = vmax.f32 %v1047, 0.0
  %v1342 = vmax.f32 %v1050, 0.0
  %v1343 = vmax.f32 %v1055, 0.0
  %v1344 = vmax.f32 %v1058, 0.0
  %v1345 = vmax.f32 %v1063, 0.0
  %v1346 = vmax.f32 %v1066, 0.0
  %v1347 = vmax.f32 %v1071, 0.0
  %v1348 = vmax.f32 %v1074, 0.0
  %v1349 = vmax.f32 %v1079, 0.0
  %v1350 = vmax.f32 %v1082, 0.0
  %v1351 = vmax.f32 %v1087, 0.0
  %v1352 = vmax.f32 %v1090, 0.0
  %v1353 = vmax.f32 %v1095, 0.0
  %v1354 = vmax.f32 %v1098, 0.0
  %v1355 = vmax.f32 %v1103, 0.0
  %v1356 = vmax.f32 %v1106, 0.0
  %v1357 = vmax.f32 %v1111, 0.0
  %v1358 = vmax.f32 %v1114, 0.0
  %v1359 = vmax.f32 %v1119, 0.0
  %v1360 = vmax.f32 %v1122, 0.0
  %v1361 = vmax.f32 %v1127, 0.0
  %v1362 = vmax.f32 %v1130, 0.0
  %v1363 = vmax.f32 %v1135, 0.0
  %v1364 = vmax.f32 %v1138, 0.0
  %v1365 = vmax.f32 %v1143, 0.0
  %v1366 = vmax.f32 %v1146, 0.0
  %v1367 = vmax.f32 %v1151, 0.0
  %v1368 = vmax.f32 %v1154, 0.0
  %v1369 = vmax.f32 %v1159, 0.0
  %v1370 = vmax.f32 %v1162, 0.0
  %v1371 = vmax.f32 %v1167, 0.0
  %v1372 = vmax.f32 %v1170, 0.0
  %v1373 = vmax.f32 %v1175, 0.0
  %v1374 = vmax.f32 %v1178, 0.0
  %v1375 = vmax.f32 %v1183, 0.0
  %v1376 = vmax.f32 %v1186, 0.0
  %v1377 = vmax.f32 %v1191, 0.0
  %v1378 = vmax.f32 %v1194, 0.0
  %v1379 = vmax.f32 %v1199, 0.0
  %v1380 = vmax.f32 %v1202, 0.0
  %v1381 = vmax.f32 %v1207, 0.0
  %v1382 = vmax.f32 %v1210, 0.0
  %v1383 = vmax.f32 %v1215, 0.0
  %v1384 = vmax.f32 %v1218, 0.0
  %v1385 = vmax.f32 %v1223, 0.0
  %v1386 = vmax.f32 %v1226, 0.0
  %v1387 = vmax.f32 %v1231, 0.0
  %v1388 = vmax.f32 %v1234, 0.0
  %v1389 = vmax.f32 %v1239, 0.0
  %v1390 = vmax.f32 %v1242, 0.0
  %v1391 = vmax.f32 %v1247, 0.0
  %v1392 = vmax.f32 %v1250, 0.0
  %v1393 = vmax.f32 %v1255, 0.0
  %v1394 = vmax.f32 %v1258, 0.0
  %v1395 = vmax.f32 %v1263, 0.0
  %v1396 = vmax.f32 %v1266, 0.0
  %1397 = vst [vmem:[%s3] sm:$0xff] %v1269
  %1398 = vst [vmem:[%s3 + $0x8] sm:$0xff] %v1270
  %1399 = vst [vmem:[%s3 + $0x10] sm:$0xff] %v1271
  %1400 = vst [vmem:[%s3 + $0x18] sm:$0xff] %v1272
  %1401 = vst [vmem:[%s3 + $0x20] sm:$0xff] %v1273
  %1402 = vst [vmem:[%s3 + $0x28] sm:$0xff] %v1274
  %1403 = vst [vmem:[%s3 + $0x30] sm:$0xff] %v1275
  %1404 = vst [vmem:[%s3 + $0x38] sm:$0xff] %v1276
  %1405 = vst [vmem:[%s3 + $0x40] sm:$0xff] %v1277
  %1406 = vst [vmem:[%s3 + $0x48] sm:$0xff] %v1278
  %1407 = vst [vmem:[%s3 + $0x50] sm:$0xff] %v1279
  %1408 = vst [vmem:[%s3 + $0x58] sm:$0xff] %v1280
  %1409 = vst [vmem:[%s3 + $0x60] sm:$0xff] %v1281
  %1410 = vst [vmem:[%s3 + $0x68] sm:$0xff] %v1282
  %1411 = vst [vmem:[%s3 + $0x70] sm:$0xff] %v1283
  %1412 = vst [vmem:[%s3 + $0x78] sm:$0xff] %v1284
  %1413 = vst [vmem:[%s3 + $0x80] sm:$0xff] %v1285
  %1414 = vst [vmem:[%s3 + $0x88] sm:$0xff] %v1286
  %1415 = vst [vmem:[%s3 + $0x90] sm:$0xff] %v1287
  %1416 = vst [vmem:[%s3 + $0x98] sm:$0xff] %v1288
  %1417 = vst [vmem:[%s3 + $0xa0] sm:$0xff] %v1289
  %1418 = vst [vmem:[%s3 + $0xa8] sm:$0xff] %v1290
  %1419 = vst [vmem:[%s3 + $0xb0] sm:$0xff] %v1291
  %1420 = vst [vmem:[%s3 + $0xb8] sm:$0xff] %v1292
  %1421 = vst [vmem:[%s3 + $0xc0] sm:$0xff] %v1293
  %1422 = vst [vmem:[%s3 + $0xc8] sm:$0xff] %v1294
  %1423 = vst [vmem:[%s3 + $0xd0] sm:$0xff] %v1295
  %1424 = vst [vmem:[%s3 + $0xd8] sm:$0xff] %v1296
  %1425 = vst [vmem:[%s3 + $0xe0] sm:$0xff] %v1297
  %1426 = vst [vmem:[%s3 + $0xe8] sm:$0xff] %v1298
  %1427 = vst [vmem:[%s3 + $0xf0] sm:$0xff] %v1299
  %1428 = vst [vmem:[%s3 + $0xf8] sm:$0xff] %v1300
  %1429 = vst [vmem:[%s3 + $0x100] sm:$0xff] %v1301
  %1430 = vst [vmem:[%s3 + $0x108] sm:$0xff] %v1302
  %1431 = vst [vmem:[%s3 + $0x110] sm:$0xff] %v1303
  %1432 = vst [vmem:[%s3 + $0x118] sm:$0xff] %v1304
  %1433 = vst [vmem:[%s3 + $0x120] sm:$0xff] %v1305
  %1434 = vst [vmem:[%s3 + $0x128] sm:$0xff] %v1306
  %1435 = vst [vmem:[%s3 + $0x130] sm:$0xff] %v1307
  %1436 = vst [vmem:[%s3 + $0x138] sm:$0xff] %v1308
  %1437 = vst [vmem:[%s3 + $0x140] sm:$0xff] %v1309
  %1438 = vst [vmem:[%s3 + $0x148] sm:$0xff] %v1310
  %1439 = vst [vmem:[%s3 + $0x150] sm:$0xff] %v1311
  %1440 = vst [vmem:[%s3 + $0x158] sm:$0xff] %v1312
  %1441 = vst [vmem:[%s3 + $0x160] sm:$0xff] %v1313
  %1442 = vst [vmem:[%s3 + $0x168] sm:$0xff] %v1314
  %1443 = vst [vmem:[%s3 + $0x170] sm:$0xff] %v1315
  %1444 = vst [vmem:[%s3 + $0x178] sm:$0xff] %v1316
  %1445 = vst [vmem:[%s3 + $0x180] sm:$0xff] %v1317
  %1446 = vst [vmem:[%s3 + $0x188] sm:$0xff] %v1318
  %1447 = vst [vmem:[%s3 + $0x190] sm:$0xff] %v1319
  %1448 = vst [vmem:[%s3 + $0x198] sm:$0xff] %v1320
  %1449 = vst [vmem:[%s3 + $0x1a0] sm:$0xff] %v1321
  %1450 = vst [vmem:[%s3 + $0x1a8] sm:$0xff] %v1322
  %1451 = vst [vmem:[%s3 + $0x1b0] sm:$0xff] %v1323
  %1452 = vst [vmem:[%s3 + $0x1b8] sm:$0xff] %v1324
  %1453 = vst [vmem:[%s3 + $0x1c0] sm:$0xff] %v1325
  %1454 = vst [vmem:[%s3 + $0x1c8] sm:$0xff] %v1326
  %1455 = vst [vmem:[%s3 + $0x1d0] sm:$0xff] %v1327
  %1456 = vst [vmem:[%s3 + $0x1d8] sm:$0xff] %v1328
  %1457 = vst [vmem:[%s3 + $0x1e0] sm:$0xff] %v1329
  %1458 = vst [vmem:[%s3 + $0x1e8] sm:$0xff] %v1330
  %1459 = vst [vmem:[%s3 + $0x1f0] sm:$0xff] %v1331
  %1460 = vst [vmem:[%s3 + $0x1f8] sm:$0xff] %v1332
  %1461 = vst [vmem:[%s3 + $0x200] sm:$0xff] %v1333
  %1462 = vst [vmem:[%s3 + $0x208] sm:$0xff] %v1334
  %1463 = vst [vmem:[%s3 + $0x210] sm:$0xff] %v1335
  %1464 = vst [vmem:[%s3 + $0x218] sm:$0xff] %v1336
  %1465 = vst [vmem:[%s3 + $0x220] sm:$0xff] %v1337
  %1466 = vst [vmem:[%s3 + $0x228] sm:$0xff] %v1338
  %1467 = vst [vmem:[%s3 + $0x230] sm:$0xff] %v1339
  %1468 = vst [vmem:[%s3 + $0x238] sm:$0xff] %v1340
  %1469 = vst [vmem:[%s3 + $0x240] sm:$0xff] %v1341
  %1470 = vst [vmem:[%s3 + $0x248] sm:$0xff] %v1342
  %1471 = vst [vmem:[%s3 + $0x250] sm:$0xff] %v1343
  %1472 = vst [vmem:[%s3 + $0x258] sm:$0xff] %v1344
  %1473 = vst [vmem:[%s3 + $0x260] sm:$0xff] %v1345
  %1474 = vst [vmem:[%s3 + $0x268] sm:$0xff] %v1346
  %1475 = vst [vmem:[%s3 + $0x270] sm:$0xff] %v1347
  %1476 = vst [vmem:[%s3 + $0x278] sm:$0xff] %v1348
  %1477 = vst [vmem:[%s3 + $0x280] sm:$0xff] %v1349
  %1478 = vst [vmem:[%s3 + $0x288] sm:$0xff] %v1350
  %1479 = vst [vmem:[%s3 + $0x290] sm:$0xff] %v1351
  %1480 = vst [vmem:[%s3 + $0x298] sm:$0xff] %v1352
  %1481 = vst [vmem:[%s3 + $0x2a0] sm:$0xff] %v1353
  %1482 = vst [vmem:[%s3 + $0x2a8] sm:$0xff] %v1354
  %1483 = vst [vmem:[%s3 + $0x2b0] sm:$0xff] %v1355
  %1484 = vst [vmem:[%s3 + $0x2b8] sm:$0xff] %v1356
  %1485 = vst [vmem:[%s3 + $0x2c0] sm:$0xff] %v1357
  %1486 = vst [vmem:[%s3 + $0x2c8] sm:$0xff] %v1358
  %1487 = vst [vmem:[%s3 + $0x2d0] sm:$0xff] %v1359
  %1488 = vst [vmem:[%s3 + $0x2d8] sm:$0xff] %v1360
  %1489 = vst [vmem:[%s3 + $0x2e0] sm:$0xff] %v1361
  %1490 = vst [vmem:[%s3 + $0x2e8] sm:$0xff] %v1362
  %1491 = vst [vmem:[%s3 + $0x2f0] sm:$0xff] %v1363
  %1492 = vst [vmem:[%s3 + $0x2f8] sm:$0xff] %v1364
  %1493 = vst [vmem:[%s3 + $0x300] sm:$0xff] %v1365
  %1494 = vst [vmem:[%s3 + $0x308] sm:$0xff] %v1366
  %1495 = vst [vmem:[%s3 + $0x310] sm:$0xff] %v1367
  %1496 = vst [vmem:[%s3 + $0x318] sm:$0xff] %v1368
  %1497 = vst [vmem:[%s3 + $0x320] sm:$0xff] %v1369
  %1498 = vst [vmem:[%s3 + $0x328] sm:$0xff] %v1370
  %1499 = vst [vmem:[%s3 + $0x330] sm:$0xff] %v1371
  %1500 = vst [vmem:[%s3 + $0x338] sm:$0xff] %v1372
  %1501 = vst [vmem:[%s3 + $0x340] sm:$0xff] %v1373
  %1502 = vst [vmem:[%s3 + $0x348] sm:$0xff] %v1374
  %1503 = vst [vmem:[%s3 + $0x350] sm:$0xff] %v1375
  %1504 = vst [vmem:[%s3 + $0x358] sm:$0xff] %v1376
  %1505 = vst [vmem:[%s3 + $0x360] sm:$0xff] %v1377
  %1506 = vst [vmem:[%s3 + $0x368] sm:$0xff] %v1378
  %1507 = vst [vmem:[%s3 + $0x370] sm:$0xff] %v1379
  %1508 = vst [vmem:[%s3 + $0x378] sm:$0xff] %v1380
  %1509 = vst [vmem:[%s3 + $0x380] sm:$0xff] %v1381
  %1510 = vst [vmem:[%s3 + $0x388] sm:$0xff] %v1382
  %1511 = vst [vmem:[%s3 + $0x390] sm:$0xff] %v1383
  %1512 = vst [vmem:[%s3 + $0x398] sm:$0xff] %v1384
  %1513 = vst [vmem:[%s3 + $0x3a0] sm:$0xff] %v1385
  %1514 = vst [vmem:[%s3 + $0x3a8] sm:$0xff] %v1386
  %1515 = vst [vmem:[%s3 + $0x3b0] sm:$0xff] %v1387
  %1516 = vst [vmem:[%s3 + $0x3b8] sm:$0xff] %v1388
  %1517 = vst [vmem:[%s3 + $0x3c0] sm:$0xff] %v1389
  %1518 = vst [vmem:[%s3 + $0x3c8] sm:$0xff] %v1390
  %1519 = vst [vmem:[%s3 + $0x3d0] sm:$0xff] %v1391
  %1520 = vst [vmem:[%s3 + $0x3d8] sm:$0xff] %v1392
  %1521 = vst [vmem:[%s3 + $0x3e0] sm:$0xff] %v1393
  %1522 = vst [vmem:[%s3 + $0x3e8] sm:$0xff] %v1394
  %1523 = vst [vmem:[%s3 + $0x3f0] sm:$0xff] %v1395
  %1524 = vst [vmem:[%s3 + $0x3f8] sm:$0xff] %v1396
  %s1525 = smul.u32 0, 1024
  %v1526 = vlaneseq
  %v1527 = vshrl.u32 %v1526, 7
  %v1528 = vadd.s32 %v1527, 8
  %v1529 = vadd.s32 %v1527, 16
  %v1530 = vadd.s32 %v1527, 24
  %v1531 = vadd.s32 %v1527, 32
  %v1532 = vadd.s32 %v1527, 40
  %v1533 = vadd.s32 %v1527, 48
  %v1534 = vadd.s32 %v1527, 56
  %v1535 = vadd.s32 %v1527, 64
  %v1536 = vadd.s32 %v1527, 72
  %v1537 = vadd.s32 %v1527, 80
  %v1538 = vadd.s32 %v1527, 88
  %v1539 = vadd.s32 %v1527, 96
  %v1540 = vadd.s32 %v1527, 104
  %v1541 = vadd.s32 %v1527, 112
  %v1542 = vadd.s32 %v1527, 120
  %v1543 = vadd.s32 %v1527, 128
  %v1544 = vadd.s32 %v1527, 136
  %v1545 = vadd.s32 %v1527, 144
  %v1546 = vadd.s32 %v1527, 152
  %v1547 = vadd.s32 %v1527, 160
  %v1548 = vadd.s32 %v1527, 168
  %v1549 = vadd.s32 %v1527, 176
  %v1550 = vadd.s32 %v1527, 184
  %v1551 = vadd.s32 %v1527, 192
  %v1552 = vadd.s32 %v1527, 200
  %v1553 = vadd.s32 %v1527, 208
  %v1554 = vadd.s32 %v1527, 216
  %v1555 = vadd.s32 %v1527, 224
  %v1556 = vadd.s32 %v1527, 232
  %v1557 = vadd.s32 %v1527, 240
  %v1558 = vadd.s32 %v1527, 248
  %v1559 = vadd.s32 %v1527, 256
  %v1560 = vadd.s32 %v1527, 264
  %v1561 = vadd.s32 %v1527, 272
  %v1562 = vadd.s32 %v1527, 280
  %v1563 = vadd.s32 %v1527, 288
  %v1564 = vadd.s32 %v1527, 296
  %v1565 = vadd.s32 %v1527, 304
  %v1566 = vadd.s32 %v1527, 312
  %v1567 = vadd.s32 %v1527, 320
  %v1568 = vadd.s32 %v1527, 328
  %v1569 = vadd.s32 %v1527, 336
  %v1570 = vadd.s32 %v1527, 344
  %v1571 = vadd.s32 %v1527, 352
  %v1572 = vadd.s32 %v1527, 360
  %v1573 = vadd.s32 %v1527, 368
  %v1574 = vadd.s32 %v1527, 376
  %v1575 = vadd.s32 %v1527, 384
  %v1576 = vadd.s32 %v1527, 392
  %v1577 = vadd.s32 %v1527, 400
  %v1578 = vadd.s32 %v1527, 408
  %v1579 = vadd.s32 %v1527, 416
  %v1580 = vadd.s32 %v1527, 424
  %v1581 = vadd.s32 %v1527, 432
  %v1582 = vadd.s32 %v1527, 440
  %v1583 = vadd.s32 %v1527, 448
  %v1584 = vadd.s32 %v1527, 456
  %v1585 = vadd.s32 %v1527, 464
  %v1586 = vadd.s32 %v1527, 472
  %v1587 = vadd.s32 %v1527, 480
  %v1588 = vadd.s32 %v1527, 488
  %v1589 = vadd.s32 %v1527, 496
  %v1590 = vadd.s32 %v1527, 504
  %v1591 = vadd.s32 %v1527, 512
  %v1592 = vadd.s32 %v1527, 520
  %v1593 = vadd.s32 %v1527, 528
  %v1594 = vadd.s32 %v1527, 536
  %v1595 = vadd.s32 %v1527, 544
  %v1596 = vadd.s32 %v1527, 552
  %v1597 = vadd.s32 %v1527, 560
  %v1598 = vadd.s32 %v1527, 568
  %v1599 = vadd.s32 %v1527, 576
  %v1600 = vadd.s32 %v1527, 584
  %v1601 = vadd.s32 %v1527, 592
  %v1602 = vadd.s32 %v1527, 600
  %v1603 = vadd.s32 %v1527, 608
  %v1604 = vadd.s32 %v1527, 616
  %v1605 = vadd.s32 %v1527, 624
  %v1606 = vadd.s32 %v1527, 632
  %v1607 = vadd.s32 %v1527, 640
  %v1608 = vadd.s32 %v1527, 648
  %v1609 = vadd.s32 %v1527, 656
  %v1610 = vadd.s32 %v1527, 664
  %v1611 = vadd.s32 %v1527, 672
  %v1612 = vadd.s32 %v1527, 680
  %v1613 = vadd.s32 %v1527, 688
  %v1614 = vadd.s32 %v1527, 696
  %v1615 = vadd.s32 %v1527, 704
  %v1616 = vadd.s32 %v1527, 712
  %v1617 = vadd.s32 %v1527, 720
  %v1618 = vadd.s32 %v1527, 728
  %v1619 = vadd.s32 %v1527, 736
  %v1620 = vadd.s32 %v1527, 744
  %v1621 = vadd.s32 %v1527, 752
  %v1622 = vadd.s32 %v1527, 760
  %v1623 = vadd.s32 %v1527, 768
  %v1624 = vadd.s32 %v1527, 776
  %v1625 = vadd.s32 %v1527, 784
  %v1626 = vadd.s32 %v1527, 792
  %v1627 = vadd.s32 %v1527, 800
  %v1628 = vadd.s32 %v1527, 808
  %v1629 = vadd.s32 %v1527, 816
  %v1630 = vadd.s32 %v1527, 824
  %v1631 = vadd.s32 %v1527, 832
  %v1632 = vadd.s32 %v1527, 840
  %v1633 = vadd.s32 %v1527, 848
  %v1634 = vadd.s32 %v1527, 856
  %v1635 = vadd.s32 %v1527, 864
  %v1636 = vadd.s32 %v1527, 872
  %v1637 = vadd.s32 %v1527, 880
  %v1638 = vadd.s32 %v1527, 888
  %v1639 = vadd.s32 %v1527, 896
  %v1640 = vadd.s32 %v1527, 904
  %v1641 = vadd.s32 %v1527, 912
  %v1642 = vadd.s32 %v1527, 920
  %v1643 = vadd.s32 %v1527, 928
  %v1644 = vadd.s32 %v1527, 936
  %v1645 = vadd.s32 %v1527, 944
  %v1646 = vadd.s32 %v1527, 952
  %v1647 = vadd.s32 %v1527, 960
  %v1648 = vadd.s32 %v1527, 968
  %v1649 = vadd.s32 %v1527, 976
  %v1650 = vadd.s32 %v1527, 984
  %v1651 = vadd.s32 %v1527, 992
  %v1652 = vadd.s32 %v1527, 1000
  %v1653 = vadd.s32 %v1527, 1008
  %v1654 = vadd.s32 %v1527, 1016
  %v1655 = vstv %s1525
  %v1656 = vadd.s32 %v1655, %v1527
  %v1657 = vadd.s32 %v1655, %v1528
  %v1658 = vadd.s32 %v1655, %v1529
  %v1659 = vadd.s32 %v1655, %v1530
  %v1660 = vadd.s32 %v1655, %v1531
  %v1661 = vadd.s32 %v1655, %v1532
  %v1662 = vadd.s32 %v1655, %v1533
  %v1663 = vadd.s32 %v1655, %v1534
  %v1664 = vadd.s32 %v1655, %v1535
  %v1665 = vadd.s32 %v1655, %v1536
  %v1666 = vadd.s32 %v1655, %v1537
  %v1667 = vadd.s32 %v1655, %v1538
  %v1668 = vadd.s32 %v1655, %v1539
  %v1669 = vadd.s32 %v1655, %v1540
  %v1670 = vadd.s32 %v1655, %v1541
  %v1671 = vadd.s32 %v1655, %v1542
  %v1672 = vadd.s32 %v1655, %v1543
  %v1673 = vadd.s32 %v1655, %v1544
  %v1674 = vadd.s32 %v1655, %v1545
  %v1675 = vadd.s32 %v1655, %v1546
  %v1676 = vadd.s32 %v1655, %v1547
  %v1677 = vadd.s32 %v1655, %v1548
  %v1678 = vadd.s32 %v1655, %v1549
  %v1679 = vadd.s32 %v1655, %v1550
  %v1680 = vadd.s32 %v1655, %v1551
  %v1681 = vadd.s32 %v1655, %v1552
  %v1682 = vadd.s32 %v1655, %v1553
  %v1683 = vadd.s32 %v1655, %v1554
  %v1684 = vadd.s32 %v1655, %v1555
  %v1685 = vadd.s32 %v1655, %v1556
  %v1686 = vadd.s32 %v1655, %v1557
  %v1687 = vadd.s32 %v1655, %v1558
  %v1688 = vadd.s32 %v1655, %v1559
  %v1689 = vadd.s32 %v1655, %v1560
  %v1690 = vadd.s32 %v1655, %v1561
  %v1691 = vadd.s32 %v1655, %v1562
  %v1692 = vadd.s32 %v1655, %v1563
  %v1693 = vadd.s32 %v1655, %v1564
  %v1694 = vadd.s32 %v1655, %v1565
  %v1695 = vadd.s32 %v1655, %v1566
  %v1696 = vadd.s32 %v1655, %v1567
  %v1697 = vadd.s32 %v1655, %v1568
  %v1698 = vadd.s32 %v1655, %v1569
  %v1699 = vadd.s32 %v1655, %v1570
  %v1700 = vadd.s32 %v1655, %v1571
  %v1701 = vadd.s32 %v1655, %v1572
  %v1702 = vadd.s32 %v1655, %v1573
  %v1703 = vadd.s32 %v1655, %v1574
  %v1704 = vadd.s32 %v1655, %v1575
  %v1705 = vadd.s32 %v1655, %v1576
  %v1706 = vadd.s32 %v1655, %v1577
  %v1707 = vadd.s32 %v1655, %v1578
  %v1708 = vadd.s32 %v1655, %v1579
  %v1709 = vadd.s32 %v1655, %v1580
  %v1710 = vadd.s32 %v1655, %v1581
  %v1711 = vadd.s32 %v1655, %v1582
  %v1712 = vadd.s32 %v1655, %v1583
  %v1713 = vadd.s32 %v1655, %v1584
  %v1714 = vadd.s32 %v1655, %v1585
  %v1715 = vadd.s32 %v1655, %v1586
  %v1716 = vadd.s32 %v1655, %v1587
  %v1717 = vadd.s32 %v1655, %v1588
  %v1718 = vadd.s32 %v1655, %v1589
  %v1719 = vadd.s32 %v1655, %v1590
  %v1720 = vadd.s32 %v1655, %v1591
  %v1721 = vadd.s32 %v1655, %v1592
  %v1722 = vadd.s32 %v1655, %v1593
  %v1723 = vadd.s32 %v1655, %v1594
  %v1724 = vadd.s32 %v1655, %v1595
  %v1725 = vadd.s32 %v1655, %v1596
  %v1726 = vadd.s32 %v1655, %v1597
  %v1727 = vadd.s32 %v1655, %v1598
  %v1728 = vadd.s32 %v1655, %v1599
  %v1729 = vadd.s32 %v1655, %v1600
  %v1730 = vadd.s32 %v1655, %v1601
  %v1731 = vadd.s32 %v1655, %v1602
  %v1732 = vadd.s32 %v1655, %v1603
  %v1733 = vadd.s32 %v1655, %v1604
  %v1734 = vadd.s32 %v1655, %v1605
  %v1735 = vadd.s32 %v1655, %v1606
  %v1736 = vadd.s32 %v1655, %v1607
  %v1737 = vadd.s32 %v1655, %v1608
  %v1738 = vadd.s32 %v1655, %v1609
  %v1739 = vadd.s32 %v1655, %v1610
  %v1740 = vadd.s32 %v1655, %v1611
  %v1741 = vadd.s32 %v1655, %v1612
  %v1742 = vadd.s32 %v1655, %v1613
  %v1743 = vadd.s32 %v1655, %v1614
  %v1744 = vadd.s32 %v1655, %v1615
  %v1745 = vadd.s32 %v1655, %v1616
  %v1746 = vadd.s32 %v1655, %v1617
  %v1747 = vadd.s32 %v1655, %v1618
  %v1748 = vadd.s32 %v1655, %v1619
  %v1749 = vadd.s32 %v1655, %v1620
  %v1750 = vadd.s32 %v1655, %v1621
  %v1751 = vadd.s32 %v1655, %v1622
  %v1752 = vadd.s32 %v1655, %v1623
  %v1753 = vadd.s32 %v1655, %v1624
  %v1754 = vadd.s32 %v1655, %v1625
  %v1755 = vadd.s32 %v1655, %v1626
  %v1756 = vadd.s32 %v1655, %v1627
  %v1757 = vadd.s32 %v1655, %v1628
  %v1758 = vadd.s32 %v1655, %v1629
  %v1759 = vadd.s32 %v1655, %v1630
  %v1760 = vadd.s32 %v1655, %v1631
  %v1761 = vadd.s32 %v1655, %v1632
  %v1762 = vadd.s32 %v1655, %v1633
  %v1763 = vadd.s32 %v1655, %v1634
  %v1764 = vadd.s32 %v1655, %v1635
  %v1765 = vadd.s32 %v1655, %v1636
  %v1766 = vadd.s32 %v1655, %v1637
  %v1767 = vadd.s32 %v1655, %v1638
  %v1768 = vadd.s32 %v1655, %v1639
  %v1769 = vadd.s32 %v1655, %v1640
  %v1770 = vadd.s32 %v1655, %v1641
  %v1771 = vadd.s32 %v1655, %v1642
  %v1772 = vadd.s32 %v1655, %v1643
  %v1773 = vadd.s32 %v1655, %v1644
  %v1774 = vadd.s32 %v1655, %v1645
  %v1775 = vadd.s32 %v1655, %v1646
  %v1776 = vadd.s32 %v1655, %v1647
  %v1777 = vadd.s32 %v1655, %v1648
  %v1778 = vadd.s32 %v1655, %v1649
  %v1779 = vadd.s32 %v1655, %v1650
  %v1780 = vadd.s32 %v1655, %v1651
  %v1781 = vadd.s32 %v1655, %v1652
  %v1782 = vadd.s32 %v1655, %v1653
  %v1783 = vadd.s32 %v1655, %v1654
  %vm1784 = vcmp.lt.s32.totalorder %v1656, 1024
  %vm1785 = vcmp.lt.s32.totalorder %v1657, 1024
  %vm1786 = vcmp.lt.s32.totalorder %v1658, 1024
  %vm1787 = vcmp.lt.s32.totalorder %v1659, 1024
  %vm1788 = vcmp.lt.s32.totalorder %v1660, 1024
  %vm1789 = vcmp.lt.s32.totalorder %v1661, 1024
  %vm1790 = vcmp.lt.s32.totalorder %v1662, 1024
  %vm1791 = vcmp.lt.s32.totalorder %v1663, 1024
  %vm1792 = vcmp.lt.s32.totalorder %v1664, 1024
  %vm1793 = vcmp.lt.s32.totalorder %v1665, 1024
  %vm1794 = vcmp.lt.s32.totalorder %v1666, 1024
  %vm1795 = vcmp.lt.s32.totalorder %v1667, 1024
  %vm1796 = vcmp.lt.s32.totalorder %v1668, 1024
  %vm1797 = vcmp.lt.s32.totalorder %v1669, 1024
  %vm1798 = vcmp.lt.s32.totalorder %v1670, 1024
  %vm1799 = vcmp.lt.s32.totalorder %v1671, 1024
  %vm1800 = vcmp.lt.s32.totalorder %v1672, 1024
  %vm1801 = vcmp.lt.s32.totalorder %v1673, 1024
  %vm1802 = vcmp.lt.s32.totalorder %v1674, 1024
  %vm1803 = vcmp.lt.s32.totalorder %v1675, 1024
  %vm1804 = vcmp.lt.s32.totalorder %v1676, 1024
  %vm1805 = vcmp.lt.s32.totalorder %v1677, 1024
  %vm1806 = vcmp.lt.s32.totalorder %v1678, 1024
  %vm1807 = vcmp.lt.s32.totalorder %v1679, 1024
  %vm1808 = vcmp.lt.s32.totalorder %v1680, 1024
  %vm1809 = vcmp.lt.s32.totalorder %v1681, 1024
  %vm1810 = vcmp.lt.s32.totalorder %v1682, 1024
  %vm1811 = vcmp.lt.s32.totalorder %v1683, 1024
  %vm1812 = vcmp.lt.s32.totalorder %v1684, 1024
  %vm1813 = vcmp.lt.s32.totalorder %v1685, 1024
  %vm1814 = vcmp.lt.s32.totalorder %v1686, 1024
  %vm1815 = vcmp.lt.s32.totalorder %v1687, 1024
  %vm1816 = vcmp.lt.s32.totalorder %v1688, 1024
  %vm1817 = vcmp.lt.s32.totalorder %v1689, 1024
  %vm1818 = vcmp.lt.s32.totalorder %v1690, 1024
  %vm1819 = vcmp.lt.s32.totalorder %v1691, 1024
  %vm1820 = vcmp.lt.s32.totalorder %v1692, 1024
  %vm1821 = vcmp.lt.s32.totalorder %v1693, 1024
  %vm1822 = vcmp.lt.s32.totalorder %v1694, 1024
  %vm1823 = vcmp.lt.s32.totalorder %v1695, 1024
  %vm1824 = vcmp.lt.s32.totalorder %v1696, 1024
  %vm1825 = vcmp.lt.s32.totalorder %v1697, 1024
  %vm1826 = vcmp.lt.s32.totalorder %v1698, 1024
  %vm1827 = vcmp.lt.s32.totalorder %v1699, 1024
  %vm1828 = vcmp.lt.s32.totalorder %v1700, 1024
  %vm1829 = vcmp.lt.s32.totalorder %v1701, 1024
  %vm1830 = vcmp.lt.s32.totalorder %v1702, 1024
  %vm1831 = vcmp.lt.s32.totalorder %v1703, 1024
  %vm1832 = vcmp.lt.s32.totalorder %v1704, 1024
  %vm1833 = vcmp.lt.s32.totalorder %v1705, 1024
  %vm1834 = vcmp.lt.s32.totalorder %v1706, 1024
  %vm1835 = vcmp.lt.s32.totalorder %v1707, 1024
  %vm1836 = vcmp.lt.s32.totalorder %v1708, 1024
  %vm1837 = vcmp.lt.s32.totalorder %v1709, 1024
  %vm1838 = vcmp.lt.s32.totalorder %v1710, 1024
  %vm1839 = vcmp.lt.s32.totalorder %v1711, 1024
  %vm1840 = vcmp.lt.s32.totalorder %v1712, 1024
  %vm1841 = vcmp.lt.s32.totalorder %v1713, 1024
  %vm1842 = vcmp.lt.s32.totalorder %v1714, 1024
  %vm1843 = vcmp.lt.s32.totalorder %v1715, 1024
  %vm1844 = vcmp.lt.s32.totalorder %v1716, 1024
  %vm1845 = vcmp.lt.s32.totalorder %v1717, 1024
  %vm1846 = vcmp.lt.s32.totalorder %v1718, 1024
  %vm1847 = vcmp.lt.s32.totalorder %v1719, 1024
  %vm1848 = vcmp.lt.s32.totalorder %v1720, 1024
  %vm1849 = vcmp.lt.s32.totalorder %v1721, 1024
  %vm1850 = vcmp.lt.s32.totalorder %v1722, 1024
  %vm1851 = vcmp.lt.s32.totalorder %v1723, 1024
  %vm1852 = vcmp.lt.s32.totalorder %v1724, 1024
  %vm1853 = vcmp.lt.s32.totalorder %v1725, 1024
  %vm1854 = vcmp.lt.s32.totalorder %v1726, 1024
  %vm1855 = vcmp.lt.s32.totalorder %v1727, 1024
  %vm1856 = vcmp.lt.s32.totalorder %v1728, 1024
  %vm1857 = vcmp.lt.s32.totalorder %v1729, 1024
  %vm1858 = vcmp.lt.s32.totalorder %v1730, 1024
  %vm1859 = vcmp.lt.s32.totalorder %v1731, 1024
  %vm1860 = vcmp.lt.s32.totalorder %v1732, 1024
  %vm1861 = vcmp.lt.s32.totalorder %v1733, 1024
  %vm1862 = vcmp.lt.s32.totalorder %v1734, 1024
  %vm1863 = vcmp.lt.s32.totalorder %v1735, 1024
  %vm1864 = vcmp.lt.s32.totalorder %v1736, 1024
  %vm1865 = vcmp.lt.s32.totalorder %v1737, 1024
  %vm1866 = vcmp.lt.s32.totalorder %v1738, 1024
  %vm1867 = vcmp.lt.s32.totalorder %v1739, 1024
  %vm1868 = vcmp.lt.s32.totalorder %v1740, 1024
  %vm1869 = vcmp.lt.s32.totalorder %v1741, 1024
  %vm1870 = vcmp.lt.s32.totalorder %v1742, 1024
  %vm1871 = vcmp.lt.s32.totalorder %v1743, 1024
  %vm1872 = vcmp.lt.s32.totalorder %v1744, 1024
  %vm1873 = vcmp.lt.s32.totalorder %v1745, 1024
  %vm1874 = vcmp.lt.s32.totalorder %v1746, 1024
  %vm1875 = vcmp.lt.s32.totalorder %v1747, 1024
  %vm1876 = vcmp.lt.s32.totalorder %v1748, 1024
  %vm1877 = vcmp.lt.s32.totalorder %v1749, 1024
  %vm1878 = vcmp.lt.s32.totalorder %v1750, 1024
  %vm1879 = vcmp.lt.s32.totalorder %v1751, 1024
  %vm1880 = vcmp.lt.s32.totalorder %v1752, 1024
  %vm1881 = vcmp.lt.s32.totalorder %v1753, 1024
  %vm1882 = vcmp.lt.s32.totalorder %v1754, 1024
  %vm1883 = vcmp.lt.s32.totalorder %v1755, 1024
  %vm1884 = vcmp.lt.s32.totalorder %v1756, 1024
  %vm1885 = vcmp.lt.s32.totalorder %v1757, 1024
  %vm1886 = vcmp.lt.s32.totalorder %v1758, 1024
  %vm1887 = vcmp.lt.s32.totalorder %v1759, 1024
  %vm1888 = vcmp.lt.s32.totalorder %v1760, 1024
  %vm1889 = vcmp.lt.s32.totalorder %v1761, 1024
  %vm1890 = vcmp.lt.s32.totalorder %v1762, 1024
  %vm1891 = vcmp.lt.s32.totalorder %v1763, 1024
  %vm1892 = vcmp.lt.s32.totalorder %v1764, 1024
  %vm1893 = vcmp.lt.s32.totalorder %v1765, 1024
  %vm1894 = vcmp.lt.s32.totalorder %v1766, 1024
  %vm1895 = vcmp.lt.s32.totalorder %v1767, 1024
  %vm1896 = vcmp.lt.s32.totalorder %v1768, 1024
  %vm1897 = vcmp.lt.s32.totalorder %v1769, 1024
  %vm1898 = vcmp.lt.s32.totalorder %v1770, 1024
  %vm1899 = vcmp.lt.s32.totalorder %v1771, 1024
  %vm1900 = vcmp.lt.s32.totalorder %v1772, 1024
  %vm1901 = vcmp.lt.s32.totalorder %v1773, 1024
  %vm1902 = vcmp.lt.s32.totalorder %v1774, 1024
  %vm1903 = vcmp.lt.s32.totalorder %v1775, 1024
  %vm1904 = vcmp.lt.s32.totalorder %v1776, 1024
  %vm1905 = vcmp.lt.s32.totalorder %v1777, 1024
  %vm1906 = vcmp.lt.s32.totalorder %v1778, 1024
  %vm1907 = vcmp.lt.s32.totalorder %v1779, 1024
  %vm1908 = vcmp.lt.s32.totalorder %v1780, 1024
  %vm1909 = vcmp.lt.s32.totalorder %v1781, 1024
  %vm1910 = vcmp.lt.s32.totalorder %v1782, 1024
  %vm1911 = vcmp.lt.s32.totalorder %v1783, 1024
  %v1912 = vsel %vm1784, %v1269, 0.0
  %v1913 = vsel %vm1785, %v1270, 0.0
  %v1914 = vsel %vm1786, %v1271, 0.0
  %v1915 = vsel %vm1787, %v1272, 0.0
  %v1916 = vsel %vm1788, %v1273, 0.0
  %v1917 = vsel %vm1789, %v1274, 0.0
  %v1918 = vsel %vm1790, %v1275, 0.0
  %v1919 = vsel %vm1791, %v1276, 0.0
  %v1920 = vsel %vm1792, %v1277, 0.0
  %v1921 = vsel %vm1793, %v1278, 0.0
  %v1922 = vsel %vm1794, %v1279, 0.0
  %v1923 = vsel %vm1795, %v1280, 0.0
  %v1924 = vsel %vm1796, %v1281, 0.0
  %v1925 = vsel %vm1797, %v1282, 0.0
  %v1926 = vsel %vm1798, %v1283, 0.0
  %v1927 = vsel %vm1799, %v1284, 0.0
  %v1928 = vsel %vm1800, %v1285, 0.0
  %v1929 = vsel %vm1801, %v1286, 0.0
  %v1930 = vsel %vm1802, %v1287, 0.0
  %v1931 = vsel %vm1803, %v1288, 0.0
  %v1932 = vsel %vm1804, %v1289, 0.0
  %v1933 = vsel %vm1805, %v1290, 0.0
  %v1934 = vsel %vm1806, %v1291, 0.0
  %v1935 = vsel %vm1807, %v1292, 0.0
  %v1936 = vsel %vm1808, %v1293, 0.0
  %v1937 = vsel %vm1809, %v1294, 0.0
  %v1938 = vsel %vm1810, %v1295, 0.0
  %v1939 = vsel %vm1811, %v1296, 0.0
  %v1940 = vsel %vm1812, %v1297, 0.0
  %v1941 = vsel %vm1813, %v1298, 0.0
  %v1942 = vsel %vm1814, %v1299, 0.0
  %v1943 = vsel %vm1815, %v1300, 0.0
  %v1944 = vsel %vm1816, %v1301, 0.0
  %v1945 = vsel %vm1817, %v1302, 0.0
  %v1946 = vsel %vm1818, %v1303, 0.0
  %v1947 = vsel %vm1819, %v1304, 0.0
  %v1948 = vsel %vm1820, %v1305, 0.0
  %v1949 = vsel %vm1821, %v1306, 0.0
  %v1950 = vsel %vm1822, %v1307, 0.0
  %v1951 = vsel %vm1823, %v1308, 0.0
  %v1952 = vsel %vm1824, %v1309, 0.0
  %v1953 = vsel %vm1825, %v1310, 0.0
  %v1954 = vsel %vm1826, %v1311, 0.0
  %v1955 = vsel %vm1827, %v1312, 0.0
  %v1956 = vsel %vm1828, %v1313, 0.0
  %v1957 = vsel %vm1829, %v1314, 0.0
  %v1958 = vsel %vm1830, %v1315, 0.0
  %v1959 = vsel %vm1831, %v1316, 0.0
  %v1960 = vsel %vm1832, %v1317, 0.0
  %v1961 = vsel %vm1833, %v1318, 0.0
  %v1962 = vsel %vm1834, %v1319, 0.0
  %v1963 = vsel %vm1835, %v1320, 0.0
  %v1964 = vsel %vm1836, %v1321, 0.0
  %v1965 = vsel %vm1837, %v1322, 0.0
  %v1966 = vsel %vm1838, %v1323, 0.0
  %v1967 = vsel %vm1839, %v1324, 0.0
  %v1968 = vsel %vm1840, %v1325, 0.0
  %v1969 = vsel %vm1841, %v1326, 0.0
  %v1970 = vsel %vm1842, %v1327, 0.0
  %v1971 = vsel %vm1843, %v1328, 0.0
  %v1972 = vsel %vm1844, %v1329, 0.0
  %v1973 = vsel %vm1845, %v1330, 0.0
  %v1974 = vsel %vm1846, %v1331, 0.0
  %v1975 = vsel %vm1847, %v1332, 0.0
  %v1976 = vsel %vm1848, %v1333, 0.0
  %v1977 = vsel %vm1849, %v1334, 0.0
  %v1978 = vsel %vm1850, %v1335, 0.0
  %v1979 = vsel %vm1851, %v1336, 0.0
  %v1980 = vsel %vm1852, %v1337, 0.0
  %v1981 = vsel %vm1853, %v1338, 0.0
  %v1982 = vsel %vm1854, %v1339, 0.0
  %v1983 = vsel %vm1855, %v1340, 0.0
  %v1984 = vsel %vm1856, %v1341, 0.0
  %v1985 = vsel %vm1857, %v1342, 0.0
  %v1986 = vsel %vm1858, %v1343, 0.0
  %v1987 = vsel %vm1859, %v1344, 0.0
  %v1988 = vsel %vm1860, %v1345, 0.0
  %v1989 = vsel %vm1861, %v1346, 0.0
  %v1990 = vsel %vm1862, %v1347, 0.0
  %v1991 = vsel %vm1863, %v1348, 0.0
  %v1992 = vsel %vm1864, %v1349, 0.0
  %v1993 = vsel %vm1865, %v1350, 0.0
  %v1994 = vsel %vm1866, %v1351, 0.0
  %v1995 = vsel %vm1867, %v1352, 0.0
  %v1996 = vsel %vm1868, %v1353, 0.0
  %v1997 = vsel %vm1869, %v1354, 0.0
  %v1998 = vsel %vm1870, %v1355, 0.0
  %v1999 = vsel %vm1871, %v1356, 0.0
  %v2000 = vsel %vm1872, %v1357, 0.0
  %v2001 = vsel %vm1873, %v1358, 0.0
  %v2002 = vsel %vm1874, %v1359, 0.0
  %v2003 = vsel %vm1875, %v1360, 0.0
  %v2004 = vsel %vm1876, %v1361, 0.0
  %v2005 = vsel %vm1877, %v1362, 0.0
  %v2006 = vsel %vm1878, %v1363, 0.0
  %v2007 = vsel %vm1879, %v1364, 0.0
  %v2008 = vsel %vm1880, %v1365, 0.0
  %v2009 = vsel %vm1881, %v1366, 0.0
  %v2010 = vsel %vm1882, %v1367, 0.0
  %v2011 = vsel %vm1883, %v1368, 0.0
  %v2012 = vsel %vm1884, %v1369, 0.0
  %v2013 = vsel %vm1885, %v1370, 0.0
  %v2014 = vsel %vm1886, %v1371, 0.0
  %v2015 = vsel %vm1887, %v1372, 0.0
  %v2016 = vsel %vm1888, %v1373, 0.0
  %v2017 = vsel %vm1889, %v1374, 0.0
  %v2018 = vsel %vm1890, %v1375, 0.0
  %v2019 = vsel %vm1891, %v1376, 0.0
  %v2020 = vsel %vm1892, %v1377, 0.0
  %v2021 = vsel %vm1893, %v1378, 0.0
  %v2022 = vsel %vm1894, %v1379, 0.0
  %v2023 = vsel %vm1895, %v1380, 0.0
  %v2024 = vsel %vm1896, %v1381, 0.0
  %v2025 = vsel %vm1897, %v1382, 0.0
  %v2026 = vsel %vm1898, %v1383, 0.0
  %v2027 = vsel %vm1899, %v1384, 0.0
  %v2028 = vsel %vm1900, %v1385, 0.0
  %v2029 = vsel %vm1901, %v1386, 0.0
  %v2030 = vsel %vm1902, %v1387, 0.0
  %v2031 = vsel %vm1903, %v1388, 0.0
  %v2032 = vsel %vm1904, %v1389, 0.0
  %v2033 = vsel %vm1905, %v1390, 0.0
  %v2034 = vsel %vm1906, %v1391, 0.0
  %v2035 = vsel %vm1907, %v1392, 0.0
  %v2036 = vsel %vm1908, %v1393, 0.0
  %v2037 = vsel %vm1909, %v1394, 0.0
  %v2038 = vsel %vm1910, %v1395, 0.0
  %v2039 = vsel %vm1911, %v1396, 0.0
  %v2040 = vadd.f32 %v1912, %v1913
  %v2041 = vadd.f32 %v2040, %v1914
  %v2042 = vadd.f32 %v2041, %v1915
  %v2043 = vadd.f32 %v2042, %v1916
  %v2044 = vadd.f32 %v2043, %v1917
  %v2045 = vadd.f32 %v2044, %v1918
  %v2046 = vadd.f32 %v2045, %v1919
  %v2047 = vadd.f32 %v2046, %v1920
  %v2048 = vadd.f32 %v2047, %v1921
  %v2049 = vadd.f32 %v2048, %v1922
  %v2050 = vadd.f32 %v2049, %v1923
  %v2051 = vadd.f32 %v2050, %v1924
  %v2052 = vadd.f32 %v2051, %v1925
  %v2053 = vadd.f32 %v2052, %v1926
  %v2054 = vadd.f32 %v2053, %v1927
  %v2055 = vadd.f32 %v2054, %v1928
  %v2056 = vadd.f32 %v2055, %v1929
  %v2057 = vadd.f32 %v2056, %v1930
  %v2058 = vadd.f32 %v2057, %v1931
  %v2059 = vadd.f32 %v2058, %v1932
  %v2060 = vadd.f32 %v2059, %v1933
  %v2061 = vadd.f32 %v2060, %v1934
  %v2062 = vadd.f32 %v2061, %v1935
  %v2063 = vadd.f32 %v2062, %v1936
  %v2064 = vadd.f32 %v2063, %v1937
  %v2065 = vadd.f32 %v2064, %v1938
  %v2066 = vadd.f32 %v2065, %v1939
  %v2067 = vadd.f32 %v2066, %v1940
  %v2068 = vadd.f32 %v2067, %v1941
  %v2069 = vadd.f32 %v2068, %v1942
  %v2070 = vadd.f32 %v2069, %v1943
  %v2071 = vadd.f32 %v2070, %v1944
  %v2072 = vadd.f32 %v2071, %v1945
  %v2073 = vadd.f32 %v2072, %v1946
  %v2074 = vadd.f32 %v2073, %v1947
  %v2075 = vadd.f32 %v2074, %v1948
  %v2076 = vadd.f32 %v2075, %v1949
  %v2077 = vadd.f32 %v2076, %v1950
  %v2078 = vadd.f32 %v2077, %v1951
  %v2079 = vadd.f32 %v2078, %v1952
  %v2080 = vadd.f32 %v2079, %v1953
  %v2081 = vadd.f32 %v2080, %v1954
  %v2082 = vadd.f32 %v2081, %v1955
  %v2083 = vadd.f32 %v2082, %v1956
  %v2084 = vadd.f32 %v2083, %v1957
  %v2085 = vadd.f32 %v2084, %v1958
  %v2086 = vadd.f32 %v2085, %v1959
  %v2087 = vadd.f32 %v2086, %v1960
  %v2088 = vadd.f32 %v2087, %v1961
  %v2089 = vadd.f32 %v2088, %v1962
  %v2090 = vadd.f32 %v2089, %v1963
  %v2091 = vadd.f32 %v2090, %v1964
  %v2092 = vadd.f32 %v2091, %v1965
  %v2093 = vadd.f32 %v2092, %v1966
  %v2094 = vadd.f32 %v2093, %v1967
  %v2095 = vadd.f32 %v2094, %v1968
  %v2096 = vadd.f32 %v2095, %v1969
  %v2097 = vadd.f32 %v2096, %v1970
  %v2098 = vadd.f32 %v2097, %v1971
  %v2099 = vadd.f32 %v2098, %v1972
  %v2100 = vadd.f32 %v2099, %v1973
  %v2101 = vadd.f32 %v2100, %v1974
  %v2102 = vadd.f32 %v2101, %v1975
  %v2103 = vadd.f32 %v2102, %v1976
  %v2104 = vadd.f32 %v2103, %v1977
  %v2105 = vadd.f32 %v2104, %v1978
  %v2106 = vadd.f32 %v2105, %v1979
  %v2107 = vadd.f32 %v2106, %v1980
  %v2108 = vadd.f32 %v2107, %v1981
  %v2109 = vadd.f32 %v2108, %v1982
  %v2110 = vadd.f32 %v2109, %v1983
  %v2111 = vadd.f32 %v2110, %v1984
  %v2112 = vadd.f32 %v2111, %v1985
  %v2113 = vadd.f32 %v2112, %v1986
  %v2114 = vadd.f32 %v2113, %v1987
  %v2115 = vadd.f32 %v2114, %v1988
  %v2116 = vadd.f32 %v2115, %v1989
  %v2117 = vadd.f32 %v2116, %v1990
  %v2118 = vadd.f32 %v2117, %v1991
  %v2119 = vadd.f32 %v2118, %v1992
  %v2120 = vadd.f32 %v2119, %v1993
  %v2121 = vadd.f32 %v2120, %v1994
  %v2122 = vadd.f32 %v2121, %v1995
  %v2123 = vadd.f32 %v2122, %v1996
  %v2124 = vadd.f32 %v2123, %v1997
  %v2125 = vadd.f32 %v2124, %v1998
  %v2126 = vadd.f32 %v2125, %v1999
  %v2127 = vadd.f32 %v2126, %v2000
  %v2128 = vadd.f32 %v2127, %v2001
  %v2129 = vadd.f32 %v2128, %v2002
  %v2130 = vadd.f32 %v2129, %v2003
  %v2131 = vadd.f32 %v2130, %v2004
  %v2132 = vadd.f32 %v2131, %v2005
  %v2133 = vadd.f32 %v2132, %v2006
  %v2134 = vadd.f32 %v2133, %v2007
  %v2135 = vadd.f32 %v2134, %v2008
  %v2136 = vadd.f32 %v2135, %v2009
  %v2137 = vadd.f32 %v2136, %v2010
  %v2138 = vadd.f32 %v2137, %v2011
  %v2139 = vadd.f32 %v2138, %v2012
  %v2140 = vadd.f32 %v2139, %v2013
  %v2141 = vadd.f32 %v2140, %v2014
  %v2142 = vadd.f32 %v2141, %v2015
  %v2143 = vadd.f32 %v2142, %v2016
  %v2144 = vadd.f32 %v2143, %v2017
  %v2145 = vadd.f32 %v2144, %v2018
  %v2146 = vadd.f32 %v2145, %v2019
  %v2147 = vadd.f32 %v2146, %v2020
  %v2148 = vadd.f32 %v2147, %v2021
  %v2149 = vadd.f32 %v2148, %v2022
  %v2150 = vadd.f32 %v2149, %v2023
  %v2151 = vadd.f32 %v2150, %v2024
  %v2152 = vadd.f32 %v2151, %v2025
  %v2153 = vadd.f32 %v2152, %v2026
  %v2154 = vadd.f32 %v2153, %v2027
  %v2155 = vadd.f32 %v2154, %v2028
  %v2156 = vadd.f32 %v2155, %v2029
  %v2157 = vadd.f32 %v2156, %v2030
  %v2158 = vadd.f32 %v2157, %v2031
  %v2159 = vadd.f32 %v2158, %v2032
  %v2160 = vadd.f32 %v2159, %v2033
  %v2161 = vadd.f32 %v2160, %v2034
  %v2162 = vadd.f32 %v2161, %v2035
  %v2163 = vadd.f32 %v2162, %v2036
  %v2164 = vadd.f32 %v2163, %v2037
  %v2165 = vadd.f32 %v2164, %v2038
  %v2166 = vadd.f32 %v2165, %v2039
  %v2167 = vrot.slane %v2166, 4
  %v2168 = vadd.f32 %v2166, %v2167
  %v2169 = vrot.slane %v2168, 2
  %v2170 = vadd.f32 %v2168, %v2169
  %v2171 = vrot.slane %v2170, 1
  %v2172 = vadd.f32 %v2170, %v2171
  %v2173 = vmul.f32 %v1912, %v1912
  %v2174 = vmul.f32 %v1913, %v1913
  %v2175 = vmul.f32 %v1914, %v1914
  %v2176 = vmul.f32 %v1915, %v1915
  %v2177 = vmul.f32 %v1916, %v1916
  %v2178 = vmul.f32 %v1917, %v1917
  %v2179 = vmul.f32 %v1918, %v1918
  %v2180 = vmul.f32 %v1919, %v1919
  %v2181 = vmul.f32 %v1920, %v1920
  %v2182 = vmul.f32 %v1921, %v1921
  %v2183 = vmul.f32 %v1922, %v1922
  %v2184 = vmul.f32 %v1923, %v1923
  %v2185 = vmul.f32 %v1924, %v1924
  %v2186 = vmul.f32 %v1925, %v1925
  %v2187 = vmul.f32 %v1926, %v1926
  %v2188 = vmul.f32 %v1927, %v1927
  %v2189 = vmul.f32 %v1928, %v1928
  %v2190 = vmul.f32 %v1929, %v1929
  %v2191 = vmul.f32 %v1930, %v1930
  %v2192 = vmul.f32 %v1931, %v1931
  %v2193 = vmul.f32 %v1932, %v1932
  %v2194 = vmul.f32 %v1933, %v1933
  %v2195 = vmul.f32 %v1934, %v1934
  %v2196 = vmul.f32 %v1935, %v1935
  %v2197 = vmul.f32 %v1936, %v1936
  %v2198 = vmul.f32 %v1937, %v1937
  %v2199 = vmul.f32 %v1938, %v1938
  %v2200 = vmul.f32 %v1939, %v1939
  %v2201 = vmul.f32 %v1940, %v1940
  %v2202 = vmul.f32 %v1941, %v1941
  %v2203 = vmul.f32 %v1942, %v1942
  %v2204 = vmul.f32 %v1943, %v1943
  %v2205 = vmul.f32 %v1944, %v1944
  %v2206 = vmul.f32 %v1945, %v1945
  %v2207 = vmul.f32 %v1946, %v1946
  %v2208 = vmul.f32 %v1947, %v1947
  %v2209 = vmul.f32 %v1948, %v1948
  %v2210 = vmul.f32 %v1949, %v1949
  %v2211 = vmul.f32 %v1950, %v1950
  %v2212 = vmul.f32 %v1951, %v1951
  %v2213 = vmul.f32 %v1952, %v1952
  %v2214 = vmul.f32 %v1953, %v1953
  %v2215 = vmul.f32 %v1954, %v1954
  %v2216 = vmul.f32 %v1955, %v1955
  %v2217 = vmul.f32 %v1956, %v1956
  %v2218 = vmul.f32 %v1957, %v1957
  %v2219 = vmul.f32 %v1958, %v1958
  %v2220 = vmul.f32 %v1959, %v1959
  %v2221 = vmul.f32 %v1960, %v1960
  %v2222 = vmul.f32 %v1961, %v1961
  %v2223 = vmul.f32 %v1962, %v1962
  %v2224 = vmul.f32 %v1963, %v1963
  %v2225 = vmul.f32 %v1964, %v1964
  %v2226 = vmul.f32 %v1965, %v1965
  %v2227 = vmul.f32 %v1966, %v1966
  %v2228 = vmul.f32 %v1967, %v1967
  %v2229 = vmul.f32 %v1968, %v1968
  %v2230 = vmul.f32 %v1969, %v1969
  %v2231 = vmul.f32 %v1970, %v1970
  %v2232 = vmul.f32 %v1971, %v1971
  %v2233 = vmul.f32 %v1972, %v1972
  %v2234 = vmul.f32 %v1973, %v1973
  %v2235 = vmul.f32 %v1974, %v1974
  %v2236 = vmul.f32 %v1975, %v1975
  %v2237 = vmul.f32 %v1976, %v1976
  %v2238 = vmul.f32 %v1977, %v1977
  %v2239 = vmul.f32 %v1978, %v1978
  %v2240 = vmul.f32 %v1979, %v1979
  %v2241 = vmul.f32 %v1980, %v1980
  %v2242 = vmul.f32 %v1981, %v1981
  %v2243 = vmul.f32 %v1982, %v1982
  %v2244 = vmul.f32 %v1983, %v1983
  %v2245 = vmul.f32 %v1984, %v1984
  %v2246 = vmul.f32 %v1985, %v1985
  %v2247 = vmul.f32 %v1986, %v1986
  %v2248 = vmul.f32 %v1987, %v1987
  %v2249 = vmul.f32 %v1988, %v1988
  %v2250 = vmul.f32 %v1989, %v1989
  %v2251 = vmul.f32 %v1990, %v1990
  %v2252 = vmul.f32 %v1991, %v1991
  %v2253 = vmul.f32 %v1992, %v1992
  %v2254 = vmul.f32 %v1993, %v1993
  %v2255 = vmul.f32 %v1994, %v1994
  %v2256 = vmul.f32 %v1995, %v1995
  %v2257 = vmul.f32 %v1996, %v1996
  %v2258 = vmul.f32 %v1997, %v1997
  %v2259 = vmul.f32 %v1998, %v1998
  %v2260 = vmul.f32 %v1999, %v1999
  %v2261 = vmul.f32 %v2000, %v2000
  %v2262 = vmul.f32 %v2001, %v2001
  %v2263 = vmul.f32 %v2002, %v2002
  %v2264 = vmul.f32 %v2003, %v2003
  %v2265 = vmul.f32 %v2004, %v2004
  %v2266 = vmul.f32 %v2005, %v2005
  %v2267 = vmul.f32 %v2006, %v2006
  %v2268 = vmul.f32 %v2007, %v2007
  %v2269 = vmul.f32 %v2008, %v2008
  %v2270 = vmul.f32 %v2009, %v2009
  %v2271 = vmul.f32 %v2010, %v2010
  %v2272 = vmul.f32 %v2011, %v2011
  %v2273 = vmul.f32 %v2012, %v2012
  %v2274 = vmul.f32 %v2013, %v2013
  %v2275 = vmul.f32 %v2014, %v2014
  %v2276 = vmul.f32 %v2015, %v2015
  %v2277 = vmul.f32 %v2016, %v2016
  %v2278 = vmul.f32 %v2017, %v2017
  %v2279 = vmul.f32 %v2018, %v2018
  %v2280 = vmul.f32 %v2019, %v2019
  %v2281 = vmul.f32 %v2020, %v2020
  %v2282 = vmul.f32 %v2021, %v2021
  %v2283 = vmul.f32 %v2022, %v2022
  %v2284 = vmul.f32 %v2023, %v2023
  %v2285 = vmul.f32 %v2024, %v2024
  %v2286 = vmul.f32 %v2025, %v2025
  %v2287 = vmul.f32 %v2026, %v2026
  %v2288 = vmul.f32 %v2027, %v2027
  %v2289 = vmul.f32 %v2028, %v2028
  %v2290 = vmul.f32 %v2029, %v2029
  %v2291 = vmul.f32 %v2030, %v2030
  %v2292 = vmul.f32 %v2031, %v2031
  %v2293 = vmul.f32 %v2032, %v2032
  %v2294 = vmul.f32 %v2033, %v2033
  %v2295 = vmul.f32 %v2034, %v2034
  %v2296 = vmul.f32 %v2035, %v2035
  %v2297 = vmul.f32 %v2036, %v2036
  %v2298 = vmul.f32 %v2037, %v2037
  %v2299 = vmul.f32 %v2038, %v2038
  %v2300 = vmul.f32 %v2039, %v2039
  %v2301 = vadd.f32 %v2173, %v2174
  %v2302 = vadd.f32 %v2301, %v2175
  %v2303 = vadd.f32 %v2302, %v2176
  %v2304 = vadd.f32 %v2303, %v2177
  %v2305 = vadd.f32 %v2304, %v2178
  %v2306 = vadd.f32 %v2305, %v2179
  %v2307 = vadd.f32 %v2306, %v2180
  %v2308 = vadd.f32 %v2307, %v2181
  %v2309 = vadd.f32 %v2308, %v2182
  %v2310 = vadd.f32 %v2309, %v2183
  %v2311 = vadd.f32 %v2310, %v2184
  %v2312 = vadd.f32 %v2311, %v2185
  %v2313 = vadd.f32 %v2312, %v2186
  %v2314 = vadd.f32 %v2313, %v2187
  %v2315 = vadd.f32 %v2314, %v2188
  %v2316 = vadd.f32 %v2315, %v2189
  %v2317 = vadd.f32 %v2316, %v2190
  %v2318 = vadd.f32 %v2317, %v2191
  %v2319 = vadd.f32 %v2318, %v2192
  %v2320 = vadd.f32 %v2319, %v2193
  %v2321 = vadd.f32 %v2320, %v2194
  %v2322 = vadd.f32 %v2321, %v2195
  %v2323 = vadd.f32 %v2322, %v2196
  %v2324 = vadd.f32 %v2323, %v2197
  %v2325 = vadd.f32 %v2324, %v2198
  %v2326 = vadd.f32 %v2325, %v2199
  %v2327 = vadd.f32 %v2326, %v2200
  %v2328 = vadd.f32 %v2327, %v2201
  %v2329 = vadd.f32 %v2328, %v2202
  %v2330 = vadd.f32 %v2329, %v2203
  %v2331 = vadd.f32 %v2330, %v2204
  %v2332 = vadd.f32 %v2331, %v2205
  %v2333 = vadd.f32 %v2332, %v2206
  %v2334 = vadd.f32 %v2333, %v2207
  %v2335 = vadd.f32 %v2334, %v2208
  %v2336 = vadd.f32 %v2335, %v2209
  %v2337 = vadd.f32 %v2336, %v2210
  %v2338 = vadd.f32 %v2337, %v2211
  %v2339 = vadd.f32 %v2338, %v2212
  %v2340 = vadd.f32 %v2339, %v2213
  %v2341 = vadd.f32 %v2340, %v2214
  %v2342 = vadd.f32 %v2341, %v2215
  %v2343 = vadd.f32 %v2342, %v2216
  %v2344 = vadd.f32 %v2343, %v2217
  %v2345 = vadd.f32 %v2344, %v2218
  %v2346 = vadd.f32 %v2345, %v2219
  %v2347 = vadd.f32 %v2346, %v2220
  %v2348 = vadd.f32 %v2347, %v2221
  %v2349 = vadd.f32 %v2348, %v2222
  %v2350 = vadd.f32 %v2349, %v2223
  %v2351 = vadd.f32 %v2350, %v2224
  %v2352 = vadd.f32 %v2351, %v2225
  %v2353 = vadd.f32 %v2352, %v2226
  %v2354 = vadd.f32 %v2353, %v2227
  %v2355 = vadd.f32 %v2354, %v2228
  %v2356 = vadd.f32 %v2355, %v2229
  %v2357 = vadd.f32 %v2356, %v2230
  %v2358 = vadd.f32 %v2357, %v2231
  %v2359 = vadd.f32 %v2358, %v2232
  %v2360 = vadd.f32 %v2359, %v2233
  %v2361 = vadd.f32 %v2360, %v2234
  %v2362 = vadd.f32 %v2361, %v2235
  %v2363 = vadd.f32 %v2362, %v2236
  %v2364 = vadd.f32 %v2363, %v2237
  %v2365 = vadd.f32 %v2364, %v2238
  %v2366 = vadd.f32 %v2365, %v2239
  %v2367 = vadd.f32 %v2366, %v2240
  %v2368 = vadd.f32 %v2367, %v2241
  %v2369 = vadd.f32 %v2368, %v2242
  %v2370 = vadd.f32 %v2369, %v2243
  %v2371 = vadd.f32 %v2370, %v2244
  %v2372 = vadd.f32 %v2371, %v2245
  %v2373 = vadd.f32 %v2372, %v2246
  %v2374 = vadd.f32 %v2373, %v2247
  %v2375 = vadd.f32 %v2374, %v2248
  %v2376 = vadd.f32 %v2375, %v2249
  %v2377 = vadd.f32 %v2376, %v2250
  %v2378 = vadd.f32 %v2377, %v2251
  %v2379 = vadd.f32 %v2378, %v2252
  %v2380 = vadd.f32 %v2379, %v2253
  %v2381 = vadd.f32 %v2380, %v2254
  %v2382 = vadd.f32 %v2381, %v2255
  %v2383 = vadd.f32 %v2382, %v2256
  %v2384 = vadd.f32 %v2383, %v2257
  %v2385 = vadd.f32 %v2384, %v2258
  %v2386 = vadd.f32 %v2385, %v2259
  %v2387 = vadd.f32 %v2386, %v2260
  %v2388 = vadd.f32 %v2387, %v2261
  %v2389 = vadd.f32 %v2388, %v2262
  %v2390 = vadd.f32 %v2389, %v2263
  %v2391 = vadd.f32 %v2390, %v2264
  %v2392 = vadd.f32 %v2391, %v2265
  %v2393 = vadd.f32 %v2392, %v2266
  %v2394 = vadd.f32 %v2393, %v2267
  %v2395 = vadd.f32 %v2394, %v2268
  %v2396 = vadd.f32 %v2395, %v2269
  %v2397 = vadd.f32 %v2396, %v2270
  %v2398 = vadd.f32 %v2397, %v2271
  %v2399 = vadd.f32 %v2398, %v2272
  %v2400 = vadd.f32 %v2399, %v2273
  %v2401 = vadd.f32 %v2400, %v2274
  %v2402 = vadd.f32 %v2401, %v2275
  %v2403 = vadd.f32 %v2402, %v2276
  %v2404 = vadd.f32 %v2403, %v2277
  %v2405 = vadd.f32 %v2404, %v2278
  %v2406 = vadd.f32 %v2405, %v2279
  %v2407 = vadd.f32 %v2406, %v2280
  %v2408 = vadd.f32 %v2407, %v2281
  %v2409 = vadd.f32 %v2408, %v2282
  %v2410 = vadd.f32 %v2409, %v2283
  %v2411 = vadd.f32 %v2410, %v2284
  %v2412 = vadd.f32 %v2411, %v2285
  %v2413 = vadd.f32 %v2412, %v2286
  %v2414 = vadd.f32 %v2413, %v2287
  %v2415 = vadd.f32 %v2414, %v2288
  %v2416 = vadd.f32 %v2415, %v2289
  %v2417 = vadd.f32 %v2416, %v2290
  %v2418 = vadd.f32 %v2417, %v2291
  %v2419 = vadd.f32 %v2418, %v2292
  %v2420 = vadd.f32 %v2419, %v2293
  %v2421 = vadd.f32 %v2420, %v2294
  %v2422 = vadd.f32 %v2421, %v2295
  %v2423 = vadd.f32 %v2422, %v2296
  %v2424 = vadd.f32 %v2423, %v2297
  %v2425 = vadd.f32 %v2424, %v2298
  %v2426 = vadd.f32 %v2425, %v2299
  %v2427 = vadd.f32 %v2426, %v2300
  %v2428 = vrot.slane %v2427, 4
  %v2429 = vadd.f32 %v2427, %v2428
  %v2430 = vrot.slane %v2429, 2
  %v2431 = vadd.f32 %v2429, %v2430
  %v2432 = vrot.slane %v2431, 1
  %v2433 = vadd.f32 %v2431, %v2432
  %vm2434 = vcmask 1040384
  %v2435 = vsel %vm2434, %v2172, %v2433
  %vm2436 = vcmask 1041408
  %v2437 = vsel %vm2436, %v2435, 0.0
  %vm2438 = vcmask 1042432
  %v2439 = vsel %vm2438, %v2437, 0.0
  %vm2440 = vcmask 1043456
  %v2441 = vsel %vm2440, %v2439, 0.0
  %vm2442 = vcmask 1044480
  %v2443 = vsel %vm2442, %v2441, 0.0
  %v2444 = vsel %vm720, %v2443, 0.0
  %vm2445 = vcmask 1046528
  %v2446 = vsel %vm2445, %v2444, 0.0
  %2447 = vst [vmem:[%s4] sm:$0xff] %v2446
  // Predicated region
  $region14: #{down_forward.5} parent=0 // pred_check
    _
  $region15: #{down_forward.5} parent=0 // pred_check_branch
    %2449 = sbr.rel (0) target = $region17
  $region16: #{down_forward.5} parent=0 // pred_region
    _
  $region17: #{down_forward.5} parent=0 // pred_fallthru
    _
  // Predicated region
  $region18: #{down_forward.5} parent=0 // pred_check
    _
  $region19: #{down_forward.5} parent=0 // pred_check_branch
    %2451 = sbr.rel (0) target = $region21
  $region20: #{down_forward.5} parent=0 // pred_region
    _
  $region21: #{down_forward.5} parent=0 // pred_fallthru
    _
  // Predicated region
  $region22: #{down_forward.5} parent=0 // pred_check
    _
  $region23: #{down_forward.5} parent=0 // pred_check_branch
    %2453 = sbr.rel (0) target = $region25
  $region24: #{down_forward.5} parent=0 // pred_region
    _
  $region25: #{down_forward.5} parent=0 // pred_fallthru
    _
  // Predicated region
  $region26: #{down_forward.5} parent=0 // pred_check
    _
  $region27: #{down_forward.5} parent=0 // pred_check_branch
    %2455 = sbr.rel (0) target = $region29
  $region28: #{down_forward.5} parent=0 // pred_region
    _
  $region29: #{down_forward.5} parent=0 // pred_fallthru
    _

// kernel: down_forward.7
$region0: #{down_forward.7}
  #allocation0 [shape = 'u32[]', space=smem, size = 0x4, offset = 0x4, fixed_abs, tag = 'smem constant byte address 0x4 - core index']
  #allocation1 [shape = 'u32[144,128]{1,0:T(1,128)}', space=vmem, size = 0x12000, scoped, tag = 'internal scratch']
  %s0 = inlined_call_operand.vmem [shape: f32[1024,128], index: 0, kind: input, shape index: {}]
  %s1 = inlined_call_operand.vmem [shape: f32[1,128], index: 1, kind: input, shape index: {}]
  %s2 = inlined_call_operand.vmem [shape: f32[1,128], index: 2, kind: input, shape index: {}]
  %s3 = inlined_call_operand.vmem [shape: f32[1024,128], index: 3, kind: output, shape index: {}]
  %s4 = sld [smem:[#allocation0]]
  $region22: #{down_forward.7} parent=0
    _
  %s6 = ssub.s32 1, %s4
  %s7 = scalar_select 0, %s6, %s4
  // Predicated region
  $region2: #{down_forward.7} parent=0 // pred_check
    _
  $region3: #{down_forward.7} parent=0 // pred_check_branch
    %9 = sbr.rel (0) target = $region5
  $region4: #{down_forward.7} parent=0 // pred_region
    _
  $region5: #{down_forward.7} parent=0 // pred_fallthru
    _
  // Predicated region
  $region6: #{down_forward.7} parent=0 // pred_check
    _
  $region7: #{down_forward.7} parent=0 // pred_check_branch
    %11 = sbr.rel (0) target = $region9
  $region8: #{down_forward.7} parent=0 // pred_region
    _
  $region9: #{down_forward.7} parent=0 // pred_fallthru
    _
  // Predicated region
  $region10: #{down_forward.7} parent=0 // pred_check
    _
  $region11: #{down_forward.7} parent=0 // pred_check_branch
    %13 = sbr.rel (0) target = $region13
  $region12: #{down_forward.7} parent=0 // pred_region
    _
  $region13: #{down_forward.7} parent=0 // pred_fallthru
    _
  %v14 = vld [vmem:[%s0] sm:$0xff]
  %v15 = vld [vmem:[%s0 + $0x8] sm:$0xff]
  %v16 = vld [vmem:[%s0 + $0x10] sm:$0xff]
  %v17 = vld [vmem:[%s0 + $0x18] sm:$0xff]
  %v18 = vld [vmem:[%s0 + $0x20] sm:$0xff]
  %v19 = vld [vmem:[%s0 + $0x28] sm:$0xff]
  %v20 = vld [vmem:[%s0 + $0x30] sm:$0xff]
  %v21 = vld [vmem:[%s0 + $0x38] sm:$0xff]
  %v22 = vld [vmem:[%s0 + $0x40] sm:$0xff]
  %v23 = vld [vmem:[%s0 + $0x48] sm:$0xff]
  %v24 = vld [vmem:[%s0 + $0x50] sm:$0xff]
  %v25 = vld [vmem:[%s0 + $0x58] sm:$0xff]
  %v26 = vld [vmem:[%s0 + $0x60] sm:$0xff]
  %v27 = vld [vmem:[%s0 + $0x68] sm:$0xff]
  %v28 = vld [vmem:[%s0 + $0x70] sm:$0xff]
  %v29 = vld [vmem:[%s0 + $0x78] sm:$0xff]
  %v30 = vld [vmem:[%s0 + $0x80] sm:$0xff]
  %v31 = vld [vmem:[%s0 + $0x88] sm:$0xff]
  %v32 = vld [vmem:[%s0 + $0x90] sm:$0xff]
  %v33 = vld [vmem:[%s0 + $0x98] sm:$0xff]
  %v34 = vld [vmem:[%s0 + $0xa0] sm:$0xff]
  %v35 = vld [vmem:[%s0 + $0xa8] sm:$0xff]
  %v36 = vld [vmem:[%s0 + $0xb0] sm:$0xff]
  %v37 = vld [vmem:[%s0 + $0xb8] sm:$0xff]
  %v38 = vld [vmem:[%s0 + $0xc0] sm:$0xff]
  %v39 = vld [vmem:[%s0 + $0xc8] sm:$0xff]
  %v40 = vld [vmem:[%s0 + $0xd0] sm:$0xff]
  %v41 = vld [vmem:[%s0 + $0xd8] sm:$0xff]
  %v42 = vld [vmem:[%s0 + $0xe0] sm:$0xff]
  %v43 = vld [vmem:[%s0 + $0xe8] sm:$0xff]
  %v44 = vld [vmem:[%s0 + $0xf0] sm:$0xff]
  %v45 = vld [vmem:[%s0 + $0xf8] sm:$0xff]
  %v46 = vld [vmem:[%s0 + $0x100] sm:$0xff]
  %v47 = vld [vmem:[%s0 + $0x108] sm:$0xff]
  %v48 = vld [vmem:[%s0 + $0x110] sm:$0xff]
  %v49 = vld [vmem:[%s0 + $0x118] sm:$0xff]
  %v50 = vld [vmem:[%s0 + $0x120] sm:$0xff]
  %v51 = vld [vmem:[%s0 + $0x128] sm:$0xff]
  %v52 = vld [vmem:[%s0 + $0x130] sm:$0xff]
  %v53 = vld [vmem:[%s0 + $0x138] sm:$0xff]
  %v54 = vld [vmem:[%s0 + $0x140] sm:$0xff]
  %v55 = vld [vmem:[%s0 + $0x148] sm:$0xff]
  %v56 = vld [vmem:[%s0 + $0x150] sm:$0xff]
  %v57 = vld [vmem:[%s0 + $0x158] sm:$0xff]
  %v58 = vld [vmem:[%s0 + $0x160] sm:$0xff]
  %v59 = vld [vmem:[%s0 + $0x168] sm:$0xff]
  %v60 = vld [vmem:[%s0 + $0x170] sm:$0xff]
  %v61 = vld [vmem:[%s0 + $0x178] sm:$0xff]
  %v62 = vld [vmem:[%s0 + $0x180] sm:$0xff]
  %v63 = vld [vmem:[%s0 + $0x188] sm:$0xff]
  %v64 = vld [vmem:[%s0 + $0x190] sm:$0xff]
  %v65 = vld [vmem:[%s0 + $0x198] sm:$0xff]
  %v66 = vld [vmem:[%s0 + $0x1a0] sm:$0xff]
  %v67 = vld [vmem:[%s0 + $0x1a8] sm:$0xff]
  %v68 = vld [vmem:[%s0 + $0x1b0] sm:$0xff]
  %v69 = vld [vmem:[%s0 + $0x1b8] sm:$0xff]
  %v70 = vld [vmem:[%s0 + $0x1c0] sm:$0xff]
  %v71 = vld [vmem:[%s0 + $0x1c8] sm:$0xff]
  %v72 = vld [vmem:[%s0 + $0x1d0] sm:$0xff]
  %v73 = vld [vmem:[%s0 + $0x1d8] sm:$0xff]
  %v74 = vld [vmem:[%s0 + $0x1e0] sm:$0xff]
  %v75 = vld [vmem:[%s0 + $0x1e8] sm:$0xff]
  %v76 = vld [vmem:[%s0 + $0x1f0] sm:$0xff]
  %v77 = vld [vmem:[%s0 + $0x1f8] sm:$0xff]
  %v78 = vld [vmem:[%s0 + $0x200] sm:$0xff]
  %v79 = vld [vmem:[%s0 + $0x208] sm:$0xff]
  %v80 = vld [vmem:[%s0 + $0x210] sm:$0xff]
  %v81 = vld [vmem:[%s0 + $0x218] sm:$0xff]
  %v82 = vld [vmem:[%s0 + $0x220] sm:$0xff]
  %v83 = vld [vmem:[%s0 + $0x228] sm:$0xff]
  %v84 = vld [vmem:[%s0 + $0x230] sm:$0xff]
  %v85 = vld [vmem:[%s0 + $0x238] sm:$0xff]
  %v86 = vld [vmem:[%s0 + $0x240] sm:$0xff]
  %v87 = vld [vmem:[%s0 + $0x248] sm:$0xff]
  %v88 = vld [vmem:[%s0 + $0x250] sm:$0xff]
  %v89 = vld [vmem:[%s0 + $0x258] sm:$0xff]
  %v90 = vld [vmem:[%s0 + $0x260] sm:$0xff]
  %v91 = vld [vmem:[%s0 + $0x268] sm:$0xff]
  %v92 = vld [vmem:[%s0 + $0x270] sm:$0xff]
  %v93 = vld [vmem:[%s0 + $0x278] sm:$0xff]
  %v94 = vld [vmem:[%s0 + $0x280] sm:$0xff]
  %v95 = vld [vmem:[%s0 + $0x288] sm:$0xff]
  %v96 = vld [vmem:[%s0 + $0x290] sm:$0xff]
  %v97 = vld [vmem:[%s0 + $0x298] sm:$0xff]
  %v98 = vld [vmem:[%s0 + $0x2a0] sm:$0xff]
  %v99 = vld [vmem:[%s0 + $0x2a8] sm:$0xff]
  %v100 = vld [vmem:[%s0 + $0x2b0] sm:$0xff]
  %v101 = vld [vmem:[%s0 + $0x2b8] sm:$0xff]
  %v102 = vld [vmem:[%s0 + $0x2c0] sm:$0xff]
  %v103 = vld [vmem:[%s0 + $0x2c8] sm:$0xff]
  %v104 = vld [vmem:[%s0 + $0x2d0] sm:$0xff]
  %v105 = vld [vmem:[%s0 + $0x2d8] sm:$0xff]
  %v106 = vld [vmem:[%s0 + $0x2e0] sm:$0xff]
  %v107 = vld [vmem:[%s0 + $0x2e8] sm:$0xff]
  %v108 = vld [vmem:[%s0 + $0x2f0] sm:$0xff]
  %v109 = vld [vmem:[%s0 + $0x2f8] sm:$0xff]
  %v110 = vld [vmem:[%s0 + $0x300] sm:$0xff]
  %v111 = vld [vmem:[%s0 + $0x308] sm:$0xff]
  %v112 = vld [vmem:[%s0 + $0x310] sm:$0xff]
  %v113 = vld [vmem:[%s0 + $0x318] sm:$0xff]
  %v114 = vld [vmem:[%s0 + $0x320] sm:$0xff]
  %v115 = vld [vmem:[%s0 + $0x328] sm:$0xff]
  %v116 = vld [vmem:[%s0 + $0x330] sm:$0xff]
  %v117 = vld [vmem:[%s0 + $0x338] sm:$0xff]
  %v118 = vld [vmem:[%s0 + $0x340] sm:$0xff]
  %v119 = vld [vmem:[%s0 + $0x348] sm:$0xff]
  %v120 = vld [vmem:[%s0 + $0x350] sm:$0xff]
  %v121 = vld [vmem:[%s0 + $0x358] sm:$0xff]
  %v122 = vld [vmem:[%s0 + $0x360] sm:$0xff]
  %v123 = vld [vmem:[%s0 + $0x368] sm:$0xff]
  %v124 = vld [vmem:[%s0 + $0x370] sm:$0xff]
  %v125 = vld [vmem:[%s0 + $0x378] sm:$0xff]
  %v126 = vld [vmem:[%s0 + $0x380] sm:$0xff]
  %v127 = vld [vmem:[%s0 + $0x388] sm:$0xff]
  %v128 = vld [vmem:[%s0 + $0x390] sm:$0xff]
  %v129 = vld [vmem:[%s0 + $0x398] sm:$0xff]
  %v130 = vld [vmem:[%s0 + $0x3a0] sm:$0xff]
  %v131 = vld [vmem:[%s0 + $0x3a8] sm:$0xff]
  %v132 = vld [vmem:[%s0 + $0x3b0] sm:$0xff]
  %v133 = vld [vmem:[%s0 + $0x3b8] sm:$0xff]
  %v134 = vld [vmem:[%s0 + $0x3c0] sm:$0xff]
  %v135 = vld [vmem:[%s0 + $0x3c8] sm:$0xff]
  %v136 = vld [vmem:[%s0 + $0x3d0] sm:$0xff]
  %v137 = vld [vmem:[%s0 + $0x3d8] sm:$0xff]
  %v138 = vld [vmem:[%s0 + $0x3e0] sm:$0xff]
  %v139 = vld [vmem:[%s0 + $0x3e8] sm:$0xff]
  %v140 = vld [vmem:[%s0 + $0x3f0] sm:$0xff]
  %v141 = vld [vmem:[%s0 + $0x3f8] sm:$0xff]
  %v142 = vld [vmem:[%s1] sm:$0x1]
  %v144 = vlaneseq
  %v145 = vshrl.u32 %v144, 7
  %v146 = vsub.s32 0, %v145
  %v147 = vrot.slane %v142, %v146
  %v149 = vmul.f32 %v14, %v147
  %v150 = vmul.f32 %v15, %v147
  %v151 = vmul.f32 %v16, %v147
  %v152 = vmul.f32 %v17, %v147
  %v153 = vmul.f32 %v18, %v147
  %v154 = vmul.f32 %v19, %v147
  %v155 = vmul.f32 %v20, %v147
  %v156 = vmul.f32 %v21, %v147
  %v157 = vmul.f32 %v22, %v147
  %v158 = vmul.f32 %v23, %v147
  %v159 = vmul.f32 %v24, %v147
  %v160 = vmul.f32 %v25, %v147
  %v161 = vmul.f32 %v26, %v147
  %v162 = vmul.f32 %v27, %v147
  %v163 = vmul.f32 %v28, %v147
  %v164 = vmul.f32 %v29, %v147
  %v165 = vmul.f32 %v30, %v147
  %v166 = vmul.f32 %v31, %v147
  %v167 = vmul.f32 %v32, %v147
  %v168 = vmul.f32 %v33, %v147
  %v169 = vmul.f32 %v34, %v147
  %v170 = vmul.f32 %v35, %v147
  %v171 = vmul.f32 %v36, %v147
  %v172 = vmul.f32 %v37, %v147
  %v173 = vmul.f32 %v38, %v147
  %v174 = vmul.f32 %v39, %v147
  %v175 = vmul.f32 %v40, %v147
  %v176 = vmul.f32 %v41, %v147
  %v177 = vmul.f32 %v42, %v147
  %v178 = vmul.f32 %v43, %v147
  %v179 = vmul.f32 %v44, %v147
  %v180 = vmul.f32 %v45, %v147
  %v181 = vmul.f32 %v46, %v147
  %v182 = vmul.f32 %v47, %v147
  %v183 = vmul.f32 %v48, %v147
  %v184 = vmul.f32 %v49, %v147
  %v185 = vmul.f32 %v50, %v147
  %v186 = vmul.f32 %v51, %v147
  %v187 = vmul.f32 %v52, %v147
  %v188 = vmul.f32 %v53, %v147
  %v189 = vmul.f32 %v54, %v147
  %v190 = vmul.f32 %v55, %v147
  %v191 = vmul.f32 %v56, %v147
  %v192 = vmul.f32 %v57, %v147
  %v193 = vmul.f32 %v58, %v147
  %v194 = vmul.f32 %v59, %v147
  %v195 = vmul.f32 %v60, %v147
  %v196 = vmul.f32 %v61, %v147
  %v197 = vmul.f32 %v62, %v147
  %v198 = vmul.f32 %v63, %v147
  %v199 = vmul.f32 %v64, %v147
  %v200 = vmul.f32 %v65, %v147
  %v201 = vmul.f32 %v66, %v147
  %v202 = vmul.f32 %v67, %v147
  %v203 = vmul.f32 %v68, %v147
  %v204 = vmul.f32 %v69, %v147
  %v205 = vmul.f32 %v70, %v147
  %v206 = vmul.f32 %v71, %v147
  %v207 = vmul.f32 %v72, %v147
  %v208 = vmul.f32 %v73, %v147
  %v209 = vmul.f32 %v74, %v147
  %v210 = vmul.f32 %v75, %v147
  %v211 = vmul.f32 %v76, %v147
  %v212 = vmul.f32 %v77, %v147
  %v213 = vmul.f32 %v78, %v147
  %v214 = vmul.f32 %v79, %v147
  %v215 = vmul.f32 %v80, %v147
  %v216 = vmul.f32 %v81, %v147
  %v217 = vmul.f32 %v82, %v147
  %v218 = vmul.f32 %v83, %v147
  %v219 = vmul.f32 %v84, %v147
  %v220 = vmul.f32 %v85, %v147
  %v221 = vmul.f32 %v86, %v147
  %v222 = vmul.f32 %v87, %v147
  %v223 = vmul.f32 %v88, %v147
  %v224 = vmul.f32 %v89, %v147
  %v225 = vmul.f32 %v90, %v147
  %v226 = vmul.f32 %v91, %v147
  %v227 = vmul.f32 %v92, %v147
  %v228 = vmul.f32 %v93, %v147
  %v229 = vmul.f32 %v94, %v147
  %v230 = vmul.f32 %v95, %v147
  %v231 = vmul.f32 %v96, %v147
  %v232 = vmul.f32 %v97, %v147
  %v233 = vmul.f32 %v98, %v147
  %v234 = vmul.f32 %v99, %v147
  %v235 = vmul.f32 %v100, %v147
  %v236 = vmul.f32 %v101, %v147
  %v237 = vmul.f32 %v102, %v147
  %v238 = vmul.f32 %v103, %v147
  %v239 = vmul.f32 %v104, %v147
  %v240 = vmul.f32 %v105, %v147
  %v241 = vmul.f32 %v106, %v147
  %v242 = vmul.f32 %v107, %v147
  %v243 = vmul.f32 %v108, %v147
  %v244 = vmul.f32 %v109, %v147
  %v245 = vmul.f32 %v110, %v147
  %v246 = vmul.f32 %v111, %v147
  %v247 = vmul.f32 %v112, %v147
  %v248 = vmul.f32 %v113, %v147
  %v249 = vmul.f32 %v114, %v147
  %v250 = vmul.f32 %v115, %v147
  %v251 = vmul.f32 %v116, %v147
  %v252 = vmul.f32 %v117, %v147
  %v253 = vmul.f32 %v118, %v147
  %v254 = vmul.f32 %v119, %v147
  %v255 = vmul.f32 %v120, %v147
  %v256 = vmul.f32 %v121, %v147
  %v257 = vmul.f32 %v122, %v147
  %v258 = vmul.f32 %v123, %v147
  %v259 = vmul.f32 %v124, %v147
  %v260 = vmul.f32 %v125, %v147
  %v261 = vmul.f32 %v126, %v147
  %v262 = vmul.f32 %v127, %v147
  %v263 = vmul.f32 %v128, %v147
  %v264 = vmul.f32 %v129, %v147
  %v265 = vmul.f32 %v130, %v147
  %v266 = vmul.f32 %v131, %v147
  %v267 = vmul.f32 %v132, %v147
  %v268 = vmul.f32 %v133, %v147
  %v269 = vmul.f32 %v134, %v147
  %v270 = vmul.f32 %v135, %v147
  %v271 = vmul.f32 %v136, %v147
  %v272 = vmul.f32 %v137, %v147
  %v273 = vmul.f32 %v138, %v147
  %v274 = vmul.f32 %v139, %v147
  %v275 = vmul.f32 %v140, %v147
  %v276 = vmul.f32 %v141, %v147
  %v277 = vld [vmem:[%s2] sm:$0x1]
  %v279 = vlaneseq
  %v280 = vshrl.u32 %v279, 7
  %v281 = vsub.s32 0, %v280
  %v282 = vrot.slane %v277, %v281
  %v284 = vadd.f32 %v149, %v282
  %v285 = vadd.f32 %v150, %v282
  %v286 = vadd.f32 %v151, %v282
  %v287 = vadd.f32 %v152, %v282
  %v288 = vadd.f32 %v153, %v282
  %v289 = vadd.f32 %v154, %v282
  %v290 = vadd.f32 %v155, %v282
  %v291 = vadd.f32 %v156, %v282
  %v292 = vadd.f32 %v157, %v282
  %v293 = vadd.f32 %v158, %v282
  %v294 = vadd.f32 %v159, %v282
  %v295 = vadd.f32 %v160, %v282
  %v296 = vadd.f32 %v161, %v282
  %v297 = vadd.f32 %v162, %v282
  %v298 = vadd.f32 %v163, %v282
  %v299 = vadd.f32 %v164, %v282
  %v300 = vadd.f32 %v165, %v282
  %v301 = vadd.f32 %v166, %v282
  %v302 = vadd.f32 %v167, %v282
  %v303 = vadd.f32 %v168, %v282
  %v304 = vadd.f32 %v169, %v282
  %v305 = vadd.f32 %v170, %v282
  %v306 = vadd.f32 %v171, %v282
  %v307 = vadd.f32 %v172, %v282
  %v308 = vadd.f32 %v173, %v282
  %v309 = vadd.f32 %v174, %v282
  %v310 = vadd.f32 %v175, %v282
  %v311 = vadd.f32 %v176, %v282
  %v312 = vadd.f32 %v177, %v282
  %v313 = vadd.f32 %v178, %v282
  %v314 = vadd.f32 %v179, %v282
  %v315 = vadd.f32 %v180, %v282
  %v316 = vadd.f32 %v181, %v282
  %v317 = vadd.f32 %v182, %v282
  %v318 = vadd.f32 %v183, %v282
  %v319 = vadd.f32 %v184, %v282
  %v320 = vadd.f32 %v185, %v282
  %v321 = vadd.f32 %v186, %v282
  %v322 = vadd.f32 %v187, %v282
  %v323 = vadd.f32 %v188, %v282
  %v324 = vadd.f32 %v189, %v282
  %v325 = vadd.f32 %v190, %v282
  %v326 = vadd.f32 %v191, %v282
  %v327 = vadd.f32 %v192, %v282
  %v328 = vadd.f32 %v193, %v282
  %v329 = vadd.f32 %v194, %v282
  %v330 = vadd.f32 %v195, %v282
  %v331 = vadd.f32 %v196, %v282
  %v332 = vadd.f32 %v197, %v282
  %v333 = vadd.f32 %v198, %v282
  %v334 = vadd.f32 %v199, %v282
  %v335 = vadd.f32 %v200, %v282
  %v336 = vadd.f32 %v201, %v282
  %v337 = vadd.f32 %v202, %v282
  %v338 = vadd.f32 %v203, %v282
  %v339 = vadd.f32 %v204, %v282
  %v340 = vadd.f32 %v205, %v282
  %v341 = vadd.f32 %v206, %v282
  %v342 = vadd.f32 %v207, %v282
  %v343 = vadd.f32 %v208, %v282
  %v344 = vadd.f32 %v209, %v282
  %v345 = vadd.f32 %v210, %v282
  %v346 = vadd.f32 %v211, %v282
  %v347 = vadd.f32 %v212, %v282
  %v348 = vadd.f32 %v213, %v282
  %v349 = vadd.f32 %v214, %v282
  %v350 = vadd.f32 %v215, %v282
  %v351 = vadd.f32 %v216, %v282
  %v352 = vadd.f32 %v217, %v282
  %v353 = vadd.f32 %v218, %v282
  %v354 = vadd.f32 %v219, %v282
  %v355 = vadd.f32 %v220, %v282
  %v356 = vadd.f32 %v221, %v282
  %v357 = vadd.f32 %v222, %v282
  %v358 = vadd.f32 %v223, %v282
  %v359 = vadd.f32 %v224, %v282
  %v360 = vadd.f32 %v225, %v282
  %v361 = vadd.f32 %v226, %v282
  %v362 = vadd.f32 %v227, %v282
  %v363 = vadd.f32 %v228, %v282
  %v364 = vadd.f32 %v229, %v282
  %v365 = vadd.f32 %v230, %v282
  %v366 = vadd.f32 %v231, %v282
  %v367 = vadd.f32 %v232, %v282
  %v368 = vadd.f32 %v233, %v282
  %v369 = vadd.f32 %v234, %v282
  %v370 = vadd.f32 %v235, %v282
  %v371 = vadd.f32 %v236, %v282
  %v372 = vadd.f32 %v237, %v282
  %v373 = vadd.f32 %v238, %v282
  %v374 = vadd.f32 %v239, %v282
  %v375 = vadd.f32 %v240, %v282
  %v376 = vadd.f32 %v241, %v282
  %v377 = vadd.f32 %v242, %v282
  %v378 = vadd.f32 %v243, %v282
  %v379 = vadd.f32 %v244, %v282
  %v380 = vadd.f32 %v245, %v282
  %v381 = vadd.f32 %v246, %v282
  %v382 = vadd.f32 %v247, %v282
  %v383 = vadd.f32 %v248, %v282
  %v384 = vadd.f32 %v249, %v282
  %v385 = vadd.f32 %v250, %v282
  %v386 = vadd.f32 %v251, %v282
  %v387 = vadd.f32 %v252, %v282
  %v388 = vadd.f32 %v253, %v282
  %v389 = vadd.f32 %v254, %v282
  %v390 = vadd.f32 %v255, %v282
  %v391 = vadd.f32 %v256, %v282
  %v392 = vadd.f32 %v257, %v282
  %v393 = vadd.f32 %v258, %v282
  %v394 = vadd.f32 %v259, %v282
  %v395 = vadd.f32 %v260, %v282
  %v396 = vadd.f32 %v261, %v282
  %v397 = vadd.f32 %v262, %v282
  %v398 = vadd.f32 %v263, %v282
  %v399 = vadd.f32 %v264, %v282
  %v400 = vadd.f32 %v265, %v282
  %v401 = vadd.f32 %v266, %v282
  %v402 = vadd.f32 %v267, %v282
  %v403 = vadd.f32 %v268, %v282
  %v404 = vadd.f32 %v269, %v282
  %v405 = vadd.f32 %v270, %v282
  %v406 = vadd.f32 %v271, %v282
  %v407 = vadd.f32 %v272, %v282
  %v408 = vadd.f32 %v273, %v282
  %v409 = vadd.f32 %v274, %v282
  %v410 = vadd.f32 %v275, %v282
  %v411 = vadd.f32 %v276, %v282
  %412 = vst [vmem:[%s3] sm:$0xff] %v284
  %413 = vst [vmem:[%s3 + $0x8] sm:$0xff] %v285
  %414 = vst [vmem:[%s3 + $0x10] sm:$0xff] %v286
  %415 = vst [vmem:[%s3 + $0x18] sm:$0xff] %v287
  %416 = vst [vmem:[%s3 + $0x20] sm:$0xff] %v288
  %417 = vst [vmem:[%s3 + $0x28] sm:$0xff] %v289
  %418 = vst [vmem:[%s3 + $0x30] sm:$0xff] %v290
  %419 = vst [vmem:[%s3 + $0x38] sm:$0xff] %v291
  %420 = vst [vmem:[%s3 + $0x40] sm:$0xff] %v292
  %421 = vst [vmem:[%s3 + $0x48] sm:$0xff] %v293
  %422 = vst [vmem:[%s3 + $0x50] sm:$0xff] %v294
  %423 = vst [vmem:[%s3 + $0x58] sm:$0xff] %v295
  %424 = vst [vmem:[%s3 + $0x60] sm:$0xff] %v296
  %425 = vst [vmem:[%s3 + $0x68] sm:$0xff] %v297
  %426 = vst [vmem:[%s3 + $0x70] sm:$0xff] %v298
  %427 = vst [vmem:[%s3 + $0x78] sm:$0xff] %v299
  %428 = vst [vmem:[%s3 + $0x80] sm:$0xff] %v300
  %429 = vst [vmem:[%s3 + $0x88] sm:$0xff] %v301
  %430 = vst [vmem:[%s3 + $0x90] sm:$0xff] %v302
  %431 = vst [vmem:[%s3 + $0x98] sm:$0xff] %v303
  %432 = vst [vmem:[%s3 + $0xa0] sm:$0xff] %v304
  %433 = vst [vmem:[%s3 + $0xa8] sm:$0xff] %v305
  %434 = vst [vmem:[%s3 + $0xb0] sm:$0xff] %v306
  %435 = vst [vmem:[%s3 + $0xb8] sm:$0xff] %v307
  %436 = vst [vmem:[%s3 + $0xc0] sm:$0xff] %v308
  %437 = vst [vmem:[%s3 + $0xc8] sm:$0xff] %v309
  %438 = vst [vmem:[%s3 + $0xd0] sm:$0xff] %v310
  %439 = vst [vmem:[%s3 + $0xd8] sm:$0xff] %v311
  %440 = vst [vmem:[%s3 + $0xe0] sm:$0xff] %v312
  %441 = vst [vmem:[%s3 + $0xe8] sm:$0xff] %v313
  %442 = vst [vmem:[%s3 + $0xf0] sm:$0xff] %v314
  %443 = vst [vmem:[%s3 + $0xf8] sm:$0xff] %v315
  %444 = vst [vmem:[%s3 + $0x100] sm:$0xff] %v316
  %445 = vst [vmem:[%s3 + $0x108] sm:$0xff] %v317
  %446 = vst [vmem:[%s3 + $0x110] sm:$0xff] %v318
  %447 = vst [vmem:[%s3 + $0x118] sm:$0xff] %v319
  %448 = vst [vmem:[%s3 + $0x120] sm:$0xff] %v320
  %449 = vst [vmem:[%s3 + $0x128] sm:$0xff] %v321
  %450 = vst [vmem:[%s3 + $0x130] sm:$0xff] %v322
  %451 = vst [vmem:[%s3 + $0x138] sm:$0xff] %v323
  %452 = vst [vmem:[%s3 + $0x140] sm:$0xff] %v324
  %453 = vst [vmem:[%s3 + $0x148] sm:$0xff] %v325
  %454 = vst [vmem:[%s3 + $0x150] sm:$0xff] %v326
  %455 = vst [vmem:[%s3 + $0x158] sm:$0xff] %v327
  %456 = vst [vmem:[%s3 + $0x160] sm:$0xff] %v328
  %457 = vst [vmem:[%s3 + $0x168] sm:$0xff] %v329
  %458 = vst [vmem:[%s3 + $0x170] sm:$0xff] %v330
  %459 = vst [vmem:[%s3 + $0x178] sm:$0xff] %v331
  %460 = vst [vmem:[%s3 + $0x180] sm:$0xff] %v332
  %461 = vst [vmem:[%s3 + $0x188] sm:$0xff] %v333
  %462 = vst [vmem:[%s3 + $0x190] sm:$0xff] %v334
  %463 = vst [vmem:[%s3 + $0x198] sm:$0xff] %v335
  %464 = vst [vmem:[%s3 + $0x1a0] sm:$0xff] %v336
  %465 = vst [vmem:[%s3 + $0x1a8] sm:$0xff] %v337
  %466 = vst [vmem:[%s3 + $0x1b0] sm:$0xff] %v338
  %467 = vst [vmem:[%s3 + $0x1b8] sm:$0xff] %v339
  %468 = vst [vmem:[%s3 + $0x1c0] sm:$0xff] %v340
  %469 = vst [vmem:[%s3 + $0x1c8] sm:$0xff] %v341
  %470 = vst [vmem:[%s3 + $0x1d0] sm:$0xff] %v342
  %471 = vst [vmem:[%s3 + $0x1d8] sm:$0xff] %v343
  %472 = vst [vmem:[%s3 + $0x1e0] sm:$0xff] %v344
  %473 = vst [vmem:[%s3 + $0x1e8] sm:$0xff] %v345
  %474 = vst [vmem:[%s3 + $0x1f0] sm:$0xff] %v346
  %475 = vst [vmem:[%s3 + $0x1f8] sm:$0xff] %v347
  %476 = vst [vmem:[%s3 + $0x200] sm:$0xff] %v348
  %477 = vst [vmem:[%s3 + $0x208] sm:$0xff] %v349
  %478 = vst [vmem:[%s3 + $0x210] sm:$0xff] %v350
  %479 = vst [vmem:[%s3 + $0x218] sm:$0xff] %v351
  %480 = vst [vmem:[%s3 + $0x220] sm:$0xff] %v352
  %481 = vst [vmem:[%s3 + $0x228] sm:$0xff] %v353
  %482 = vst [vmem:[%s3 + $0x230] sm:$0xff] %v354
  %483 = vst [vmem:[%s3 + $0x238] sm:$0xff] %v355
  %484 = vst [vmem:[%s3 + $0x240] sm:$0xff] %v356
  %485 = vst [vmem:[%s3 + $0x248] sm:$0xff] %v357
  %486 = vst [vmem:[%s3 + $0x250] sm:$0xff] %v358
  %487 = vst [vmem:[%s3 + $0x258] sm:$0xff] %v359
  %488 = vst [vmem:[%s3 + $0x260] sm:$0xff] %v360
  %489 = vst [vmem:[%s3 + $0x268] sm:$0xff] %v361
  %490 = vst [vmem:[%s3 + $0x270] sm:$0xff] %v362
  %491 = vst [vmem:[%s3 + $0x278] sm:$0xff] %v363
  %492 = vst [vmem:[%s3 + $0x280] sm:$0xff] %v364
  %493 = vst [vmem:[%s3 + $0x288] sm:$0xff] %v365
  %494 = vst [vmem:[%s3 + $0x290] sm:$0xff] %v366
  %495 = vst [vmem:[%s3 + $0x298] sm:$0xff] %v367
  %496 = vst [vmem:[%s3 + $0x2a0] sm:$0xff] %v368
  %497 = vst [vmem:[%s3 + $0x2a8] sm:$0xff] %v369
  %498 = vst [vmem:[%s3 + $0x2b0] sm:$0xff] %v370
  %499 = vst [vmem:[%s3 + $0x2b8] sm:$0xff] %v371
  %500 = vst [vmem:[%s3 + $0x2c0] sm:$0xff] %v372
  %501 = vst [vmem:[%s3 + $0x2c8] sm:$0xff] %v373
  %502 = vst [vmem:[%s3 + $0x2d0] sm:$0xff] %v374
  %503 = vst [vmem:[%s3 + $0x2d8] sm:$0xff] %v375
  %504 = vst [vmem:[%s3 + $0x2e0] sm:$0xff] %v376
  %505 = vst [vmem:[%s3 + $0x2e8] sm:$0xff] %v377
  %506 = vst [vmem:[%s3 + $0x2f0] sm:$0xff] %v378
  %507 = vst [vmem:[%s3 + $0x2f8] sm:$0xff] %v379
  %508 = vst [vmem:[%s3 + $0x300] sm:$0xff] %v380
  %509 = vst [vmem:[%s3 + $0x308] sm:$0xff] %v381
  %510 = vst [vmem:[%s3 + $0x310] sm:$0xff] %v382
  %511 = vst [vmem:[%s3 + $0x318] sm:$0xff] %v383
  %512 = vst [vmem:[%s3 + $0x320] sm:$0xff] %v384
  %513 = vst [vmem:[%s3 + $0x328] sm:$0xff] %v385
  %514 = vst [vmem:[%s3 + $0x330] sm:$0xff] %v386
  %515 = vst [vmem:[%s3 + $0x338] sm:$0xff] %v387
  %516 = vst [vmem:[%s3 + $0x340] sm:$0xff] %v388
  %517 = vst [vmem:[%s3 + $0x348] sm:$0xff] %v389
  %518 = vst [vmem:[%s3 + $0x350] sm:$0xff] %v390
  %519 = vst [vmem:[%s3 + $0x358] sm:$0xff] %v391
  %520 = vst [vmem:[%s3 + $0x360] sm:$0xff] %v392
  %521 = vst [vmem:[%s3 + $0x368] sm:$0xff] %v393
  %522 = vst [vmem:[%s3 + $0x370] sm:$0xff] %v394
  %523 = vst [vmem:[%s3 + $0x378] sm:$0xff] %v395
  %524 = vst [vmem:[%s3 + $0x380] sm:$0xff] %v396
  %525 = vst [vmem:[%s3 + $0x388] sm:$0xff] %v397
  %526 = vst [vmem:[%s3 + $0x390] sm:$0xff] %v398
  %527 = vst [vmem:[%s3 + $0x398] sm:$0xff] %v399
  %528 = vst [vmem:[%s3 + $0x3a0] sm:$0xff] %v400
  %529 = vst [vmem:[%s3 + $0x3a8] sm:$0xff] %v401
  %530 = vst [vmem:[%s3 + $0x3b0] sm:$0xff] %v402
  %531 = vst [vmem:[%s3 + $0x3b8] sm:$0xff] %v403
  %532 = vst [vmem:[%s3 + $0x3c0] sm:$0xff] %v404
  %533 = vst [vmem:[%s3 + $0x3c8] sm:$0xff] %v405
  %534 = vst [vmem:[%s3 + $0x3d0] sm:$0xff] %v406
  %535 = vst [vmem:[%s3 + $0x3d8] sm:$0xff] %v407
  %536 = vst [vmem:[%s3 + $0x3e0] sm:$0xff] %v408
  %537 = vst [vmem:[%s3 + $0x3e8] sm:$0xff] %v409
  %538 = vst [vmem:[%s3 + $0x3f0] sm:$0xff] %v410
  %539 = vst [vmem:[%s3 + $0x3f8] sm:$0xff] %v411
  // Predicated region
  $region14: #{down_forward.7} parent=0 // pred_check
    _
  $region15: #{down_forward.7} parent=0 // pred_check_branch
    %541 = sbr.rel (0) target = $region17
  $region16: #{down_forward.7} parent=0 // pred_region
    _
  $region17: #{down_forward.7} parent=0 // pred_fallthru
    _
  // Predicated region
  $region18: #{down_forward.7} parent=0 // pred_check
    _
  $region19: #{down_forward.7} parent=0 // pred_check_branch
    %543 = sbr.rel (0) target = $region21
  $region20: #{down_forward.7} parent=0 // pred_region
    _
  $region21: #{down_forward.7} parent=0 // pred_fallthru
    _

</llo_original>
